<compile_context>
chip_gen: v5e
topology: v5e:2x2
jax: 0.10.0
libtpu: 0.0.40
codegen_flags: <defaults>
</compile_context>

<pallas_src>
import math

import jax
import jax.numpy as jnp
from jax.experimental import pallas as pl
from jax.experimental.pallas import tpu as pltpu

NHEAD = 8
LN_EPS = 1e-5
PARAMS_PER_LAYER = 20  # number of per-layer weight/bias arrays passed to the kernel


# ----------------------------- fused kernel --------------------------------

def _make_decoder_kernel(n_layers, d_model, nhead):
    """Build a fused kernel for one batch element: all layers + output head."""
    dh = d_model // nhead
    scale = 1.0 / math.sqrt(dh)
    D = d_model

    def _layernorm(y, g, b):
        mu = jnp.mean(y, axis=-1, keepdims=True)
        cen = y - mu
        var = jnp.mean(cen * cen, axis=-1, keepdims=True)
        return cen * jax.lax.rsqrt(var + LN_EPS) * g + b

    def _mha(q, k, v):
        # q:[T,D] k,v:[S,D] -> [T,D]; heads are static lane slices of width dh.
        outs = []
        for h in range(nhead):
            lo = h * dh
            qh = q[:, lo:lo + dh]
            kh = k[:, lo:lo + dh]
            vh = v[:, lo:lo + dh]
            # scores = qh @ kh^T (contract head_dim without materializing a transpose)
            s = jax.lax.dot_general(
                qh, kh, (((1,), (1,)), ((), ())),
                preferred_element_type=jnp.float32) * scale
            s = s - jnp.max(s, axis=-1, keepdims=True)
            p = jnp.exp(s)
            p = p * pl.reciprocal(jnp.sum(p, axis=-1, keepdims=True), approx=True)
            outs.append(jnp.dot(p, vh, preferred_element_type=jnp.float32))
        return jnp.concatenate(outs, axis=-1)          # merged, lane-dense [T, D]

    def kernel(*refs):
        x_ref, mem_ref = refs[0], refs[1]
        o_ref = refs[-1]
        p_refs = refs[2:-1]

        x = x_ref[...].astype(jnp.float32)             # [T, D]
        mem = mem_ref[...].astype(jnp.float32)         # [S, D]

        for li in range(n_layers):                      # static unroll over layers
            base = li * PARAMS_PER_LAYER
            (sa_wqkv, sa_bqkv, sa_wo, sa_bo, ln1_g, ln1_b,
             ca_wq, ca_bq, ca_wkv, ca_bkv, ca_wo, ca_bo, ln2_g, ln2_b,
             ff_w1, ff_b1, ff_w2, ff_b2, ln3_g, ln3_b) = [
                r[...] for r in p_refs[base:base + PARAMS_PER_LAYER]]

            # ---- self-attention (packed QKV projection) + add & norm ----
            qkv = jnp.dot(x, sa_wqkv, preferred_element_type=jnp.float32) + sa_bqkv
            q, k, v = qkv[:, :D], qkv[:, D:2 * D], qkv[:, 2 * D:3 * D]
            sa = jnp.dot(_mha(q, k, v), sa_wo,
                         preferred_element_type=jnp.float32) + sa_bo
            x = _layernorm(x + sa, ln1_g, ln1_b)

            # ---- cross-attention (packed KV projection on memory) + add & norm ----
            q = jnp.dot(x, ca_wq, preferred_element_type=jnp.float32) + ca_bq
            kv = jnp.dot(mem, ca_wkv, preferred_element_type=jnp.float32) + ca_bkv
            k, v = kv[:, :D], kv[:, D:2 * D]
            ca = jnp.dot(_mha(q, k, v), ca_wo,
                         preferred_element_type=jnp.float32) + ca_bo
            x = _layernorm(x + ca, ln2_g, ln2_b)

            # ---- feed-forward (relu) + add & norm ----
            h = jnp.maximum(
                jnp.dot(x, ff_w1, preferred_element_type=jnp.float32) + ff_b1, 0.0)
            ff = jnp.dot(h, ff_w2, preferred_element_type=jnp.float32) + ff_b2
            x = _layernorm(x + ff, ln3_g, ln3_b)

        # ---- output Linear fused into the same kernel ----
        out_w = p_refs[n_layers * PARAMS_PER_LAYER][...]
        out_b = p_refs[n_layers * PARAMS_PER_LAYER + 1][...]
        o_ref[...] = (jnp.dot(x, out_w, preferred_element_type=jnp.float32)
                      + out_b).astype(o_ref.dtype)

    return kernel


# ----------------------------- model ---------------------------------------

_LAYER_KEYS = ('sa_wqkv', 'sa_bqkv', 'sa_wo', 'sa_bo', 'ln1_g', 'ln1_b',
               'ca_wq', 'ca_bq', 'ca_wkv', 'ca_bkv', 'ca_wo', 'ca_bo',
               'ln2_g', 'ln2_b',
               'ff_w1', 'ff_b1', 'ff_w2', 'ff_b2', 'ln3_g', 'ln3_b')


def init_params(key, config):
    D = config['input_dim']
    F = config['hidden_dim']
    O = config['output_dim']
    n_layers = config['n_layers']

    def w(k, shape, scale=0.05):
        return (scale * jax.random.normal(k, shape)).astype(jnp.float32)

    params = {'layers': []}
    keys = jax.random.split(key, n_layers + 1)
    for li in range(n_layers):
        lk = jax.random.split(keys[li], 8)
        layer = {
            # packed Q|K|V projection for self-attention
            'sa_wqkv': w(lk[0], (D, 3 * D)), 'sa_bqkv': jnp.zeros((1, 3 * D), jnp.float32),
            'sa_wo': w(lk[1], (D, D)),       'sa_bo': jnp.zeros((1, D), jnp.float32),
            # cross-attention: Q from x, packed K|V from memory
            'ca_wq': w(lk[2], (D, D)),       'ca_bq': jnp.zeros((1, D), jnp.float32),
            'ca_wkv': w(lk[3], (D, 2 * D)),  'ca_bkv': jnp.zeros((1, 2 * D), jnp.float32),
            'ca_wo': w(lk[4], (D, D)),       'ca_bo': jnp.zeros((1, D), jnp.float32),
            # feed-forward
            'ff_w1': w(lk[5], (D, F)),       'ff_b1': jnp.zeros((1, F), jnp.float32),
            'ff_w2': w(lk[6], (F, D)),       'ff_b2': jnp.zeros((1, D), jnp.float32),
            # layer norms
            'ln1_g': jnp.ones((1, D), jnp.float32), 'ln1_b': jnp.zeros((1, D), jnp.float32),
            'ln2_g': jnp.ones((1, D), jnp.float32), 'ln2_b': jnp.zeros((1, D), jnp.float32),
            'ln3_g': jnp.ones((1, D), jnp.float32), 'ln3_b': jnp.zeros((1, D), jnp.float32),
        }
        params['layers'].append(layer)
    params['out_w'] = w(keys[-1], (D, O))
    params['out_b'] = jnp.zeros((1, O), jnp.float32)
    return params


def mel_spectrogram2_decoder_forward(x, memory, params):
    # mirrors MelSpectrogram2Decoder.forward
    if x.ndim == 4:
        x = jnp.squeeze(x, axis=1)               # [B, T, D]
    elif x.ndim != 3:
        raise ValueError(f"Expected 3-D or 4-D input, got {x.shape}")
    if memory.ndim != 3:
        raise ValueError(f"Expected 3-D memory, got {memory.shape}")
    # PyTorch permutes to (seq, batch, dim) for seq-first MHA; attention math is identical
    # per batch element, so we keep batch-major layout throughout (no transposes needed).

    B, T, D = x.shape
    S = memory.shape[1]
    n_layers = len(params['layers'])
    O = params['out_w'].shape[1]

    flat = []
    for lp in params['layers']:
        flat.extend(lp[k] for k in _LAYER_KEYS)
    flat.append(params['out_w'])
    flat.append(params['out_b'])

    in_specs = [pl.BlockSpec((None, T, D), lambda b: (b, 0, 0)),   # x, per-batch slice
                pl.BlockSpec((None, S, D), lambda b: (b, 0, 0))]   # memory, per-batch slice
    # all weights: full-array VMEM blocks, constant index -> resident across grid steps
    in_specs += [pl.BlockSpec(p.shape, lambda b: (0, 0)) for p in flat]

    kernel = _make_decoder_kernel(n_layers, D, NHEAD)

    return pl.pallas_call(
        kernel,
        out_shape=jax.ShapeDtypeStruct((B, T, O), x.dtype),
        grid=(B,),
        in_specs=in_specs,
        out_specs=pl.BlockSpec((None, T, O), lambda b: (b, 0, 0)),
        compiler_params=pltpu.CompilerParams(
            dimension_semantics=("parallel",)),   # batch split across TCs on v7x
    )(x, memory, *flat)


# ----------------------------- main -----------------------------------------

if __name__ == "__main__":
    config = {'input_dim': 32, 'hidden_dim': 64, 'output_dim': 16, 'n_layers': 2}

    key = jax.random.PRNGKey(0)
    k_param, k_x, k_mem = jax.random.split(key, 3)

    params = init_params(k_param, config)

    B, T, S, D = 2, 16, 8, config['input_dim']
    # 4-D input [batch, channels=1, time, freq] exercises the squeeze(1) path
    x = jax.random.normal(k_x, (B, 1, T, D), dtype=jnp.float32)
    memory = jax.random.normal(k_mem, (B, S, D), dtype=jnp.float32)

    out = mel_spectrogram2_decoder_forward(x, memory, params)
    out = jax.block_until_ready(out)

    assert out.shape == (B, T, config['output_dim']), out.shape
    assert jnp.all(jnp.isfinite(out))
    print("KERNEL_OK")
</pallas_src>

<mosaic_0001>
module attributes {stable_mosaic.version = 11 : i64} {
  func.func @kernel(%arg0: i32, %arg1: memref<1x16x32xf32, #tpu.memory_space<vmem>>, %arg2: memref<1x8x32xf32, #tpu.memory_space<vmem>>, %arg3: memref<32x96xf32, #tpu.memory_space<vmem>>, %arg4: memref<1x96xf32, #tpu.memory_space<vmem>>, %arg5: memref<32x32xf32, #tpu.memory_space<vmem>>, %arg6: memref<1x32xf32, #tpu.memory_space<vmem>>, %arg7: memref<1x32xf32, #tpu.memory_space<vmem>>, %arg8: memref<1x32xf32, #tpu.memory_space<vmem>>, %arg9: memref<32x32xf32, #tpu.memory_space<vmem>>, %arg10: memref<1x32xf32, #tpu.memory_space<vmem>>, %arg11: memref<32x64xf32, #tpu.memory_space<vmem>>, %arg12: memref<1x64xf32, #tpu.memory_space<vmem>>, %arg13: memref<32x32xf32, #tpu.memory_space<vmem>>, %arg14: memref<1x32xf32, #tpu.memory_space<vmem>>, %arg15: memref<1x32xf32, #tpu.memory_space<vmem>>, %arg16: memref<1x32xf32, #tpu.memory_space<vmem>>, %arg17: memref<32x64xf32, #tpu.memory_space<vmem>>, %arg18: memref<1x64xf32, #tpu.memory_space<vmem>>, %arg19: memref<64x32xf32, #tpu.memory_space<vmem>>, %arg20: memref<1x32xf32, #tpu.memory_space<vmem>>, %arg21: memref<1x32xf32, #tpu.memory_space<vmem>>, %arg22: memref<1x32xf32, #tpu.memory_space<vmem>>, %arg23: memref<32x96xf32, #tpu.memory_space<vmem>>, %arg24: memref<1x96xf32, #tpu.memory_space<vmem>>, %arg25: memref<32x32xf32, #tpu.memory_space<vmem>>, %arg26: memref<1x32xf32, #tpu.memory_space<vmem>>, %arg27: memref<1x32xf32, #tpu.memory_space<vmem>>, %arg28: memref<1x32xf32, #tpu.memory_space<vmem>>, %arg29: memref<32x32xf32, #tpu.memory_space<vmem>>, %arg30: memref<1x32xf32, #tpu.memory_space<vmem>>, %arg31: memref<32x64xf32, #tpu.memory_space<vmem>>, %arg32: memref<1x64xf32, #tpu.memory_space<vmem>>, %arg33: memref<32x32xf32, #tpu.memory_space<vmem>>, %arg34: memref<1x32xf32, #tpu.memory_space<vmem>>, %arg35: memref<1x32xf32, #tpu.memory_space<vmem>>, %arg36: memref<1x32xf32, #tpu.memory_space<vmem>>, %arg37: memref<32x64xf32, #tpu.memory_space<vmem>>, %arg38: memref<1x64xf32, #tpu.memory_space<vmem>>, %arg39: memref<64x32xf32, #tpu.memory_space<vmem>>, %arg40: memref<1x32xf32, #tpu.memory_space<vmem>>, %arg41: memref<1x32xf32, #tpu.memory_space<vmem>>, %arg42: memref<1x32xf32, #tpu.memory_space<vmem>>, %arg43: memref<32x16xf32, #tpu.memory_space<vmem>>, %arg44: memref<1x16xf32, #tpu.memory_space<vmem>>, %arg45: memref<1x16x16xf32, #tpu.memory_space<vmem>>) attributes {dimension_semantics = [#tpu.dimension_semantics<parallel>], iteration_bounds = array<i64: 2>, scalar_prefetch = 0 : i64, scratch_operands = 0 : i64, tpu.core_type = #tpu.core_type<tc>, window_params = [{transform_indices = @transform_0, window_bounds = array<i64: 1, 16, 32>}, {transform_indices = @transform_1, window_bounds = array<i64: 1, 8, 32>}, {pipeline_mode = #tpu.pipeline_mode<synchronous>, transform_indices = @transform_2, window_bounds = array<i64: 32, 96>}, {pipeline_mode = #tpu.pipeline_mode<synchronous>, transform_indices = @transform_3, window_bounds = array<i64: 1, 96>}, {pipeline_mode = #tpu.pipeline_mode<synchronous>, transform_indices = @transform_4, window_bounds = array<i64: 32, 32>}, {pipeline_mode = #tpu.pipeline_mode<synchronous>, transform_indices = @transform_5, window_bounds = array<i64: 1, 32>}, {pipeline_mode = #tpu.pipeline_mode<synchronous>, transform_indices = @transform_6, window_bounds = array<i64: 1, 32>}, {pipeline_mode = #tpu.pipeline_mode<synchronous>, transform_indices = @transform_7, window_bounds = array<i64: 1, 32>}, {pipeline_mode = #tpu.pipeline_mode<synchronous>, transform_indices = @transform_8, window_bounds = array<i64: 32, 32>}, {pipeline_mode = #tpu.pipeline_mode<synchronous>, transform_indices = @transform_9, window_bounds = array<i64: 1, 32>}, {pipeline_mode = #tpu.pipeline_mode<synchronous>, transform_indices = @transform_10, window_bounds = array<i64: 32, 64>}, {pipeline_mode = #tpu.pipeline_mode<synchronous>, transform_indices = @transform_11, window_bounds = array<i64: 1, 64>}, {pipeline_mode = #tpu.pipeline_mode<synchronous>, transform_indices = @transform_12, window_bounds = array<i64: 32, 32>}, {pipeline_mode = #tpu.pipeline_mode<synchronous>, transform_indices = @transform_13, window_bounds = array<i64: 1, 32>}, {pipeline_mode = #tpu.pipeline_mode<synchronous>, transform_indices = @transform_14, window_bounds = array<i64: 1, 32>}, {pipeline_mode = #tpu.pipeline_mode<synchronous>, transform_indices = @transform_15, window_bounds = array<i64: 1, 32>}, {pipeline_mode = #tpu.pipeline_mode<synchronous>, transform_indices = @transform_16, window_bounds = array<i64: 32, 64>}, {pipeline_mode = #tpu.pipeline_mode<synchronous>, transform_indices = @transform_17, window_bounds = array<i64: 1, 64>}, {pipeline_mode = #tpu.pipeline_mode<synchronous>, transform_indices = @transform_18, window_bounds = array<i64: 64, 32>}, {pipeline_mode = #tpu.pipeline_mode<synchronous>, transform_indices = @transform_19, window_bounds = array<i64: 1, 32>}, {pipeline_mode = #tpu.pipeline_mode<synchronous>, transform_indices = @transform_20, window_bounds = array<i64: 1, 32>}, {pipeline_mode = #tpu.pipeline_mode<synchronous>, transform_indices = @transform_21, window_bounds = array<i64: 1, 32>}, {pipeline_mode = #tpu.pipeline_mode<synchronous>, transform_indices = @transform_22, window_bounds = array<i64: 32, 96>}, {pipeline_mode = #tpu.pipeline_mode<synchronous>, transform_indices = @transform_23, window_bounds = array<i64: 1, 96>}, {pipeline_mode = #tpu.pipeline_mode<synchronous>, transform_indices = @transform_24, window_bounds = array<i64: 32, 32>}, {pipeline_mode = #tpu.pipeline_mode<synchronous>, transform_indices = @transform_25, window_bounds = array<i64: 1, 32>}, {pipeline_mode = #tpu.pipeline_mode<synchronous>, transform_indices = @transform_26, window_bounds = array<i64: 1, 32>}, {pipeline_mode = #tpu.pipeline_mode<synchronous>, transform_indices = @transform_27, window_bounds = array<i64: 1, 32>}, {pipeline_mode = #tpu.pipeline_mode<synchronous>, transform_indices = @transform_28, window_bounds = array<i64: 32, 32>}, {pipeline_mode = #tpu.pipeline_mode<synchronous>, transform_indices = @transform_29, window_bounds = array<i64: 1, 32>}, {pipeline_mode = #tpu.pipeline_mode<synchronous>, transform_indices = @transform_30, window_bounds = array<i64: 32, 64>}, {pipeline_mode = #tpu.pipeline_mode<synchronous>, transform_indices = @transform_31, window_bounds = array<i64: 1, 64>}, {pipeline_mode = #tpu.pipeline_mode<synchronous>, transform_indices = @transform_32, window_bounds = array<i64: 32, 32>}, {pipeline_mode = #tpu.pipeline_mode<synchronous>, transform_indices = @transform_33, window_bounds = array<i64: 1, 32>}, {pipeline_mode = #tpu.pipeline_mode<synchronous>, transform_indices = @transform_34, window_bounds = array<i64: 1, 32>}, {pipeline_mode = #tpu.pipeline_mode<synchronous>, transform_indices = @transform_35, window_bounds = array<i64: 1, 32>}, {pipeline_mode = #tpu.pipeline_mode<synchronous>, transform_indices = @transform_36, window_bounds = array<i64: 32, 64>}, {pipeline_mode = #tpu.pipeline_mode<synchronous>, transform_indices = @transform_37, window_bounds = array<i64: 1, 64>}, {pipeline_mode = #tpu.pipeline_mode<synchronous>, transform_indices = @transform_38, window_bounds = array<i64: 64, 32>}, {pipeline_mode = #tpu.pipeline_mode<synchronous>, transform_indices = @transform_39, window_bounds = array<i64: 1, 32>}, {pipeline_mode = #tpu.pipeline_mode<synchronous>, transform_indices = @transform_40, window_bounds = array<i64: 1, 32>}, {pipeline_mode = #tpu.pipeline_mode<synchronous>, transform_indices = @transform_41, window_bounds = array<i64: 1, 32>}, {pipeline_mode = #tpu.pipeline_mode<synchronous>, transform_indices = @transform_42, window_bounds = array<i64: 32, 16>}, {pipeline_mode = #tpu.pipeline_mode<synchronous>, transform_indices = @transform_43, window_bounds = array<i64: 1, 16>}, {transform_indices = @transform_44, window_bounds = array<i64: 1, 16, 16>}]} {
    %c0 = arith.constant 0 : index
    %c0_0 = arith.constant 0 : index
    %c0_1 = arith.constant 0 : index
    %0 = vector.load %arg1[%c0, %c0_0, %c0_1] : memref<1x16x32xf32, #tpu.memory_space<vmem>>, vector<1x16x32xf32>
    %1 = vector.shape_cast %0 : vector<1x16x32xf32> to vector<16x32xf32>
    %c0_2 = arith.constant 0 : index
    %c0_3 = arith.constant 0 : index
    %c0_4 = arith.constant 0 : index
    %2 = vector.load %arg2[%c0_2, %c0_3, %c0_4] : memref<1x8x32xf32, #tpu.memory_space<vmem>>, vector<1x8x32xf32>
    %3 = vector.shape_cast %2 : vector<1x8x32xf32> to vector<8x32xf32>
    %c0_5 = arith.constant 0 : index
    %c0_6 = arith.constant 0 : index
    %4 = vector.load %arg3[%c0_5, %c0_6] : memref<32x96xf32, #tpu.memory_space<vmem>>, vector<32x96xf32>
    %c0_7 = arith.constant 0 : index
    %c0_8 = arith.constant 0 : index
    %5 = vector.load %arg4[%c0_7, %c0_8] : memref<1x96xf32, #tpu.memory_space<vmem>>, vector<1x96xf32>
    %c0_9 = arith.constant 0 : index
    %c0_10 = arith.constant 0 : index
    %6 = vector.load %arg5[%c0_9, %c0_10] : memref<32x32xf32, #tpu.memory_space<vmem>>, vector<32x32xf32>
    %c0_11 = arith.constant 0 : index
    %c0_12 = arith.constant 0 : index
    %7 = vector.load %arg6[%c0_11, %c0_12] : memref<1x32xf32, #tpu.memory_space<vmem>>, vector<1x32xf32>
    %c0_13 = arith.constant 0 : index
    %c0_14 = arith.constant 0 : index
    %8 = vector.load %arg7[%c0_13, %c0_14] : memref<1x32xf32, #tpu.memory_space<vmem>>, vector<1x32xf32>
    %c0_15 = arith.constant 0 : index
    %c0_16 = arith.constant 0 : index
    %9 = vector.load %arg8[%c0_15, %c0_16] : memref<1x32xf32, #tpu.memory_space<vmem>>, vector<1x32xf32>
    %c0_17 = arith.constant 0 : index
    %c0_18 = arith.constant 0 : index
    %10 = vector.load %arg9[%c0_17, %c0_18] : memref<32x32xf32, #tpu.memory_space<vmem>>, vector<32x32xf32>
    %c0_19 = arith.constant 0 : index
    %c0_20 = arith.constant 0 : index
    %11 = vector.load %arg10[%c0_19, %c0_20] : memref<1x32xf32, #tpu.memory_space<vmem>>, vector<1x32xf32>
    %c0_21 = arith.constant 0 : index
    %c0_22 = arith.constant 0 : index
    %12 = vector.load %arg11[%c0_21, %c0_22] : memref<32x64xf32, #tpu.memory_space<vmem>>, vector<32x64xf32>
    %c0_23 = arith.constant 0 : index
    %c0_24 = arith.constant 0 : index
    %13 = vector.load %arg12[%c0_23, %c0_24] : memref<1x64xf32, #tpu.memory_space<vmem>>, vector<1x64xf32>
    %c0_25 = arith.constant 0 : index
    %c0_26 = arith.constant 0 : index
    %14 = vector.load %arg13[%c0_25, %c0_26] : memref<32x32xf32, #tpu.memory_space<vmem>>, vector<32x32xf32>
    %c0_27 = arith.constant 0 : index
    %c0_28 = arith.constant 0 : index
    %15 = vector.load %arg14[%c0_27, %c0_28] : memref<1x32xf32, #tpu.memory_space<vmem>>, vector<1x32xf32>
    %c0_29 = arith.constant 0 : index
    %c0_30 = arith.constant 0 : index
    %16 = vector.load %arg15[%c0_29, %c0_30] : memref<1x32xf32, #tpu.memory_space<vmem>>, vector<1x32xf32>
    %c0_31 = arith.constant 0 : index
    %c0_32 = arith.constant 0 : index
    %17 = vector.load %arg16[%c0_31, %c0_32] : memref<1x32xf32, #tpu.memory_space<vmem>>, vector<1x32xf32>
    %c0_33 = arith.constant 0 : index
    %c0_34 = arith.constant 0 : index
    %18 = vector.load %arg17[%c0_33, %c0_34] : memref<32x64xf32, #tpu.memory_space<vmem>>, vector<32x64xf32>
    %c0_35 = arith.constant 0 : index
    %c0_36 = arith.constant 0 : index
    %19 = vector.load %arg18[%c0_35, %c0_36] : memref<1x64xf32, #tpu.memory_space<vmem>>, vector<1x64xf32>
    %c0_37 = arith.constant 0 : index
    %c0_38 = arith.constant 0 : index
    %20 = vector.load %arg19[%c0_37, %c0_38] : memref<64x32xf32, #tpu.memory_space<vmem>>, vector<64x32xf32>
    %c0_39 = arith.constant 0 : index
    %c0_40 = arith.constant 0 : index
    %21 = vector.load %arg20[%c0_39, %c0_40] : memref<1x32xf32, #tpu.memory_space<vmem>>, vector<1x32xf32>
    %c0_41 = arith.constant 0 : index
    %c0_42 = arith.constant 0 : index
    %22 = vector.load %arg21[%c0_41, %c0_42] : memref<1x32xf32, #tpu.memory_space<vmem>>, vector<1x32xf32>
    %c0_43 = arith.constant 0 : index
    %c0_44 = arith.constant 0 : index
    %23 = vector.load %arg22[%c0_43, %c0_44] : memref<1x32xf32, #tpu.memory_space<vmem>>, vector<1x32xf32>
    %cst = arith.constant dense<0.000000e+00> : vector<16x96xf32>
    %24 = tpu.matmul %1, %4, %cst {dimension_numbers = #tpu.dot_dimension_numbers<[1], [0], [0], [1], [0, 0, 1, 1], [], []>} : vector<16x32xf32>, vector<32x96xf32>, vector<16x96xf32> -> vector<16x96xf32>
    %25 = vector.broadcast %5 : vector<1x96xf32> to vector<16x96xf32>
    %26 = arith.addf %24, %25 : vector<16x96xf32>
    %27 = vector.extract_strided_slice %26 {offsets = [0, 0], sizes = [16, 32], strides = [1, 1]} : vector<16x96xf32> to vector<16x32xf32>
    %28 = vector.extract_strided_slice %26 {offsets = [0, 32], sizes = [16, 32], strides = [1, 1]} : vector<16x96xf32> to vector<16x32xf32>
    %29 = vector.extract_strided_slice %26 {offsets = [0, 64], sizes = [16, 32], strides = [1, 1]} : vector<16x96xf32> to vector<16x32xf32>
    %30 = vector.extract_strided_slice %27 {offsets = [0, 0], sizes = [16, 4], strides = [1, 1]} : vector<16x32xf32> to vector<16x4xf32>
    %31 = vector.extract_strided_slice %28 {offsets = [0, 0], sizes = [16, 4], strides = [1, 1]} : vector<16x32xf32> to vector<16x4xf32>
    %32 = vector.extract_strided_slice %29 {offsets = [0, 0], sizes = [16, 4], strides = [1, 1]} : vector<16x32xf32> to vector<16x4xf32>
    %cst_45 = arith.constant dense<0.000000e+00> : vector<16x16xf32>
    %33 = tpu.matmul %30, %31, %cst_45 {dimension_numbers = #tpu.dot_dimension_numbers<[1], [1], [0], [0], [0, 0, 1, 0], [], []>} : vector<16x4xf32>, vector<16x4xf32>, vector<16x16xf32> -> vector<16x16xf32>
    %cst_46 = arith.constant 5.000000e-01 : f32
    %34 = vector.broadcast %cst_46 : f32 to vector<16x16xf32>
    %35 = arith.mulf %33, %34 : vector<16x16xf32>
    %cst_47 = arith.constant dense<0xFF800000> : vector<16xf32>
    %36 = vector.multi_reduction <maximumf>, %35, %cst_47 [1] : vector<16x16xf32> to vector<16xf32>
    %37 = vector.shape_cast %36 : vector<16xf32> to vector<16x1xf32>
    %38 = vector.broadcast %37 : vector<16x1xf32> to vector<16x16xf32>
    %39 = arith.subf %35, %38 : vector<16x16xf32>
    %40 = math.exp %39 : vector<16x16xf32>
    %cst_48 = arith.constant dense<0.000000e+00> : vector<16xf32>
    %41 = vector.multi_reduction <add>, %40, %cst_48 [1] : vector<16x16xf32> to vector<16xf32>
    %42 = vector.shape_cast %41 : vector<16xf32> to vector<16x1xf32>
    %43 = tpu.reciprocal %42 {approx = true} : vector<16x1xf32> -> vector<16x1xf32>
    %44 = vector.broadcast %43 : vector<16x1xf32> to vector<16x16xf32>
    %45 = arith.mulf %40, %44 : vector<16x16xf32>
    %cst_49 = arith.constant dense<0.000000e+00> : vector<16x4xf32>
    %46 = tpu.matmul %45, %32, %cst_49 {dimension_numbers = #tpu.dot_dimension_numbers<[1], [0], [0], [1], [0, 0, 1, 1], [], []>} : vector<16x16xf32>, vector<16x4xf32>, vector<16x4xf32> -> vector<16x4xf32>
    %47 = vector.extract_strided_slice %27 {offsets = [0, 4], sizes = [16, 4], strides = [1, 1]} : vector<16x32xf32> to vector<16x4xf32>
    %48 = vector.extract_strided_slice %28 {offsets = [0, 4], sizes = [16, 4], strides = [1, 1]} : vector<16x32xf32> to vector<16x4xf32>
    %49 = vector.extract_strided_slice %29 {offsets = [0, 4], sizes = [16, 4], strides = [1, 1]} : vector<16x32xf32> to vector<16x4xf32>
    %cst_50 = arith.constant dense<0.000000e+00> : vector<16x16xf32>
    %50 = tpu.matmul %47, %48, %cst_50 {dimension_numbers = #tpu.dot_dimension_numbers<[1], [1], [0], [0], [0, 0, 1, 0], [], []>} : vector<16x4xf32>, vector<16x4xf32>, vector<16x16xf32> -> vector<16x16xf32>
    %cst_51 = arith.constant 5.000000e-01 : f32
    %51 = vector.broadcast %cst_51 : f32 to vector<16x16xf32>
    %52 = arith.mulf %50, %51 : vector<16x16xf32>
    %cst_52 = arith.constant dense<0xFF800000> : vector<16xf32>
    %53 = vector.multi_reduction <maximumf>, %52, %cst_52 [1] : vector<16x16xf32> to vector<16xf32>
    %54 = vector.shape_cast %53 : vector<16xf32> to vector<16x1xf32>
    %55 = vector.broadcast %54 : vector<16x1xf32> to vector<16x16xf32>
    %56 = arith.subf %52, %55 : vector<16x16xf32>
    %57 = math.exp %56 : vector<16x16xf32>
    %cst_53 = arith.constant dense<0.000000e+00> : vector<16xf32>
    %58 = vector.multi_reduction <add>, %57, %cst_53 [1] : vector<16x16xf32> to vector<16xf32>
    %59 = vector.shape_cast %58 : vector<16xf32> to vector<16x1xf32>
    %60 = tpu.reciprocal %59 {approx = true} : vector<16x1xf32> -> vector<16x1xf32>
    %61 = vector.broadcast %60 : vector<16x1xf32> to vector<16x16xf32>
    %62 = arith.mulf %57, %61 : vector<16x16xf32>
    %cst_54 = arith.constant dense<0.000000e+00> : vector<16x4xf32>
    %63 = tpu.matmul %62, %49, %cst_54 {dimension_numbers = #tpu.dot_dimension_numbers<[1], [0], [0], [1], [0, 0, 1, 1], [], []>} : vector<16x16xf32>, vector<16x4xf32>, vector<16x4xf32> -> vector<16x4xf32>
    %64 = vector.extract_strided_slice %27 {offsets = [0, 8], sizes = [16, 4], strides = [1, 1]} : vector<16x32xf32> to vector<16x4xf32>
    %65 = vector.extract_strided_slice %28 {offsets = [0, 8], sizes = [16, 4], strides = [1, 1]} : vector<16x32xf32> to vector<16x4xf32>
    %66 = vector.extract_strided_slice %29 {offsets = [0, 8], sizes = [16, 4], strides = [1, 1]} : vector<16x32xf32> to vector<16x4xf32>
    %cst_55 = arith.constant dense<0.000000e+00> : vector<16x16xf32>
    %67 = tpu.matmul %64, %65, %cst_55 {dimension_numbers = #tpu.dot_dimension_numbers<[1], [1], [0], [0], [0, 0, 1, 0], [], []>} : vector<16x4xf32>, vector<16x4xf32>, vector<16x16xf32> -> vector<16x16xf32>
    %cst_56 = arith.constant 5.000000e-01 : f32
    %68 = vector.broadcast %cst_56 : f32 to vector<16x16xf32>
    %69 = arith.mulf %67, %68 : vector<16x16xf32>
    %cst_57 = arith.constant dense<0xFF800000> : vector<16xf32>
    %70 = vector.multi_reduction <maximumf>, %69, %cst_57 [1] : vector<16x16xf32> to vector<16xf32>
    %71 = vector.shape_cast %70 : vector<16xf32> to vector<16x1xf32>
    %72 = vector.broadcast %71 : vector<16x1xf32> to vector<16x16xf32>
    %73 = arith.subf %69, %72 : vector<16x16xf32>
    %74 = math.exp %73 : vector<16x16xf32>
    %cst_58 = arith.constant dense<0.000000e+00> : vector<16xf32>
    %75 = vector.multi_reduction <add>, %74, %cst_58 [1] : vector<16x16xf32> to vector<16xf32>
    %76 = vector.shape_cast %75 : vector<16xf32> to vector<16x1xf32>
    %77 = tpu.reciprocal %76 {approx = true} : vector<16x1xf32> -> vector<16x1xf32>
    %78 = vector.broadcast %77 : vector<16x1xf32> to vector<16x16xf32>
    %79 = arith.mulf %74, %78 : vector<16x16xf32>
    %cst_59 = arith.constant dense<0.000000e+00> : vector<16x4xf32>
    %80 = tpu.matmul %79, %66, %cst_59 {dimension_numbers = #tpu.dot_dimension_numbers<[1], [0], [0], [1], [0, 0, 1, 1], [], []>} : vector<16x16xf32>, vector<16x4xf32>, vector<16x4xf32> -> vector<16x4xf32>
    %81 = vector.extract_strided_slice %27 {offsets = [0, 12], sizes = [16, 4], strides = [1, 1]} : vector<16x32xf32> to vector<16x4xf32>
    %82 = vector.extract_strided_slice %28 {offsets = [0, 12], sizes = [16, 4], strides = [1, 1]} : vector<16x32xf32> to vector<16x4xf32>
    %83 = vector.extract_strided_slice %29 {offsets = [0, 12], sizes = [16, 4], strides = [1, 1]} : vector<16x32xf32> to vector<16x4xf32>
    %cst_60 = arith.constant dense<0.000000e+00> : vector<16x16xf32>
    %84 = tpu.matmul %81, %82, %cst_60 {dimension_numbers = #tpu.dot_dimension_numbers<[1], [1], [0], [0], [0, 0, 1, 0], [], []>} : vector<16x4xf32>, vector<16x4xf32>, vector<16x16xf32> -> vector<16x16xf32>
    %cst_61 = arith.constant 5.000000e-01 : f32
    %85 = vector.broadcast %cst_61 : f32 to vector<16x16xf32>
    %86 = arith.mulf %84, %85 : vector<16x16xf32>
    %cst_62 = arith.constant dense<0xFF800000> : vector<16xf32>
    %87 = vector.multi_reduction <maximumf>, %86, %cst_62 [1] : vector<16x16xf32> to vector<16xf32>
    %88 = vector.shape_cast %87 : vector<16xf32> to vector<16x1xf32>
    %89 = vector.broadcast %88 : vector<16x1xf32> to vector<16x16xf32>
    %90 = arith.subf %86, %89 : vector<16x16xf32>
    %91 = math.exp %90 : vector<16x16xf32>
    %cst_63 = arith.constant dense<0.000000e+00> : vector<16xf32>
    %92 = vector.multi_reduction <add>, %91, %cst_63 [1] : vector<16x16xf32> to vector<16xf32>
    %93 = vector.shape_cast %92 : vector<16xf32> to vector<16x1xf32>
    %94 = tpu.reciprocal %93 {approx = true} : vector<16x1xf32> -> vector<16x1xf32>
    %95 = vector.broadcast %94 : vector<16x1xf32> to vector<16x16xf32>
    %96 = arith.mulf %91, %95 : vector<16x16xf32>
    %cst_64 = arith.constant dense<0.000000e+00> : vector<16x4xf32>
    %97 = tpu.matmul %96, %83, %cst_64 {dimension_numbers = #tpu.dot_dimension_numbers<[1], [0], [0], [1], [0, 0, 1, 1], [], []>} : vector<16x16xf32>, vector<16x4xf32>, vector<16x4xf32> -> vector<16x4xf32>
    %98 = vector.extract_strided_slice %27 {offsets = [0, 16], sizes = [16, 4], strides = [1, 1]} : vector<16x32xf32> to vector<16x4xf32>
    %99 = vector.extract_strided_slice %28 {offsets = [0, 16], sizes = [16, 4], strides = [1, 1]} : vector<16x32xf32> to vector<16x4xf32>
    %100 = vector.extract_strided_slice %29 {offsets = [0, 16], sizes = [16, 4], strides = [1, 1]} : vector<16x32xf32> to vector<16x4xf32>
    %cst_65 = arith.constant dense<0.000000e+00> : vector<16x16xf32>
    %101 = tpu.matmul %98, %99, %cst_65 {dimension_numbers = #tpu.dot_dimension_numbers<[1], [1], [0], [0], [0, 0, 1, 0], [], []>} : vector<16x4xf32>, vector<16x4xf32>, vector<16x16xf32> -> vector<16x16xf32>
    %cst_66 = arith.constant 5.000000e-01 : f32
    %102 = vector.broadcast %cst_66 : f32 to vector<16x16xf32>
    %103 = arith.mulf %101, %102 : vector<16x16xf32>
    %cst_67 = arith.constant dense<0xFF800000> : vector<16xf32>
    %104 = vector.multi_reduction <maximumf>, %103, %cst_67 [1] : vector<16x16xf32> to vector<16xf32>
    %105 = vector.shape_cast %104 : vector<16xf32> to vector<16x1xf32>
    %106 = vector.broadcast %105 : vector<16x1xf32> to vector<16x16xf32>
    %107 = arith.subf %103, %106 : vector<16x16xf32>
    %108 = math.exp %107 : vector<16x16xf32>
    %cst_68 = arith.constant dense<0.000000e+00> : vector<16xf32>
    %109 = vector.multi_reduction <add>, %108, %cst_68 [1] : vector<16x16xf32> to vector<16xf32>
    %110 = vector.shape_cast %109 : vector<16xf32> to vector<16x1xf32>
    %111 = tpu.reciprocal %110 {approx = true} : vector<16x1xf32> -> vector<16x1xf32>
    %112 = vector.broadcast %111 : vector<16x1xf32> to vector<16x16xf32>
    %113 = arith.mulf %108, %112 : vector<16x16xf32>
    %cst_69 = arith.constant dense<0.000000e+00> : vector<16x4xf32>
    %114 = tpu.matmul %113, %100, %cst_69 {dimension_numbers = #tpu.dot_dimension_numbers<[1], [0], [0], [1], [0, 0, 1, 1], [], []>} : vector<16x16xf32>, vector<16x4xf32>, vector<16x4xf32> -> vector<16x4xf32>
    %115 = vector.extract_strided_slice %27 {offsets = [0, 20], sizes = [16, 4], strides = [1, 1]} : vector<16x32xf32> to vector<16x4xf32>
    %116 = vector.extract_strided_slice %28 {offsets = [0, 20], sizes = [16, 4], strides = [1, 1]} : vector<16x32xf32> to vector<16x4xf32>
    %117 = vector.extract_strided_slice %29 {offsets = [0, 20], sizes = [16, 4], strides = [1, 1]} : vector<16x32xf32> to vector<16x4xf32>
    %cst_70 = arith.constant dense<0.000000e+00> : vector<16x16xf32>
    %118 = tpu.matmul %115, %116, %cst_70 {dimension_numbers = #tpu.dot_dimension_numbers<[1], [1], [0], [0], [0, 0, 1, 0], [], []>} : vector<16x4xf32>, vector<16x4xf32>, vector<16x16xf32> -> vector<16x16xf32>
    %cst_71 = arith.constant 5.000000e-01 : f32
    %119 = vector.broadcast %cst_71 : f32 to vector<16x16xf32>
    %120 = arith.mulf %118, %119 : vector<16x16xf32>
    %cst_72 = arith.constant dense<0xFF800000> : vector<16xf32>
    %121 = vector.multi_reduction <maximumf>, %120, %cst_72 [1] : vector<16x16xf32> to vector<16xf32>
    %122 = vector.shape_cast %121 : vector<16xf32> to vector<16x1xf32>
    %123 = vector.broadcast %122 : vector<16x1xf32> to vector<16x16xf32>
    %124 = arith.subf %120, %123 : vector<16x16xf32>
    %125 = math.exp %124 : vector<16x16xf32>
    %cst_73 = arith.constant dense<0.000000e+00> : vector<16xf32>
    %126 = vector.multi_reduction <add>, %125, %cst_73 [1] : vector<16x16xf32> to vector<16xf32>
    %127 = vector.shape_cast %126 : vector<16xf32> to vector<16x1xf32>
    %128 = tpu.reciprocal %127 {approx = true} : vector<16x1xf32> -> vector<16x1xf32>
    %129 = vector.broadcast %128 : vector<16x1xf32> to vector<16x16xf32>
    %130 = arith.mulf %125, %129 : vector<16x16xf32>
    %cst_74 = arith.constant dense<0.000000e+00> : vector<16x4xf32>
    %131 = tpu.matmul %130, %117, %cst_74 {dimension_numbers = #tpu.dot_dimension_numbers<[1], [0], [0], [1], [0, 0, 1, 1], [], []>} : vector<16x16xf32>, vector<16x4xf32>, vector<16x4xf32> -> vector<16x4xf32>
    %132 = vector.extract_strided_slice %27 {offsets = [0, 24], sizes = [16, 4], strides = [1, 1]} : vector<16x32xf32> to vector<16x4xf32>
    %133 = vector.extract_strided_slice %28 {offsets = [0, 24], sizes = [16, 4], strides = [1, 1]} : vector<16x32xf32> to vector<16x4xf32>
    %134 = vector.extract_strided_slice %29 {offsets = [0, 24], sizes = [16, 4], strides = [1, 1]} : vector<16x32xf32> to vector<16x4xf32>
    %cst_75 = arith.constant dense<0.000000e+00> : vector<16x16xf32>
    %135 = tpu.matmul %132, %133, %cst_75 {dimension_numbers = #tpu.dot_dimension_numbers<[1], [1], [0], [0], [0, 0, 1, 0], [], []>} : vector<16x4xf32>, vector<16x4xf32>, vector<16x16xf32> -> vector<16x16xf32>
    %cst_76 = arith.constant 5.000000e-01 : f32
    %136 = vector.broadcast %cst_76 : f32 to vector<16x16xf32>
    %137 = arith.mulf %135, %136 : vector<16x16xf32>
    %cst_77 = arith.constant dense<0xFF800000> : vector<16xf32>
    %138 = vector.multi_reduction <maximumf>, %137, %cst_77 [1] : vector<16x16xf32> to vector<16xf32>
    %139 = vector.shape_cast %138 : vector<16xf32> to vector<16x1xf32>
    %140 = vector.broadcast %139 : vector<16x1xf32> to vector<16x16xf32>
    %141 = arith.subf %137, %140 : vector<16x16xf32>
    %142 = math.exp %141 : vector<16x16xf32>
    %cst_78 = arith.constant dense<0.000000e+00> : vector<16xf32>
    %143 = vector.multi_reduction <add>, %142, %cst_78 [1] : vector<16x16xf32> to vector<16xf32>
    %144 = vector.shape_cast %143 : vector<16xf32> to vector<16x1xf32>
    %145 = tpu.reciprocal %144 {approx = true} : vector<16x1xf32> -> vector<16x1xf32>
    %146 = vector.broadcast %145 : vector<16x1xf32> to vector<16x16xf32>
    %147 = arith.mulf %142, %146 : vector<16x16xf32>
    %cst_79 = arith.constant dense<0.000000e+00> : vector<16x4xf32>
    %148 = tpu.matmul %147, %134, %cst_79 {dimension_numbers = #tpu.dot_dimension_numbers<[1], [0], [0], [1], [0, 0, 1, 1], [], []>} : vector<16x16xf32>, vector<16x4xf32>, vector<16x4xf32> -> vector<16x4xf32>
    %149 = vector.extract_strided_slice %27 {offsets = [0, 28], sizes = [16, 4], strides = [1, 1]} : vector<16x32xf32> to vector<16x4xf32>
    %150 = vector.extract_strided_slice %28 {offsets = [0, 28], sizes = [16, 4], strides = [1, 1]} : vector<16x32xf32> to vector<16x4xf32>
    %151 = vector.extract_strided_slice %29 {offsets = [0, 28], sizes = [16, 4], strides = [1, 1]} : vector<16x32xf32> to vector<16x4xf32>
    %cst_80 = arith.constant dense<0.000000e+00> : vector<16x16xf32>
    %152 = tpu.matmul %149, %150, %cst_80 {dimension_numbers = #tpu.dot_dimension_numbers<[1], [1], [0], [0], [0, 0, 1, 0], [], []>} : vector<16x4xf32>, vector<16x4xf32>, vector<16x16xf32> -> vector<16x16xf32>
    %cst_81 = arith.constant 5.000000e-01 : f32
    %153 = vector.broadcast %cst_81 : f32 to vector<16x16xf32>
    %154 = arith.mulf %152, %153 : vector<16x16xf32>
    %cst_82 = arith.constant dense<0xFF800000> : vector<16xf32>
    %155 = vector.multi_reduction <maximumf>, %154, %cst_82 [1] : vector<16x16xf32> to vector<16xf32>
    %156 = vector.shape_cast %155 : vector<16xf32> to vector<16x1xf32>
    %157 = vector.broadcast %156 : vector<16x1xf32> to vector<16x16xf32>
    %158 = arith.subf %154, %157 : vector<16x16xf32>
    %159 = math.exp %158 : vector<16x16xf32>
    %cst_83 = arith.constant dense<0.000000e+00> : vector<16xf32>
    %160 = vector.multi_reduction <add>, %159, %cst_83 [1] : vector<16x16xf32> to vector<16xf32>
    %161 = vector.shape_cast %160 : vector<16xf32> to vector<16x1xf32>
    %162 = tpu.reciprocal %161 {approx = true} : vector<16x1xf32> -> vector<16x1xf32>
    %163 = vector.broadcast %162 : vector<16x1xf32> to vector<16x16xf32>
    %164 = arith.mulf %159, %163 : vector<16x16xf32>
    %cst_84 = arith.constant dense<0.000000e+00> : vector<16x4xf32>
    %165 = tpu.matmul %164, %151, %cst_84 {dimension_numbers = #tpu.dot_dimension_numbers<[1], [0], [0], [1], [0, 0, 1, 1], [], []>} : vector<16x16xf32>, vector<16x4xf32>, vector<16x4xf32> -> vector<16x4xf32>
    %166 = tpu.concatenate %46, %63, %80, %97, %114, %131, %148, %165 in 1 : vector<16x4xf32>, vector<16x4xf32>, vector<16x4xf32>, vector<16x4xf32>, vector<16x4xf32>, vector<16x4xf32>, vector<16x4xf32>, vector<16x4xf32> -> vector<16x32xf32>
    %cst_85 = arith.constant dense<0.000000e+00> : vector<16x32xf32>
    %167 = tpu.matmul %166, %6, %cst_85 {dimension_numbers = #tpu.dot_dimension_numbers<[1], [0], [0], [1], [0, 0, 1, 1], [], []>} : vector<16x32xf32>, vector<32x32xf32>, vector<16x32xf32> -> vector<16x32xf32>
    %168 = vector.broadcast %7 : vector<1x32xf32> to vector<16x32xf32>
    %169 = arith.addf %167, %168 : vector<16x32xf32>
    %170 = arith.addf %1, %169 : vector<16x32xf32>
    %cst_86 = arith.constant dense<0.000000e+00> : vector<16xf32>
    %171 = vector.multi_reduction <add>, %170, %cst_86 [1] : vector<16x32xf32> to vector<16xf32>
    %172 = vector.shape_cast %171 : vector<16xf32> to vector<16x1xf32>
    %cst_87 = arith.constant 3.200000e+01 : f32
    %173 = vector.broadcast %cst_87 : f32 to vector<16x1xf32>
    %174 = arith.divf %172, %173 : vector<16x1xf32>
    %175 = vector.broadcast %174 : vector<16x1xf32> to vector<16x32xf32>
    %176 = arith.subf %170, %175 : vector<16x32xf32>
    %177 = arith.mulf %176, %176 : vector<16x32xf32>
    %cst_88 = arith.constant dense<0.000000e+00> : vector<16xf32>
    %178 = vector.multi_reduction <add>, %177, %cst_88 [1] : vector<16x32xf32> to vector<16xf32>
    %179 = vector.shape_cast %178 : vector<16xf32> to vector<16x1xf32>
    %cst_89 = arith.constant 3.200000e+01 : f32
    %180 = vector.broadcast %cst_89 : f32 to vector<16x1xf32>
    %181 = arith.divf %179, %180 : vector<16x1xf32>
    %cst_90 = arith.constant 9.99999974E-6 : f32
    %182 = vector.broadcast %cst_90 : f32 to vector<16x1xf32>
    %183 = arith.addf %181, %182 : vector<16x1xf32>
    %184 = math.rsqrt %183 : vector<16x1xf32>
    %185 = vector.broadcast %184 : vector<16x1xf32> to vector<16x32xf32>
    %186 = arith.mulf %176, %185 : vector<16x32xf32>
    %187 = vector.broadcast %8 : vector<1x32xf32> to vector<16x32xf32>
    %188 = arith.mulf %186, %187 : vector<16x32xf32>
    %189 = vector.broadcast %9 : vector<1x32xf32> to vector<16x32xf32>
    %190 = arith.addf %188, %189 : vector<16x32xf32>
    %cst_91 = arith.constant dense<0.000000e+00> : vector<16x32xf32>
    %191 = tpu.matmul %190, %10, %cst_91 {dimension_numbers = #tpu.dot_dimension_numbers<[1], [0], [0], [1], [0, 0, 1, 1], [], []>} : vector<16x32xf32>, vector<32x32xf32>, vector<16x32xf32> -> vector<16x32xf32>
    %192 = vector.broadcast %11 : vector<1x32xf32> to vector<16x32xf32>
    %193 = arith.addf %191, %192 : vector<16x32xf32>
    %cst_92 = arith.constant dense<0.000000e+00> : vector<8x64xf32>
    %194 = tpu.matmul %3, %12, %cst_92 {dimension_numbers = #tpu.dot_dimension_numbers<[1], [0], [0], [1], [0, 0, 1, 1], [], []>} : vector<8x32xf32>, vector<32x64xf32>, vector<8x64xf32> -> vector<8x64xf32>
    %195 = vector.broadcast %13 : vector<1x64xf32> to vector<8x64xf32>
    %196 = arith.addf %194, %195 : vector<8x64xf32>
    %197 = vector.extract_strided_slice %196 {offsets = [0, 0], sizes = [8, 32], strides = [1, 1]} : vector<8x64xf32> to vector<8x32xf32>
    %198 = vector.extract_strided_slice %196 {offsets = [0, 32], sizes = [8, 32], strides = [1, 1]} : vector<8x64xf32> to vector<8x32xf32>
    %199 = vector.extract_strided_slice %193 {offsets = [0, 0], sizes = [16, 4], strides = [1, 1]} : vector<16x32xf32> to vector<16x4xf32>
    %200 = vector.extract_strided_slice %197 {offsets = [0, 0], sizes = [8, 4], strides = [1, 1]} : vector<8x32xf32> to vector<8x4xf32>
    %201 = vector.extract_strided_slice %198 {offsets = [0, 0], sizes = [8, 4], strides = [1, 1]} : vector<8x32xf32> to vector<8x4xf32>
    %cst_93 = arith.constant dense<0.000000e+00> : vector<16x8xf32>
    %202 = tpu.matmul %199, %200, %cst_93 {dimension_numbers = #tpu.dot_dimension_numbers<[1], [1], [0], [0], [0, 0, 1, 0], [], []>} : vector<16x4xf32>, vector<8x4xf32>, vector<16x8xf32> -> vector<16x8xf32>
    %cst_94 = arith.constant 5.000000e-01 : f32
    %203 = vector.broadcast %cst_94 : f32 to vector<16x8xf32>
    %204 = arith.mulf %202, %203 : vector<16x8xf32>
    %cst_95 = arith.constant dense<0xFF800000> : vector<16xf32>
    %205 = vector.multi_reduction <maximumf>, %204, %cst_95 [1] : vector<16x8xf32> to vector<16xf32>
    %206 = vector.shape_cast %205 : vector<16xf32> to vector<16x1xf32>
    %207 = vector.broadcast %206 : vector<16x1xf32> to vector<16x8xf32>
    %208 = arith.subf %204, %207 : vector<16x8xf32>
    %209 = math.exp %208 : vector<16x8xf32>
    %cst_96 = arith.constant dense<0.000000e+00> : vector<16xf32>
    %210 = vector.multi_reduction <add>, %209, %cst_96 [1] : vector<16x8xf32> to vector<16xf32>
    %211 = vector.shape_cast %210 : vector<16xf32> to vector<16x1xf32>
    %212 = tpu.reciprocal %211 {approx = true} : vector<16x1xf32> -> vector<16x1xf32>
    %213 = vector.broadcast %212 : vector<16x1xf32> to vector<16x8xf32>
    %214 = arith.mulf %209, %213 : vector<16x8xf32>
    %cst_97 = arith.constant dense<0.000000e+00> : vector<16x4xf32>
    %215 = tpu.matmul %214, %201, %cst_97 {dimension_numbers = #tpu.dot_dimension_numbers<[1], [0], [0], [1], [0, 0, 1, 1], [], []>} : vector<16x8xf32>, vector<8x4xf32>, vector<16x4xf32> -> vector<16x4xf32>
    %216 = vector.extract_strided_slice %193 {offsets = [0, 4], sizes = [16, 4], strides = [1, 1]} : vector<16x32xf32> to vector<16x4xf32>
    %217 = vector.extract_strided_slice %197 {offsets = [0, 4], sizes = [8, 4], strides = [1, 1]} : vector<8x32xf32> to vector<8x4xf32>
    %218 = vector.extract_strided_slice %198 {offsets = [0, 4], sizes = [8, 4], strides = [1, 1]} : vector<8x32xf32> to vector<8x4xf32>
    %cst_98 = arith.constant dense<0.000000e+00> : vector<16x8xf32>
    %219 = tpu.matmul %216, %217, %cst_98 {dimension_numbers = #tpu.dot_dimension_numbers<[1], [1], [0], [0], [0, 0, 1, 0], [], []>} : vector<16x4xf32>, vector<8x4xf32>, vector<16x8xf32> -> vector<16x8xf32>
    %cst_99 = arith.constant 5.000000e-01 : f32
    %220 = vector.broadcast %cst_99 : f32 to vector<16x8xf32>
    %221 = arith.mulf %219, %220 : vector<16x8xf32>
    %cst_100 = arith.constant dense<0xFF800000> : vector<16xf32>
    %222 = vector.multi_reduction <maximumf>, %221, %cst_100 [1] : vector<16x8xf32> to vector<16xf32>
    %223 = vector.shape_cast %222 : vector<16xf32> to vector<16x1xf32>
    %224 = vector.broadcast %223 : vector<16x1xf32> to vector<16x8xf32>
    %225 = arith.subf %221, %224 : vector<16x8xf32>
    %226 = math.exp %225 : vector<16x8xf32>
    %cst_101 = arith.constant dense<0.000000e+00> : vector<16xf32>
    %227 = vector.multi_reduction <add>, %226, %cst_101 [1] : vector<16x8xf32> to vector<16xf32>
    %228 = vector.shape_cast %227 : vector<16xf32> to vector<16x1xf32>
    %229 = tpu.reciprocal %228 {approx = true} : vector<16x1xf32> -> vector<16x1xf32>
    %230 = vector.broadcast %229 : vector<16x1xf32> to vector<16x8xf32>
    %231 = arith.mulf %226, %230 : vector<16x8xf32>
    %cst_102 = arith.constant dense<0.000000e+00> : vector<16x4xf32>
    %232 = tpu.matmul %231, %218, %cst_102 {dimension_numbers = #tpu.dot_dimension_numbers<[1], [0], [0], [1], [0, 0, 1, 1], [], []>} : vector<16x8xf32>, vector<8x4xf32>, vector<16x4xf32> -> vector<16x4xf32>
    %233 = vector.extract_strided_slice %193 {offsets = [0, 8], sizes = [16, 4], strides = [1, 1]} : vector<16x32xf32> to vector<16x4xf32>
    %234 = vector.extract_strided_slice %197 {offsets = [0, 8], sizes = [8, 4], strides = [1, 1]} : vector<8x32xf32> to vector<8x4xf32>
    %235 = vector.extract_strided_slice %198 {offsets = [0, 8], sizes = [8, 4], strides = [1, 1]} : vector<8x32xf32> to vector<8x4xf32>
    %cst_103 = arith.constant dense<0.000000e+00> : vector<16x8xf32>
    %236 = tpu.matmul %233, %234, %cst_103 {dimension_numbers = #tpu.dot_dimension_numbers<[1], [1], [0], [0], [0, 0, 1, 0], [], []>} : vector<16x4xf32>, vector<8x4xf32>, vector<16x8xf32> -> vector<16x8xf32>
    %cst_104 = arith.constant 5.000000e-01 : f32
    %237 = vector.broadcast %cst_104 : f32 to vector<16x8xf32>
    %238 = arith.mulf %236, %237 : vector<16x8xf32>
    %cst_105 = arith.constant dense<0xFF800000> : vector<16xf32>
    %239 = vector.multi_reduction <maximumf>, %238, %cst_105 [1] : vector<16x8xf32> to vector<16xf32>
    %240 = vector.shape_cast %239 : vector<16xf32> to vector<16x1xf32>
    %241 = vector.broadcast %240 : vector<16x1xf32> to vector<16x8xf32>
    %242 = arith.subf %238, %241 : vector<16x8xf32>
    %243 = math.exp %242 : vector<16x8xf32>
    %cst_106 = arith.constant dense<0.000000e+00> : vector<16xf32>
    %244 = vector.multi_reduction <add>, %243, %cst_106 [1] : vector<16x8xf32> to vector<16xf32>
    %245 = vector.shape_cast %244 : vector<16xf32> to vector<16x1xf32>
    %246 = tpu.reciprocal %245 {approx = true} : vector<16x1xf32> -> vector<16x1xf32>
    %247 = vector.broadcast %246 : vector<16x1xf32> to vector<16x8xf32>
    %248 = arith.mulf %243, %247 : vector<16x8xf32>
    %cst_107 = arith.constant dense<0.000000e+00> : vector<16x4xf32>
    %249 = tpu.matmul %248, %235, %cst_107 {dimension_numbers = #tpu.dot_dimension_numbers<[1], [0], [0], [1], [0, 0, 1, 1], [], []>} : vector<16x8xf32>, vector<8x4xf32>, vector<16x4xf32> -> vector<16x4xf32>
    %250 = vector.extract_strided_slice %193 {offsets = [0, 12], sizes = [16, 4], strides = [1, 1]} : vector<16x32xf32> to vector<16x4xf32>
    %251 = vector.extract_strided_slice %197 {offsets = [0, 12], sizes = [8, 4], strides = [1, 1]} : vector<8x32xf32> to vector<8x4xf32>
    %252 = vector.extract_strided_slice %198 {offsets = [0, 12], sizes = [8, 4], strides = [1, 1]} : vector<8x32xf32> to vector<8x4xf32>
    %cst_108 = arith.constant dense<0.000000e+00> : vector<16x8xf32>
    %253 = tpu.matmul %250, %251, %cst_108 {dimension_numbers = #tpu.dot_dimension_numbers<[1], [1], [0], [0], [0, 0, 1, 0], [], []>} : vector<16x4xf32>, vector<8x4xf32>, vector<16x8xf32> -> vector<16x8xf32>
    %cst_109 = arith.constant 5.000000e-01 : f32
    %254 = vector.broadcast %cst_109 : f32 to vector<16x8xf32>
    %255 = arith.mulf %253, %254 : vector<16x8xf32>
    %cst_110 = arith.constant dense<0xFF800000> : vector<16xf32>
    %256 = vector.multi_reduction <maximumf>, %255, %cst_110 [1] : vector<16x8xf32> to vector<16xf32>
    %257 = vector.shape_cast %256 : vector<16xf32> to vector<16x1xf32>
    %258 = vector.broadcast %257 : vector<16x1xf32> to vector<16x8xf32>
    %259 = arith.subf %255, %258 : vector<16x8xf32>
    %260 = math.exp %259 : vector<16x8xf32>
    %cst_111 = arith.constant dense<0.000000e+00> : vector<16xf32>
    %261 = vector.multi_reduction <add>, %260, %cst_111 [1] : vector<16x8xf32> to vector<16xf32>
    %262 = vector.shape_cast %261 : vector<16xf32> to vector<16x1xf32>
    %263 = tpu.reciprocal %262 {approx = true} : vector<16x1xf32> -> vector<16x1xf32>
    %264 = vector.broadcast %263 : vector<16x1xf32> to vector<16x8xf32>
    %265 = arith.mulf %260, %264 : vector<16x8xf32>
    %cst_112 = arith.constant dense<0.000000e+00> : vector<16x4xf32>
    %266 = tpu.matmul %265, %252, %cst_112 {dimension_numbers = #tpu.dot_dimension_numbers<[1], [0], [0], [1], [0, 0, 1, 1], [], []>} : vector<16x8xf32>, vector<8x4xf32>, vector<16x4xf32> -> vector<16x4xf32>
    %267 = vector.extract_strided_slice %193 {offsets = [0, 16], sizes = [16, 4], strides = [1, 1]} : vector<16x32xf32> to vector<16x4xf32>
    %268 = vector.extract_strided_slice %197 {offsets = [0, 16], sizes = [8, 4], strides = [1, 1]} : vector<8x32xf32> to vector<8x4xf32>
    %269 = vector.extract_strided_slice %198 {offsets = [0, 16], sizes = [8, 4], strides = [1, 1]} : vector<8x32xf32> to vector<8x4xf32>
    %cst_113 = arith.constant dense<0.000000e+00> : vector<16x8xf32>
    %270 = tpu.matmul %267, %268, %cst_113 {dimension_numbers = #tpu.dot_dimension_numbers<[1], [1], [0], [0], [0, 0, 1, 0], [], []>} : vector<16x4xf32>, vector<8x4xf32>, vector<16x8xf32> -> vector<16x8xf32>
    %cst_114 = arith.constant 5.000000e-01 : f32
    %271 = vector.broadcast %cst_114 : f32 to vector<16x8xf32>
    %272 = arith.mulf %270, %271 : vector<16x8xf32>
    %cst_115 = arith.constant dense<0xFF800000> : vector<16xf32>
    %273 = vector.multi_reduction <maximumf>, %272, %cst_115 [1] : vector<16x8xf32> to vector<16xf32>
    %274 = vector.shape_cast %273 : vector<16xf32> to vector<16x1xf32>
    %275 = vector.broadcast %274 : vector<16x1xf32> to vector<16x8xf32>
    %276 = arith.subf %272, %275 : vector<16x8xf32>
    %277 = math.exp %276 : vector<16x8xf32>
    %cst_116 = arith.constant dense<0.000000e+00> : vector<16xf32>
    %278 = vector.multi_reduction <add>, %277, %cst_116 [1] : vector<16x8xf32> to vector<16xf32>
    %279 = vector.shape_cast %278 : vector<16xf32> to vector<16x1xf32>
    %280 = tpu.reciprocal %279 {approx = true} : vector<16x1xf32> -> vector<16x1xf32>
    %281 = vector.broadcast %280 : vector<16x1xf32> to vector<16x8xf32>
    %282 = arith.mulf %277, %281 : vector<16x8xf32>
    %cst_117 = arith.constant dense<0.000000e+00> : vector<16x4xf32>
    %283 = tpu.matmul %282, %269, %cst_117 {dimension_numbers = #tpu.dot_dimension_numbers<[1], [0], [0], [1], [0, 0, 1, 1], [], []>} : vector<16x8xf32>, vector<8x4xf32>, vector<16x4xf32> -> vector<16x4xf32>
    %284 = vector.extract_strided_slice %193 {offsets = [0, 20], sizes = [16, 4], strides = [1, 1]} : vector<16x32xf32> to vector<16x4xf32>
    %285 = vector.extract_strided_slice %197 {offsets = [0, 20], sizes = [8, 4], strides = [1, 1]} : vector<8x32xf32> to vector<8x4xf32>
    %286 = vector.extract_strided_slice %198 {offsets = [0, 20], sizes = [8, 4], strides = [1, 1]} : vector<8x32xf32> to vector<8x4xf32>
    %cst_118 = arith.constant dense<0.000000e+00> : vector<16x8xf32>
    %287 = tpu.matmul %284, %285, %cst_118 {dimension_numbers = #tpu.dot_dimension_numbers<[1], [1], [0], [0], [0, 0, 1, 0], [], []>} : vector<16x4xf32>, vector<8x4xf32>, vector<16x8xf32> -> vector<16x8xf32>
    %cst_119 = arith.constant 5.000000e-01 : f32
    %288 = vector.broadcast %cst_119 : f32 to vector<16x8xf32>
    %289 = arith.mulf %287, %288 : vector<16x8xf32>
    %cst_120 = arith.constant dense<0xFF800000> : vector<16xf32>
    %290 = vector.multi_reduction <maximumf>, %289, %cst_120 [1] : vector<16x8xf32> to vector<16xf32>
    %291 = vector.shape_cast %290 : vector<16xf32> to vector<16x1xf32>
    %292 = vector.broadcast %291 : vector<16x1xf32> to vector<16x8xf32>
    %293 = arith.subf %289, %292 : vector<16x8xf32>
    %294 = math.exp %293 : vector<16x8xf32>
    %cst_121 = arith.constant dense<0.000000e+00> : vector<16xf32>
    %295 = vector.multi_reduction <add>, %294, %cst_121 [1] : vector<16x8xf32> to vector<16xf32>
    %296 = vector.shape_cast %295 : vector<16xf32> to vector<16x1xf32>
    %297 = tpu.reciprocal %296 {approx = true} : vector<16x1xf32> -> vector<16x1xf32>
    %298 = vector.broadcast %297 : vector<16x1xf32> to vector<16x8xf32>
    %299 = arith.mulf %294, %298 : vector<16x8xf32>
    %cst_122 = arith.constant dense<0.000000e+00> : vector<16x4xf32>
    %300 = tpu.matmul %299, %286, %cst_122 {dimension_numbers = #tpu.dot_dimension_numbers<[1], [0], [0], [1], [0, 0, 1, 1], [], []>} : vector<16x8xf32>, vector<8x4xf32>, vector<16x4xf32> -> vector<16x4xf32>
    %301 = vector.extract_strided_slice %193 {offsets = [0, 24], sizes = [16, 4], strides = [1, 1]} : vector<16x32xf32> to vector<16x4xf32>
    %302 = vector.extract_strided_slice %197 {offsets = [0, 24], sizes = [8, 4], strides = [1, 1]} : vector<8x32xf32> to vector<8x4xf32>
    %303 = vector.extract_strided_slice %198 {offsets = [0, 24], sizes = [8, 4], strides = [1, 1]} : vector<8x32xf32> to vector<8x4xf32>
    %cst_123 = arith.constant dense<0.000000e+00> : vector<16x8xf32>
    %304 = tpu.matmul %301, %302, %cst_123 {dimension_numbers = #tpu.dot_dimension_numbers<[1], [1], [0], [0], [0, 0, 1, 0], [], []>} : vector<16x4xf32>, vector<8x4xf32>, vector<16x8xf32> -> vector<16x8xf32>
    %cst_124 = arith.constant 5.000000e-01 : f32
    %305 = vector.broadcast %cst_124 : f32 to vector<16x8xf32>
    %306 = arith.mulf %304, %305 : vector<16x8xf32>
    %cst_125 = arith.constant dense<0xFF800000> : vector<16xf32>
    %307 = vector.multi_reduction <maximumf>, %306, %cst_125 [1] : vector<16x8xf32> to vector<16xf32>
    %308 = vector.shape_cast %307 : vector<16xf32> to vector<16x1xf32>
    %309 = vector.broadcast %308 : vector<16x1xf32> to vector<16x8xf32>
    %310 = arith.subf %306, %309 : vector<16x8xf32>
    %311 = math.exp %310 : vector<16x8xf32>
    %cst_126 = arith.constant dense<0.000000e+00> : vector<16xf32>
    %312 = vector.multi_reduction <add>, %311, %cst_126 [1] : vector<16x8xf32> to vector<16xf32>
    %313 = vector.shape_cast %312 : vector<16xf32> to vector<16x1xf32>
    %314 = tpu.reciprocal %313 {approx = true} : vector<16x1xf32> -> vector<16x1xf32>
    %315 = vector.broadcast %314 : vector<16x1xf32> to vector<16x8xf32>
    %316 = arith.mulf %311, %315 : vector<16x8xf32>
    %cst_127 = arith.constant dense<0.000000e+00> : vector<16x4xf32>
    %317 = tpu.matmul %316, %303, %cst_127 {dimension_numbers = #tpu.dot_dimension_numbers<[1], [0], [0], [1], [0, 0, 1, 1], [], []>} : vector<16x8xf32>, vector<8x4xf32>, vector<16x4xf32> -> vector<16x4xf32>
    %318 = vector.extract_strided_slice %193 {offsets = [0, 28], sizes = [16, 4], strides = [1, 1]} : vector<16x32xf32> to vector<16x4xf32>
    %319 = vector.extract_strided_slice %197 {offsets = [0, 28], sizes = [8, 4], strides = [1, 1]} : vector<8x32xf32> to vector<8x4xf32>
    %320 = vector.extract_strided_slice %198 {offsets = [0, 28], sizes = [8, 4], strides = [1, 1]} : vector<8x32xf32> to vector<8x4xf32>
    %cst_128 = arith.constant dense<0.000000e+00> : vector<16x8xf32>
    %321 = tpu.matmul %318, %319, %cst_128 {dimension_numbers = #tpu.dot_dimension_numbers<[1], [1], [0], [0], [0, 0, 1, 0], [], []>} : vector<16x4xf32>, vector<8x4xf32>, vector<16x8xf32> -> vector<16x8xf32>
    %cst_129 = arith.constant 5.000000e-01 : f32
    %322 = vector.broadcast %cst_129 : f32 to vector<16x8xf32>
    %323 = arith.mulf %321, %322 : vector<16x8xf32>
    %cst_130 = arith.constant dense<0xFF800000> : vector<16xf32>
    %324 = vector.multi_reduction <maximumf>, %323, %cst_130 [1] : vector<16x8xf32> to vector<16xf32>
    %325 = vector.shape_cast %324 : vector<16xf32> to vector<16x1xf32>
    %326 = vector.broadcast %325 : vector<16x1xf32> to vector<16x8xf32>
    %327 = arith.subf %323, %326 : vector<16x8xf32>
    %328 = math.exp %327 : vector<16x8xf32>
    %cst_131 = arith.constant dense<0.000000e+00> : vector<16xf32>
    %329 = vector.multi_reduction <add>, %328, %cst_131 [1] : vector<16x8xf32> to vector<16xf32>
    %330 = vector.shape_cast %329 : vector<16xf32> to vector<16x1xf32>
    %331 = tpu.reciprocal %330 {approx = true} : vector<16x1xf32> -> vector<16x1xf32>
    %332 = vector.broadcast %331 : vector<16x1xf32> to vector<16x8xf32>
    %333 = arith.mulf %328, %332 : vector<16x8xf32>
    %cst_132 = arith.constant dense<0.000000e+00> : vector<16x4xf32>
    %334 = tpu.matmul %333, %320, %cst_132 {dimension_numbers = #tpu.dot_dimension_numbers<[1], [0], [0], [1], [0, 0, 1, 1], [], []>} : vector<16x8xf32>, vector<8x4xf32>, vector<16x4xf32> -> vector<16x4xf32>
    %335 = tpu.concatenate %215, %232, %249, %266, %283, %300, %317, %334 in 1 : vector<16x4xf32>, vector<16x4xf32>, vector<16x4xf32>, vector<16x4xf32>, vector<16x4xf32>, vector<16x4xf32>, vector<16x4xf32>, vector<16x4xf32> -> vector<16x32xf32>
    %cst_133 = arith.constant dense<0.000000e+00> : vector<16x32xf32>
    %336 = tpu.matmul %335, %14, %cst_133 {dimension_numbers = #tpu.dot_dimension_numbers<[1], [0], [0], [1], [0, 0, 1, 1], [], []>} : vector<16x32xf32>, vector<32x32xf32>, vector<16x32xf32> -> vector<16x32xf32>
    %337 = vector.broadcast %15 : vector<1x32xf32> to vector<16x32xf32>
    %338 = arith.addf %336, %337 : vector<16x32xf32>
    %339 = arith.addf %190, %338 : vector<16x32xf32>
    %cst_134 = arith.constant dense<0.000000e+00> : vector<16xf32>
    %340 = vector.multi_reduction <add>, %339, %cst_134 [1] : vector<16x32xf32> to vector<16xf32>
    %341 = vector.shape_cast %340 : vector<16xf32> to vector<16x1xf32>
    %cst_135 = arith.constant 3.200000e+01 : f32
    %342 = vector.broadcast %cst_135 : f32 to vector<16x1xf32>
    %343 = arith.divf %341, %342 : vector<16x1xf32>
    %344 = vector.broadcast %343 : vector<16x1xf32> to vector<16x32xf32>
    %345 = arith.subf %339, %344 : vector<16x32xf32>
    %346 = arith.mulf %345, %345 : vector<16x32xf32>
    %cst_136 = arith.constant dense<0.000000e+00> : vector<16xf32>
    %347 = vector.multi_reduction <add>, %346, %cst_136 [1] : vector<16x32xf32> to vector<16xf32>
    %348 = vector.shape_cast %347 : vector<16xf32> to vector<16x1xf32>
    %cst_137 = arith.constant 3.200000e+01 : f32
    %349 = vector.broadcast %cst_137 : f32 to vector<16x1xf32>
    %350 = arith.divf %348, %349 : vector<16x1xf32>
    %cst_138 = arith.constant 9.99999974E-6 : f32
    %351 = vector.broadcast %cst_138 : f32 to vector<16x1xf32>
    %352 = arith.addf %350, %351 : vector<16x1xf32>
    %353 = math.rsqrt %352 : vector<16x1xf32>
    %354 = vector.broadcast %353 : vector<16x1xf32> to vector<16x32xf32>
    %355 = arith.mulf %345, %354 : vector<16x32xf32>
    %356 = vector.broadcast %16 : vector<1x32xf32> to vector<16x32xf32>
    %357 = arith.mulf %355, %356 : vector<16x32xf32>
    %358 = vector.broadcast %17 : vector<1x32xf32> to vector<16x32xf32>
    %359 = arith.addf %357, %358 : vector<16x32xf32>
    %cst_139 = arith.constant dense<0.000000e+00> : vector<16x64xf32>
    %360 = tpu.matmul %359, %18, %cst_139 {dimension_numbers = #tpu.dot_dimension_numbers<[1], [0], [0], [1], [0, 0, 1, 1], [], []>} : vector<16x32xf32>, vector<32x64xf32>, vector<16x64xf32> -> vector<16x64xf32>
    %361 = vector.broadcast %19 : vector<1x64xf32> to vector<16x64xf32>
    %362 = arith.addf %360, %361 : vector<16x64xf32>
    %cst_140 = arith.constant 0.000000e+00 : f32
    %363 = vector.broadcast %cst_140 : f32 to vector<16x64xf32>
    %364 = arith.maximumf %362, %363 : vector<16x64xf32>
    %cst_141 = arith.constant dense<0.000000e+00> : vector<16x32xf32>
    %365 = tpu.matmul %364, %20, %cst_141 {dimension_numbers = #tpu.dot_dimension_numbers<[1], [0], [0], [1], [0, 0, 1, 1], [], []>} : vector<16x64xf32>, vector<64x32xf32>, vector<16x32xf32> -> vector<16x32xf32>
    %366 = vector.broadcast %21 : vector<1x32xf32> to vector<16x32xf32>
    %367 = arith.addf %365, %366 : vector<16x32xf32>
    %368 = arith.addf %359, %367 : vector<16x32xf32>
    %cst_142 = arith.constant dense<0.000000e+00> : vector<16xf32>
    %369 = vector.multi_reduction <add>, %368, %cst_142 [1] : vector<16x32xf32> to vector<16xf32>
    %370 = vector.shape_cast %369 : vector<16xf32> to vector<16x1xf32>
    %cst_143 = arith.constant 3.200000e+01 : f32
    %371 = vector.broadcast %cst_143 : f32 to vector<16x1xf32>
    %372 = arith.divf %370, %371 : vector<16x1xf32>
    %373 = vector.broadcast %372 : vector<16x1xf32> to vector<16x32xf32>
    %374 = arith.subf %368, %373 : vector<16x32xf32>
    %375 = arith.mulf %374, %374 : vector<16x32xf32>
    %cst_144 = arith.constant dense<0.000000e+00> : vector<16xf32>
    %376 = vector.multi_reduction <add>, %375, %cst_144 [1] : vector<16x32xf32> to vector<16xf32>
    %377 = vector.shape_cast %376 : vector<16xf32> to vector<16x1xf32>
    %cst_145 = arith.constant 3.200000e+01 : f32
    %378 = vector.broadcast %cst_145 : f32 to vector<16x1xf32>
    %379 = arith.divf %377, %378 : vector<16x1xf32>
    %cst_146 = arith.constant 9.99999974E-6 : f32
    %380 = vector.broadcast %cst_146 : f32 to vector<16x1xf32>
    %381 = arith.addf %379, %380 : vector<16x1xf32>
    %382 = math.rsqrt %381 : vector<16x1xf32>
    %383 = vector.broadcast %382 : vector<16x1xf32> to vector<16x32xf32>
    %384 = arith.mulf %374, %383 : vector<16x32xf32>
    %385 = vector.broadcast %22 : vector<1x32xf32> to vector<16x32xf32>
    %386 = arith.mulf %384, %385 : vector<16x32xf32>
    %387 = vector.broadcast %23 : vector<1x32xf32> to vector<16x32xf32>
    %388 = arith.addf %386, %387 : vector<16x32xf32>
    %c0_147 = arith.constant 0 : index
    %c0_148 = arith.constant 0 : index
    %389 = vector.load %arg23[%c0_147, %c0_148] : memref<32x96xf32, #tpu.memory_space<vmem>>, vector<32x96xf32>
    %c0_149 = arith.constant 0 : index
    %c0_150 = arith.constant 0 : index
    %390 = vector.load %arg24[%c0_149, %c0_150] : memref<1x96xf32, #tpu.memory_space<vmem>>, vector<1x96xf32>
    %c0_151 = arith.constant 0 : index
    %c0_152 = arith.constant 0 : index
    %391 = vector.load %arg25[%c0_151, %c0_152] : memref<32x32xf32, #tpu.memory_space<vmem>>, vector<32x32xf32>
    %c0_153 = arith.constant 0 : index
    %c0_154 = arith.constant 0 : index
    %392 = vector.load %arg26[%c0_153, %c0_154] : memref<1x32xf32, #tpu.memory_space<vmem>>, vector<1x32xf32>
    %c0_155 = arith.constant 0 : index
    %c0_156 = arith.constant 0 : index
    %393 = vector.load %arg27[%c0_155, %c0_156] : memref<1x32xf32, #tpu.memory_space<vmem>>, vector<1x32xf32>
    %c0_157 = arith.constant 0 : index
    %c0_158 = arith.constant 0 : index
    %394 = vector.load %arg28[%c0_157, %c0_158] : memref<1x32xf32, #tpu.memory_space<vmem>>, vector<1x32xf32>
    %c0_159 = arith.constant 0 : index
    %c0_160 = arith.constant 0 : index
    %395 = vector.load %arg29[%c0_159, %c0_160] : memref<32x32xf32, #tpu.memory_space<vmem>>, vector<32x32xf32>
    %c0_161 = arith.constant 0 : index
    %c0_162 = arith.constant 0 : index
    %396 = vector.load %arg30[%c0_161, %c0_162] : memref<1x32xf32, #tpu.memory_space<vmem>>, vector<1x32xf32>
    %c0_163 = arith.constant 0 : index
    %c0_164 = arith.constant 0 : index
    %397 = vector.load %arg31[%c0_163, %c0_164] : memref<32x64xf32, #tpu.memory_space<vmem>>, vector<32x64xf32>
    %c0_165 = arith.constant 0 : index
    %c0_166 = arith.constant 0 : index
    %398 = vector.load %arg32[%c0_165, %c0_166] : memref<1x64xf32, #tpu.memory_space<vmem>>, vector<1x64xf32>
    %c0_167 = arith.constant 0 : index
    %c0_168 = arith.constant 0 : index
    %399 = vector.load %arg33[%c0_167, %c0_168] : memref<32x32xf32, #tpu.memory_space<vmem>>, vector<32x32xf32>
    %c0_169 = arith.constant 0 : index
    %c0_170 = arith.constant 0 : index
    %400 = vector.load %arg34[%c0_169, %c0_170] : memref<1x32xf32, #tpu.memory_space<vmem>>, vector<1x32xf32>
    %c0_171 = arith.constant 0 : index
    %c0_172 = arith.constant 0 : index
    %401 = vector.load %arg35[%c0_171, %c0_172] : memref<1x32xf32, #tpu.memory_space<vmem>>, vector<1x32xf32>
    %c0_173 = arith.constant 0 : index
    %c0_174 = arith.constant 0 : index
    %402 = vector.load %arg36[%c0_173, %c0_174] : memref<1x32xf32, #tpu.memory_space<vmem>>, vector<1x32xf32>
    %c0_175 = arith.constant 0 : index
    %c0_176 = arith.constant 0 : index
    %403 = vector.load %arg37[%c0_175, %c0_176] : memref<32x64xf32, #tpu.memory_space<vmem>>, vector<32x64xf32>
    %c0_177 = arith.constant 0 : index
    %c0_178 = arith.constant 0 : index
    %404 = vector.load %arg38[%c0_177, %c0_178] : memref<1x64xf32, #tpu.memory_space<vmem>>, vector<1x64xf32>
    %c0_179 = arith.constant 0 : index
    %c0_180 = arith.constant 0 : index
    %405 = vector.load %arg39[%c0_179, %c0_180] : memref<64x32xf32, #tpu.memory_space<vmem>>, vector<64x32xf32>
    %c0_181 = arith.constant 0 : index
    %c0_182 = arith.constant 0 : index
    %406 = vector.load %arg40[%c0_181, %c0_182] : memref<1x32xf32, #tpu.memory_space<vmem>>, vector<1x32xf32>
    %c0_183 = arith.constant 0 : index
    %c0_184 = arith.constant 0 : index
    %407 = vector.load %arg41[%c0_183, %c0_184] : memref<1x32xf32, #tpu.memory_space<vmem>>, vector<1x32xf32>
    %c0_185 = arith.constant 0 : index
    %c0_186 = arith.constant 0 : index
    %408 = vector.load %arg42[%c0_185, %c0_186] : memref<1x32xf32, #tpu.memory_space<vmem>>, vector<1x32xf32>
    %cst_187 = arith.constant dense<0.000000e+00> : vector<16x96xf32>
    %409 = tpu.matmul %388, %389, %cst_187 {dimension_numbers = #tpu.dot_dimension_numbers<[1], [0], [0], [1], [0, 0, 1, 1], [], []>} : vector<16x32xf32>, vector<32x96xf32>, vector<16x96xf32> -> vector<16x96xf32>
    %410 = vector.broadcast %390 : vector<1x96xf32> to vector<16x96xf32>
    %411 = arith.addf %409, %410 : vector<16x96xf32>
    %412 = vector.extract_strided_slice %411 {offsets = [0, 0], sizes = [16, 32], strides = [1, 1]} : vector<16x96xf32> to vector<16x32xf32>
    %413 = vector.extract_strided_slice %411 {offsets = [0, 32], sizes = [16, 32], strides = [1, 1]} : vector<16x96xf32> to vector<16x32xf32>
    %414 = vector.extract_strided_slice %411 {offsets = [0, 64], sizes = [16, 32], strides = [1, 1]} : vector<16x96xf32> to vector<16x32xf32>
    %415 = vector.extract_strided_slice %412 {offsets = [0, 0], sizes = [16, 4], strides = [1, 1]} : vector<16x32xf32> to vector<16x4xf32>
    %416 = vector.extract_strided_slice %413 {offsets = [0, 0], sizes = [16, 4], strides = [1, 1]} : vector<16x32xf32> to vector<16x4xf32>
    %417 = vector.extract_strided_slice %414 {offsets = [0, 0], sizes = [16, 4], strides = [1, 1]} : vector<16x32xf32> to vector<16x4xf32>
    %cst_188 = arith.constant dense<0.000000e+00> : vector<16x16xf32>
    %418 = tpu.matmul %415, %416, %cst_188 {dimension_numbers = #tpu.dot_dimension_numbers<[1], [1], [0], [0], [0, 0, 1, 0], [], []>} : vector<16x4xf32>, vector<16x4xf32>, vector<16x16xf32> -> vector<16x16xf32>
    %cst_189 = arith.constant 5.000000e-01 : f32
    %419 = vector.broadcast %cst_189 : f32 to vector<16x16xf32>
    %420 = arith.mulf %418, %419 : vector<16x16xf32>
    %cst_190 = arith.constant dense<0xFF800000> : vector<16xf32>
    %421 = vector.multi_reduction <maximumf>, %420, %cst_190 [1] : vector<16x16xf32> to vector<16xf32>
    %422 = vector.shape_cast %421 : vector<16xf32> to vector<16x1xf32>
    %423 = vector.broadcast %422 : vector<16x1xf32> to vector<16x16xf32>
    %424 = arith.subf %420, %423 : vector<16x16xf32>
    %425 = math.exp %424 : vector<16x16xf32>
    %cst_191 = arith.constant dense<0.000000e+00> : vector<16xf32>
    %426 = vector.multi_reduction <add>, %425, %cst_191 [1] : vector<16x16xf32> to vector<16xf32>
    %427 = vector.shape_cast %426 : vector<16xf32> to vector<16x1xf32>
    %428 = tpu.reciprocal %427 {approx = true} : vector<16x1xf32> -> vector<16x1xf32>
    %429 = vector.broadcast %428 : vector<16x1xf32> to vector<16x16xf32>
    %430 = arith.mulf %425, %429 : vector<16x16xf32>
    %cst_192 = arith.constant dense<0.000000e+00> : vector<16x4xf32>
    %431 = tpu.matmul %430, %417, %cst_192 {dimension_numbers = #tpu.dot_dimension_numbers<[1], [0], [0], [1], [0, 0, 1, 1], [], []>} : vector<16x16xf32>, vector<16x4xf32>, vector<16x4xf32> -> vector<16x4xf32>
    %432 = vector.extract_strided_slice %412 {offsets = [0, 4], sizes = [16, 4], strides = [1, 1]} : vector<16x32xf32> to vector<16x4xf32>
    %433 = vector.extract_strided_slice %413 {offsets = [0, 4], sizes = [16, 4], strides = [1, 1]} : vector<16x32xf32> to vector<16x4xf32>
    %434 = vector.extract_strided_slice %414 {offsets = [0, 4], sizes = [16, 4], strides = [1, 1]} : vector<16x32xf32> to vector<16x4xf32>
    %cst_193 = arith.constant dense<0.000000e+00> : vector<16x16xf32>
    %435 = tpu.matmul %432, %433, %cst_193 {dimension_numbers = #tpu.dot_dimension_numbers<[1], [1], [0], [0], [0, 0, 1, 0], [], []>} : vector<16x4xf32>, vector<16x4xf32>, vector<16x16xf32> -> vector<16x16xf32>
    %cst_194 = arith.constant 5.000000e-01 : f32
    %436 = vector.broadcast %cst_194 : f32 to vector<16x16xf32>
    %437 = arith.mulf %435, %436 : vector<16x16xf32>
    %cst_195 = arith.constant dense<0xFF800000> : vector<16xf32>
    %438 = vector.multi_reduction <maximumf>, %437, %cst_195 [1] : vector<16x16xf32> to vector<16xf32>
    %439 = vector.shape_cast %438 : vector<16xf32> to vector<16x1xf32>
    %440 = vector.broadcast %439 : vector<16x1xf32> to vector<16x16xf32>
    %441 = arith.subf %437, %440 : vector<16x16xf32>
    %442 = math.exp %441 : vector<16x16xf32>
    %cst_196 = arith.constant dense<0.000000e+00> : vector<16xf32>
    %443 = vector.multi_reduction <add>, %442, %cst_196 [1] : vector<16x16xf32> to vector<16xf32>
    %444 = vector.shape_cast %443 : vector<16xf32> to vector<16x1xf32>
    %445 = tpu.reciprocal %444 {approx = true} : vector<16x1xf32> -> vector<16x1xf32>
    %446 = vector.broadcast %445 : vector<16x1xf32> to vector<16x16xf32>
    %447 = arith.mulf %442, %446 : vector<16x16xf32>
    %cst_197 = arith.constant dense<0.000000e+00> : vector<16x4xf32>
    %448 = tpu.matmul %447, %434, %cst_197 {dimension_numbers = #tpu.dot_dimension_numbers<[1], [0], [0], [1], [0, 0, 1, 1], [], []>} : vector<16x16xf32>, vector<16x4xf32>, vector<16x4xf32> -> vector<16x4xf32>
    %449 = vector.extract_strided_slice %412 {offsets = [0, 8], sizes = [16, 4], strides = [1, 1]} : vector<16x32xf32> to vector<16x4xf32>
    %450 = vector.extract_strided_slice %413 {offsets = [0, 8], sizes = [16, 4], strides = [1, 1]} : vector<16x32xf32> to vector<16x4xf32>
    %451 = vector.extract_strided_slice %414 {offsets = [0, 8], sizes = [16, 4], strides = [1, 1]} : vector<16x32xf32> to vector<16x4xf32>
    %cst_198 = arith.constant dense<0.000000e+00> : vector<16x16xf32>
    %452 = tpu.matmul %449, %450, %cst_198 {dimension_numbers = #tpu.dot_dimension_numbers<[1], [1], [0], [0], [0, 0, 1, 0], [], []>} : vector<16x4xf32>, vector<16x4xf32>, vector<16x16xf32> -> vector<16x16xf32>
    %cst_199 = arith.constant 5.000000e-01 : f32
    %453 = vector.broadcast %cst_199 : f32 to vector<16x16xf32>
    %454 = arith.mulf %452, %453 : vector<16x16xf32>
    %cst_200 = arith.constant dense<0xFF800000> : vector<16xf32>
    %455 = vector.multi_reduction <maximumf>, %454, %cst_200 [1] : vector<16x16xf32> to vector<16xf32>
    %456 = vector.shape_cast %455 : vector<16xf32> to vector<16x1xf32>
    %457 = vector.broadcast %456 : vector<16x1xf32> to vector<16x16xf32>
    %458 = arith.subf %454, %457 : vector<16x16xf32>
    %459 = math.exp %458 : vector<16x16xf32>
    %cst_201 = arith.constant dense<0.000000e+00> : vector<16xf32>
    %460 = vector.multi_reduction <add>, %459, %cst_201 [1] : vector<16x16xf32> to vector<16xf32>
    %461 = vector.shape_cast %460 : vector<16xf32> to vector<16x1xf32>
    %462 = tpu.reciprocal %461 {approx = true} : vector<16x1xf32> -> vector<16x1xf32>
    %463 = vector.broadcast %462 : vector<16x1xf32> to vector<16x16xf32>
    %464 = arith.mulf %459, %463 : vector<16x16xf32>
    %cst_202 = arith.constant dense<0.000000e+00> : vector<16x4xf32>
    %465 = tpu.matmul %464, %451, %cst_202 {dimension_numbers = #tpu.dot_dimension_numbers<[1], [0], [0], [1], [0, 0, 1, 1], [], []>} : vector<16x16xf32>, vector<16x4xf32>, vector<16x4xf32> -> vector<16x4xf32>
    %466 = vector.extract_strided_slice %412 {offsets = [0, 12], sizes = [16, 4], strides = [1, 1]} : vector<16x32xf32> to vector<16x4xf32>
    %467 = vector.extract_strided_slice %413 {offsets = [0, 12], sizes = [16, 4], strides = [1, 1]} : vector<16x32xf32> to vector<16x4xf32>
    %468 = vector.extract_strided_slice %414 {offsets = [0, 12], sizes = [16, 4], strides = [1, 1]} : vector<16x32xf32> to vector<16x4xf32>
    %cst_203 = arith.constant dense<0.000000e+00> : vector<16x16xf32>
    %469 = tpu.matmul %466, %467, %cst_203 {dimension_numbers = #tpu.dot_dimension_numbers<[1], [1], [0], [0], [0, 0, 1, 0], [], []>} : vector<16x4xf32>, vector<16x4xf32>, vector<16x16xf32> -> vector<16x16xf32>
    %cst_204 = arith.constant 5.000000e-01 : f32
    %470 = vector.broadcast %cst_204 : f32 to vector<16x16xf32>
    %471 = arith.mulf %469, %470 : vector<16x16xf32>
    %cst_205 = arith.constant dense<0xFF800000> : vector<16xf32>
    %472 = vector.multi_reduction <maximumf>, %471, %cst_205 [1] : vector<16x16xf32> to vector<16xf32>
    %473 = vector.shape_cast %472 : vector<16xf32> to vector<16x1xf32>
    %474 = vector.broadcast %473 : vector<16x1xf32> to vector<16x16xf32>
    %475 = arith.subf %471, %474 : vector<16x16xf32>
    %476 = math.exp %475 : vector<16x16xf32>
    %cst_206 = arith.constant dense<0.000000e+00> : vector<16xf32>
    %477 = vector.multi_reduction <add>, %476, %cst_206 [1] : vector<16x16xf32> to vector<16xf32>
    %478 = vector.shape_cast %477 : vector<16xf32> to vector<16x1xf32>
    %479 = tpu.reciprocal %478 {approx = true} : vector<16x1xf32> -> vector<16x1xf32>
    %480 = vector.broadcast %479 : vector<16x1xf32> to vector<16x16xf32>
    %481 = arith.mulf %476, %480 : vector<16x16xf32>
    %cst_207 = arith.constant dense<0.000000e+00> : vector<16x4xf32>
    %482 = tpu.matmul %481, %468, %cst_207 {dimension_numbers = #tpu.dot_dimension_numbers<[1], [0], [0], [1], [0, 0, 1, 1], [], []>} : vector<16x16xf32>, vector<16x4xf32>, vector<16x4xf32> -> vector<16x4xf32>
    %483 = vector.extract_strided_slice %412 {offsets = [0, 16], sizes = [16, 4], strides = [1, 1]} : vector<16x32xf32> to vector<16x4xf32>
    %484 = vector.extract_strided_slice %413 {offsets = [0, 16], sizes = [16, 4], strides = [1, 1]} : vector<16x32xf32> to vector<16x4xf32>
    %485 = vector.extract_strided_slice %414 {offsets = [0, 16], sizes = [16, 4], strides = [1, 1]} : vector<16x32xf32> to vector<16x4xf32>
    %cst_208 = arith.constant dense<0.000000e+00> : vector<16x16xf32>
    %486 = tpu.matmul %483, %484, %cst_208 {dimension_numbers = #tpu.dot_dimension_numbers<[1], [1], [0], [0], [0, 0, 1, 0], [], []>} : vector<16x4xf32>, vector<16x4xf32>, vector<16x16xf32> -> vector<16x16xf32>
    %cst_209 = arith.constant 5.000000e-01 : f32
    %487 = vector.broadcast %cst_209 : f32 to vector<16x16xf32>
    %488 = arith.mulf %486, %487 : vector<16x16xf32>
    %cst_210 = arith.constant dense<0xFF800000> : vector<16xf32>
    %489 = vector.multi_reduction <maximumf>, %488, %cst_210 [1] : vector<16x16xf32> to vector<16xf32>
    %490 = vector.shape_cast %489 : vector<16xf32> to vector<16x1xf32>
    %491 = vector.broadcast %490 : vector<16x1xf32> to vector<16x16xf32>
    %492 = arith.subf %488, %491 : vector<16x16xf32>
    %493 = math.exp %492 : vector<16x16xf32>
    %cst_211 = arith.constant dense<0.000000e+00> : vector<16xf32>
    %494 = vector.multi_reduction <add>, %493, %cst_211 [1] : vector<16x16xf32> to vector<16xf32>
    %495 = vector.shape_cast %494 : vector<16xf32> to vector<16x1xf32>
    %496 = tpu.reciprocal %495 {approx = true} : vector<16x1xf32> -> vector<16x1xf32>
    %497 = vector.broadcast %496 : vector<16x1xf32> to vector<16x16xf32>
    %498 = arith.mulf %493, %497 : vector<16x16xf32>
    %cst_212 = arith.constant dense<0.000000e+00> : vector<16x4xf32>
    %499 = tpu.matmul %498, %485, %cst_212 {dimension_numbers = #tpu.dot_dimension_numbers<[1], [0], [0], [1], [0, 0, 1, 1], [], []>} : vector<16x16xf32>, vector<16x4xf32>, vector<16x4xf32> -> vector<16x4xf32>
    %500 = vector.extract_strided_slice %412 {offsets = [0, 20], sizes = [16, 4], strides = [1, 1]} : vector<16x32xf32> to vector<16x4xf32>
    %501 = vector.extract_strided_slice %413 {offsets = [0, 20], sizes = [16, 4], strides = [1, 1]} : vector<16x32xf32> to vector<16x4xf32>
    %502 = vector.extract_strided_slice %414 {offsets = [0, 20], sizes = [16, 4], strides = [1, 1]} : vector<16x32xf32> to vector<16x4xf32>
    %cst_213 = arith.constant dense<0.000000e+00> : vector<16x16xf32>
    %503 = tpu.matmul %500, %501, %cst_213 {dimension_numbers = #tpu.dot_dimension_numbers<[1], [1], [0], [0], [0, 0, 1, 0], [], []>} : vector<16x4xf32>, vector<16x4xf32>, vector<16x16xf32> -> vector<16x16xf32>
    %cst_214 = arith.constant 5.000000e-01 : f32
    %504 = vector.broadcast %cst_214 : f32 to vector<16x16xf32>
    %505 = arith.mulf %503, %504 : vector<16x16xf32>
    %cst_215 = arith.constant dense<0xFF800000> : vector<16xf32>
    %506 = vector.multi_reduction <maximumf>, %505, %cst_215 [1] : vector<16x16xf32> to vector<16xf32>
    %507 = vector.shape_cast %506 : vector<16xf32> to vector<16x1xf32>
    %508 = vector.broadcast %507 : vector<16x1xf32> to vector<16x16xf32>
    %509 = arith.subf %505, %508 : vector<16x16xf32>
    %510 = math.exp %509 : vector<16x16xf32>
    %cst_216 = arith.constant dense<0.000000e+00> : vector<16xf32>
    %511 = vector.multi_reduction <add>, %510, %cst_216 [1] : vector<16x16xf32> to vector<16xf32>
    %512 = vector.shape_cast %511 : vector<16xf32> to vector<16x1xf32>
    %513 = tpu.reciprocal %512 {approx = true} : vector<16x1xf32> -> vector<16x1xf32>
    %514 = vector.broadcast %513 : vector<16x1xf32> to vector<16x16xf32>
    %515 = arith.mulf %510, %514 : vector<16x16xf32>
    %cst_217 = arith.constant dense<0.000000e+00> : vector<16x4xf32>
    %516 = tpu.matmul %515, %502, %cst_217 {dimension_numbers = #tpu.dot_dimension_numbers<[1], [0], [0], [1], [0, 0, 1, 1], [], []>} : vector<16x16xf32>, vector<16x4xf32>, vector<16x4xf32> -> vector<16x4xf32>
    %517 = vector.extract_strided_slice %412 {offsets = [0, 24], sizes = [16, 4], strides = [1, 1]} : vector<16x32xf32> to vector<16x4xf32>
    %518 = vector.extract_strided_slice %413 {offsets = [0, 24], sizes = [16, 4], strides = [1, 1]} : vector<16x32xf32> to vector<16x4xf32>
    %519 = vector.extract_strided_slice %414 {offsets = [0, 24], sizes = [16, 4], strides = [1, 1]} : vector<16x32xf32> to vector<16x4xf32>
    %cst_218 = arith.constant dense<0.000000e+00> : vector<16x16xf32>
    %520 = tpu.matmul %517, %518, %cst_218 {dimension_numbers = #tpu.dot_dimension_numbers<[1], [1], [0], [0], [0, 0, 1, 0], [], []>} : vector<16x4xf32>, vector<16x4xf32>, vector<16x16xf32> -> vector<16x16xf32>
    %cst_219 = arith.constant 5.000000e-01 : f32
    %521 = vector.broadcast %cst_219 : f32 to vector<16x16xf32>
    %522 = arith.mulf %520, %521 : vector<16x16xf32>
    %cst_220 = arith.constant dense<0xFF800000> : vector<16xf32>
    %523 = vector.multi_reduction <maximumf>, %522, %cst_220 [1] : vector<16x16xf32> to vector<16xf32>
    %524 = vector.shape_cast %523 : vector<16xf32> to vector<16x1xf32>
    %525 = vector.broadcast %524 : vector<16x1xf32> to vector<16x16xf32>
    %526 = arith.subf %522, %525 : vector<16x16xf32>
    %527 = math.exp %526 : vector<16x16xf32>
    %cst_221 = arith.constant dense<0.000000e+00> : vector<16xf32>
    %528 = vector.multi_reduction <add>, %527, %cst_221 [1] : vector<16x16xf32> to vector<16xf32>
    %529 = vector.shape_cast %528 : vector<16xf32> to vector<16x1xf32>
    %530 = tpu.reciprocal %529 {approx = true} : vector<16x1xf32> -> vector<16x1xf32>
    %531 = vector.broadcast %530 : vector<16x1xf32> to vector<16x16xf32>
    %532 = arith.mulf %527, %531 : vector<16x16xf32>
    %cst_222 = arith.constant dense<0.000000e+00> : vector<16x4xf32>
    %533 = tpu.matmul %532, %519, %cst_222 {dimension_numbers = #tpu.dot_dimension_numbers<[1], [0], [0], [1], [0, 0, 1, 1], [], []>} : vector<16x16xf32>, vector<16x4xf32>, vector<16x4xf32> -> vector<16x4xf32>
    %534 = vector.extract_strided_slice %412 {offsets = [0, 28], sizes = [16, 4], strides = [1, 1]} : vector<16x32xf32> to vector<16x4xf32>
    %535 = vector.extract_strided_slice %413 {offsets = [0, 28], sizes = [16, 4], strides = [1, 1]} : vector<16x32xf32> to vector<16x4xf32>
    %536 = vector.extract_strided_slice %414 {offsets = [0, 28], sizes = [16, 4], strides = [1, 1]} : vector<16x32xf32> to vector<16x4xf32>
    %cst_223 = arith.constant dense<0.000000e+00> : vector<16x16xf32>
    %537 = tpu.matmul %534, %535, %cst_223 {dimension_numbers = #tpu.dot_dimension_numbers<[1], [1], [0], [0], [0, 0, 1, 0], [], []>} : vector<16x4xf32>, vector<16x4xf32>, vector<16x16xf32> -> vector<16x16xf32>
    %cst_224 = arith.constant 5.000000e-01 : f32
    %538 = vector.broadcast %cst_224 : f32 to vector<16x16xf32>
    %539 = arith.mulf %537, %538 : vector<16x16xf32>
    %cst_225 = arith.constant dense<0xFF800000> : vector<16xf32>
    %540 = vector.multi_reduction <maximumf>, %539, %cst_225 [1] : vector<16x16xf32> to vector<16xf32>
    %541 = vector.shape_cast %540 : vector<16xf32> to vector<16x1xf32>
    %542 = vector.broadcast %541 : vector<16x1xf32> to vector<16x16xf32>
    %543 = arith.subf %539, %542 : vector<16x16xf32>
    %544 = math.exp %543 : vector<16x16xf32>
    %cst_226 = arith.constant dense<0.000000e+00> : vector<16xf32>
    %545 = vector.multi_reduction <add>, %544, %cst_226 [1] : vector<16x16xf32> to vector<16xf32>
    %546 = vector.shape_cast %545 : vector<16xf32> to vector<16x1xf32>
    %547 = tpu.reciprocal %546 {approx = true} : vector<16x1xf32> -> vector<16x1xf32>
    %548 = vector.broadcast %547 : vector<16x1xf32> to vector<16x16xf32>
    %549 = arith.mulf %544, %548 : vector<16x16xf32>
    %cst_227 = arith.constant dense<0.000000e+00> : vector<16x4xf32>
    %550 = tpu.matmul %549, %536, %cst_227 {dimension_numbers = #tpu.dot_dimension_numbers<[1], [0], [0], [1], [0, 0, 1, 1], [], []>} : vector<16x16xf32>, vector<16x4xf32>, vector<16x4xf32> -> vector<16x4xf32>
    %551 = tpu.concatenate %431, %448, %465, %482, %499, %516, %533, %550 in 1 : vector<16x4xf32>, vector<16x4xf32>, vector<16x4xf32>, vector<16x4xf32>, vector<16x4xf32>, vector<16x4xf32>, vector<16x4xf32>, vector<16x4xf32> -> vector<16x32xf32>
    %cst_228 = arith.constant dense<0.000000e+00> : vector<16x32xf32>
    %552 = tpu.matmul %551, %391, %cst_228 {dimension_numbers = #tpu.dot_dimension_numbers<[1], [0], [0], [1], [0, 0, 1, 1], [], []>} : vector<16x32xf32>, vector<32x32xf32>, vector<16x32xf32> -> vector<16x32xf32>
    %553 = vector.broadcast %392 : vector<1x32xf32> to vector<16x32xf32>
    %554 = arith.addf %552, %553 : vector<16x32xf32>
    %555 = arith.addf %388, %554 : vector<16x32xf32>
    %cst_229 = arith.constant dense<0.000000e+00> : vector<16xf32>
    %556 = vector.multi_reduction <add>, %555, %cst_229 [1] : vector<16x32xf32> to vector<16xf32>
    %557 = vector.shape_cast %556 : vector<16xf32> to vector<16x1xf32>
    %cst_230 = arith.constant 3.200000e+01 : f32
    %558 = vector.broadcast %cst_230 : f32 to vector<16x1xf32>
    %559 = arith.divf %557, %558 : vector<16x1xf32>
    %560 = vector.broadcast %559 : vector<16x1xf32> to vector<16x32xf32>
    %561 = arith.subf %555, %560 : vector<16x32xf32>
    %562 = arith.mulf %561, %561 : vector<16x32xf32>
    %cst_231 = arith.constant dense<0.000000e+00> : vector<16xf32>
    %563 = vector.multi_reduction <add>, %562, %cst_231 [1] : vector<16x32xf32> to vector<16xf32>
    %564 = vector.shape_cast %563 : vector<16xf32> to vector<16x1xf32>
    %cst_232 = arith.constant 3.200000e+01 : f32
    %565 = vector.broadcast %cst_232 : f32 to vector<16x1xf32>
    %566 = arith.divf %564, %565 : vector<16x1xf32>
    %cst_233 = arith.constant 9.99999974E-6 : f32
    %567 = vector.broadcast %cst_233 : f32 to vector<16x1xf32>
    %568 = arith.addf %566, %567 : vector<16x1xf32>
    %569 = math.rsqrt %568 : vector<16x1xf32>
    %570 = vector.broadcast %569 : vector<16x1xf32> to vector<16x32xf32>
    %571 = arith.mulf %561, %570 : vector<16x32xf32>
    %572 = vector.broadcast %393 : vector<1x32xf32> to vector<16x32xf32>
    %573 = arith.mulf %571, %572 : vector<16x32xf32>
    %574 = vector.broadcast %394 : vector<1x32xf32> to vector<16x32xf32>
    %575 = arith.addf %573, %574 : vector<16x32xf32>
    %cst_234 = arith.constant dense<0.000000e+00> : vector<16x32xf32>
    %576 = tpu.matmul %575, %395, %cst_234 {dimension_numbers = #tpu.dot_dimension_numbers<[1], [0], [0], [1], [0, 0, 1, 1], [], []>} : vector<16x32xf32>, vector<32x32xf32>, vector<16x32xf32> -> vector<16x32xf32>
    %577 = vector.broadcast %396 : vector<1x32xf32> to vector<16x32xf32>
    %578 = arith.addf %576, %577 : vector<16x32xf32>
    %cst_235 = arith.constant dense<0.000000e+00> : vector<8x64xf32>
    %579 = tpu.matmul %3, %397, %cst_235 {dimension_numbers = #tpu.dot_dimension_numbers<[1], [0], [0], [1], [0, 0, 1, 1], [], []>} : vector<8x32xf32>, vector<32x64xf32>, vector<8x64xf32> -> vector<8x64xf32>
    %580 = vector.broadcast %398 : vector<1x64xf32> to vector<8x64xf32>
    %581 = arith.addf %579, %580 : vector<8x64xf32>
    %582 = vector.extract_strided_slice %581 {offsets = [0, 0], sizes = [8, 32], strides = [1, 1]} : vector<8x64xf32> to vector<8x32xf32>
    %583 = vector.extract_strided_slice %581 {offsets = [0, 32], sizes = [8, 32], strides = [1, 1]} : vector<8x64xf32> to vector<8x32xf32>
    %584 = vector.extract_strided_slice %578 {offsets = [0, 0], sizes = [16, 4], strides = [1, 1]} : vector<16x32xf32> to vector<16x4xf32>
    %585 = vector.extract_strided_slice %582 {offsets = [0, 0], sizes = [8, 4], strides = [1, 1]} : vector<8x32xf32> to vector<8x4xf32>
    %586 = vector.extract_strided_slice %583 {offsets = [0, 0], sizes = [8, 4], strides = [1, 1]} : vector<8x32xf32> to vector<8x4xf32>
    %cst_236 = arith.constant dense<0.000000e+00> : vector<16x8xf32>
    %587 = tpu.matmul %584, %585, %cst_236 {dimension_numbers = #tpu.dot_dimension_numbers<[1], [1], [0], [0], [0, 0, 1, 0], [], []>} : vector<16x4xf32>, vector<8x4xf32>, vector<16x8xf32> -> vector<16x8xf32>
    %cst_237 = arith.constant 5.000000e-01 : f32
    %588 = vector.broadcast %cst_237 : f32 to vector<16x8xf32>
    %589 = arith.mulf %587, %588 : vector<16x8xf32>
    %cst_238 = arith.constant dense<0xFF800000> : vector<16xf32>
    %590 = vector.multi_reduction <maximumf>, %589, %cst_238 [1] : vector<16x8xf32> to vector<16xf32>
    %591 = vector.shape_cast %590 : vector<16xf32> to vector<16x1xf32>
    %592 = vector.broadcast %591 : vector<16x1xf32> to vector<16x8xf32>
    %593 = arith.subf %589, %592 : vector<16x8xf32>
    %594 = math.exp %593 : vector<16x8xf32>
    %cst_239 = arith.constant dense<0.000000e+00> : vector<16xf32>
    %595 = vector.multi_reduction <add>, %594, %cst_239 [1] : vector<16x8xf32> to vector<16xf32>
    %596 = vector.shape_cast %595 : vector<16xf32> to vector<16x1xf32>
    %597 = tpu.reciprocal %596 {approx = true} : vector<16x1xf32> -> vector<16x1xf32>
    %598 = vector.broadcast %597 : vector<16x1xf32> to vector<16x8xf32>
    %599 = arith.mulf %594, %598 : vector<16x8xf32>
    %cst_240 = arith.constant dense<0.000000e+00> : vector<16x4xf32>
    %600 = tpu.matmul %599, %586, %cst_240 {dimension_numbers = #tpu.dot_dimension_numbers<[1], [0], [0], [1], [0, 0, 1, 1], [], []>} : vector<16x8xf32>, vector<8x4xf32>, vector<16x4xf32> -> vector<16x4xf32>
    %601 = vector.extract_strided_slice %578 {offsets = [0, 4], sizes = [16, 4], strides = [1, 1]} : vector<16x32xf32> to vector<16x4xf32>
    %602 = vector.extract_strided_slice %582 {offsets = [0, 4], sizes = [8, 4], strides = [1, 1]} : vector<8x32xf32> to vector<8x4xf32>
    %603 = vector.extract_strided_slice %583 {offsets = [0, 4], sizes = [8, 4], strides = [1, 1]} : vector<8x32xf32> to vector<8x4xf32>
    %cst_241 = arith.constant dense<0.000000e+00> : vector<16x8xf32>
    %604 = tpu.matmul %601, %602, %cst_241 {dimension_numbers = #tpu.dot_dimension_numbers<[1], [1], [0], [0], [0, 0, 1, 0], [], []>} : vector<16x4xf32>, vector<8x4xf32>, vector<16x8xf32> -> vector<16x8xf32>
    %cst_242 = arith.constant 5.000000e-01 : f32
    %605 = vector.broadcast %cst_242 : f32 to vector<16x8xf32>
    %606 = arith.mulf %604, %605 : vector<16x8xf32>
    %cst_243 = arith.constant dense<0xFF800000> : vector<16xf32>
    %607 = vector.multi_reduction <maximumf>, %606, %cst_243 [1] : vector<16x8xf32> to vector<16xf32>
    %608 = vector.shape_cast %607 : vector<16xf32> to vector<16x1xf32>
    %609 = vector.broadcast %608 : vector<16x1xf32> to vector<16x8xf32>
    %610 = arith.subf %606, %609 : vector<16x8xf32>
    %611 = math.exp %610 : vector<16x8xf32>
    %cst_244 = arith.constant dense<0.000000e+00> : vector<16xf32>
    %612 = vector.multi_reduction <add>, %611, %cst_244 [1] : vector<16x8xf32> to vector<16xf32>
    %613 = vector.shape_cast %612 : vector<16xf32> to vector<16x1xf32>
    %614 = tpu.reciprocal %613 {approx = true} : vector<16x1xf32> -> vector<16x1xf32>
    %615 = vector.broadcast %614 : vector<16x1xf32> to vector<16x8xf32>
    %616 = arith.mulf %611, %615 : vector<16x8xf32>
    %cst_245 = arith.constant dense<0.000000e+00> : vector<16x4xf32>
    %617 = tpu.matmul %616, %603, %cst_245 {dimension_numbers = #tpu.dot_dimension_numbers<[1], [0], [0], [1], [0, 0, 1, 1], [], []>} : vector<16x8xf32>, vector<8x4xf32>, vector<16x4xf32> -> vector<16x4xf32>
    %618 = vector.extract_strided_slice %578 {offsets = [0, 8], sizes = [16, 4], strides = [1, 1]} : vector<16x32xf32> to vector<16x4xf32>
    %619 = vector.extract_strided_slice %582 {offsets = [0, 8], sizes = [8, 4], strides = [1, 1]} : vector<8x32xf32> to vector<8x4xf32>
    %620 = vector.extract_strided_slice %583 {offsets = [0, 8], sizes = [8, 4], strides = [1, 1]} : vector<8x32xf32> to vector<8x4xf32>
    %cst_246 = arith.constant dense<0.000000e+00> : vector<16x8xf32>
    %621 = tpu.matmul %618, %619, %cst_246 {dimension_numbers = #tpu.dot_dimension_numbers<[1], [1], [0], [0], [0, 0, 1, 0], [], []>} : vector<16x4xf32>, vector<8x4xf32>, vector<16x8xf32> -> vector<16x8xf32>
    %cst_247 = arith.constant 5.000000e-01 : f32
    %622 = vector.broadcast %cst_247 : f32 to vector<16x8xf32>
    %623 = arith.mulf %621, %622 : vector<16x8xf32>
    %cst_248 = arith.constant dense<0xFF800000> : vector<16xf32>
    %624 = vector.multi_reduction <maximumf>, %623, %cst_248 [1] : vector<16x8xf32> to vector<16xf32>
    %625 = vector.shape_cast %624 : vector<16xf32> to vector<16x1xf32>
    %626 = vector.broadcast %625 : vector<16x1xf32> to vector<16x8xf32>
    %627 = arith.subf %623, %626 : vector<16x8xf32>
    %628 = math.exp %627 : vector<16x8xf32>
    %cst_249 = arith.constant dense<0.000000e+00> : vector<16xf32>
    %629 = vector.multi_reduction <add>, %628, %cst_249 [1] : vector<16x8xf32> to vector<16xf32>
    %630 = vector.shape_cast %629 : vector<16xf32> to vector<16x1xf32>
    %631 = tpu.reciprocal %630 {approx = true} : vector<16x1xf32> -> vector<16x1xf32>
    %632 = vector.broadcast %631 : vector<16x1xf32> to vector<16x8xf32>
    %633 = arith.mulf %628, %632 : vector<16x8xf32>
    %cst_250 = arith.constant dense<0.000000e+00> : vector<16x4xf32>
    %634 = tpu.matmul %633, %620, %cst_250 {dimension_numbers = #tpu.dot_dimension_numbers<[1], [0], [0], [1], [0, 0, 1, 1], [], []>} : vector<16x8xf32>, vector<8x4xf32>, vector<16x4xf32> -> vector<16x4xf32>
    %635 = vector.extract_strided_slice %578 {offsets = [0, 12], sizes = [16, 4], strides = [1, 1]} : vector<16x32xf32> to vector<16x4xf32>
    %636 = vector.extract_strided_slice %582 {offsets = [0, 12], sizes = [8, 4], strides = [1, 1]} : vector<8x32xf32> to vector<8x4xf32>
    %637 = vector.extract_strided_slice %583 {offsets = [0, 12], sizes = [8, 4], strides = [1, 1]} : vector<8x32xf32> to vector<8x4xf32>
    %cst_251 = arith.constant dense<0.000000e+00> : vector<16x8xf32>
    %638 = tpu.matmul %635, %636, %cst_251 {dimension_numbers = #tpu.dot_dimension_numbers<[1], [1], [0], [0], [0, 0, 1, 0], [], []>} : vector<16x4xf32>, vector<8x4xf32>, vector<16x8xf32> -> vector<16x8xf32>
    %cst_252 = arith.constant 5.000000e-01 : f32
    %639 = vector.broadcast %cst_252 : f32 to vector<16x8xf32>
    %640 = arith.mulf %638, %639 : vector<16x8xf32>
    %cst_253 = arith.constant dense<0xFF800000> : vector<16xf32>
    %641 = vector.multi_reduction <maximumf>, %640, %cst_253 [1] : vector<16x8xf32> to vector<16xf32>
    %642 = vector.shape_cast %641 : vector<16xf32> to vector<16x1xf32>
    %643 = vector.broadcast %642 : vector<16x1xf32> to vector<16x8xf32>
    %644 = arith.subf %640, %643 : vector<16x8xf32>
    %645 = math.exp %644 : vector<16x8xf32>
    %cst_254 = arith.constant dense<0.000000e+00> : vector<16xf32>
    %646 = vector.multi_reduction <add>, %645, %cst_254 [1] : vector<16x8xf32> to vector<16xf32>
    %647 = vector.shape_cast %646 : vector<16xf32> to vector<16x1xf32>
    %648 = tpu.reciprocal %647 {approx = true} : vector<16x1xf32> -> vector<16x1xf32>
    %649 = vector.broadcast %648 : vector<16x1xf32> to vector<16x8xf32>
    %650 = arith.mulf %645, %649 : vector<16x8xf32>
    %cst_255 = arith.constant dense<0.000000e+00> : vector<16x4xf32>
    %651 = tpu.matmul %650, %637, %cst_255 {dimension_numbers = #tpu.dot_dimension_numbers<[1], [0], [0], [1], [0, 0, 1, 1], [], []>} : vector<16x8xf32>, vector<8x4xf32>, vector<16x4xf32> -> vector<16x4xf32>
    %652 = vector.extract_strided_slice %578 {offsets = [0, 16], sizes = [16, 4], strides = [1, 1]} : vector<16x32xf32> to vector<16x4xf32>
    %653 = vector.extract_strided_slice %582 {offsets = [0, 16], sizes = [8, 4], strides = [1, 1]} : vector<8x32xf32> to vector<8x4xf32>
    %654 = vector.extract_strided_slice %583 {offsets = [0, 16], sizes = [8, 4], strides = [1, 1]} : vector<8x32xf32> to vector<8x4xf32>
    %cst_256 = arith.constant dense<0.000000e+00> : vector<16x8xf32>
    %655 = tpu.matmul %652, %653, %cst_256 {dimension_numbers = #tpu.dot_dimension_numbers<[1], [1], [0], [0], [0, 0, 1, 0], [], []>} : vector<16x4xf32>, vector<8x4xf32>, vector<16x8xf32> -> vector<16x8xf32>
    %cst_257 = arith.constant 5.000000e-01 : f32
    %656 = vector.broadcast %cst_257 : f32 to vector<16x8xf32>
    %657 = arith.mulf %655, %656 : vector<16x8xf32>
    %cst_258 = arith.constant dense<0xFF800000> : vector<16xf32>
    %658 = vector.multi_reduction <maximumf>, %657, %cst_258 [1] : vector<16x8xf32> to vector<16xf32>
    %659 = vector.shape_cast %658 : vector<16xf32> to vector<16x1xf32>
    %660 = vector.broadcast %659 : vector<16x1xf32> to vector<16x8xf32>
    %661 = arith.subf %657, %660 : vector<16x8xf32>
    %662 = math.exp %661 : vector<16x8xf32>
    %cst_259 = arith.constant dense<0.000000e+00> : vector<16xf32>
    %663 = vector.multi_reduction <add>, %662, %cst_259 [1] : vector<16x8xf32> to vector<16xf32>
    %664 = vector.shape_cast %663 : vector<16xf32> to vector<16x1xf32>
    %665 = tpu.reciprocal %664 {approx = true} : vector<16x1xf32> -> vector<16x1xf32>
    %666 = vector.broadcast %665 : vector<16x1xf32> to vector<16x8xf32>
    %667 = arith.mulf %662, %666 : vector<16x8xf32>
    %cst_260 = arith.constant dense<0.000000e+00> : vector<16x4xf32>
    %668 = tpu.matmul %667, %654, %cst_260 {dimension_numbers = #tpu.dot_dimension_numbers<[1], [0], [0], [1], [0, 0, 1, 1], [], []>} : vector<16x8xf32>, vector<8x4xf32>, vector<16x4xf32> -> vector<16x4xf32>
    %669 = vector.extract_strided_slice %578 {offsets = [0, 20], sizes = [16, 4], strides = [1, 1]} : vector<16x32xf32> to vector<16x4xf32>
    %670 = vector.extract_strided_slice %582 {offsets = [0, 20], sizes = [8, 4], strides = [1, 1]} : vector<8x32xf32> to vector<8x4xf32>
    %671 = vector.extract_strided_slice %583 {offsets = [0, 20], sizes = [8, 4], strides = [1, 1]} : vector<8x32xf32> to vector<8x4xf32>
    %cst_261 = arith.constant dense<0.000000e+00> : vector<16x8xf32>
    %672 = tpu.matmul %669, %670, %cst_261 {dimension_numbers = #tpu.dot_dimension_numbers<[1], [1], [0], [0], [0, 0, 1, 0], [], []>} : vector<16x4xf32>, vector<8x4xf32>, vector<16x8xf32> -> vector<16x8xf32>
    %cst_262 = arith.constant 5.000000e-01 : f32
    %673 = vector.broadcast %cst_262 : f32 to vector<16x8xf32>
    %674 = arith.mulf %672, %673 : vector<16x8xf32>
    %cst_263 = arith.constant dense<0xFF800000> : vector<16xf32>
    %675 = vector.multi_reduction <maximumf>, %674, %cst_263 [1] : vector<16x8xf32> to vector<16xf32>
    %676 = vector.shape_cast %675 : vector<16xf32> to vector<16x1xf32>
    %677 = vector.broadcast %676 : vector<16x1xf32> to vector<16x8xf32>
    %678 = arith.subf %674, %677 : vector<16x8xf32>
    %679 = math.exp %678 : vector<16x8xf32>
    %cst_264 = arith.constant dense<0.000000e+00> : vector<16xf32>
    %680 = vector.multi_reduction <add>, %679, %cst_264 [1] : vector<16x8xf32> to vector<16xf32>
    %681 = vector.shape_cast %680 : vector<16xf32> to vector<16x1xf32>
    %682 = tpu.reciprocal %681 {approx = true} : vector<16x1xf32> -> vector<16x1xf32>
    %683 = vector.broadcast %682 : vector<16x1xf32> to vector<16x8xf32>
    %684 = arith.mulf %679, %683 : vector<16x8xf32>
    %cst_265 = arith.constant dense<0.000000e+00> : vector<16x4xf32>
    %685 = tpu.matmul %684, %671, %cst_265 {dimension_numbers = #tpu.dot_dimension_numbers<[1], [0], [0], [1], [0, 0, 1, 1], [], []>} : vector<16x8xf32>, vector<8x4xf32>, vector<16x4xf32> -> vector<16x4xf32>
    %686 = vector.extract_strided_slice %578 {offsets = [0, 24], sizes = [16, 4], strides = [1, 1]} : vector<16x32xf32> to vector<16x4xf32>
    %687 = vector.extract_strided_slice %582 {offsets = [0, 24], sizes = [8, 4], strides = [1, 1]} : vector<8x32xf32> to vector<8x4xf32>
    %688 = vector.extract_strided_slice %583 {offsets = [0, 24], sizes = [8, 4], strides = [1, 1]} : vector<8x32xf32> to vector<8x4xf32>
    %cst_266 = arith.constant dense<0.000000e+00> : vector<16x8xf32>
    %689 = tpu.matmul %686, %687, %cst_266 {dimension_numbers = #tpu.dot_dimension_numbers<[1], [1], [0], [0], [0, 0, 1, 0], [], []>} : vector<16x4xf32>, vector<8x4xf32>, vector<16x8xf32> -> vector<16x8xf32>
    %cst_267 = arith.constant 5.000000e-01 : f32
    %690 = vector.broadcast %cst_267 : f32 to vector<16x8xf32>
    %691 = arith.mulf %689, %690 : vector<16x8xf32>
    %cst_268 = arith.constant dense<0xFF800000> : vector<16xf32>
    %692 = vector.multi_reduction <maximumf>, %691, %cst_268 [1] : vector<16x8xf32> to vector<16xf32>
    %693 = vector.shape_cast %692 : vector<16xf32> to vector<16x1xf32>
    %694 = vector.broadcast %693 : vector<16x1xf32> to vector<16x8xf32>
    %695 = arith.subf %691, %694 : vector<16x8xf32>
    %696 = math.exp %695 : vector<16x8xf32>
    %cst_269 = arith.constant dense<0.000000e+00> : vector<16xf32>
    %697 = vector.multi_reduction <add>, %696, %cst_269 [1] : vector<16x8xf32> to vector<16xf32>
    %698 = vector.shape_cast %697 : vector<16xf32> to vector<16x1xf32>
    %699 = tpu.reciprocal %698 {approx = true} : vector<16x1xf32> -> vector<16x1xf32>
    %700 = vector.broadcast %699 : vector<16x1xf32> to vector<16x8xf32>
    %701 = arith.mulf %696, %700 : vector<16x8xf32>
    %cst_270 = arith.constant dense<0.000000e+00> : vector<16x4xf32>
    %702 = tpu.matmul %701, %688, %cst_270 {dimension_numbers = #tpu.dot_dimension_numbers<[1], [0], [0], [1], [0, 0, 1, 1], [], []>} : vector<16x8xf32>, vector<8x4xf32>, vector<16x4xf32> -> vector<16x4xf32>
    %703 = vector.extract_strided_slice %578 {offsets = [0, 28], sizes = [16, 4], strides = [1, 1]} : vector<16x32xf32> to vector<16x4xf32>
    %704 = vector.extract_strided_slice %582 {offsets = [0, 28], sizes = [8, 4], strides = [1, 1]} : vector<8x32xf32> to vector<8x4xf32>
    %705 = vector.extract_strided_slice %583 {offsets = [0, 28], sizes = [8, 4], strides = [1, 1]} : vector<8x32xf32> to vector<8x4xf32>
    %cst_271 = arith.constant dense<0.000000e+00> : vector<16x8xf32>
    %706 = tpu.matmul %703, %704, %cst_271 {dimension_numbers = #tpu.dot_dimension_numbers<[1], [1], [0], [0], [0, 0, 1, 0], [], []>} : vector<16x4xf32>, vector<8x4xf32>, vector<16x8xf32> -> vector<16x8xf32>
    %cst_272 = arith.constant 5.000000e-01 : f32
    %707 = vector.broadcast %cst_272 : f32 to vector<16x8xf32>
    %708 = arith.mulf %706, %707 : vector<16x8xf32>
    %cst_273 = arith.constant dense<0xFF800000> : vector<16xf32>
    %709 = vector.multi_reduction <maximumf>, %708, %cst_273 [1] : vector<16x8xf32> to vector<16xf32>
    %710 = vector.shape_cast %709 : vector<16xf32> to vector<16x1xf32>
    %711 = vector.broadcast %710 : vector<16x1xf32> to vector<16x8xf32>
    %712 = arith.subf %708, %711 : vector<16x8xf32>
    %713 = math.exp %712 : vector<16x8xf32>
    %cst_274 = arith.constant dense<0.000000e+00> : vector<16xf32>
    %714 = vector.multi_reduction <add>, %713, %cst_274 [1] : vector<16x8xf32> to vector<16xf32>
    %715 = vector.shape_cast %714 : vector<16xf32> to vector<16x1xf32>
    %716 = tpu.reciprocal %715 {approx = true} : vector<16x1xf32> -> vector<16x1xf32>
    %717 = vector.broadcast %716 : vector<16x1xf32> to vector<16x8xf32>
    %718 = arith.mulf %713, %717 : vector<16x8xf32>
    %cst_275 = arith.constant dense<0.000000e+00> : vector<16x4xf32>
    %719 = tpu.matmul %718, %705, %cst_275 {dimension_numbers = #tpu.dot_dimension_numbers<[1], [0], [0], [1], [0, 0, 1, 1], [], []>} : vector<16x8xf32>, vector<8x4xf32>, vector<16x4xf32> -> vector<16x4xf32>
    %720 = tpu.concatenate %600, %617, %634, %651, %668, %685, %702, %719 in 1 : vector<16x4xf32>, vector<16x4xf32>, vector<16x4xf32>, vector<16x4xf32>, vector<16x4xf32>, vector<16x4xf32>, vector<16x4xf32>, vector<16x4xf32> -> vector<16x32xf32>
    %cst_276 = arith.constant dense<0.000000e+00> : vector<16x32xf32>
    %721 = tpu.matmul %720, %399, %cst_276 {dimension_numbers = #tpu.dot_dimension_numbers<[1], [0], [0], [1], [0, 0, 1, 1], [], []>} : vector<16x32xf32>, vector<32x32xf32>, vector<16x32xf32> -> vector<16x32xf32>
    %722 = vector.broadcast %400 : vector<1x32xf32> to vector<16x32xf32>
    %723 = arith.addf %721, %722 : vector<16x32xf32>
    %724 = arith.addf %575, %723 : vector<16x32xf32>
    %cst_277 = arith.constant dense<0.000000e+00> : vector<16xf32>
    %725 = vector.multi_reduction <add>, %724, %cst_277 [1] : vector<16x32xf32> to vector<16xf32>
    %726 = vector.shape_cast %725 : vector<16xf32> to vector<16x1xf32>
    %cst_278 = arith.constant 3.200000e+01 : f32
    %727 = vector.broadcast %cst_278 : f32 to vector<16x1xf32>
    %728 = arith.divf %726, %727 : vector<16x1xf32>
    %729 = vector.broadcast %728 : vector<16x1xf32> to vector<16x32xf32>
    %730 = arith.subf %724, %729 : vector<16x32xf32>
    %731 = arith.mulf %730, %730 : vector<16x32xf32>
    %cst_279 = arith.constant dense<0.000000e+00> : vector<16xf32>
    %732 = vector.multi_reduction <add>, %731, %cst_279 [1] : vector<16x32xf32> to vector<16xf32>
    %733 = vector.shape_cast %732 : vector<16xf32> to vector<16x1xf32>
    %cst_280 = arith.constant 3.200000e+01 : f32
    %734 = vector.broadcast %cst_280 : f32 to vector<16x1xf32>
    %735 = arith.divf %733, %734 : vector<16x1xf32>
    %cst_281 = arith.constant 9.99999974E-6 : f32
    %736 = vector.broadcast %cst_281 : f32 to vector<16x1xf32>
    %737 = arith.addf %735, %736 : vector<16x1xf32>
    %738 = math.rsqrt %737 : vector<16x1xf32>
    %739 = vector.broadcast %738 : vector<16x1xf32> to vector<16x32xf32>
    %740 = arith.mulf %730, %739 : vector<16x32xf32>
    %741 = vector.broadcast %401 : vector<1x32xf32> to vector<16x32xf32>
    %742 = arith.mulf %740, %741 : vector<16x32xf32>
    %743 = vector.broadcast %402 : vector<1x32xf32> to vector<16x32xf32>
    %744 = arith.addf %742, %743 : vector<16x32xf32>
    %cst_282 = arith.constant dense<0.000000e+00> : vector<16x64xf32>
    %745 = tpu.matmul %744, %403, %cst_282 {dimension_numbers = #tpu.dot_dimension_numbers<[1], [0], [0], [1], [0, 0, 1, 1], [], []>} : vector<16x32xf32>, vector<32x64xf32>, vector<16x64xf32> -> vector<16x64xf32>
    %746 = vector.broadcast %404 : vector<1x64xf32> to vector<16x64xf32>
    %747 = arith.addf %745, %746 : vector<16x64xf32>
    %cst_283 = arith.constant 0.000000e+00 : f32
    %748 = vector.broadcast %cst_283 : f32 to vector<16x64xf32>
    %749 = arith.maximumf %747, %748 : vector<16x64xf32>
    %cst_284 = arith.constant dense<0.000000e+00> : vector<16x32xf32>
    %750 = tpu.matmul %749, %405, %cst_284 {dimension_numbers = #tpu.dot_dimension_numbers<[1], [0], [0], [1], [0, 0, 1, 1], [], []>} : vector<16x64xf32>, vector<64x32xf32>, vector<16x32xf32> -> vector<16x32xf32>
    %751 = vector.broadcast %406 : vector<1x32xf32> to vector<16x32xf32>
    %752 = arith.addf %750, %751 : vector<16x32xf32>
    %753 = arith.addf %744, %752 : vector<16x32xf32>
    %cst_285 = arith.constant dense<0.000000e+00> : vector<16xf32>
    %754 = vector.multi_reduction <add>, %753, %cst_285 [1] : vector<16x32xf32> to vector<16xf32>
    %755 = vector.shape_cast %754 : vector<16xf32> to vector<16x1xf32>
    %cst_286 = arith.constant 3.200000e+01 : f32
    %756 = vector.broadcast %cst_286 : f32 to vector<16x1xf32>
    %757 = arith.divf %755, %756 : vector<16x1xf32>
    %758 = vector.broadcast %757 : vector<16x1xf32> to vector<16x32xf32>
    %759 = arith.subf %753, %758 : vector<16x32xf32>
    %760 = arith.mulf %759, %759 : vector<16x32xf32>
    %cst_287 = arith.constant dense<0.000000e+00> : vector<16xf32>
    %761 = vector.multi_reduction <add>, %760, %cst_287 [1] : vector<16x32xf32> to vector<16xf32>
    %762 = vector.shape_cast %761 : vector<16xf32> to vector<16x1xf32>
    %cst_288 = arith.constant 3.200000e+01 : f32
    %763 = vector.broadcast %cst_288 : f32 to vector<16x1xf32>
    %764 = arith.divf %762, %763 : vector<16x1xf32>
    %cst_289 = arith.constant 9.99999974E-6 : f32
    %765 = vector.broadcast %cst_289 : f32 to vector<16x1xf32>
    %766 = arith.addf %764, %765 : vector<16x1xf32>
    %767 = math.rsqrt %766 : vector<16x1xf32>
    %768 = vector.broadcast %767 : vector<16x1xf32> to vector<16x32xf32>
    %769 = arith.mulf %759, %768 : vector<16x32xf32>
    %770 = vector.broadcast %407 : vector<1x32xf32> to vector<16x32xf32>
    %771 = arith.mulf %769, %770 : vector<16x32xf32>
    %772 = vector.broadcast %408 : vector<1x32xf32> to vector<16x32xf32>
    %773 = arith.addf %771, %772 : vector<16x32xf32>
    %c0_290 = arith.constant 0 : index
    %c0_291 = arith.constant 0 : index
    %774 = vector.load %arg43[%c0_290, %c0_291] : memref<32x16xf32, #tpu.memory_space<vmem>>, vector<32x16xf32>
    %c0_292 = arith.constant 0 : index
    %c0_293 = arith.constant 0 : index
    %775 = vector.load %arg44[%c0_292, %c0_293] : memref<1x16xf32, #tpu.memory_space<vmem>>, vector<1x16xf32>
    %cst_294 = arith.constant dense<0.000000e+00> : vector<16x16xf32>
    %776 = tpu.matmul %773, %774, %cst_294 {dimension_numbers = #tpu.dot_dimension_numbers<[1], [0], [0], [1], [0, 0, 1, 1], [], []>} : vector<16x32xf32>, vector<32x16xf32>, vector<16x16xf32> -> vector<16x16xf32>
    %777 = vector.broadcast %775 : vector<1x16xf32> to vector<16x16xf32>
    %778 = arith.addf %776, %777 : vector<16x16xf32>
    %c0_295 = arith.constant 0 : index
    %c0_296 = arith.constant 0 : index
    %c0_297 = arith.constant 0 : index
    %779 = vector.load %arg45[%c0_295, %c0_296, %c0_297] : memref<1x16x16xf32, #tpu.memory_space<vmem>>, vector<1x16x16xf32>
    %780 = vector.shape_cast %779 : vector<1x16x16xf32> to vector<16x16xf32>
    %781 = vector.shape_cast %778 : vector<16x16xf32> to vector<1x16x16xf32>
    tpu.vector_store %arg45[%c0_295, %c0_296, %c0_297], %781 {strides = array<i32>} : memref<1x16x16xf32, #tpu.memory_space<vmem>>, vector<1x16x16xf32>,
    return
  }
  func.func @transform_0(%arg0: i32) -> (i32, i32, i32) {
    %c0_i32 = arith.constant 0 : i32
    %c0_i32_0 = arith.constant 0 : i32
    %c0_i32_1 = arith.constant 0 : i32
    return %arg0, %c0_i32, %c0_i32_0 : i32, i32, i32
  }
  func.func @transform_1(%arg0: i32) -> (i32, i32, i32) {
    %c0_i32 = arith.constant 0 : i32
    %c0_i32_0 = arith.constant 0 : i32
    %c0_i32_1 = arith.constant 0 : i32
    return %arg0, %c0_i32, %c0_i32_0 : i32, i32, i32
  }
  func.func @transform_2(%arg0: i32) -> (i32, i32) {
    %c0_i32 = arith.constant 0 : i32
    %c0_i32_0 = arith.constant 0 : i32
    %c0_i32_1 = arith.constant 0 : i32
    return %c0_i32, %c0_i32_0 : i32, i32
  }
  func.func @transform_3(%arg0: i32) -> (i32, i32) {
    %c0_i32 = arith.constant 0 : i32
    %c0_i32_0 = arith.constant 0 : i32
    %c0_i32_1 = arith.constant 0 : i32
    return %c0_i32, %c0_i32_0 : i32, i32
  }
  func.func @transform_4(%arg0: i32) -> (i32, i32) {
    %c0_i32 = arith.constant 0 : i32
    %c0_i32_0 = arith.constant 0 : i32
    %c0_i32_1 = arith.constant 0 : i32
    return %c0_i32, %c0_i32_0 : i32, i32
  }
  func.func @transform_5(%arg0: i32) -> (i32, i32) {
    %c0_i32 = arith.constant 0 : i32
    %c0_i32_0 = arith.constant 0 : i32
    %c0_i32_1 = arith.constant 0 : i32
    return %c0_i32, %c0_i32_0 : i32, i32
  }
  func.func @transform_6(%arg0: i32) -> (i32, i32) {
    %c0_i32 = arith.constant 0 : i32
    %c0_i32_0 = arith.constant 0 : i32
    %c0_i32_1 = arith.constant 0 : i32
    return %c0_i32, %c0_i32_0 : i32, i32
  }
  func.func @transform_7(%arg0: i32) -> (i32, i32) {
    %c0_i32 = arith.constant 0 : i32
    %c0_i32_0 = arith.constant 0 : i32
    %c0_i32_1 = arith.constant 0 : i32
    return %c0_i32, %c0_i32_0 : i32, i32
  }
  func.func @transform_8(%arg0: i32) -> (i32, i32) {
    %c0_i32 = arith.constant 0 : i32
    %c0_i32_0 = arith.constant 0 : i32
    %c0_i32_1 = arith.constant 0 : i32
    return %c0_i32, %c0_i32_0 : i32, i32
  }
  func.func @transform_9(%arg0: i32) -> (i32, i32) {
    %c0_i32 = arith.constant 0 : i32
    %c0_i32_0 = arith.constant 0 : i32
    %c0_i32_1 = arith.constant 0 : i32
    return %c0_i32, %c0_i32_0 : i32, i32
  }
  func.func @transform_10(%arg0: i32) -> (i32, i32) {
    %c0_i32 = arith.constant 0 : i32
    %c0_i32_0 = arith.constant 0 : i32
    %c0_i32_1 = arith.constant 0 : i32
    return %c0_i32, %c0_i32_0 : i32, i32
  }
  func.func @transform_11(%arg0: i32) -> (i32, i32) {
    %c0_i32 = arith.constant 0 : i32
    %c0_i32_0 = arith.constant 0 : i32
    %c0_i32_1 = arith.constant 0 : i32
    return %c0_i32, %c0_i32_0 : i32, i32
  }
  func.func @transform_12(%arg0: i32) -> (i32, i32) {
    %c0_i32 = arith.constant 0 : i32
    %c0_i32_0 = arith.constant 0 : i32
    %c0_i32_1 = arith.constant 0 : i32
    return %c0_i32, %c0_i32_0 : i32, i32
  }
  func.func @transform_13(%arg0: i32) -> (i32, i32) {
    %c0_i32 = arith.constant 0 : i32
    %c0_i32_0 = arith.constant 0 : i32
    %c0_i32_1 = arith.constant 0 : i32
    return %c0_i32, %c0_i32_0 : i32, i32
  }
  func.func @transform_14(%arg0: i32) -> (i32, i32) {
    %c0_i32 = arith.constant 0 : i32
    %c0_i32_0 = arith.constant 0 : i32
    %c0_i32_1 = arith.constant 0 : i32
    return %c0_i32, %c0_i32_0 : i32, i32
  }
  func.func @transform_15(%arg0: i32) -> (i32, i32) {
    %c0_i32 = arith.constant 0 : i32
    %c0_i32_0 = arith.constant 0 : i32
    %c0_i32_1 = arith.constant 0 : i32
    return %c0_i32, %c0_i32_0 : i32, i32
  }
  func.func @transform_16(%arg0: i32) -> (i32, i32) {
    %c0_i32 = arith.constant 0 : i32
    %c0_i32_0 = arith.constant 0 : i32
    %c0_i32_1 = arith.constant 0 : i32
    return %c0_i32, %c0_i32_0 : i32, i32
  }
  func.func @transform_17(%arg0: i32) -> (i32, i32) {
    %c0_i32 = arith.constant 0 : i32
    %c0_i32_0 = arith.constant 0 : i32
    %c0_i32_1 = arith.constant 0 : i32
    return %c0_i32, %c0_i32_0 : i32, i32
  }
  func.func @transform_18(%arg0: i32) -> (i32, i32) {
    %c0_i32 = arith.constant 0 : i32
    %c0_i32_0 = arith.constant 0 : i32
    %c0_i32_1 = arith.constant 0 : i32
    return %c0_i32, %c0_i32_0 : i32, i32
  }
  func.func @transform_19(%arg0: i32) -> (i32, i32) {
    %c0_i32 = arith.constant 0 : i32
    %c0_i32_0 = arith.constant 0 : i32
    %c0_i32_1 = arith.constant 0 : i32
    return %c0_i32, %c0_i32_0 : i32, i32
  }
  func.func @transform_20(%arg0: i32) -> (i32, i32) {
    %c0_i32 = arith.constant 0 : i32
    %c0_i32_0 = arith.constant 0 : i32
    %c0_i32_1 = arith.constant 0 : i32
    return %c0_i32, %c0_i32_0 : i32, i32
  }
  func.func @transform_21(%arg0: i32) -> (i32, i32) {
    %c0_i32 = arith.constant 0 : i32
    %c0_i32_0 = arith.constant 0 : i32
    %c0_i32_1 = arith.constant 0 : i32
    return %c0_i32, %c0_i32_0 : i32, i32
  }
  func.func @transform_22(%arg0: i32) -> (i32, i32) {
    %c0_i32 = arith.constant 0 : i32
    %c0_i32_0 = arith.constant 0 : i32
    %c0_i32_1 = arith.constant 0 : i32
    return %c0_i32, %c0_i32_0 : i32, i32
  }
  func.func @transform_23(%arg0: i32) -> (i32, i32) {
    %c0_i32 = arith.constant 0 : i32
    %c0_i32_0 = arith.constant 0 : i32
    %c0_i32_1 = arith.constant 0 : i32
    return %c0_i32, %c0_i32_0 : i32, i32
  }
  func.func @transform_24(%arg0: i32) -> (i32, i32) {
    %c0_i32 = arith.constant 0 : i32
    %c0_i32_0 = arith.constant 0 : i32
    %c0_i32_1 = arith.constant 0 : i32
    return %c0_i32, %c0_i32_0 : i32, i32
  }
  func.func @transform_25(%arg0: i32) -> (i32, i32) {
    %c0_i32 = arith.constant 0 : i32
    %c0_i32_0 = arith.constant 0 : i32
    %c0_i32_1 = arith.constant 0 : i32
    return %c0_i32, %c0_i32_0 : i32, i32
  }
  func.func @transform_26(%arg0: i32) -> (i32, i32) {
    %c0_i32 = arith.constant 0 : i32
    %c0_i32_0 = arith.constant 0 : i32
    %c0_i32_1 = arith.constant 0 : i32
    return %c0_i32, %c0_i32_0 : i32, i32
  }
  func.func @transform_27(%arg0: i32) -> (i32, i32) {
    %c0_i32 = arith.constant 0 : i32
    %c0_i32_0 = arith.constant 0 : i32
    %c0_i32_1 = arith.constant 0 : i32
    return %c0_i32, %c0_i32_0 : i32, i32
  }
  func.func @transform_28(%arg0: i32) -> (i32, i32) {
    %c0_i32 = arith.constant 0 : i32
    %c0_i32_0 = arith.constant 0 : i32
    %c0_i32_1 = arith.constant 0 : i32
    return %c0_i32, %c0_i32_0 : i32, i32
  }
  func.func @transform_29(%arg0: i32) -> (i32, i32) {
    %c0_i32 = arith.constant 0 : i32
    %c0_i32_0 = arith.constant 0 : i32
    %c0_i32_1 = arith.constant 0 : i32
    return %c0_i32, %c0_i32_0 : i32, i32
  }
  func.func @transform_30(%arg0: i32) -> (i32, i32) {
    %c0_i32 = arith.constant 0 : i32
    %c0_i32_0 = arith.constant 0 : i32
    %c0_i32_1 = arith.constant 0 : i32
    return %c0_i32, %c0_i32_0 : i32, i32
  }
  func.func @transform_31(%arg0: i32) -> (i32, i32) {
    %c0_i32 = arith.constant 0 : i32
    %c0_i32_0 = arith.constant 0 : i32
    %c0_i32_1 = arith.constant 0 : i32
    return %c0_i32, %c0_i32_0 : i32, i32
  }
  func.func @transform_32(%arg0: i32) -> (i32, i32) {
    %c0_i32 = arith.constant 0 : i32
    %c0_i32_0 = arith.constant 0 : i32
    %c0_i32_1 = arith.constant 0 : i32
    return %c0_i32, %c0_i32_0 : i32, i32
  }
  func.func @transform_33(%arg0: i32) -> (i32, i32) {
    %c0_i32 = arith.constant 0 : i32
    %c0_i32_0 = arith.constant 0 : i32
    %c0_i32_1 = arith.constant 0 : i32
    return %c0_i32, %c0_i32_0 : i32, i32
  }
  func.func @transform_34(%arg0: i32) -> (i32, i32) {
    %c0_i32 = arith.constant 0 : i32
    %c0_i32_0 = arith.constant 0 : i32
    %c0_i32_1 = arith.constant 0 : i32
    return %c0_i32, %c0_i32_0 : i32, i32
  }
  func.func @transform_35(%arg0: i32) -> (i32, i32) {
    %c0_i32 = arith.constant 0 : i32
    %c0_i32_0 = arith.constant 0 : i32
    %c0_i32_1 = arith.constant 0 : i32
    return %c0_i32, %c0_i32_0 : i32, i32
  }
  func.func @transform_36(%arg0: i32) -> (i32, i32) {
    %c0_i32 = arith.constant 0 : i32
    %c0_i32_0 = arith.constant 0 : i32
    %c0_i32_1 = arith.constant 0 : i32
    return %c0_i32, %c0_i32_0 : i32, i32
  }
  func.func @transform_37(%arg0: i32) -> (i32, i32) {
    %c0_i32 = arith.constant 0 : i32
    %c0_i32_0 = arith.constant 0 : i32
    %c0_i32_1 = arith.constant 0 : i32
    return %c0_i32, %c0_i32_0 : i32, i32
  }
  func.func @transform_38(%arg0: i32) -> (i32, i32) {
    %c0_i32 = arith.constant 0 : i32
    %c0_i32_0 = arith.constant 0 : i32
    %c0_i32_1 = arith.constant 0 : i32
    return %c0_i32, %c0_i32_0 : i32, i32
  }
  func.func @transform_39(%arg0: i32) -> (i32, i32) {
    %c0_i32 = arith.constant 0 : i32
    %c0_i32_0 = arith.constant 0 : i32
    %c0_i32_1 = arith.constant 0 : i32
    return %c0_i32, %c0_i32_0 : i32, i32
  }
  func.func @transform_40(%arg0: i32) -> (i32, i32) {
    %c0_i32 = arith.constant 0 : i32
    %c0_i32_0 = arith.constant 0 : i32
    %c0_i32_1 = arith.constant 0 : i32
    return %c0_i32, %c0_i32_0 : i32, i32
  }
  func.func @transform_41(%arg0: i32) -> (i32, i32) {
    %c0_i32 = arith.constant 0 : i32
    %c0_i32_0 = arith.constant 0 : i32
    %c0_i32_1 = arith.constant 0 : i32
    return %c0_i32, %c0_i32_0 : i32, i32
  }
  func.func @transform_42(%arg0: i32) -> (i32, i32) {
    %c0_i32 = arith.constant 0 : i32
    %c0_i32_0 = arith.constant 0 : i32
    %c0_i32_1 = arith.constant 0 : i32
    return %c0_i32, %c0_i32_0 : i32, i32
  }
  func.func @transform_43(%arg0: i32) -> (i32, i32) {
    %c0_i32 = arith.constant 0 : i32
    %c0_i32_0 = arith.constant 0 : i32
    %c0_i32_1 = arith.constant 0 : i32
    return %c0_i32, %c0_i32_0 : i32, i32
  }
  func.func @transform_44(%arg0: i32) -> (i32, i32, i32) {
    %c0_i32 = arith.constant 0 : i32
    %c0_i32_0 = arith.constant 0 : i32
    %c0_i32_1 = arith.constant 0 : i32
    return %arg0, %c0_i32, %c0_i32_0 : i32, i32, i32
  }
}

</mosaic_0001>

<llo_original>
// kernel: tpu_custom_call.1
$region0: #{tpu_custom_call.1}
  #allocation0 [shape = 'u32[]', space=smem, size = 0x4, offset = 0x4, fixed_abs, tag = 'smem constant byte address 0x4 - core index']
  #allocation1 [shape = 'u32[72,128]{1,0:T(1,128)}', space=vmem, size = 0x9000, scoped, tag = 'internal scratch']
  %s0 = inlined_call_operand.smem [shape: u32[45], index: -1, kind: input, shape index: {}]
  %s1 = sld [smem:[%s0]]
  %s2 = scalar_lea.smem %s0, 1
  %s3 = sld [smem:[%s2]]
  %s4 = scalar_lea.smem %s0, 2
  %s5 = sld [smem:[%s4]]
  %s6 = scalar_lea.smem %s0, 3
  %s7 = sld [smem:[%s6]]
  %s8 = scalar_lea.smem %s0, 4
  %s9 = sld [smem:[%s8]]
  %s10 = scalar_lea.smem %s0, 5
  %s11 = sld [smem:[%s10]]
  %s12 = scalar_lea.smem %s0, 6
  %s13 = sld [smem:[%s12]]
  %s14 = scalar_lea.smem %s0, 7
  %s15 = sld [smem:[%s14]]
  %s16 = scalar_lea.smem %s0, 8
  %s17 = sld [smem:[%s16]]
  %s18 = scalar_lea.smem %s0, 9
  %s19 = sld [smem:[%s18]]
  %s20 = scalar_lea.smem %s0, 10
  %s21 = sld [smem:[%s20]]
  %s22 = scalar_lea.smem %s0, 11
  %s23 = sld [smem:[%s22]]
  %s24 = scalar_lea.smem %s0, 12
  %s25 = sld [smem:[%s24]]
  %s26 = scalar_lea.smem %s0, 13
  %s27 = sld [smem:[%s26]]
  %s28 = scalar_lea.smem %s0, 14
  %s29 = sld [smem:[%s28]]
  %s30 = scalar_lea.smem %s0, 15
  %s31 = sld [smem:[%s30]]
  %s32 = scalar_lea.smem %s0, 16
  %s33 = sld [smem:[%s32]]
  %s34 = scalar_lea.smem %s0, 17
  %s35 = sld [smem:[%s34]]
  %s36 = scalar_lea.smem %s0, 18
  %s37 = sld [smem:[%s36]]
  %s38 = scalar_lea.smem %s0, 19
  %s39 = sld [smem:[%s38]]
  %s40 = scalar_lea.smem %s0, 20
  %s41 = sld [smem:[%s40]]
  %s42 = scalar_lea.smem %s0, 21
  %s43 = sld [smem:[%s42]]
  %s44 = scalar_lea.smem %s0, 22
  %s45 = sld [smem:[%s44]]
  %s46 = scalar_lea.smem %s0, 23
  %s47 = sld [smem:[%s46]]
  %s48 = scalar_lea.smem %s0, 24
  %s49 = sld [smem:[%s48]]
  %s50 = scalar_lea.smem %s0, 25
  %s51 = sld [smem:[%s50]]
  %s52 = scalar_lea.smem %s0, 26
  %s53 = sld [smem:[%s52]]
  %s54 = scalar_lea.smem %s0, 27
  %s55 = sld [smem:[%s54]]
  %s56 = scalar_lea.smem %s0, 28
  %s57 = sld [smem:[%s56]]
  %s58 = scalar_lea.smem %s0, 29
  %s59 = sld [smem:[%s58]]
  %s60 = scalar_lea.smem %s0, 30
  %s61 = sld [smem:[%s60]]
  %s62 = scalar_lea.smem %s0, 31
  %s63 = sld [smem:[%s62]]
  %s64 = scalar_lea.smem %s0, 32
  %s65 = sld [smem:[%s64]]
  %s66 = scalar_lea.smem %s0, 33
  %s67 = sld [smem:[%s66]]
  %s68 = scalar_lea.smem %s0, 34
  %s69 = sld [smem:[%s68]]
  %s70 = scalar_lea.smem %s0, 35
  %s71 = sld [smem:[%s70]]
  %s72 = scalar_lea.smem %s0, 36
  %s73 = sld [smem:[%s72]]
  %s74 = scalar_lea.smem %s0, 37
  %s75 = sld [smem:[%s74]]
  %s76 = scalar_lea.smem %s0, 38
  %s77 = sld [smem:[%s76]]
  %s78 = scalar_lea.smem %s0, 39
  %s79 = sld [smem:[%s78]]
  %s80 = scalar_lea.smem %s0, 40
  %s81 = sld [smem:[%s80]]
  %s82 = scalar_lea.smem %s0, 41
  %s83 = sld [smem:[%s82]]
  %s84 = scalar_lea.smem %s0, 42
  %s85 = sld [smem:[%s84]]
  %s86 = scalar_lea.smem %s0, 43
  %s87 = sld [smem:[%s86]]
  %s88 = scalar_lea.smem %s0, 44
  %s89 = sld [smem:[%s88]]
  %s90 = sld [smem:[#allocation0]]
  $region269: #{tpu_custom_call.1} parent=0
    _
  %s92 = ssub.s32 1, %s90
  %s93 = scalar_select 0, %s92, %s90
  $region1: #{tpu_custom_call.1} parent=0
    #allocation2 [shape = 'u8[16384]{0}', space=vmem, size = 0x4000, scoped, tag = 'input window, operand 12, single buffered']
    #allocation3 [shape = 's32[2]{0}', space=sflag, size = 0x8, scoped, tag = 'scoped memory for tpu_custom_call.1']
    #allocation4 [shape = 's32[2]{0}', space=sflag, size = 0x8, scoped, tag = 'scoped memory for tpu_custom_call.1']
    #allocation5 [shape = 'u8[16384]{0}', space=vmem, size = 0x4000, scoped, tag = 'input window, operand 16, single buffered']
    #allocation6 [shape = 's32[1]{0}', space=sflag, size = 0x4, scoped, tag = 'scoped memory for tpu_custom_call.1']
    #allocation7 [shape = 'u8[16384]{0}', space=vmem, size = 0x4000, scoped, tag = 'input window, operand 22, single buffered']
    #allocation8 [shape = 'u8[16384]{0}', space=vmem, size = 0x4000, scoped, tag = 'input window, operand 24, single buffered']
    #allocation9 [shape = 's32[1]{0}', space=sflag, size = 0x4, scoped, tag = 'scoped memory for tpu_custom_call.1']
    #allocation10 [shape = 'u8[512]{0}', space=vmem, size = 0x400, scoped, tag = 'input window, operand 26, single buffered']
    #allocation11 [shape = 'u8[512]{0}', space=vmem, size = 0x400, scoped, tag = 'input window, operand 27, single buffered']
    #allocation12 [shape = 's32[1]{0}', space=sflag, size = 0x4, scoped, tag = 'scoped memory for tpu_custom_call.1']
    #allocation13 [shape = 'u8[16384]{0}', space=vmem, size = 0x4000, scoped, tag = 'input window, operand 28, single buffered']
    #allocation14 [shape = 'u8[512]{0}', space=vmem, size = 0x400, scoped, tag = 'input window, operand 29, single buffered']
    #allocation15 [shape = 's32[1]{0}', space=sflag, size = 0x4, scoped, tag = 'scoped memory for tpu_custom_call.1']
    #allocation16 [shape = 'u8[16384]{0}', space=vmem, size = 0x4000, scoped, tag = 'input window, operand 30, single buffered']
    #allocation17 [shape = 'u8[512]{0}', space=vmem, size = 0x400, scoped, tag = 'input window, operand 31, single buffered']
    #allocation18 [shape = 's32[1]{0}', space=sflag, size = 0x4, scoped, tag = 'scoped memory for tpu_custom_call.1']
    #allocation19 [shape = 'u8[16384]{0}', space=vmem, size = 0x4000, scoped, tag = 'input window, operand 32, single buffered']
    #allocation20 [shape = 'u8[512]{0}', space=vmem, size = 0x400, scoped, tag = 'input window, operand 33, single buffered']
    #allocation21 [shape = 's32[1]{0}', space=sflag, size = 0x4, scoped, tag = 'scoped memory for tpu_custom_call.1']
    #allocation22 [shape = 'u8[512]{0}', space=vmem, size = 0x400, scoped, tag = 'input window, operand 34, single buffered']
    #allocation23 [shape = 'u8[512]{0}', space=vmem, size = 0x400, scoped, tag = 'input window, operand 35, single buffered']
    #allocation24 [shape = 's32[1]{0}', space=sflag, size = 0x4, scoped, tag = 'scoped memory for tpu_custom_call.1']
    #allocation25 [shape = 'u8[16384]{0}', space=vmem, size = 0x4000, scoped, tag = 'input window, operand 36, single buffered']
    #allocation26 [shape = 'u8[16384]{0}', space=vmem, size = 0x4000, scoped, tag = 'output window, operand 0']
    %94 = vsyncpa [#allocation3], 0
    %95 = vsyncpa [#allocation6], 0
    %96 = vsyncpa [#allocation9], 0
    %97 = vsyncpa [#allocation12], 0
    %98 = vsyncpa [#allocation15], 0
    %99 = vsyncpa [#allocation18], 0
    %100 = vsyncpa [#allocation21], 0
    %101 = vsyncpa [#allocation24], 0
    %102 = vsyncpa [#allocation4], 0
    %s103 = scalar_lea.sflag [#allocation4], 1
    %104 = vsyncpa %s103, 0
    loop: start=0, step=1, limit=4
    $region2: #{tpu_custom_call.1} parent=1 // loop_pre_header
      _
    $region3: #{tpu_custom_call.1} parent=1 // loop_header
      %s106 = sphi 0, %s110
      %p107 = scmp.ge.s32.totalorder %s106, 4
      %s116 = sphi 0, %s118
      %s119 = sphi 0, %s116
      %s120 = sphi 0, %s119
      %s136 = sphi 0, %s120
      %s142 = sphi 0, %s144
      %s145 = sphi 0, %s142
      %s146 = sphi 0, %s145
      %s162 = sphi 0, %s146
      %s166 = sphi 0, %s166
      %s168 = sphi 0, %s166
      %s169 = sphi 0, %s168
      %s183 = sphi 0, %s169
      %s187 = sphi 0, %s187
      %s189 = sphi 0, %s187
      %s190 = sphi 0, %s189
      %s204 = sphi 0, %s190
      %s208 = sphi 0, %s208
      %s210 = sphi 0, %s208
      %s211 = sphi 0, %s210
      %s225 = sphi 0, %s211
      %s229 = sphi 0, %s229
      %s231 = sphi 0, %s229
      %s232 = sphi 0, %s231
      %s246 = sphi 0, %s232
      %s250 = sphi 0, %s250
      %s252 = sphi 0, %s250
      %s253 = sphi 0, %s252
      %s267 = sphi 0, %s253
      %s271 = sphi 0, %s271
      %s273 = sphi 0, %s271
      %s274 = sphi 0, %s273
      %s288 = sphi 0, %s274
      %s292 = sphi 0, %s292
      %s294 = sphi 0, %s292
      %s295 = sphi 0, %s294
      %s309 = sphi 0, %s295
      %s313 = sphi 0, %s313
      %s315 = sphi 0, %s313
      %s316 = sphi 0, %s315
      %s330 = sphi 0, %s316
      %s334 = sphi 0, %s334
      %s336 = sphi 0, %s334
      %s337 = sphi 0, %s336
      %s351 = sphi 0, %s337
      %s355 = sphi 0, %s355
      %s357 = sphi 0, %s355
      %s358 = sphi 0, %s357
      %s372 = sphi 0, %s358
      %s376 = sphi 0, %s376
      %s378 = sphi 0, %s376
      %s379 = sphi 0, %s378
      %s393 = sphi 0, %s379
      %s397 = sphi 0, %s397
      %s399 = sphi 0, %s397
      %s400 = sphi 0, %s399
      %s414 = sphi 0, %s400
      %s418 = sphi 0, %s418
      %s420 = sphi 0, %s418
      %s421 = sphi 0, %s420
      %s435 = sphi 0, %s421
      %s439 = sphi 0, %s439
      %s441 = sphi 0, %s439
      %s442 = sphi 0, %s441
      %s456 = sphi 0, %s442
      %s460 = sphi 0, %s460
      %s462 = sphi 0, %s460
      %s463 = sphi 0, %s462
      %s477 = sphi 0, %s463
      %s481 = sphi 0, %s481
      %s483 = sphi 0, %s481
      %s484 = sphi 0, %s483
      %s498 = sphi 0, %s484
      %s502 = sphi 0, %s502
      %s504 = sphi 0, %s502
      %s505 = sphi 0, %s504
      %s519 = sphi 0, %s505
      %s523 = sphi 0, %s523
      %s525 = sphi 0, %s523
      %s526 = sphi 0, %s525
      %s540 = sphi 0, %s526
      %s544 = sphi 0, %s544
      %s546 = sphi 0, %s544
      %s547 = sphi 0, %s546
      %s561 = sphi 0, %s547
      %s565 = sphi 0, %s565
      %s567 = sphi 0, %s565
      %s568 = sphi 0, %s567
      %s582 = sphi 0, %s568
      %s586 = sphi 0, %s586
      %s588 = sphi 0, %s586
      %s589 = sphi 0, %s588
      %s603 = sphi 0, %s589
      %s607 = sphi 0, %s607
      %s609 = sphi 0, %s607
      %s610 = sphi 0, %s609
      %s624 = sphi 0, %s610
      %s628 = sphi 0, %s628
      %s630 = sphi 0, %s628
      %s631 = sphi 0, %s630
      %s645 = sphi 0, %s631
      %s649 = sphi 0, %s649
      %s651 = sphi 0, %s649
      %s652 = sphi 0, %s651
      %s666 = sphi 0, %s652
      %s670 = sphi 0, %s670
      %s672 = sphi 0, %s670
      %s673 = sphi 0, %s672
      %s687 = sphi 0, %s673
      %s691 = sphi 0, %s691
      %s693 = sphi 0, %s691
      %s694 = sphi 0, %s693
      %s708 = sphi 0, %s694
      %s712 = sphi 0, %s712
      %s714 = sphi 0, %s712
      %s715 = sphi 0, %s714
      %s729 = sphi 0, %s715
      %s733 = sphi 0, %s733
      %s735 = sphi 0, %s733
      %s736 = sphi 0, %s735
      %s750 = sphi 0, %s736
      %s754 = sphi 0, %s754
      %s756 = sphi 0, %s754
      %s757 = sphi 0, %s756
      %s771 = sphi 0, %s757
      %s775 = sphi 0, %s775
      %s777 = sphi 0, %s775
      %s778 = sphi 0, %s777
      %s792 = sphi 0, %s778
      %s796 = sphi 0, %s796
      %s798 = sphi 0, %s796
      %s799 = sphi 0, %s798
      %s813 = sphi 0, %s799
      %s817 = sphi 0, %s817
      %s819 = sphi 0, %s817
      %s820 = sphi 0, %s819
      %s834 = sphi 0, %s820
      %s838 = sphi 0, %s838
      %s840 = sphi 0, %s838
      %s841 = sphi 0, %s840
      %s855 = sphi 0, %s841
      %s859 = sphi 0, %s859
      %s861 = sphi 0, %s859
      %s862 = sphi 0, %s861
      %s876 = sphi 0, %s862
      %s880 = sphi 0, %s880
      %s882 = sphi 0, %s880
      %s883 = sphi 0, %s882
      %s897 = sphi 0, %s883
      %s901 = sphi 0, %s901
      %s903 = sphi 0, %s901
      %s904 = sphi 0, %s903
      %s918 = sphi 0, %s904
      %s922 = sphi 0, %s922
      %s924 = sphi 0, %s922
      %s925 = sphi 0, %s924
      %s939 = sphi 0, %s925
      %s943 = sphi 0, %s943
      %s945 = sphi 0, %s943
      %s946 = sphi 0, %s945
      %s960 = sphi 0, %s946
      %s964 = sphi 0, %s964
      %s966 = sphi 0, %s964
      %s967 = sphi 0, %s966
      %s981 = sphi 0, %s967
      %s985 = sphi 0, %s985
      %s987 = sphi 0, %s985
      %s988 = sphi 0, %s987
      %s1002 = sphi 0, %s988
      %s1006 = sphi 0, %s1006
      %s1008 = sphi 0, %s1006
      %s1009 = sphi 0, %s1008
      %s1023 = sphi 0, %s1009
      %s1027 = sphi 0, %s1027
      %s1029 = sphi 0, %s1027
      %s1030 = sphi 0, %s1029
      %s1044 = sphi 0, %s1030
      %s1050 = sphi 0, %s1052
      %s1053 = sphi 0, %s1050
      %s1054 = sphi 0, %s1053
      %s1070 = sphi 0, %s1054
    $region4: #{tpu_custom_call.1} parent=1 // loop_header_branch
      %109 = sbr.rel (%p107) target = $region8
    $region5: #{tpu_custom_call.1} parent=1 // loop_body
      %s111 = ssub.s32 %s106, 1
      %s112 = ssub.s32 %s106, 2
      %s113 = sadd.s32 %s106, 1
      %s114 = ssub.s32 %s106, %s113
      %p115 = scmp.eq.s32.totalorder %s114, 0
      %s117 = sadd.s32 %s116, 1
      %s118 = scalar_select %p115, %s116, %s117
      %p121 = pneg %p115
      %p122 = scmp.eq.s32.totalorder %s106, 1
      %p123 = por %p121, %p122
      %p124 = scmp.ne.s32.totalorder %s116, %s119
      %p125 = scmp.eq.s32.totalorder %s106, 0
      %p126 = por %p124, %p125
      %p127 = scmp.ne.s32.totalorder %s116, %s119
      %p128 = scmp.eq.s32.totalorder %s111, 1
      %p129 = por %p127, %p128
      %p130 = scmp.ne.s32.totalorder %s119, %s120
      %p131 = scmp.eq.s32.totalorder %s111, 0
      %p132 = por %p130, %p131
      %p133 = scmp.ne.s32.totalorder %s119, %s120
      %p134 = scmp.eq.s32.totalorder %s112, 1
      %p135 = por %p133, %p134
      %p137 = scmp.ne.s32.totalorder %s120, %s136
      %p138 = scmp.eq.s32.totalorder %s112, 0
      %p139 = por %p137, %p138
      %s140 = ssub.s32 %s106, %s113
      %p141 = scmp.eq.s32.totalorder %s140, 0
      %s143 = sadd.s32 %s142, 1
      %s144 = scalar_select %p141, %s142, %s143
      %p147 = pneg %p141
      %p148 = scmp.eq.s32.totalorder %s106, 1
      %p149 = por %p147, %p148
      %p150 = scmp.ne.s32.totalorder %s142, %s145
      %p151 = scmp.eq.s32.totalorder %s106, 0
      %p152 = por %p150, %p151
      %p153 = scmp.ne.s32.totalorder %s142, %s145
      %p154 = scmp.eq.s32.totalorder %s111, 1
      %p155 = por %p153, %p154
      %p156 = scmp.ne.s32.totalorder %s145, %s146
      %p157 = scmp.eq.s32.totalorder %s111, 0
      %p158 = por %p156, %p157
      %p159 = scmp.ne.s32.totalorder %s145, %s146
      %p160 = scmp.eq.s32.totalorder %s112, 1
      %p161 = por %p159, %p160
      %p163 = scmp.ne.s32.totalorder %s146, %s162
      %p164 = scmp.eq.s32.totalorder %s112, 0
      %p165 = por %p163, %p164
      %s167 = sadd.s32 %s166, 1
      %p170 = scmp.eq.s32.totalorder %s106, 1
      %p171 = scmp.ne.s32.totalorder %s166, %s168
      %p172 = scmp.eq.s32.totalorder %s106, 0
      %p173 = por %p171, %p172
      %p174 = scmp.ne.s32.totalorder %s166, %s168
      %p175 = scmp.eq.s32.totalorder %s111, 1
      %p176 = por %p174, %p175
      %p177 = scmp.ne.s32.totalorder %s168, %s169
      %p178 = scmp.eq.s32.totalorder %s111, 0
      %p179 = por %p177, %p178
      %p180 = scmp.ne.s32.totalorder %s168, %s169
      %p181 = scmp.eq.s32.totalorder %s112, 1
      %p182 = por %p180, %p181
      %p184 = scmp.ne.s32.totalorder %s169, %s183
      %p185 = scmp.eq.s32.totalorder %s112, 0
      %p186 = por %p184, %p185
      %s188 = sadd.s32 %s187, 1
      %p191 = scmp.eq.s32.totalorder %s106, 1
      %p192 = scmp.ne.s32.totalorder %s187, %s189
      %p193 = scmp.eq.s32.totalorder %s106, 0
      %p194 = por %p192, %p193
      %p195 = scmp.ne.s32.totalorder %s187, %s189
      %p196 = scmp.eq.s32.totalorder %s111, 1
      %p197 = por %p195, %p196
      %p198 = scmp.ne.s32.totalorder %s189, %s190
      %p199 = scmp.eq.s32.totalorder %s111, 0
      %p200 = por %p198, %p199
      %p201 = scmp.ne.s32.totalorder %s189, %s190
      %p202 = scmp.eq.s32.totalorder %s112, 1
      %p203 = por %p201, %p202
      %p205 = scmp.ne.s32.totalorder %s190, %s204
      %p206 = scmp.eq.s32.totalorder %s112, 0
      %p207 = por %p205, %p206
      %s209 = sadd.s32 %s208, 1
      %p212 = scmp.eq.s32.totalorder %s106, 1
      %p213 = scmp.ne.s32.totalorder %s208, %s210
      %p214 = scmp.eq.s32.totalorder %s106, 0
      %p215 = por %p213, %p214
      %p216 = scmp.ne.s32.totalorder %s208, %s210
      %p217 = scmp.eq.s32.totalorder %s111, 1
      %p218 = por %p216, %p217
      %p219 = scmp.ne.s32.totalorder %s210, %s211
      %p220 = scmp.eq.s32.totalorder %s111, 0
      %p221 = por %p219, %p220
      %p222 = scmp.ne.s32.totalorder %s210, %s211
      %p223 = scmp.eq.s32.totalorder %s112, 1
      %p224 = por %p222, %p223
      %p226 = scmp.ne.s32.totalorder %s211, %s225
      %p227 = scmp.eq.s32.totalorder %s112, 0
      %p228 = por %p226, %p227
      %s230 = sadd.s32 %s229, 1
      %p233 = scmp.eq.s32.totalorder %s106, 1
      %p234 = scmp.ne.s32.totalorder %s229, %s231
      %p235 = scmp.eq.s32.totalorder %s106, 0
      %p236 = por %p234, %p235
      %p237 = scmp.ne.s32.totalorder %s229, %s231
      %p238 = scmp.eq.s32.totalorder %s111, 1
      %p239 = por %p237, %p238
      %p240 = scmp.ne.s32.totalorder %s231, %s232
      %p241 = scmp.eq.s32.totalorder %s111, 0
      %p242 = por %p240, %p241
      %p243 = scmp.ne.s32.totalorder %s231, %s232
      %p244 = scmp.eq.s32.totalorder %s112, 1
      %p245 = por %p243, %p244
      %p247 = scmp.ne.s32.totalorder %s232, %s246
      %p248 = scmp.eq.s32.totalorder %s112, 0
      %p249 = por %p247, %p248
      %s251 = sadd.s32 %s250, 1
      %p254 = scmp.eq.s32.totalorder %s106, 1
      %p255 = scmp.ne.s32.totalorder %s250, %s252
      %p256 = scmp.eq.s32.totalorder %s106, 0
      %p257 = por %p255, %p256
      %p258 = scmp.ne.s32.totalorder %s250, %s252
      %p259 = scmp.eq.s32.totalorder %s111, 1
      %p260 = por %p258, %p259
      %p261 = scmp.ne.s32.totalorder %s252, %s253
      %p262 = scmp.eq.s32.totalorder %s111, 0
      %p263 = por %p261, %p262
      %p264 = scmp.ne.s32.totalorder %s252, %s253
      %p265 = scmp.eq.s32.totalorder %s112, 1
      %p266 = por %p264, %p265
      %p268 = scmp.ne.s32.totalorder %s253, %s267
      %p269 = scmp.eq.s32.totalorder %s112, 0
      %p270 = por %p268, %p269
      %s272 = sadd.s32 %s271, 1
      %p275 = scmp.eq.s32.totalorder %s106, 1
      %p276 = scmp.ne.s32.totalorder %s271, %s273
      %p277 = scmp.eq.s32.totalorder %s106, 0
      %p278 = por %p276, %p277
      %p279 = scmp.ne.s32.totalorder %s271, %s273
      %p280 = scmp.eq.s32.totalorder %s111, 1
      %p281 = por %p279, %p280
      %p282 = scmp.ne.s32.totalorder %s273, %s274
      %p283 = scmp.eq.s32.totalorder %s111, 0
      %p284 = por %p282, %p283
      %p285 = scmp.ne.s32.totalorder %s273, %s274
      %p286 = scmp.eq.s32.totalorder %s112, 1
      %p287 = por %p285, %p286
      %p289 = scmp.ne.s32.totalorder %s274, %s288
      %p290 = scmp.eq.s32.totalorder %s112, 0
      %p291 = por %p289, %p290
      %s293 = sadd.s32 %s292, 1
      %p296 = scmp.eq.s32.totalorder %s106, 1
      %p297 = scmp.ne.s32.totalorder %s292, %s294
      %p298 = scmp.eq.s32.totalorder %s106, 0
      %p299 = por %p297, %p298
      %p300 = scmp.ne.s32.totalorder %s292, %s294
      %p301 = scmp.eq.s32.totalorder %s111, 1
      %p302 = por %p300, %p301
      %p303 = scmp.ne.s32.totalorder %s294, %s295
      %p304 = scmp.eq.s32.totalorder %s111, 0
      %p305 = por %p303, %p304
      %p306 = scmp.ne.s32.totalorder %s294, %s295
      %p307 = scmp.eq.s32.totalorder %s112, 1
      %p308 = por %p306, %p307
      %p310 = scmp.ne.s32.totalorder %s295, %s309
      %p311 = scmp.eq.s32.totalorder %s112, 0
      %p312 = por %p310, %p311
      %s314 = sadd.s32 %s313, 1
      %p317 = scmp.eq.s32.totalorder %s106, 1
      %p318 = scmp.ne.s32.totalorder %s313, %s315
      %p319 = scmp.eq.s32.totalorder %s106, 0
      %p320 = por %p318, %p319
      %p321 = scmp.ne.s32.totalorder %s313, %s315
      %p322 = scmp.eq.s32.totalorder %s111, 1
      %p323 = por %p321, %p322
      %p324 = scmp.ne.s32.totalorder %s315, %s316
      %p325 = scmp.eq.s32.totalorder %s111, 0
      %p326 = por %p324, %p325
      %p327 = scmp.ne.s32.totalorder %s315, %s316
      %p328 = scmp.eq.s32.totalorder %s112, 1
      %p329 = por %p327, %p328
      %p331 = scmp.ne.s32.totalorder %s316, %s330
      %p332 = scmp.eq.s32.totalorder %s112, 0
      %p333 = por %p331, %p332
      %s335 = sadd.s32 %s334, 1
      %p338 = scmp.eq.s32.totalorder %s106, 1
      %p339 = scmp.ne.s32.totalorder %s334, %s336
      %p340 = scmp.eq.s32.totalorder %s106, 0
      %p341 = por %p339, %p340
      %p342 = scmp.ne.s32.totalorder %s334, %s336
      %p343 = scmp.eq.s32.totalorder %s111, 1
      %p344 = por %p342, %p343
      %p345 = scmp.ne.s32.totalorder %s336, %s337
      %p346 = scmp.eq.s32.totalorder %s111, 0
      %p347 = por %p345, %p346
      %p348 = scmp.ne.s32.totalorder %s336, %s337
      %p349 = scmp.eq.s32.totalorder %s112, 1
      %p350 = por %p348, %p349
      %p352 = scmp.ne.s32.totalorder %s337, %s351
      %p353 = scmp.eq.s32.totalorder %s112, 0
      %p354 = por %p352, %p353
      %s356 = sadd.s32 %s355, 1
      %p359 = scmp.eq.s32.totalorder %s106, 1
      %p360 = scmp.ne.s32.totalorder %s355, %s357
      %p361 = scmp.eq.s32.totalorder %s106, 0
      %p362 = por %p360, %p361
      %p363 = scmp.ne.s32.totalorder %s355, %s357
      %p364 = scmp.eq.s32.totalorder %s111, 1
      %p365 = por %p363, %p364
      %p366 = scmp.ne.s32.totalorder %s357, %s358
      %p367 = scmp.eq.s32.totalorder %s111, 0
      %p368 = por %p366, %p367
      %p369 = scmp.ne.s32.totalorder %s357, %s358
      %p370 = scmp.eq.s32.totalorder %s112, 1
      %p371 = por %p369, %p370
      %p373 = scmp.ne.s32.totalorder %s358, %s372
      %p374 = scmp.eq.s32.totalorder %s112, 0
      %p375 = por %p373, %p374
      %s377 = sadd.s32 %s376, 1
      %p380 = scmp.eq.s32.totalorder %s106, 1
      %p381 = scmp.ne.s32.totalorder %s376, %s378
      %p382 = scmp.eq.s32.totalorder %s106, 0
      %p383 = por %p381, %p382
      %p384 = scmp.ne.s32.totalorder %s376, %s378
      %p385 = scmp.eq.s32.totalorder %s111, 1
      %p386 = por %p384, %p385
      %p387 = scmp.ne.s32.totalorder %s378, %s379
      %p388 = scmp.eq.s32.totalorder %s111, 0
      %p389 = por %p387, %p388
      %p390 = scmp.ne.s32.totalorder %s378, %s379
      %p391 = scmp.eq.s32.totalorder %s112, 1
      %p392 = por %p390, %p391
      %p394 = scmp.ne.s32.totalorder %s379, %s393
      %p395 = scmp.eq.s32.totalorder %s112, 0
      %p396 = por %p394, %p395
      %s398 = sadd.s32 %s397, 1
      %p401 = scmp.eq.s32.totalorder %s106, 1
      %p402 = scmp.ne.s32.totalorder %s397, %s399
      %p403 = scmp.eq.s32.totalorder %s106, 0
      %p404 = por %p402, %p403
      %p405 = scmp.ne.s32.totalorder %s397, %s399
      %p406 = scmp.eq.s32.totalorder %s111, 1
      %p407 = por %p405, %p406
      %p408 = scmp.ne.s32.totalorder %s399, %s400
      %p409 = scmp.eq.s32.totalorder %s111, 0
      %p410 = por %p408, %p409
      %p411 = scmp.ne.s32.totalorder %s399, %s400
      %p412 = scmp.eq.s32.totalorder %s112, 1
      %p413 = por %p411, %p412
      %p415 = scmp.ne.s32.totalorder %s400, %s414
      %p416 = scmp.eq.s32.totalorder %s112, 0
      %p417 = por %p415, %p416
      %s419 = sadd.s32 %s418, 1
      %p422 = scmp.eq.s32.totalorder %s106, 1
      %p423 = scmp.ne.s32.totalorder %s418, %s420
      %p424 = scmp.eq.s32.totalorder %s106, 0
      %p425 = por %p423, %p424
      %p426 = scmp.ne.s32.totalorder %s418, %s420
      %p427 = scmp.eq.s32.totalorder %s111, 1
      %p428 = por %p426, %p427
      %p429 = scmp.ne.s32.totalorder %s420, %s421
      %p430 = scmp.eq.s32.totalorder %s111, 0
      %p431 = por %p429, %p430
      %p432 = scmp.ne.s32.totalorder %s420, %s421
      %p433 = scmp.eq.s32.totalorder %s112, 1
      %p434 = por %p432, %p433
      %p436 = scmp.ne.s32.totalorder %s421, %s435
      %p437 = scmp.eq.s32.totalorder %s112, 0
      %p438 = por %p436, %p437
      %s440 = sadd.s32 %s439, 1
      %p443 = scmp.eq.s32.totalorder %s106, 1
      %p444 = scmp.ne.s32.totalorder %s439, %s441
      %p445 = scmp.eq.s32.totalorder %s106, 0
      %p446 = por %p444, %p445
      %p447 = scmp.ne.s32.totalorder %s439, %s441
      %p448 = scmp.eq.s32.totalorder %s111, 1
      %p449 = por %p447, %p448
      %p450 = scmp.ne.s32.totalorder %s441, %s442
      %p451 = scmp.eq.s32.totalorder %s111, 0
      %p452 = por %p450, %p451
      %p453 = scmp.ne.s32.totalorder %s441, %s442
      %p454 = scmp.eq.s32.totalorder %s112, 1
      %p455 = por %p453, %p454
      %p457 = scmp.ne.s32.totalorder %s442, %s456
      %p458 = scmp.eq.s32.totalorder %s112, 0
      %p459 = por %p457, %p458
      %s461 = sadd.s32 %s460, 1
      %p464 = scmp.eq.s32.totalorder %s106, 1
      %p465 = scmp.ne.s32.totalorder %s460, %s462
      %p466 = scmp.eq.s32.totalorder %s106, 0
      %p467 = por %p465, %p466
      %p468 = scmp.ne.s32.totalorder %s460, %s462
      %p469 = scmp.eq.s32.totalorder %s111, 1
      %p470 = por %p468, %p469
      %p471 = scmp.ne.s32.totalorder %s462, %s463
      %p472 = scmp.eq.s32.totalorder %s111, 0
      %p473 = por %p471, %p472
      %p474 = scmp.ne.s32.totalorder %s462, %s463
      %p475 = scmp.eq.s32.totalorder %s112, 1
      %p476 = por %p474, %p475
      %p478 = scmp.ne.s32.totalorder %s463, %s477
      %p479 = scmp.eq.s32.totalorder %s112, 0
      %p480 = por %p478, %p479
      %s482 = sadd.s32 %s481, 1
      %p485 = scmp.eq.s32.totalorder %s106, 1
      %p486 = scmp.ne.s32.totalorder %s481, %s483
      %p487 = scmp.eq.s32.totalorder %s106, 0
      %p488 = por %p486, %p487
      %p489 = scmp.ne.s32.totalorder %s481, %s483
      %p490 = scmp.eq.s32.totalorder %s111, 1
      %p491 = por %p489, %p490
      %p492 = scmp.ne.s32.totalorder %s483, %s484
      %p493 = scmp.eq.s32.totalorder %s111, 0
      %p494 = por %p492, %p493
      %p495 = scmp.ne.s32.totalorder %s483, %s484
      %p496 = scmp.eq.s32.totalorder %s112, 1
      %p497 = por %p495, %p496
      %p499 = scmp.ne.s32.totalorder %s484, %s498
      %p500 = scmp.eq.s32.totalorder %s112, 0
      %p501 = por %p499, %p500
      %s503 = sadd.s32 %s502, 1
      %p506 = scmp.eq.s32.totalorder %s106, 1
      %p507 = scmp.ne.s32.totalorder %s502, %s504
      %p508 = scmp.eq.s32.totalorder %s106, 0
      %p509 = por %p507, %p508
      %p510 = scmp.ne.s32.totalorder %s502, %s504
      %p511 = scmp.eq.s32.totalorder %s111, 1
      %p512 = por %p510, %p511
      %p513 = scmp.ne.s32.totalorder %s504, %s505
      %p514 = scmp.eq.s32.totalorder %s111, 0
      %p515 = por %p513, %p514
      %p516 = scmp.ne.s32.totalorder %s504, %s505
      %p517 = scmp.eq.s32.totalorder %s112, 1
      %p518 = por %p516, %p517
      %p520 = scmp.ne.s32.totalorder %s505, %s519
      %p521 = scmp.eq.s32.totalorder %s112, 0
      %p522 = por %p520, %p521
      %s524 = sadd.s32 %s523, 1
      %p527 = scmp.eq.s32.totalorder %s106, 1
      %p528 = scmp.ne.s32.totalorder %s523, %s525
      %p529 = scmp.eq.s32.totalorder %s106, 0
      %p530 = por %p528, %p529
      %p531 = scmp.ne.s32.totalorder %s523, %s525
      %p532 = scmp.eq.s32.totalorder %s111, 1
      %p533 = por %p531, %p532
      %p534 = scmp.ne.s32.totalorder %s525, %s526
      %p535 = scmp.eq.s32.totalorder %s111, 0
      %p536 = por %p534, %p535
      %p537 = scmp.ne.s32.totalorder %s525, %s526
      %p538 = scmp.eq.s32.totalorder %s112, 1
      %p539 = por %p537, %p538
      %p541 = scmp.ne.s32.totalorder %s526, %s540
      %p542 = scmp.eq.s32.totalorder %s112, 0
      %p543 = por %p541, %p542
      %s545 = sadd.s32 %s544, 1
      %p548 = scmp.eq.s32.totalorder %s106, 1
      %p549 = scmp.ne.s32.totalorder %s544, %s546
      %p550 = scmp.eq.s32.totalorder %s106, 0
      %p551 = por %p549, %p550
      %p552 = scmp.ne.s32.totalorder %s544, %s546
      %p553 = scmp.eq.s32.totalorder %s111, 1
      %p554 = por %p552, %p553
      %p555 = scmp.ne.s32.totalorder %s546, %s547
      %p556 = scmp.eq.s32.totalorder %s111, 0
      %p557 = por %p555, %p556
      %p558 = scmp.ne.s32.totalorder %s546, %s547
      %p559 = scmp.eq.s32.totalorder %s112, 1
      %p560 = por %p558, %p559
      %p562 = scmp.ne.s32.totalorder %s547, %s561
      %p563 = scmp.eq.s32.totalorder %s112, 0
      %p564 = por %p562, %p563
      %s566 = sadd.s32 %s565, 1
      %p569 = scmp.eq.s32.totalorder %s106, 1
      %p570 = scmp.ne.s32.totalorder %s565, %s567
      %p571 = scmp.eq.s32.totalorder %s106, 0
      %p572 = por %p570, %p571
      %p573 = scmp.ne.s32.totalorder %s565, %s567
      %p574 = scmp.eq.s32.totalorder %s111, 1
      %p575 = por %p573, %p574
      %p576 = scmp.ne.s32.totalorder %s567, %s568
      %p577 = scmp.eq.s32.totalorder %s111, 0
      %p578 = por %p576, %p577
      %p579 = scmp.ne.s32.totalorder %s567, %s568
      %p580 = scmp.eq.s32.totalorder %s112, 1
      %p581 = por %p579, %p580
      %p583 = scmp.ne.s32.totalorder %s568, %s582
      %p584 = scmp.eq.s32.totalorder %s112, 0
      %p585 = por %p583, %p584
      %s587 = sadd.s32 %s586, 1
      %p590 = scmp.eq.s32.totalorder %s106, 1
      %p591 = scmp.ne.s32.totalorder %s586, %s588
      %p592 = scmp.eq.s32.totalorder %s106, 0
      %p593 = por %p591, %p592
      %p594 = scmp.ne.s32.totalorder %s586, %s588
      %p595 = scmp.eq.s32.totalorder %s111, 1
      %p596 = por %p594, %p595
      %p597 = scmp.ne.s32.totalorder %s588, %s589
      %p598 = scmp.eq.s32.totalorder %s111, 0
      %p599 = por %p597, %p598
      %p600 = scmp.ne.s32.totalorder %s588, %s589
      %p601 = scmp.eq.s32.totalorder %s112, 1
      %p602 = por %p600, %p601
      %p604 = scmp.ne.s32.totalorder %s589, %s603
      %p605 = scmp.eq.s32.totalorder %s112, 0
      %p606 = por %p604, %p605
      %s608 = sadd.s32 %s607, 1
      %p611 = scmp.eq.s32.totalorder %s106, 1
      %p612 = scmp.ne.s32.totalorder %s607, %s609
      %p613 = scmp.eq.s32.totalorder %s106, 0
      %p614 = por %p612, %p613
      %p615 = scmp.ne.s32.totalorder %s607, %s609
      %p616 = scmp.eq.s32.totalorder %s111, 1
      %p617 = por %p615, %p616
      %p618 = scmp.ne.s32.totalorder %s609, %s610
      %p619 = scmp.eq.s32.totalorder %s111, 0
      %p620 = por %p618, %p619
      %p621 = scmp.ne.s32.totalorder %s609, %s610
      %p622 = scmp.eq.s32.totalorder %s112, 1
      %p623 = por %p621, %p622
      %p625 = scmp.ne.s32.totalorder %s610, %s624
      %p626 = scmp.eq.s32.totalorder %s112, 0
      %p627 = por %p625, %p626
      %s629 = sadd.s32 %s628, 1
      %p632 = scmp.eq.s32.totalorder %s106, 1
      %p633 = scmp.ne.s32.totalorder %s628, %s630
      %p634 = scmp.eq.s32.totalorder %s106, 0
      %p635 = por %p633, %p634
      %p636 = scmp.ne.s32.totalorder %s628, %s630
      %p637 = scmp.eq.s32.totalorder %s111, 1
      %p638 = por %p636, %p637
      %p639 = scmp.ne.s32.totalorder %s630, %s631
      %p640 = scmp.eq.s32.totalorder %s111, 0
      %p641 = por %p639, %p640
      %p642 = scmp.ne.s32.totalorder %s630, %s631
      %p643 = scmp.eq.s32.totalorder %s112, 1
      %p644 = por %p642, %p643
      %p646 = scmp.ne.s32.totalorder %s631, %s645
      %p647 = scmp.eq.s32.totalorder %s112, 0
      %p648 = por %p646, %p647
      %s650 = sadd.s32 %s649, 1
      %p653 = scmp.eq.s32.totalorder %s106, 1
      %p654 = scmp.ne.s32.totalorder %s649, %s651
      %p655 = scmp.eq.s32.totalorder %s106, 0
      %p656 = por %p654, %p655
      %p657 = scmp.ne.s32.totalorder %s649, %s651
      %p658 = scmp.eq.s32.totalorder %s111, 1
      %p659 = por %p657, %p658
      %p660 = scmp.ne.s32.totalorder %s651, %s652
      %p661 = scmp.eq.s32.totalorder %s111, 0
      %p662 = por %p660, %p661
      %p663 = scmp.ne.s32.totalorder %s651, %s652
      %p664 = scmp.eq.s32.totalorder %s112, 1
      %p665 = por %p663, %p664
      %p667 = scmp.ne.s32.totalorder %s652, %s666
      %p668 = scmp.eq.s32.totalorder %s112, 0
      %p669 = por %p667, %p668
      %s671 = sadd.s32 %s670, 1
      %p674 = scmp.eq.s32.totalorder %s106, 1
      %p675 = scmp.ne.s32.totalorder %s670, %s672
      %p676 = scmp.eq.s32.totalorder %s106, 0
      %p677 = por %p675, %p676
      %p678 = scmp.ne.s32.totalorder %s670, %s672
      %p679 = scmp.eq.s32.totalorder %s111, 1
      %p680 = por %p678, %p679
      %p681 = scmp.ne.s32.totalorder %s672, %s673
      %p682 = scmp.eq.s32.totalorder %s111, 0
      %p683 = por %p681, %p682
      %p684 = scmp.ne.s32.totalorder %s672, %s673
      %p685 = scmp.eq.s32.totalorder %s112, 1
      %p686 = por %p684, %p685
      %p688 = scmp.ne.s32.totalorder %s673, %s687
      %p689 = scmp.eq.s32.totalorder %s112, 0
      %p690 = por %p688, %p689
      %s692 = sadd.s32 %s691, 1
      %p695 = scmp.eq.s32.totalorder %s106, 1
      %p696 = scmp.ne.s32.totalorder %s691, %s693
      %p697 = scmp.eq.s32.totalorder %s106, 0
      %p698 = por %p696, %p697
      %p699 = scmp.ne.s32.totalorder %s691, %s693
      %p700 = scmp.eq.s32.totalorder %s111, 1
      %p701 = por %p699, %p700
      %p702 = scmp.ne.s32.totalorder %s693, %s694
      %p703 = scmp.eq.s32.totalorder %s111, 0
      %p704 = por %p702, %p703
      %p705 = scmp.ne.s32.totalorder %s693, %s694
      %p706 = scmp.eq.s32.totalorder %s112, 1
      %p707 = por %p705, %p706
      %p709 = scmp.ne.s32.totalorder %s694, %s708
      %p710 = scmp.eq.s32.totalorder %s112, 0
      %p711 = por %p709, %p710
      %s713 = sadd.s32 %s712, 1
      %p716 = scmp.eq.s32.totalorder %s106, 1
      %p717 = scmp.ne.s32.totalorder %s712, %s714
      %p718 = scmp.eq.s32.totalorder %s106, 0
      %p719 = por %p717, %p718
      %p720 = scmp.ne.s32.totalorder %s712, %s714
      %p721 = scmp.eq.s32.totalorder %s111, 1
      %p722 = por %p720, %p721
      %p723 = scmp.ne.s32.totalorder %s714, %s715
      %p724 = scmp.eq.s32.totalorder %s111, 0
      %p725 = por %p723, %p724
      %p726 = scmp.ne.s32.totalorder %s714, %s715
      %p727 = scmp.eq.s32.totalorder %s112, 1
      %p728 = por %p726, %p727
      %p730 = scmp.ne.s32.totalorder %s715, %s729
      %p731 = scmp.eq.s32.totalorder %s112, 0
      %p732 = por %p730, %p731
      %s734 = sadd.s32 %s733, 1
      %p737 = scmp.eq.s32.totalorder %s106, 1
      %p738 = scmp.ne.s32.totalorder %s733, %s735
      %p739 = scmp.eq.s32.totalorder %s106, 0
      %p740 = por %p738, %p739
      %p741 = scmp.ne.s32.totalorder %s733, %s735
      %p742 = scmp.eq.s32.totalorder %s111, 1
      %p743 = por %p741, %p742
      %p744 = scmp.ne.s32.totalorder %s735, %s736
      %p745 = scmp.eq.s32.totalorder %s111, 0
      %p746 = por %p744, %p745
      %p747 = scmp.ne.s32.totalorder %s735, %s736
      %p748 = scmp.eq.s32.totalorder %s112, 1
      %p749 = por %p747, %p748
      %p751 = scmp.ne.s32.totalorder %s736, %s750
      %p752 = scmp.eq.s32.totalorder %s112, 0
      %p753 = por %p751, %p752
      %s755 = sadd.s32 %s754, 1
      %p758 = scmp.eq.s32.totalorder %s106, 1
      %p759 = scmp.ne.s32.totalorder %s754, %s756
      %p760 = scmp.eq.s32.totalorder %s106, 0
      %p761 = por %p759, %p760
      %p762 = scmp.ne.s32.totalorder %s754, %s756
      %p763 = scmp.eq.s32.totalorder %s111, 1
      %p764 = por %p762, %p763
      %p765 = scmp.ne.s32.totalorder %s756, %s757
      %p766 = scmp.eq.s32.totalorder %s111, 0
      %p767 = por %p765, %p766
      %p768 = scmp.ne.s32.totalorder %s756, %s757
      %p769 = scmp.eq.s32.totalorder %s112, 1
      %p770 = por %p768, %p769
      %p772 = scmp.ne.s32.totalorder %s757, %s771
      %p773 = scmp.eq.s32.totalorder %s112, 0
      %p774 = por %p772, %p773
      %s776 = sadd.s32 %s775, 1
      %p779 = scmp.eq.s32.totalorder %s106, 1
      %p780 = scmp.ne.s32.totalorder %s775, %s777
      %p781 = scmp.eq.s32.totalorder %s106, 0
      %p782 = por %p780, %p781
      %p783 = scmp.ne.s32.totalorder %s775, %s777
      %p784 = scmp.eq.s32.totalorder %s111, 1
      %p785 = por %p783, %p784
      %p786 = scmp.ne.s32.totalorder %s777, %s778
      %p787 = scmp.eq.s32.totalorder %s111, 0
      %p788 = por %p786, %p787
      %p789 = scmp.ne.s32.totalorder %s777, %s778
      %p790 = scmp.eq.s32.totalorder %s112, 1
      %p791 = por %p789, %p790
      %p793 = scmp.ne.s32.totalorder %s778, %s792
      %p794 = scmp.eq.s32.totalorder %s112, 0
      %p795 = por %p793, %p794
      %s797 = sadd.s32 %s796, 1
      %p800 = scmp.eq.s32.totalorder %s106, 1
      %p801 = scmp.ne.s32.totalorder %s796, %s798
      %p802 = scmp.eq.s32.totalorder %s106, 0
      %p803 = por %p801, %p802
      %p804 = scmp.ne.s32.totalorder %s796, %s798
      %p805 = scmp.eq.s32.totalorder %s111, 1
      %p806 = por %p804, %p805
      %p807 = scmp.ne.s32.totalorder %s798, %s799
      %p808 = scmp.eq.s32.totalorder %s111, 0
      %p809 = por %p807, %p808
      %p810 = scmp.ne.s32.totalorder %s798, %s799
      %p811 = scmp.eq.s32.totalorder %s112, 1
      %p812 = por %p810, %p811
      %p814 = scmp.ne.s32.totalorder %s799, %s813
      %p815 = scmp.eq.s32.totalorder %s112, 0
      %p816 = por %p814, %p815
      %s818 = sadd.s32 %s817, 1
      %p821 = scmp.eq.s32.totalorder %s106, 1
      %p822 = scmp.ne.s32.totalorder %s817, %s819
      %p823 = scmp.eq.s32.totalorder %s106, 0
      %p824 = por %p822, %p823
      %p825 = scmp.ne.s32.totalorder %s817, %s819
      %p826 = scmp.eq.s32.totalorder %s111, 1
      %p827 = por %p825, %p826
      %p828 = scmp.ne.s32.totalorder %s819, %s820
      %p829 = scmp.eq.s32.totalorder %s111, 0
      %p830 = por %p828, %p829
      %p831 = scmp.ne.s32.totalorder %s819, %s820
      %p832 = scmp.eq.s32.totalorder %s112, 1
      %p833 = por %p831, %p832
      %p835 = scmp.ne.s32.totalorder %s820, %s834
      %p836 = scmp.eq.s32.totalorder %s112, 0
      %p837 = por %p835, %p836
      %s839 = sadd.s32 %s838, 1
      %p842 = scmp.eq.s32.totalorder %s106, 1
      %p843 = scmp.ne.s32.totalorder %s838, %s840
      %p844 = scmp.eq.s32.totalorder %s106, 0
      %p845 = por %p843, %p844
      %p846 = scmp.ne.s32.totalorder %s838, %s840
      %p847 = scmp.eq.s32.totalorder %s111, 1
      %p848 = por %p846, %p847
      %p849 = scmp.ne.s32.totalorder %s840, %s841
      %p850 = scmp.eq.s32.totalorder %s111, 0
      %p851 = por %p849, %p850
      %p852 = scmp.ne.s32.totalorder %s840, %s841
      %p853 = scmp.eq.s32.totalorder %s112, 1
      %p854 = por %p852, %p853
      %p856 = scmp.ne.s32.totalorder %s841, %s855
      %p857 = scmp.eq.s32.totalorder %s112, 0
      %p858 = por %p856, %p857
      %s860 = sadd.s32 %s859, 1
      %p863 = scmp.eq.s32.totalorder %s106, 1
      %p864 = scmp.ne.s32.totalorder %s859, %s861
      %p865 = scmp.eq.s32.totalorder %s106, 0
      %p866 = por %p864, %p865
      %p867 = scmp.ne.s32.totalorder %s859, %s861
      %p868 = scmp.eq.s32.totalorder %s111, 1
      %p869 = por %p867, %p868
      %p870 = scmp.ne.s32.totalorder %s861, %s862
      %p871 = scmp.eq.s32.totalorder %s111, 0
      %p872 = por %p870, %p871
      %p873 = scmp.ne.s32.totalorder %s861, %s862
      %p874 = scmp.eq.s32.totalorder %s112, 1
      %p875 = por %p873, %p874
      %p877 = scmp.ne.s32.totalorder %s862, %s876
      %p878 = scmp.eq.s32.totalorder %s112, 0
      %p879 = por %p877, %p878
      %s881 = sadd.s32 %s880, 1
      %p884 = scmp.eq.s32.totalorder %s106, 1
      %p885 = scmp.ne.s32.totalorder %s880, %s882
      %p886 = scmp.eq.s32.totalorder %s106, 0
      %p887 = por %p885, %p886
      %p888 = scmp.ne.s32.totalorder %s880, %s882
      %p889 = scmp.eq.s32.totalorder %s111, 1
      %p890 = por %p888, %p889
      %p891 = scmp.ne.s32.totalorder %s882, %s883
      %p892 = scmp.eq.s32.totalorder %s111, 0
      %p893 = por %p891, %p892
      %p894 = scmp.ne.s32.totalorder %s882, %s883
      %p895 = scmp.eq.s32.totalorder %s112, 1
      %p896 = por %p894, %p895
      %p898 = scmp.ne.s32.totalorder %s883, %s897
      %p899 = scmp.eq.s32.totalorder %s112, 0
      %p900 = por %p898, %p899
      %s902 = sadd.s32 %s901, 1
      %p905 = scmp.eq.s32.totalorder %s106, 1
      %p906 = scmp.ne.s32.totalorder %s901, %s903
      %p907 = scmp.eq.s32.totalorder %s106, 0
      %p908 = por %p906, %p907
      %p909 = scmp.ne.s32.totalorder %s901, %s903
      %p910 = scmp.eq.s32.totalorder %s111, 1
      %p911 = por %p909, %p910
      %p912 = scmp.ne.s32.totalorder %s903, %s904
      %p913 = scmp.eq.s32.totalorder %s111, 0
      %p914 = por %p912, %p913
      %p915 = scmp.ne.s32.totalorder %s903, %s904
      %p916 = scmp.eq.s32.totalorder %s112, 1
      %p917 = por %p915, %p916
      %p919 = scmp.ne.s32.totalorder %s904, %s918
      %p920 = scmp.eq.s32.totalorder %s112, 0
      %p921 = por %p919, %p920
      %s923 = sadd.s32 %s922, 1
      %p926 = scmp.eq.s32.totalorder %s106, 1
      %p927 = scmp.ne.s32.totalorder %s922, %s924
      %p928 = scmp.eq.s32.totalorder %s106, 0
      %p929 = por %p927, %p928
      %p930 = scmp.ne.s32.totalorder %s922, %s924
      %p931 = scmp.eq.s32.totalorder %s111, 1
      %p932 = por %p930, %p931
      %p933 = scmp.ne.s32.totalorder %s924, %s925
      %p934 = scmp.eq.s32.totalorder %s111, 0
      %p935 = por %p933, %p934
      %p936 = scmp.ne.s32.totalorder %s924, %s925
      %p937 = scmp.eq.s32.totalorder %s112, 1
      %p938 = por %p936, %p937
      %p940 = scmp.ne.s32.totalorder %s925, %s939
      %p941 = scmp.eq.s32.totalorder %s112, 0
      %p942 = por %p940, %p941
      %s944 = sadd.s32 %s943, 1
      %p947 = scmp.eq.s32.totalorder %s106, 1
      %p948 = scmp.ne.s32.totalorder %s943, %s945
      %p949 = scmp.eq.s32.totalorder %s106, 0
      %p950 = por %p948, %p949
      %p951 = scmp.ne.s32.totalorder %s943, %s945
      %p952 = scmp.eq.s32.totalorder %s111, 1
      %p953 = por %p951, %p952
      %p954 = scmp.ne.s32.totalorder %s945, %s946
      %p955 = scmp.eq.s32.totalorder %s111, 0
      %p956 = por %p954, %p955
      %p957 = scmp.ne.s32.totalorder %s945, %s946
      %p958 = scmp.eq.s32.totalorder %s112, 1
      %p959 = por %p957, %p958
      %p961 = scmp.ne.s32.totalorder %s946, %s960
      %p962 = scmp.eq.s32.totalorder %s112, 0
      %p963 = por %p961, %p962
      %s965 = sadd.s32 %s964, 1
      %p968 = scmp.eq.s32.totalorder %s106, 1
      %p969 = scmp.ne.s32.totalorder %s964, %s966
      %p970 = scmp.eq.s32.totalorder %s106, 0
      %p971 = por %p969, %p970
      %p972 = scmp.ne.s32.totalorder %s964, %s966
      %p973 = scmp.eq.s32.totalorder %s111, 1
      %p974 = por %p972, %p973
      %p975 = scmp.ne.s32.totalorder %s966, %s967
      %p976 = scmp.eq.s32.totalorder %s111, 0
      %p977 = por %p975, %p976
      %p978 = scmp.ne.s32.totalorder %s966, %s967
      %p979 = scmp.eq.s32.totalorder %s112, 1
      %p980 = por %p978, %p979
      %p982 = scmp.ne.s32.totalorder %s967, %s981
      %p983 = scmp.eq.s32.totalorder %s112, 0
      %p984 = por %p982, %p983
      %s986 = sadd.s32 %s985, 1
      %p989 = scmp.eq.s32.totalorder %s106, 1
      %p990 = scmp.ne.s32.totalorder %s985, %s987
      %p991 = scmp.eq.s32.totalorder %s106, 0
      %p992 = por %p990, %p991
      %p993 = scmp.ne.s32.totalorder %s985, %s987
      %p994 = scmp.eq.s32.totalorder %s111, 1
      %p995 = por %p993, %p994
      %p996 = scmp.ne.s32.totalorder %s987, %s988
      %p997 = scmp.eq.s32.totalorder %s111, 0
      %p998 = por %p996, %p997
      %p999 = scmp.ne.s32.totalorder %s987, %s988
      %p1000 = scmp.eq.s32.totalorder %s112, 1
      %p1001 = por %p999, %p1000
      %p1003 = scmp.ne.s32.totalorder %s988, %s1002
      %p1004 = scmp.eq.s32.totalorder %s112, 0
      %p1005 = por %p1003, %p1004
      %s1007 = sadd.s32 %s1006, 1
      %p1010 = scmp.eq.s32.totalorder %s106, 1
      %p1011 = scmp.ne.s32.totalorder %s1006, %s1008
      %p1012 = scmp.eq.s32.totalorder %s106, 0
      %p1013 = por %p1011, %p1012
      %p1014 = scmp.ne.s32.totalorder %s1006, %s1008
      %p1015 = scmp.eq.s32.totalorder %s111, 1
      %p1016 = por %p1014, %p1015
      %p1017 = scmp.ne.s32.totalorder %s1008, %s1009
      %p1018 = scmp.eq.s32.totalorder %s111, 0
      %p1019 = por %p1017, %p1018
      %p1020 = scmp.ne.s32.totalorder %s1008, %s1009
      %p1021 = scmp.eq.s32.totalorder %s112, 1
      %p1022 = por %p1020, %p1021
      %p1024 = scmp.ne.s32.totalorder %s1009, %s1023
      %p1025 = scmp.eq.s32.totalorder %s112, 0
      %p1026 = por %p1024, %p1025
      %s1028 = sadd.s32 %s1027, 1
      %p1031 = scmp.eq.s32.totalorder %s106, 1
      %p1032 = scmp.ne.s32.totalorder %s1027, %s1029
      %p1033 = scmp.eq.s32.totalorder %s106, 0
      %p1034 = por %p1032, %p1033
      %p1035 = scmp.ne.s32.totalorder %s1027, %s1029
      %p1036 = scmp.eq.s32.totalorder %s111, 1
      %p1037 = por %p1035, %p1036
      %p1038 = scmp.ne.s32.totalorder %s1029, %s1030
      %p1039 = scmp.eq.s32.totalorder %s111, 0
      %p1040 = por %p1038, %p1039
      %p1041 = scmp.ne.s32.totalorder %s1029, %s1030
      %p1042 = scmp.eq.s32.totalorder %s112, 1
      %p1043 = por %p1041, %p1042
      %p1045 = scmp.ne.s32.totalorder %s1030, %s1044
      %p1046 = scmp.eq.s32.totalorder %s112, 0
      %p1047 = por %p1045, %p1046
      %s1048 = ssub.s32 %s106, %s113
      %p1049 = scmp.eq.s32.totalorder %s1048, 0
      %s1051 = sadd.s32 %s1050, 1
      %s1052 = scalar_select %p1049, %s1050, %s1051
      %p1055 = pneg %p1049
      %p1056 = scmp.eq.s32.totalorder %s106, 1
      %p1057 = por %p1055, %p1056
      %p1058 = scmp.ne.s32.totalorder %s1050, %s1053
      %p1059 = scmp.eq.s32.totalorder %s106, 0
      %p1060 = por %p1058, %p1059
      %p1061 = scmp.ne.s32.totalorder %s1050, %s1053
      %p1062 = scmp.eq.s32.totalorder %s111, 1
      %p1063 = por %p1061, %p1062
      %p1064 = scmp.ne.s32.totalorder %s1053, %s1054
      %p1065 = scmp.eq.s32.totalorder %s111, 0
      %p1066 = por %p1064, %p1065
      %p1067 = scmp.ne.s32.totalorder %s1053, %s1054
      %p1068 = scmp.eq.s32.totalorder %s112, 1
      %p1069 = por %p1067, %p1068
      %p1071 = scmp.ne.s32.totalorder %s1054, %s1070
      %p1072 = scmp.eq.s32.totalorder %s112, 0
      %p1073 = por %p1071, %p1072
      %p1074 = scmp.le.s32.totalorder 1, %s106
      %p1075 = scmp.lt.s32.totalorder %s106, 3
      %p1076 = pnand %p1074, %p1075
      %p1077 = pneg %p1076
      // Predicated region
      $region9: #{tpu_custom_call.1} parent=5 // pred_check
        _
      $region10: #{tpu_custom_call.1} parent=5 // pred_check_branch
        %1079 = sbr.rel (%p1076) target = $region12
      $region11: #{tpu_custom_call.1} parent=5 // pred_region
        %s1080 = ssub.s32 %s106, 1
        // Predicated region
        $region13: #{tpu_custom_call.1} parent=11 // pred_check
          %p1081 = pneg %p179
        $region14: #{tpu_custom_call.1} parent=11 // pred_check_branch
          %1083 = sbr.rel (%p1081) target = $region16
        $region15: #{tpu_custom_call.1} parent=11 // pred_region
          _
        $region16: #{tpu_custom_call.1} parent=11 // pred_fallthru
          _
        // Predicated region
        $region17: #{tpu_custom_call.1} parent=11 // pred_check
          %p1084 = pneg %p200
        $region18: #{tpu_custom_call.1} parent=11 // pred_check_branch
          %1086 = sbr.rel (%p1084) target = $region20
        $region19: #{tpu_custom_call.1} parent=11 // pred_region
          _
        $region20: #{tpu_custom_call.1} parent=11 // pred_fallthru
          _
        // Predicated region
        $region21: #{tpu_custom_call.1} parent=11 // pred_check
          %p1087 = pneg %p221
        $region22: #{tpu_custom_call.1} parent=11 // pred_check_branch
          %1089 = sbr.rel (%p1087) target = $region24
        $region23: #{tpu_custom_call.1} parent=11 // pred_region
          _
        $region24: #{tpu_custom_call.1} parent=11 // pred_fallthru
          _
        // Predicated region
        $region25: #{tpu_custom_call.1} parent=11 // pred_check
          %p1090 = pneg %p242
        $region26: #{tpu_custom_call.1} parent=11 // pred_check_branch
          %1092 = sbr.rel (%p1090) target = $region28
        $region27: #{tpu_custom_call.1} parent=11 // pred_region
          _
        $region28: #{tpu_custom_call.1} parent=11 // pred_fallthru
          _
        // Predicated region
        $region29: #{tpu_custom_call.1} parent=11 // pred_check
          %p1093 = pneg %p263
        $region30: #{tpu_custom_call.1} parent=11 // pred_check_branch
          %1095 = sbr.rel (%p1093) target = $region32
        $region31: #{tpu_custom_call.1} parent=11 // pred_region
          _
        $region32: #{tpu_custom_call.1} parent=11 // pred_fallthru
          _
        // Predicated region
        $region33: #{tpu_custom_call.1} parent=11 // pred_check
          %p1096 = pneg %p284
        $region34: #{tpu_custom_call.1} parent=11 // pred_check_branch
          %1098 = sbr.rel (%p1096) target = $region36
        $region35: #{tpu_custom_call.1} parent=11 // pred_region
          _
        $region36: #{tpu_custom_call.1} parent=11 // pred_fallthru
          _
        // Predicated region
        $region37: #{tpu_custom_call.1} parent=11 // pred_check
          %p1099 = pneg %p305
        $region38: #{tpu_custom_call.1} parent=11 // pred_check_branch
          %1101 = sbr.rel (%p1099) target = $region40
        $region39: #{tpu_custom_call.1} parent=11 // pred_region
          _
        $region40: #{tpu_custom_call.1} parent=11 // pred_fallthru
          _
        // Predicated region
        $region41: #{tpu_custom_call.1} parent=11 // pred_check
          %p1102 = pneg %p326
        $region42: #{tpu_custom_call.1} parent=11 // pred_check_branch
          %1104 = sbr.rel (%p1102) target = $region44
        $region43: #{tpu_custom_call.1} parent=11 // pred_region
          _
        $region44: #{tpu_custom_call.1} parent=11 // pred_fallthru
          _
        // Predicated region
        $region45: #{tpu_custom_call.1} parent=11 // pred_check
          %p1105 = pneg %p347
        $region46: #{tpu_custom_call.1} parent=11 // pred_check_branch
          %1107 = sbr.rel (%p1105) target = $region48
        $region47: #{tpu_custom_call.1} parent=11 // pred_region
          _
        $region48: #{tpu_custom_call.1} parent=11 // pred_fallthru
          _
        // Predicated region
        $region49: #{tpu_custom_call.1} parent=11 // pred_check
          %p1108 = pneg %p368
        $region50: #{tpu_custom_call.1} parent=11 // pred_check_branch
          %1110 = sbr.rel (%p1108) target = $region52
        $region51: #{tpu_custom_call.1} parent=11 // pred_region
          _
        $region52: #{tpu_custom_call.1} parent=11 // pred_fallthru
          _
        // Predicated region
        $region53: #{tpu_custom_call.1} parent=11 // pred_check
          %p1111 = pneg %p389
        $region54: #{tpu_custom_call.1} parent=11 // pred_check_branch
          %1113 = sbr.rel (%p1111) target = $region56
        $region55: #{tpu_custom_call.1} parent=11 // pred_region
          %1115 = vsyncadd [#allocation3], 0
          %s1116 = sshll.u32 %s25, 4
          %s1117 = int_to_ptr.hbm [resolvable:$true] %s1116
          %s1118 = sshll.u32 [#allocation2], 4
          %s1119 = int_to_ptr.vmem [resolvable:$true] %s1118
          %1124 = dma.hbm_to_vmem [thread:$0]  %s1117, 512, %s1119, [#allocation3], 128, 128, 8
        $region56: #{tpu_custom_call.1} parent=11 // pred_fallthru
          _
        // Predicated region
        $region57: #{tpu_custom_call.1} parent=11 // pred_check
          %p1125 = pneg %p410
        $region58: #{tpu_custom_call.1} parent=11 // pred_check_branch
          %1127 = sbr.rel (%p1125) target = $region60
        $region59: #{tpu_custom_call.1} parent=11 // pred_region
          _
        $region60: #{tpu_custom_call.1} parent=11 // pred_fallthru
          _
        // Predicated region
        $region61: #{tpu_custom_call.1} parent=11 // pred_check
          %p1128 = pneg %p431
        $region62: #{tpu_custom_call.1} parent=11 // pred_check_branch
          %1130 = sbr.rel (%p1128) target = $region64
        $region63: #{tpu_custom_call.1} parent=11 // pred_region
          _
        $region64: #{tpu_custom_call.1} parent=11 // pred_fallthru
          _
        // Predicated region
        $region65: #{tpu_custom_call.1} parent=11 // pred_check
          %p1131 = pneg %p452
        $region66: #{tpu_custom_call.1} parent=11 // pred_check_branch
          %1133 = sbr.rel (%p1131) target = $region68
        $region67: #{tpu_custom_call.1} parent=11 // pred_region
          _
        $region68: #{tpu_custom_call.1} parent=11 // pred_fallthru
          _
        // Predicated region
        $region69: #{tpu_custom_call.1} parent=11 // pred_check
          %p1134 = pneg %p473
        $region70: #{tpu_custom_call.1} parent=11 // pred_check_branch
          %1136 = sbr.rel (%p1134) target = $region72
        $region71: #{tpu_custom_call.1} parent=11 // pred_region
          %1138 = vsyncadd [#allocation6], 0
          %s1139 = sshll.u32 %s33, 4
          %s1140 = int_to_ptr.hbm [resolvable:$true] %s1139
          %s1141 = sshll.u32 [#allocation5], 4
          %s1142 = int_to_ptr.vmem [resolvable:$true] %s1141
          %1147 = dma.hbm_to_vmem [thread:$0]  %s1140, 512, %s1142, [#allocation6], 128, 128, 8
        $region72: #{tpu_custom_call.1} parent=11 // pred_fallthru
          _
        // Predicated region
        $region73: #{tpu_custom_call.1} parent=11 // pred_check
          %p1148 = pneg %p494
        $region74: #{tpu_custom_call.1} parent=11 // pred_check_branch
          %1150 = sbr.rel (%p1148) target = $region76
        $region75: #{tpu_custom_call.1} parent=11 // pred_region
          _
        $region76: #{tpu_custom_call.1} parent=11 // pred_fallthru
          _
        // Predicated region
        $region77: #{tpu_custom_call.1} parent=11 // pred_check
          %p1151 = pneg %p515
        $region78: #{tpu_custom_call.1} parent=11 // pred_check_branch
          %1153 = sbr.rel (%p1151) target = $region80
        $region79: #{tpu_custom_call.1} parent=11 // pred_region
          _
        $region80: #{tpu_custom_call.1} parent=11 // pred_fallthru
          _
        // Predicated region
        $region81: #{tpu_custom_call.1} parent=11 // pred_check
          %p1154 = pneg %p536
        $region82: #{tpu_custom_call.1} parent=11 // pred_check_branch
          %1156 = sbr.rel (%p1154) target = $region84
        $region83: #{tpu_custom_call.1} parent=11 // pred_region
          _
        $region84: #{tpu_custom_call.1} parent=11 // pred_fallthru
          _
        // Predicated region
        $region85: #{tpu_custom_call.1} parent=11 // pred_check
          %p1157 = pneg %p557
        $region86: #{tpu_custom_call.1} parent=11 // pred_check_branch
          %1159 = sbr.rel (%p1157) target = $region88
        $region87: #{tpu_custom_call.1} parent=11 // pred_region
          _
        $region88: #{tpu_custom_call.1} parent=11 // pred_fallthru
          _
        // Predicated region
        $region89: #{tpu_custom_call.1} parent=11 // pred_check
          %p1160 = pneg %p578
        $region90: #{tpu_custom_call.1} parent=11 // pred_check_branch
          %1162 = sbr.rel (%p1160) target = $region92
        $region91: #{tpu_custom_call.1} parent=11 // pred_region
          _
        $region92: #{tpu_custom_call.1} parent=11 // pred_fallthru
          _
        // Predicated region
        $region93: #{tpu_custom_call.1} parent=11 // pred_check
          %p1163 = pneg %p599
        $region94: #{tpu_custom_call.1} parent=11 // pred_check_branch
          %1165 = sbr.rel (%p1163) target = $region96
        $region95: #{tpu_custom_call.1} parent=11 // pred_region
          %1167 = vsyncadd [#allocation6], 0
          %s1168 = sshll.u32 %s45, 4
          %s1169 = int_to_ptr.hbm [resolvable:$true] %s1168
          %s1170 = sshll.u32 [#allocation7], 4
          %s1171 = int_to_ptr.vmem [resolvable:$true] %s1170
          %1176 = dma.hbm_to_vmem [thread:$0]  %s1169, 512, %s1171, [#allocation6], 128, 128, 8
        $region96: #{tpu_custom_call.1} parent=11 // pred_fallthru
          _
        // Predicated region
        $region97: #{tpu_custom_call.1} parent=11 // pred_check
          %p1177 = pneg %p620
        $region98: #{tpu_custom_call.1} parent=11 // pred_check_branch
          %1179 = sbr.rel (%p1177) target = $region100
        $region99: #{tpu_custom_call.1} parent=11 // pred_region
          _
        $region100: #{tpu_custom_call.1} parent=11 // pred_fallthru
          _
        // Predicated region
        $region101: #{tpu_custom_call.1} parent=11 // pred_check
          %p1180 = pneg %p641
        $region102: #{tpu_custom_call.1} parent=11 // pred_check_branch
          %1182 = sbr.rel (%p1180) target = $region104
        $region103: #{tpu_custom_call.1} parent=11 // pred_region
          %1184 = vsyncadd [#allocation9], 0
          %s1185 = sshll.u32 %s49, 4
          %s1186 = int_to_ptr.hbm [resolvable:$true] %s1185
          %s1187 = sshll.u32 [#allocation8], 4
          %s1188 = int_to_ptr.vmem [resolvable:$true] %s1187
          %1193 = dma.hbm_to_vmem [thread:$0]  %s1186, 512, %s1188, [#allocation9], 128, 128, 8
        $region104: #{tpu_custom_call.1} parent=11 // pred_fallthru
          _
        // Predicated region
        $region105: #{tpu_custom_call.1} parent=11 // pred_check
          %p1194 = pneg %p662
        $region106: #{tpu_custom_call.1} parent=11 // pred_check_branch
          %1196 = sbr.rel (%p1194) target = $region108
        $region107: #{tpu_custom_call.1} parent=11 // pred_region
          _
        $region108: #{tpu_custom_call.1} parent=11 // pred_fallthru
          _
        // Predicated region
        $region109: #{tpu_custom_call.1} parent=11 // pred_check
          %p1197 = pneg %p683
        $region110: #{tpu_custom_call.1} parent=11 // pred_check_branch
          %1199 = sbr.rel (%p1197) target = $region112
        $region111: #{tpu_custom_call.1} parent=11 // pred_region
          %1201 = vsyncadd [#allocation9], 0
          %s1203 = sshll.u32 %s53, 4
          %s1204 = int_to_ptr.hbm [resolvable:$true] %s1203
          %s1205 = sshll.u32 [#allocation10], 4
          %s1206 = int_to_ptr.vmem [resolvable:$true] %s1205
          %1208 = dma.hbm_to_vmem [thread:$0]  %s1204, 16, %s1206, [#allocation9]
        $region112: #{tpu_custom_call.1} parent=11 // pred_fallthru
          _
        // Predicated region
        $region113: #{tpu_custom_call.1} parent=11 // pred_check
          %p1209 = pneg %p704
        $region114: #{tpu_custom_call.1} parent=11 // pred_check_branch
          %1211 = sbr.rel (%p1209) target = $region116
        $region115: #{tpu_custom_call.1} parent=11 // pred_region
          %1213 = vsyncadd [#allocation12], 0
          %s1215 = sshll.u32 %s55, 4
          %s1216 = int_to_ptr.hbm [resolvable:$true] %s1215
          %s1217 = sshll.u32 [#allocation11], 4
          %s1218 = int_to_ptr.vmem [resolvable:$true] %s1217
          %1220 = dma.hbm_to_vmem [thread:$0]  %s1216, 16, %s1218, [#allocation12]
        $region116: #{tpu_custom_call.1} parent=11 // pred_fallthru
          _
        // Predicated region
        $region117: #{tpu_custom_call.1} parent=11 // pred_check
          %p1221 = pneg %p725
        $region118: #{tpu_custom_call.1} parent=11 // pred_check_branch
          %1223 = sbr.rel (%p1221) target = $region120
        $region119: #{tpu_custom_call.1} parent=11 // pred_region
          %1225 = vsyncadd [#allocation12], 0
          %s1226 = sshll.u32 %s57, 4
          %s1227 = int_to_ptr.hbm [resolvable:$true] %s1226
          %s1228 = sshll.u32 [#allocation13], 4
          %s1229 = int_to_ptr.vmem [resolvable:$true] %s1228
          %1234 = dma.hbm_to_vmem [thread:$0]  %s1227, 512, %s1229, [#allocation12], 128, 128, 8
        $region120: #{tpu_custom_call.1} parent=11 // pred_fallthru
          _
        // Predicated region
        $region121: #{tpu_custom_call.1} parent=11 // pred_check
          %p1235 = pneg %p746
        $region122: #{tpu_custom_call.1} parent=11 // pred_check_branch
          %1237 = sbr.rel (%p1235) target = $region124
        $region123: #{tpu_custom_call.1} parent=11 // pred_region
          %1239 = vsyncadd [#allocation15], 0
          %s1241 = sshll.u32 %s59, 4
          %s1242 = int_to_ptr.hbm [resolvable:$true] %s1241
          %s1243 = sshll.u32 [#allocation14], 4
          %s1244 = int_to_ptr.vmem [resolvable:$true] %s1243
          %1246 = dma.hbm_to_vmem [thread:$0]  %s1242, 16, %s1244, [#allocation15]
        $region124: #{tpu_custom_call.1} parent=11 // pred_fallthru
          _
        // Predicated region
        $region125: #{tpu_custom_call.1} parent=11 // pred_check
          %p1247 = pneg %p767
        $region126: #{tpu_custom_call.1} parent=11 // pred_check_branch
          %1249 = sbr.rel (%p1247) target = $region128
        $region127: #{tpu_custom_call.1} parent=11 // pred_region
          %1251 = vsyncadd [#allocation15], 0
          %s1252 = sshll.u32 %s61, 4
          %s1253 = int_to_ptr.hbm [resolvable:$true] %s1252
          %s1254 = sshll.u32 [#allocation16], 4
          %s1255 = int_to_ptr.vmem [resolvable:$true] %s1254
          %1260 = dma.hbm_to_vmem [thread:$0]  %s1253, 512, %s1255, [#allocation15], 128, 128, 8
        $region128: #{tpu_custom_call.1} parent=11 // pred_fallthru
          _
        // Predicated region
        $region129: #{tpu_custom_call.1} parent=11 // pred_check
          %p1261 = pneg %p788
        $region130: #{tpu_custom_call.1} parent=11 // pred_check_branch
          %1263 = sbr.rel (%p1261) target = $region132
        $region131: #{tpu_custom_call.1} parent=11 // pred_region
          %1265 = vsyncadd [#allocation18], 0
          %s1267 = sshll.u32 %s63, 4
          %s1268 = int_to_ptr.hbm [resolvable:$true] %s1267
          %s1269 = sshll.u32 [#allocation17], 4
          %s1270 = int_to_ptr.vmem [resolvable:$true] %s1269
          %1272 = dma.hbm_to_vmem [thread:$0]  %s1268, 16, %s1270, [#allocation18]
        $region132: #{tpu_custom_call.1} parent=11 // pred_fallthru
          _
        // Predicated region
        $region133: #{tpu_custom_call.1} parent=11 // pred_check
          %p1273 = pneg %p809
        $region134: #{tpu_custom_call.1} parent=11 // pred_check_branch
          %1275 = sbr.rel (%p1273) target = $region136
        $region135: #{tpu_custom_call.1} parent=11 // pred_region
          %1277 = vsyncadd [#allocation18], 0
          %s1278 = sshll.u32 %s65, 4
          %s1279 = int_to_ptr.hbm [resolvable:$true] %s1278
          %s1280 = sshll.u32 [#allocation19], 4
          %s1281 = int_to_ptr.vmem [resolvable:$true] %s1280
          %1286 = dma.hbm_to_vmem [thread:$0]  %s1279, 512, %s1281, [#allocation18], 128, 128, 8
        $region136: #{tpu_custom_call.1} parent=11 // pred_fallthru
          _
        // Predicated region
        $region137: #{tpu_custom_call.1} parent=11 // pred_check
          %p1287 = pneg %p830
        $region138: #{tpu_custom_call.1} parent=11 // pred_check_branch
          %1289 = sbr.rel (%p1287) target = $region140
        $region139: #{tpu_custom_call.1} parent=11 // pred_region
          %1291 = vsyncadd [#allocation21], 0
          %s1293 = sshll.u32 %s67, 4
          %s1294 = int_to_ptr.hbm [resolvable:$true] %s1293
          %s1295 = sshll.u32 [#allocation20], 4
          %s1296 = int_to_ptr.vmem [resolvable:$true] %s1295
          %1298 = dma.hbm_to_vmem [thread:$0]  %s1294, 16, %s1296, [#allocation21]
        $region140: #{tpu_custom_call.1} parent=11 // pred_fallthru
          _
        // Predicated region
        $region141: #{tpu_custom_call.1} parent=11 // pred_check
          %p1299 = pneg %p851
        $region142: #{tpu_custom_call.1} parent=11 // pred_check_branch
          %1301 = sbr.rel (%p1299) target = $region144
        $region143: #{tpu_custom_call.1} parent=11 // pred_region
          %1303 = vsyncadd [#allocation21], 0
          %s1305 = sshll.u32 %s69, 4
          %s1306 = int_to_ptr.hbm [resolvable:$true] %s1305
          %s1307 = sshll.u32 [#allocation22], 4
          %s1308 = int_to_ptr.vmem [resolvable:$true] %s1307
          %1310 = dma.hbm_to_vmem [thread:$0]  %s1306, 16, %s1308, [#allocation21]
        $region144: #{tpu_custom_call.1} parent=11 // pred_fallthru
          _
        // Predicated region
        $region145: #{tpu_custom_call.1} parent=11 // pred_check
          %p1311 = pneg %p872
        $region146: #{tpu_custom_call.1} parent=11 // pred_check_branch
          %1313 = sbr.rel (%p1311) target = $region148
        $region147: #{tpu_custom_call.1} parent=11 // pred_region
          %1315 = vsyncadd [#allocation24], 0
          %s1317 = sshll.u32 %s71, 4
          %s1318 = int_to_ptr.hbm [resolvable:$true] %s1317
          %s1319 = sshll.u32 [#allocation23], 4
          %s1320 = int_to_ptr.vmem [resolvable:$true] %s1319
          %1322 = dma.hbm_to_vmem [thread:$0]  %s1318, 16, %s1320, [#allocation24]
        $region148: #{tpu_custom_call.1} parent=11 // pred_fallthru
          _
        // Predicated region
        $region149: #{tpu_custom_call.1} parent=11 // pred_check
          %p1323 = pneg %p893
        $region150: #{tpu_custom_call.1} parent=11 // pred_check_branch
          %1325 = sbr.rel (%p1323) target = $region152
        $region151: #{tpu_custom_call.1} parent=11 // pred_region
          %1327 = vsyncadd [#allocation24], 0
          %s1328 = sshll.u32 %s73, 4
          %s1329 = int_to_ptr.hbm [resolvable:$true] %s1328
          %s1330 = sshll.u32 [#allocation25], 4
          %s1331 = int_to_ptr.vmem [resolvable:$true] %s1330
          %1336 = dma.hbm_to_vmem [thread:$0]  %s1329, 512, %s1331, [#allocation24], 128, 128, 8
        $region152: #{tpu_custom_call.1} parent=11 // pred_fallthru
          _
        // Predicated region
        $region153: #{tpu_custom_call.1} parent=11 // pred_check
          %p1337 = pneg %p914
        $region154: #{tpu_custom_call.1} parent=11 // pred_check_branch
          %1339 = sbr.rel (%p1337) target = $region156
        $region155: #{tpu_custom_call.1} parent=11 // pred_region
          _
        $region156: #{tpu_custom_call.1} parent=11 // pred_fallthru
          _
        // Predicated region
        $region157: #{tpu_custom_call.1} parent=11 // pred_check
          %p1340 = pneg %p935
        $region158: #{tpu_custom_call.1} parent=11 // pred_check_branch
          %1342 = sbr.rel (%p1340) target = $region160
        $region159: #{tpu_custom_call.1} parent=11 // pred_region
          _
        $region160: #{tpu_custom_call.1} parent=11 // pred_fallthru
          _
        // Predicated region
        $region161: #{tpu_custom_call.1} parent=11 // pred_check
          %p1343 = pneg %p956
        $region162: #{tpu_custom_call.1} parent=11 // pred_check_branch
          %1345 = sbr.rel (%p1343) target = $region164
        $region163: #{tpu_custom_call.1} parent=11 // pred_region
          _
        $region164: #{tpu_custom_call.1} parent=11 // pred_fallthru
          _
        // Predicated region
        $region165: #{tpu_custom_call.1} parent=11 // pred_check
          %p1346 = pneg %p977
        $region166: #{tpu_custom_call.1} parent=11 // pred_check_branch
          %1348 = sbr.rel (%p1346) target = $region168
        $region167: #{tpu_custom_call.1} parent=11 // pred_region
          _
        $region168: #{tpu_custom_call.1} parent=11 // pred_fallthru
          _
        // Predicated region
        $region169: #{tpu_custom_call.1} parent=11 // pred_check
          %p1349 = pneg %p998
        $region170: #{tpu_custom_call.1} parent=11 // pred_check_branch
          %1351 = sbr.rel (%p1349) target = $region172
        $region171: #{tpu_custom_call.1} parent=11 // pred_region
          _
        $region172: #{tpu_custom_call.1} parent=11 // pred_fallthru
          _
        // Predicated region
        $region173: #{tpu_custom_call.1} parent=11 // pred_check
          %p1352 = pneg %p1019
        $region174: #{tpu_custom_call.1} parent=11 // pred_check_branch
          %1354 = sbr.rel (%p1352) target = $region176
        $region175: #{tpu_custom_call.1} parent=11 // pred_region
          _
        $region176: #{tpu_custom_call.1} parent=11 // pred_fallthru
          _
        // Predicated region
        $region177: #{tpu_custom_call.1} parent=11 // pred_check
          %p1355 = pneg %p1040
        $region178: #{tpu_custom_call.1} parent=11 // pred_check_branch
          %1357 = sbr.rel (%p1355) target = $region180
        $region179: #{tpu_custom_call.1} parent=11 // pred_region
          _
        $region180: #{tpu_custom_call.1} parent=11 // pred_fallthru
          _
      $region12: #{tpu_custom_call.1} parent=5 // pred_fallthru
        _
      %p1358 = scmp.lt.s32.totalorder %s106, 2
      // Predicated region
      $region181: #{tpu_custom_call.1} parent=5 // pred_check
        %p1359 = pneg %p1358
      $region182: #{tpu_custom_call.1} parent=5 // pred_check_branch
        %1361 = sbr.rel (%p1359) target = $region184
      $region183: #{tpu_custom_call.1} parent=5 // pred_region
        // Predicated region
        $region185: #{tpu_custom_call.1} parent=183 // pred_check
          %p1362 = pneg %p126
        $region186: #{tpu_custom_call.1} parent=183 // pred_check_branch
          %1364 = sbr.rel (%p1362) target = $region188
        $region187: #{tpu_custom_call.1} parent=183 // pred_region
          %p1365 = scmp.lt.s32.totalorder %s106, 1
          %s1366 = scalar_select %p1365, %s106, 1
          %s1367 = smul.addr %s1366, 2
          %s1368 = smul.addr %s1367, 8
          %s1369 = scalar_lea.vmem %s1, %s1368
        $region188: #{tpu_custom_call.1} parent=183 // pred_fallthru
          _
        // Predicated region
        $region189: #{tpu_custom_call.1} parent=183 // pred_check
          %p1370 = pneg %p152
        $region190: #{tpu_custom_call.1} parent=183 // pred_check_branch
          %1372 = sbr.rel (%p1370) target = $region192
        $region191: #{tpu_custom_call.1} parent=183 // pred_region
          %p1373 = scmp.lt.s32.totalorder %s106, 1
          %s1374 = scalar_select %p1373, %s106, 1
          %s1375 = smul.addr %s1374, 8
          %s1376 = scalar_lea.vmem %s3, %s1375
        $region192: #{tpu_custom_call.1} parent=183 // pred_fallthru
          _
      $region184: #{tpu_custom_call.1} parent=5 // pred_fallthru
        _
      %p1377 = scmp.le.s32.totalorder 1, %s106
      %p1378 = scmp.lt.s32.totalorder %s106, 3
      %p1379 = pnand %p1377, %p1378
      %p1380 = pneg %p1379
      // Predicated region
      $region193: #{tpu_custom_call.1} parent=5 // pred_check
        _
      $region194: #{tpu_custom_call.1} parent=5 // pred_check_branch
        %1382 = sbr.rel (%p1379) target = $region196
      $region195: #{tpu_custom_call.1} parent=5 // pred_region
        %s1383 = ssub.s32 %s106, 1
        // Predicated region
        $region197: #{tpu_custom_call.1} parent=195 // pred_check
          %p1384 = pneg %p389
        $region198: #{tpu_custom_call.1} parent=195 // pred_check_branch
          %1386 = sbr.rel (%p1384) target = $region200
        $region199: #{tpu_custom_call.1} parent=195 // pred_region
          %1388 = dma.done [#allocation3], 512
        $region200: #{tpu_custom_call.1} parent=195 // pred_fallthru
          _
        // Predicated region
        $region201: #{tpu_custom_call.1} parent=195 // pred_check
          %p1389 = pneg %p473
        $region202: #{tpu_custom_call.1} parent=195 // pred_check_branch
          %1391 = sbr.rel (%p1389) target = $region204
        $region203: #{tpu_custom_call.1} parent=195 // pred_region
          %1393 = dma.done [#allocation6], 512
        $region204: #{tpu_custom_call.1} parent=195 // pred_fallthru
          _
        // Predicated region
        $region205: #{tpu_custom_call.1} parent=195 // pred_check
          %p1394 = pneg %p599
        $region206: #{tpu_custom_call.1} parent=195 // pred_check_branch
          %1396 = sbr.rel (%p1394) target = $region208
        $region207: #{tpu_custom_call.1} parent=195 // pred_region
          %1398 = dma.done [#allocation6], 512
        $region208: #{tpu_custom_call.1} parent=195 // pred_fallthru
          _
        // Predicated region
        $region209: #{tpu_custom_call.1} parent=195 // pred_check
          %p1399 = pneg %p641
        $region210: #{tpu_custom_call.1} parent=195 // pred_check_branch
          %1401 = sbr.rel (%p1399) target = $region212
        $region211: #{tpu_custom_call.1} parent=195 // pred_region
          %1403 = dma.done [#allocation9], 512
        $region212: #{tpu_custom_call.1} parent=195 // pred_fallthru
          _
        // Predicated region
        $region213: #{tpu_custom_call.1} parent=195 // pred_check
          %p1404 = pneg %p683
        $region214: #{tpu_custom_call.1} parent=195 // pred_check_branch
          %1406 = sbr.rel (%p1404) target = $region216
        $region215: #{tpu_custom_call.1} parent=195 // pred_region
          %1408 = dma.done [#allocation9], 16
        $region216: #{tpu_custom_call.1} parent=195 // pred_fallthru
          _
        // Predicated region
        $region217: #{tpu_custom_call.1} parent=195 // pred_check
          %p1409 = pneg %p704
        $region218: #{tpu_custom_call.1} parent=195 // pred_check_branch
          %1411 = sbr.rel (%p1409) target = $region220
        $region219: #{tpu_custom_call.1} parent=195 // pred_region
          %1413 = dma.done [#allocation12], 16
        $region220: #{tpu_custom_call.1} parent=195 // pred_fallthru
          _
        // Predicated region
        $region221: #{tpu_custom_call.1} parent=195 // pred_check
          %p1414 = pneg %p725
        $region222: #{tpu_custom_call.1} parent=195 // pred_check_branch
          %1416 = sbr.rel (%p1414) target = $region224
        $region223: #{tpu_custom_call.1} parent=195 // pred_region
          %1418 = dma.done [#allocation12], 512
        $region224: #{tpu_custom_call.1} parent=195 // pred_fallthru
          _
        // Predicated region
        $region225: #{tpu_custom_call.1} parent=195 // pred_check
          %p1419 = pneg %p746
        $region226: #{tpu_custom_call.1} parent=195 // pred_check_branch
          %1421 = sbr.rel (%p1419) target = $region228
        $region227: #{tpu_custom_call.1} parent=195 // pred_region
          %1423 = dma.done [#allocation15], 16
        $region228: #{tpu_custom_call.1} parent=195 // pred_fallthru
          _
        // Predicated region
        $region229: #{tpu_custom_call.1} parent=195 // pred_check
          %p1424 = pneg %p767
        $region230: #{tpu_custom_call.1} parent=195 // pred_check_branch
          %1426 = sbr.rel (%p1424) target = $region232
        $region231: #{tpu_custom_call.1} parent=195 // pred_region
          %1428 = dma.done [#allocation15], 512
        $region232: #{tpu_custom_call.1} parent=195 // pred_fallthru
          _
        // Predicated region
        $region233: #{tpu_custom_call.1} parent=195 // pred_check
          %p1429 = pneg %p788
        $region234: #{tpu_custom_call.1} parent=195 // pred_check_branch
          %1431 = sbr.rel (%p1429) target = $region236
        $region235: #{tpu_custom_call.1} parent=195 // pred_region
          %1433 = dma.done [#allocation18], 16
        $region236: #{tpu_custom_call.1} parent=195 // pred_fallthru
          _
        // Predicated region
        $region237: #{tpu_custom_call.1} parent=195 // pred_check
          %p1434 = pneg %p809
        $region238: #{tpu_custom_call.1} parent=195 // pred_check_branch
          %1436 = sbr.rel (%p1434) target = $region240
        $region239: #{tpu_custom_call.1} parent=195 // pred_region
          %1438 = dma.done [#allocation18], 512
        $region240: #{tpu_custom_call.1} parent=195 // pred_fallthru
          _
        // Predicated region
        $region241: #{tpu_custom_call.1} parent=195 // pred_check
          %p1439 = pneg %p830
        $region242: #{tpu_custom_call.1} parent=195 // pred_check_branch
          %1441 = sbr.rel (%p1439) target = $region244
        $region243: #{tpu_custom_call.1} parent=195 // pred_region
          %1443 = dma.done [#allocation21], 16
        $region244: #{tpu_custom_call.1} parent=195 // pred_fallthru
          _
        // Predicated region
        $region245: #{tpu_custom_call.1} parent=195 // pred_check
          %p1444 = pneg %p851
        $region246: #{tpu_custom_call.1} parent=195 // pred_check_branch
          %1446 = sbr.rel (%p1444) target = $region248
        $region247: #{tpu_custom_call.1} parent=195 // pred_region
          %1448 = dma.done [#allocation21], 16
        $region248: #{tpu_custom_call.1} parent=195 // pred_fallthru
          _
        // Predicated region
        $region249: #{tpu_custom_call.1} parent=195 // pred_check
          %p1449 = pneg %p872
        $region250: #{tpu_custom_call.1} parent=195 // pred_check_branch
          %1451 = sbr.rel (%p1449) target = $region252
        $region251: #{tpu_custom_call.1} parent=195 // pred_region
          %1453 = dma.done [#allocation24], 16
        $region252: #{tpu_custom_call.1} parent=195 // pred_fallthru
          _
        // Predicated region
        $region253: #{tpu_custom_call.1} parent=195 // pred_check
          %p1454 = pneg %p893
        $region254: #{tpu_custom_call.1} parent=195 // pred_check_branch
          %1456 = sbr.rel (%p1454) target = $region256
        $region255: #{tpu_custom_call.1} parent=195 // pred_region
          %1458 = dma.done [#allocation24], 512
        $region256: #{tpu_custom_call.1} parent=195 // pred_fallthru
          _
        %p1459 = scmp.lt.s32.totalorder %s111, 1
        %s1460 = scalar_select %p1459, %s111, 1
        %s1461 = smul.addr %s1460, 2
        %s1462 = smul.addr %s1461, 8
        %s1463 = scalar_lea.vmem %s1, %s1462
        %p1464 = pneg %p132
        %p1465 = pneg %p129
        %p1466 = scmp.lt.s32.totalorder %s111, 1
        %s1467 = scalar_select %p1466, %s111, 1
        %s1468 = smul.addr %s1467, 8
        %s1469 = scalar_lea.vmem %s3, %s1468
        %p1470 = pneg %p158
        %p1471 = pneg %p155
        %p1472 = pneg %p179
        %p1473 = pneg %p176
        %p1474 = pneg %p200
        %p1475 = pneg %p197
        %p1476 = pneg %p221
        %p1477 = pneg %p218
        %p1478 = pneg %p242
        %p1479 = pneg %p239
        %p1480 = pneg %p263
        %p1481 = pneg %p260
        %p1482 = pneg %p284
        %p1483 = pneg %p281
        %p1484 = pneg %p305
        %p1485 = pneg %p302
        %p1486 = pneg %p326
        %p1487 = pneg %p323
        %p1488 = pneg %p347
        %p1489 = pneg %p344
        %p1490 = pneg %p368
        %p1491 = pneg %p365
        %p1492 = pneg %p389
        %p1493 = pneg %p386
        %p1494 = pneg %p410
        %p1495 = pneg %p407
        %p1496 = pneg %p431
        %p1497 = pneg %p428
        %p1498 = pneg %p452
        %p1499 = pneg %p449
        %p1500 = pneg %p473
        %p1501 = pneg %p470
        %p1502 = pneg %p494
        %p1503 = pneg %p491
        %p1504 = pneg %p515
        %p1505 = pneg %p512
        %p1506 = pneg %p536
        %p1507 = pneg %p533
        %p1508 = pneg %p557
        %p1509 = pneg %p554
        %p1510 = pneg %p578
        %p1511 = pneg %p575
        %p1512 = pneg %p599
        %p1513 = pneg %p596
        %p1514 = pneg %p620
        %p1515 = pneg %p617
        %p1516 = pneg %p641
        %p1517 = pneg %p638
        %p1518 = pneg %p662
        %p1519 = pneg %p659
        %p1520 = pneg %p683
        %p1521 = pneg %p680
        %p1522 = pneg %p704
        %p1523 = pneg %p701
        %p1524 = pneg %p725
        %p1525 = pneg %p722
        %p1526 = pneg %p746
        %p1527 = pneg %p743
        %p1528 = pneg %p767
        %p1529 = pneg %p764
        %p1530 = pneg %p788
        %p1531 = pneg %p785
        %p1532 = pneg %p809
        %p1533 = pneg %p806
        %p1534 = pneg %p830
        %p1535 = pneg %p827
        %p1536 = pneg %p851
        %p1537 = pneg %p848
        %p1538 = pneg %p872
        %p1539 = pneg %p869
        %p1540 = pneg %p893
        %p1541 = pneg %p890
        %p1542 = pneg %p914
        %p1543 = pneg %p911
        %p1544 = pneg %p935
        %p1545 = pneg %p932
        %p1546 = pneg %p956
        %p1547 = pneg %p953
        %p1548 = pneg %p977
        %p1549 = pneg %p974
        %p1550 = pneg %p998
        %p1551 = pneg %p995
        %p1552 = pneg %p1019
        %p1553 = pneg %p1016
        %p1554 = pneg %p1040
        %p1555 = pneg %p1037
        %p1556 = pneg %p1066
        %p1557 = pneg %p1063
        %s1558 = sand.u32 %s1053, 1
        %s1559 = scalar_lea.sflag [#allocation4], %s1558
        %s1560 = sand.u32 %s1053, 1
        %s1561 = smul.addr %s1560, 16
        %s1562 = scalar_lea.vmem [#allocation26], %s1561
        %p1563 = scmp.lt.s32.totalorder %s111, 1
        %s1564 = scalar_select %p1563, %s111, 1
        %s1565 = smul.addr %s1564, 2
        %s1566 = smul.addr %s1565, 8
        %s1567 = scalar_lea.vmem %s1, %s1566
        %p1568 = scmp.lt.s32.totalorder %s111, 1
        %s1569 = scalar_select %p1568, %s111, 1
        %s1570 = smul.addr %s1569, 8
        %s1571 = scalar_lea.vmem %s3, %s1570
        %v1572 = vld [vmem:[%s1567] sm:$0xff]
        %v1573 = vld [vmem:[%s1567 + $0x8] sm:$0xff]
        %v1574 = vld [vmem:[%s1571] sm:$0xff]
        %v1575 = vld [vmem:[%s5] sm:$0xff]
        %v1576 = vld [vmem:[%s5 + $0x8] sm:$0xff]
        %v1577 = vld [vmem:[%s5 + $0x10] sm:$0xff]
        %v1578 = vld [vmem:[%s5 + $0x18] sm:$0xff]
        %v1579 = vld [vmem:[%s7] sm:$0x1]
        %v1580 = vld [vmem:[%s9] sm:$0xff]
        %v1581 = vld [vmem:[%s9 + $0x8] sm:$0xff]
        %v1582 = vld [vmem:[%s9 + $0x10] sm:$0xff]
        %v1583 = vld [vmem:[%s9 + $0x18] sm:$0xff]
        %v1584 = vld [vmem:[%s11] sm:$0x1]
        %v1585 = vld [vmem:[%s13] sm:$0x1]
        %v1586 = vld [vmem:[%s15] sm:$0x1]
        %v1587 = vld [vmem:[%s17] sm:$0xff]
        %v1588 = vld [vmem:[%s17 + $0x8] sm:$0xff]
        %v1589 = vld [vmem:[%s17 + $0x10] sm:$0xff]
        %v1590 = vld [vmem:[%s17 + $0x18] sm:$0xff]
        %v1591 = vld [vmem:[%s19] sm:$0x1]
        %v1592 = vld [vmem:[%s21] sm:$0xff]
        %v1593 = vld [vmem:[%s21 + $0x8] sm:$0xff]
        %v1594 = vld [vmem:[%s21 + $0x10] sm:$0xff]
        %v1595 = vld [vmem:[%s21 + $0x18] sm:$0xff]
        %v1596 = vld [vmem:[%s23] sm:$0x1]
        %v1597 = vld [vmem:[#allocation2] sm:$0xff]
        %v1598 = vld [vmem:[#allocation2 + $0x8] sm:$0xff]
        %v1599 = vld [vmem:[#allocation2 + $0x10] sm:$0xff]
        %v1600 = vld [vmem:[#allocation2 + $0x18] sm:$0xff]
        %v1601 = vld [vmem:[%s27] sm:$0x1]
        %v1602 = vld [vmem:[%s29] sm:$0x1]
        %v1603 = vld [vmem:[%s31] sm:$0x1]
        %v1604 = vld [vmem:[#allocation5] sm:$0xff]
        %v1605 = vld [vmem:[#allocation5 + $0x8] sm:$0xff]
        %v1606 = vld [vmem:[#allocation5 + $0x10] sm:$0xff]
        %v1607 = vld [vmem:[#allocation5 + $0x18] sm:$0xff]
        %v1608 = vld [vmem:[%s35] sm:$0x1]
        %v1609 = vld [vmem:[%s37] sm:$0xff]
        %v1610 = vld [vmem:[%s37 + $0x8] sm:$0xff]
        %v1611 = vld [vmem:[%s37 + $0x10] sm:$0xff]
        %v1612 = vld [vmem:[%s37 + $0x18] sm:$0xff]
        %v1613 = vld [vmem:[%s37 + $0x20] sm:$0xff]
        %v1614 = vld [vmem:[%s37 + $0x28] sm:$0xff]
        %v1615 = vld [vmem:[%s37 + $0x30] sm:$0xff]
        %v1616 = vld [vmem:[%s37 + $0x38] sm:$0xff]
        %v1617 = vld [vmem:[%s39] sm:$0x1]
        %v1618 = vld [vmem:[%s41] sm:$0x1]
        %v1619 = vld [vmem:[%s43] sm:$0x1]
        %v1621 = vperm.slane %v1579, 0
        %vm1623 = vcmask 261120
        %v1625 = vsel %vm1623, %v1572, 0
        %v1628 = vsel %vm1623, %v1573, 0
        %1630 = vmatpush.msra.mxu0 0.0
        %1631 = vmatpush.msra.mxu0 0.0
        %1632 = vmatpush.msra.mxu0 0.0
        %1633 = vmatpush.msra.mxu0 0.0
        %1634 = vmatpush.msra.mxu0 0.0
        %1635 = vmatpush.msra.mxu0 0.0
        %1636 = vmatpush.msra.mxu0 0.0
        %1637 = vmatpush.msra.mxu0 0.0
        %1638 = vmatpush.msra.mxu0 0.0
        %1639 = vmatpush.msra.mxu0 0.0
        %1640 = vmatpush.msra.mxu0 0.0
        %1641 = vmatpush.msra.mxu0 0.0
        %1642 = vmatpush.msra.mxu0 %v1578
        %1643 = vmatpush.msra.mxu0 %v1577
        %1644 = vmatpush.msra.mxu0 %v1576
        %1645 = vmatpush.msra.mxu0 %v1575
        %1646 = vmatmul.f32.gmra.mxu0 %v1625
        %v1647 = vpop.f32.mrf.mxu0
        %v1648 = vadd.f32 %v1621, %v1647
        %1649 = vmatmul.f32.gmra.mxu0 %v1628
        %v1650 = vpop.f32.mrf.mxu0
        %v1651 = vadd.f32 %v1621, %v1650
        %1652 = vdwg.mxu0
        %1655 = vrot.lane.b32.xlu0 %v1648, 96
        %v1656 = vpop.permute.xlu0 %1655
        %1657 = vrot.lane.b32.xlu0 %v1651, 96
        %v1658 = vpop.permute.xlu0 %1657
        %vm1659 = vcmask 31744
        %v1660 = vsel %vm1659, %v1648, 0
        %v1662 = vsel %vm1659, %v1651, 0
        %v1664 = vsel %vm1659, %v1656, 0
        %v1666 = vsel %vm1659, %v1658, 0
        %1668 = vmatpush.xpose.msra.mxu0 0.0
        %1669 = vmatpush.xpose.msra.mxu0 0.0
        %1670 = vmatpush.xpose.msra.mxu0 0.0
        %1671 = vmatpush.xpose.msra.mxu0 0.0
        %1672 = vmatpush.xpose.msra.mxu0 0.0
        %1673 = vmatpush.xpose.msra.mxu0 0.0
        %1674 = vmatpush.xpose.msra.mxu0 0.0
        %1675 = vmatpush.xpose.msra.mxu0 0.0
        %1676 = vmatpush.xpose.msra.mxu0 0.0
        %1677 = vmatpush.xpose.msra.mxu0 0.0
        %1678 = vmatpush.xpose.msra.mxu0 0.0
        %1679 = vmatpush.xpose.msra.mxu0 0.0
        %1680 = vmatpush.xpose.msra.mxu0 0.0
        %1681 = vmatpush.xpose.msra.mxu0 0.0
        %1682 = vmatpush.xpose.msra.mxu0 %v1666
        %1683 = vmatpush.xpose.msra.mxu0 %v1664
        %1684 = vmatmul.f32.gmra.mxu0 %v1660
        %v1685 = vpop.f32.mrf.mxu0
        %v1686 = vadd.f32 0.0, %v1685
        %1687 = vmatmul.f32.gmra.mxu0 %v1662
        %v1688 = vpop.f32.mrf.mxu0
        %v1689 = vadd.f32 0.0, %v1688
        %1690 = vdwg.mxu0
        %v1691 = vmul.f32 %v1686, 0.5
        %v1692 = vmul.f32 %v1689, 0.5
        %vm1693 = vcmask 130048
        %v1694 = vsel %vm1693, %v1691, -inf
        %1695 = vmax.xlane.f32.xlu0 %v1694
        %v1696 = vpop.xlane.xlu0 %1695
        %v1697 = vsel %vm1693, %v1692, -inf
        %1698 = vmax.xlane.f32.xlu0 %v1697
        %v1699 = vpop.xlane.xlu0 %1698
        %v1700 = vsub.f32 %v1691, %v1696
        %v1701 = vsub.f32 %v1692, %v1699
        %v1702 = vmul.f32 %v1700, 1.442695
        %v1703 = vpow.pop %v1702
        %v1704 = vmul.f32 %v1701, 1.442695
        %v1705 = vpow.pop %v1704
        %v1706 = vsel %vm1693, %v1703, 0.0
        %1707 = vadd.xlane.f32.xlu0 %v1706
        %v1708 = vpop.xlane.xlu0 %1707
        %v1709 = vsel %vm1693, %v1705, 0.0
        %1710 = vadd.xlane.f32.xlu0 %v1709
        %v1711 = vpop.xlane.xlu0 %1710
        %v1712 = vrcp.pop %v1708
        %v1713 = vrcp.pop %v1711
        %v1714 = vmul.f32 %v1703, %v1712
        %v1715 = vmul.f32 %v1705, %v1713
        %1716 = vrot.lane.b32.xlu0 %v1648, 64
        %v1717 = vpop.permute.xlu0 %1716
        %1718 = vrot.lane.b32.xlu0 %v1651, 64
        %v1719 = vpop.permute.xlu0 %1718
        %v1723 = vsel %vm1693, %v1714, 0
        %v1726 = vsel %vm1693, %v1715, 0
        %1728 = vmatpush.msra.mxu0 0.0
        %1729 = vmatpush.msra.mxu0 0.0
        %1730 = vmatpush.msra.mxu0 0.0
        %1731 = vmatpush.msra.mxu0 0.0
        %1732 = vmatpush.msra.mxu0 0.0
        %1733 = vmatpush.msra.mxu0 0.0
        %1734 = vmatpush.msra.mxu0 0.0
        %1735 = vmatpush.msra.mxu0 0.0
        %1736 = vmatpush.msra.mxu0 0.0
        %1737 = vmatpush.msra.mxu0 0.0
        %1738 = vmatpush.msra.mxu0 0.0
        %1739 = vmatpush.msra.mxu0 0.0
        %1740 = vmatpush.msra.mxu0 0.0
        %1741 = vmatpush.msra.mxu0 0.0
        %1742 = vmatpush.msra.mxu0 %v1719
        %1743 = vmatpush.msra.mxu0 %v1717
        %1744 = vmatmul.f32.gmra.mxu0 %v1723
        %v1745 = vpop.f32.mrf.mxu0
        %v1746 = vadd.f32 0.0, %v1745
        %1747 = vmatmul.f32.gmra.mxu0 %v1726
        %v1748 = vpop.f32.mrf.mxu0
        %v1749 = vadd.f32 0.0, %v1748
        %1750 = vdwg.mxu0
        %1751 = vrot.lane.b32.xlu0 %v1648, 124
        %v1752 = vpop.permute.xlu0 %1751
        %1753 = vrot.lane.b32.xlu0 %v1651, 124
        %v1754 = vpop.permute.xlu0 %1753
        %1755 = vrot.lane.b32.xlu0 %v1648, 92
        %v1756 = vpop.permute.xlu0 %1755
        %1757 = vrot.lane.b32.xlu0 %v1651, 92
        %v1758 = vpop.permute.xlu0 %1757
        %v1759 = vsel %vm1659, %v1752, 0
        %v1761 = vsel %vm1659, %v1754, 0
        %v1763 = vsel %vm1659, %v1756, 0
        %v1765 = vsel %vm1659, %v1758, 0
        %1767 = vmatpush.xpose.msra.mxu0 0.0
        %1768 = vmatpush.xpose.msra.mxu0 0.0
        %1769 = vmatpush.xpose.msra.mxu0 0.0
        %1770 = vmatpush.xpose.msra.mxu0 0.0
        %1771 = vmatpush.xpose.msra.mxu0 0.0
        %1772 = vmatpush.xpose.msra.mxu0 0.0
        %1773 = vmatpush.xpose.msra.mxu0 0.0
        %1774 = vmatpush.xpose.msra.mxu0 0.0
        %1775 = vmatpush.xpose.msra.mxu0 0.0
        %1776 = vmatpush.xpose.msra.mxu0 0.0
        %1777 = vmatpush.xpose.msra.mxu0 0.0
        %1778 = vmatpush.xpose.msra.mxu0 0.0
        %1779 = vmatpush.xpose.msra.mxu0 0.0
        %1780 = vmatpush.xpose.msra.mxu0 0.0
        %1781 = vmatpush.xpose.msra.mxu0 %v1765
        %1782 = vmatpush.xpose.msra.mxu0 %v1763
        %1783 = vmatmul.f32.gmra.mxu0 %v1759
        %v1784 = vpop.f32.mrf.mxu0
        %v1785 = vadd.f32 0.0, %v1784
        %1786 = vmatmul.f32.gmra.mxu0 %v1761
        %v1787 = vpop.f32.mrf.mxu0
        %v1788 = vadd.f32 0.0, %v1787
        %1789 = vdwg.mxu0
        %v1790 = vmul.f32 %v1785, 0.5
        %v1791 = vmul.f32 %v1788, 0.5
        %v1792 = vsel %vm1693, %v1790, -inf
        %1793 = vmax.xlane.f32.xlu0 %v1792
        %v1794 = vpop.xlane.xlu0 %1793
        %v1795 = vsel %vm1693, %v1791, -inf
        %1796 = vmax.xlane.f32.xlu0 %v1795
        %v1797 = vpop.xlane.xlu0 %1796
        %v1798 = vsub.f32 %v1790, %v1794
        %v1799 = vsub.f32 %v1791, %v1797
        %v1800 = vmul.f32 %v1798, 1.442695
        %v1801 = vpow.pop %v1800
        %v1802 = vmul.f32 %v1799, 1.442695
        %v1803 = vpow.pop %v1802
        %v1804 = vsel %vm1693, %v1801, 0.0
        %1805 = vadd.xlane.f32.xlu0 %v1804
        %v1806 = vpop.xlane.xlu0 %1805
        %v1807 = vsel %vm1693, %v1803, 0.0
        %1808 = vadd.xlane.f32.xlu0 %v1807
        %v1809 = vpop.xlane.xlu0 %1808
        %v1810 = vrcp.pop %v1806
        %v1811 = vrcp.pop %v1809
        %v1812 = vmul.f32 %v1801, %v1810
        %v1813 = vmul.f32 %v1803, %v1811
        %1814 = vrot.lane.b32.xlu0 %v1648, 60
        %v1815 = vpop.permute.xlu0 %1814
        %1816 = vrot.lane.b32.xlu0 %v1651, 60
        %v1817 = vpop.permute.xlu0 %1816
        %v1821 = vsel %vm1693, %v1812, 0
        %v1824 = vsel %vm1693, %v1813, 0
        %1826 = vmatpush.msra.mxu0 0.0
        %1827 = vmatpush.msra.mxu0 0.0
        %1828 = vmatpush.msra.mxu0 0.0
        %1829 = vmatpush.msra.mxu0 0.0
        %1830 = vmatpush.msra.mxu0 0.0
        %1831 = vmatpush.msra.mxu0 0.0
        %1832 = vmatpush.msra.mxu0 0.0
        %1833 = vmatpush.msra.mxu0 0.0
        %1834 = vmatpush.msra.mxu0 0.0
        %1835 = vmatpush.msra.mxu0 0.0
        %1836 = vmatpush.msra.mxu0 0.0
        %1837 = vmatpush.msra.mxu0 0.0
        %1838 = vmatpush.msra.mxu0 0.0
        %1839 = vmatpush.msra.mxu0 0.0
        %1840 = vmatpush.msra.mxu0 %v1817
        %1841 = vmatpush.msra.mxu0 %v1815
        %1842 = vmatmul.f32.gmra.mxu0 %v1821
        %v1843 = vpop.f32.mrf.mxu0
        %v1844 = vadd.f32 0.0, %v1843
        %1845 = vmatmul.f32.gmra.mxu0 %v1824
        %v1846 = vpop.f32.mrf.mxu0
        %v1847 = vadd.f32 0.0, %v1846
        %1848 = vdwg.mxu0
        %1849 = vrot.lane.b32.xlu0 %v1648, 120
        %v1850 = vpop.permute.xlu0 %1849
        %1851 = vrot.lane.b32.xlu0 %v1651, 120
        %v1852 = vpop.permute.xlu0 %1851
        %1853 = vrot.lane.b32.xlu0 %v1648, 88
        %v1854 = vpop.permute.xlu0 %1853
        %1855 = vrot.lane.b32.xlu0 %v1651, 88
        %v1856 = vpop.permute.xlu0 %1855
        %v1857 = vsel %vm1659, %v1850, 0
        %v1859 = vsel %vm1659, %v1852, 0
        %v1861 = vsel %vm1659, %v1854, 0
        %v1863 = vsel %vm1659, %v1856, 0
        %1865 = vmatpush.xpose.msra.mxu0 0.0
        %1866 = vmatpush.xpose.msra.mxu0 0.0
        %1867 = vmatpush.xpose.msra.mxu0 0.0
        %1868 = vmatpush.xpose.msra.mxu0 0.0
        %1869 = vmatpush.xpose.msra.mxu0 0.0
        %1870 = vmatpush.xpose.msra.mxu0 0.0
        %1871 = vmatpush.xpose.msra.mxu0 0.0
        %1872 = vmatpush.xpose.msra.mxu0 0.0
        %1873 = vmatpush.xpose.msra.mxu0 0.0
        %1874 = vmatpush.xpose.msra.mxu0 0.0
        %1875 = vmatpush.xpose.msra.mxu0 0.0
        %1876 = vmatpush.xpose.msra.mxu0 0.0
        %1877 = vmatpush.xpose.msra.mxu0 0.0
        %1878 = vmatpush.xpose.msra.mxu0 0.0
        %1879 = vmatpush.xpose.msra.mxu0 %v1863
        %1880 = vmatpush.xpose.msra.mxu0 %v1861
        %1881 = vmatmul.f32.gmra.mxu0 %v1857
        %v1882 = vpop.f32.mrf.mxu0
        %v1883 = vadd.f32 0.0, %v1882
        %1884 = vmatmul.f32.gmra.mxu0 %v1859
        %v1885 = vpop.f32.mrf.mxu0
        %v1886 = vadd.f32 0.0, %v1885
        %1887 = vdwg.mxu0
        %v1888 = vmul.f32 %v1883, 0.5
        %v1889 = vmul.f32 %v1886, 0.5
        %v1890 = vsel %vm1693, %v1888, -inf
        %1891 = vmax.xlane.f32.xlu0 %v1890
        %v1892 = vpop.xlane.xlu0 %1891
        %v1893 = vsel %vm1693, %v1889, -inf
        %1894 = vmax.xlane.f32.xlu0 %v1893
        %v1895 = vpop.xlane.xlu0 %1894
        %v1896 = vsub.f32 %v1888, %v1892
        %v1897 = vsub.f32 %v1889, %v1895
        %v1898 = vmul.f32 %v1896, 1.442695
        %v1899 = vpow.pop %v1898
        %v1900 = vmul.f32 %v1897, 1.442695
        %v1901 = vpow.pop %v1900
        %v1902 = vsel %vm1693, %v1899, 0.0
        %1903 = vadd.xlane.f32.xlu0 %v1902
        %v1904 = vpop.xlane.xlu0 %1903
        %v1905 = vsel %vm1693, %v1901, 0.0
        %1906 = vadd.xlane.f32.xlu0 %v1905
        %v1907 = vpop.xlane.xlu0 %1906
        %v1908 = vrcp.pop %v1904
        %v1909 = vrcp.pop %v1907
        %v1910 = vmul.f32 %v1899, %v1908
        %v1911 = vmul.f32 %v1901, %v1909
        %1912 = vrot.lane.b32.xlu0 %v1648, 56
        %v1913 = vpop.permute.xlu0 %1912
        %1914 = vrot.lane.b32.xlu0 %v1651, 56
        %v1915 = vpop.permute.xlu0 %1914
        %v1919 = vsel %vm1693, %v1910, 0
        %v1922 = vsel %vm1693, %v1911, 0
        %1924 = vmatpush.msra.mxu0 0.0
        %1925 = vmatpush.msra.mxu0 0.0
        %1926 = vmatpush.msra.mxu0 0.0
        %1927 = vmatpush.msra.mxu0 0.0
        %1928 = vmatpush.msra.mxu0 0.0
        %1929 = vmatpush.msra.mxu0 0.0
        %1930 = vmatpush.msra.mxu0 0.0
        %1931 = vmatpush.msra.mxu0 0.0
        %1932 = vmatpush.msra.mxu0 0.0
        %1933 = vmatpush.msra.mxu0 0.0
        %1934 = vmatpush.msra.mxu0 0.0
        %1935 = vmatpush.msra.mxu0 0.0
        %1936 = vmatpush.msra.mxu0 0.0
        %1937 = vmatpush.msra.mxu0 0.0
        %1938 = vmatpush.msra.mxu0 %v1915
        %1939 = vmatpush.msra.mxu0 %v1913
        %1940 = vmatmul.f32.gmra.mxu0 %v1919
        %v1941 = vpop.f32.mrf.mxu0
        %v1942 = vadd.f32 0.0, %v1941
        %1943 = vmatmul.f32.gmra.mxu0 %v1922
        %v1944 = vpop.f32.mrf.mxu0
        %v1945 = vadd.f32 0.0, %v1944
        %1946 = vdwg.mxu0
        %1947 = vrot.lane.b32.xlu0 %v1648, 116
        %v1948 = vpop.permute.xlu0 %1947
        %1949 = vrot.lane.b32.xlu0 %v1651, 116
        %v1950 = vpop.permute.xlu0 %1949
        %1951 = vrot.lane.b32.xlu0 %v1648, 84
        %v1952 = vpop.permute.xlu0 %1951
        %1953 = vrot.lane.b32.xlu0 %v1651, 84
        %v1954 = vpop.permute.xlu0 %1953
        %v1955 = vsel %vm1659, %v1948, 0
        %v1957 = vsel %vm1659, %v1950, 0
        %v1959 = vsel %vm1659, %v1952, 0
        %v1961 = vsel %vm1659, %v1954, 0
        %1963 = vmatpush.xpose.msra.mxu0 0.0
        %1964 = vmatpush.xpose.msra.mxu0 0.0
        %1965 = vmatpush.xpose.msra.mxu0 0.0
        %1966 = vmatpush.xpose.msra.mxu0 0.0
        %1967 = vmatpush.xpose.msra.mxu0 0.0
        %1968 = vmatpush.xpose.msra.mxu0 0.0
        %1969 = vmatpush.xpose.msra.mxu0 0.0
        %1970 = vmatpush.xpose.msra.mxu0 0.0
        %1971 = vmatpush.xpose.msra.mxu0 0.0
        %1972 = vmatpush.xpose.msra.mxu0 0.0
        %1973 = vmatpush.xpose.msra.mxu0 0.0
        %1974 = vmatpush.xpose.msra.mxu0 0.0
        %1975 = vmatpush.xpose.msra.mxu0 0.0
        %1976 = vmatpush.xpose.msra.mxu0 0.0
        %1977 = vmatpush.xpose.msra.mxu0 %v1961
        %1978 = vmatpush.xpose.msra.mxu0 %v1959
        %1979 = vmatmul.f32.gmra.mxu0 %v1955
        %v1980 = vpop.f32.mrf.mxu0
        %v1981 = vadd.f32 0.0, %v1980
        %1982 = vmatmul.f32.gmra.mxu0 %v1957
        %v1983 = vpop.f32.mrf.mxu0
        %v1984 = vadd.f32 0.0, %v1983
        %1985 = vdwg.mxu0
        %v1986 = vmul.f32 %v1981, 0.5
        %v1987 = vmul.f32 %v1984, 0.5
        %v1988 = vsel %vm1693, %v1986, -inf
        %1989 = vmax.xlane.f32.xlu0 %v1988
        %v1990 = vpop.xlane.xlu0 %1989
        %v1991 = vsel %vm1693, %v1987, -inf
        %1992 = vmax.xlane.f32.xlu0 %v1991
        %v1993 = vpop.xlane.xlu0 %1992
        %v1994 = vsub.f32 %v1986, %v1990
        %v1995 = vsub.f32 %v1987, %v1993
        %v1996 = vmul.f32 %v1994, 1.442695
        %v1997 = vpow.pop %v1996
        %v1998 = vmul.f32 %v1995, 1.442695
        %v1999 = vpow.pop %v1998
        %v2000 = vsel %vm1693, %v1997, 0.0
        %2001 = vadd.xlane.f32.xlu0 %v2000
        %v2002 = vpop.xlane.xlu0 %2001
        %v2003 = vsel %vm1693, %v1999, 0.0
        %2004 = vadd.xlane.f32.xlu0 %v2003
        %v2005 = vpop.xlane.xlu0 %2004
        %v2006 = vrcp.pop %v2002
        %v2007 = vrcp.pop %v2005
        %v2008 = vmul.f32 %v1997, %v2006
        %v2009 = vmul.f32 %v1999, %v2007
        %2010 = vrot.lane.b32.xlu0 %v1648, 52
        %v2011 = vpop.permute.xlu0 %2010
        %2012 = vrot.lane.b32.xlu0 %v1651, 52
        %v2013 = vpop.permute.xlu0 %2012
        %v2017 = vsel %vm1693, %v2008, 0
        %v2020 = vsel %vm1693, %v2009, 0
        %2022 = vmatpush.msra.mxu0 0.0
        %2023 = vmatpush.msra.mxu0 0.0
        %2024 = vmatpush.msra.mxu0 0.0
        %2025 = vmatpush.msra.mxu0 0.0
        %2026 = vmatpush.msra.mxu0 0.0
        %2027 = vmatpush.msra.mxu0 0.0
        %2028 = vmatpush.msra.mxu0 0.0
        %2029 = vmatpush.msra.mxu0 0.0
        %2030 = vmatpush.msra.mxu0 0.0
        %2031 = vmatpush.msra.mxu0 0.0
        %2032 = vmatpush.msra.mxu0 0.0
        %2033 = vmatpush.msra.mxu0 0.0
        %2034 = vmatpush.msra.mxu0 0.0
        %2035 = vmatpush.msra.mxu0 0.0
        %2036 = vmatpush.msra.mxu0 %v2013
        %2037 = vmatpush.msra.mxu0 %v2011
        %2038 = vmatmul.f32.gmra.mxu0 %v2017
        %v2039 = vpop.f32.mrf.mxu0
        %v2040 = vadd.f32 0.0, %v2039
        %2041 = vmatmul.f32.gmra.mxu0 %v2020
        %v2042 = vpop.f32.mrf.mxu0
        %v2043 = vadd.f32 0.0, %v2042
        %2044 = vdwg.mxu0
        %2045 = vrot.lane.b32.xlu0 %v1648, 112
        %v2046 = vpop.permute.xlu0 %2045
        %2047 = vrot.lane.b32.xlu0 %v1651, 112
        %v2048 = vpop.permute.xlu0 %2047
        %2049 = vrot.lane.b32.xlu0 %v1648, 80
        %v2050 = vpop.permute.xlu0 %2049
        %2051 = vrot.lane.b32.xlu0 %v1651, 80
        %v2052 = vpop.permute.xlu0 %2051
        %v2053 = vsel %vm1659, %v2046, 0
        %v2055 = vsel %vm1659, %v2048, 0
        %v2057 = vsel %vm1659, %v2050, 0
        %v2059 = vsel %vm1659, %v2052, 0
        %2061 = vmatpush.xpose.msra.mxu0 0.0
        %2062 = vmatpush.xpose.msra.mxu0 0.0
        %2063 = vmatpush.xpose.msra.mxu0 0.0
        %2064 = vmatpush.xpose.msra.mxu0 0.0
        %2065 = vmatpush.xpose.msra.mxu0 0.0
        %2066 = vmatpush.xpose.msra.mxu0 0.0
        %2067 = vmatpush.xpose.msra.mxu0 0.0
        %2068 = vmatpush.xpose.msra.mxu0 0.0
        %2069 = vmatpush.xpose.msra.mxu0 0.0
        %2070 = vmatpush.xpose.msra.mxu0 0.0
        %2071 = vmatpush.xpose.msra.mxu0 0.0
        %2072 = vmatpush.xpose.msra.mxu0 0.0
        %2073 = vmatpush.xpose.msra.mxu0 0.0
        %2074 = vmatpush.xpose.msra.mxu0 0.0
        %2075 = vmatpush.xpose.msra.mxu0 %v2059
        %2076 = vmatpush.xpose.msra.mxu0 %v2057
        %2077 = vmatmul.f32.gmra.mxu0 %v2053
        %v2078 = vpop.f32.mrf.mxu0
        %v2079 = vadd.f32 0.0, %v2078
        %2080 = vmatmul.f32.gmra.mxu0 %v2055
        %v2081 = vpop.f32.mrf.mxu0
        %v2082 = vadd.f32 0.0, %v2081
        %2083 = vdwg.mxu0
        %v2084 = vmul.f32 %v2079, 0.5
        %v2085 = vmul.f32 %v2082, 0.5
        %v2086 = vsel %vm1693, %v2084, -inf
        %2087 = vmax.xlane.f32.xlu0 %v2086
        %v2088 = vpop.xlane.xlu0 %2087
        %v2089 = vsel %vm1693, %v2085, -inf
        %2090 = vmax.xlane.f32.xlu0 %v2089
        %v2091 = vpop.xlane.xlu0 %2090
        %v2092 = vsub.f32 %v2084, %v2088
        %v2093 = vsub.f32 %v2085, %v2091
        %v2094 = vmul.f32 %v2092, 1.442695
        %v2095 = vpow.pop %v2094
        %v2096 = vmul.f32 %v2093, 1.442695
        %v2097 = vpow.pop %v2096
        %v2098 = vsel %vm1693, %v2095, 0.0
        %2099 = vadd.xlane.f32.xlu0 %v2098
        %v2100 = vpop.xlane.xlu0 %2099
        %v2101 = vsel %vm1693, %v2097, 0.0
        %2102 = vadd.xlane.f32.xlu0 %v2101
        %v2103 = vpop.xlane.xlu0 %2102
        %v2104 = vrcp.pop %v2100
        %v2105 = vrcp.pop %v2103
        %v2106 = vmul.f32 %v2095, %v2104
        %v2107 = vmul.f32 %v2097, %v2105
        %2108 = vrot.lane.b32.xlu0 %v1648, 48
        %v2109 = vpop.permute.xlu0 %2108
        %2110 = vrot.lane.b32.xlu0 %v1651, 48
        %v2111 = vpop.permute.xlu0 %2110
        %v2115 = vsel %vm1693, %v2106, 0
        %v2118 = vsel %vm1693, %v2107, 0
        %2120 = vmatpush.msra.mxu0 0.0
        %2121 = vmatpush.msra.mxu0 0.0
        %2122 = vmatpush.msra.mxu0 0.0
        %2123 = vmatpush.msra.mxu0 0.0
        %2124 = vmatpush.msra.mxu0 0.0
        %2125 = vmatpush.msra.mxu0 0.0
        %2126 = vmatpush.msra.mxu0 0.0
        %2127 = vmatpush.msra.mxu0 0.0
        %2128 = vmatpush.msra.mxu0 0.0
        %2129 = vmatpush.msra.mxu0 0.0
        %2130 = vmatpush.msra.mxu0 0.0
        %2131 = vmatpush.msra.mxu0 0.0
        %2132 = vmatpush.msra.mxu0 0.0
        %2133 = vmatpush.msra.mxu0 0.0
        %2134 = vmatpush.msra.mxu0 %v2111
        %2135 = vmatpush.msra.mxu0 %v2109
        %2136 = vmatmul.f32.gmra.mxu0 %v2115
        %v2137 = vpop.f32.mrf.mxu0
        %v2138 = vadd.f32 0.0, %v2137
        %2139 = vmatmul.f32.gmra.mxu0 %v2118
        %v2140 = vpop.f32.mrf.mxu0
        %v2141 = vadd.f32 0.0, %v2140
        %2142 = vdwg.mxu0
        %2143 = vrot.lane.b32.xlu0 %v1648, 108
        %v2144 = vpop.permute.xlu0 %2143
        %2145 = vrot.lane.b32.xlu0 %v1651, 108
        %v2146 = vpop.permute.xlu0 %2145
        %2147 = vrot.lane.b32.xlu0 %v1648, 76
        %v2148 = vpop.permute.xlu0 %2147
        %2149 = vrot.lane.b32.xlu0 %v1651, 76
        %v2150 = vpop.permute.xlu0 %2149
        %v2151 = vsel %vm1659, %v2144, 0
        %v2153 = vsel %vm1659, %v2146, 0
        %v2155 = vsel %vm1659, %v2148, 0
        %v2157 = vsel %vm1659, %v2150, 0
        %2159 = vmatpush.xpose.msra.mxu0 0.0
        %2160 = vmatpush.xpose.msra.mxu0 0.0
        %2161 = vmatpush.xpose.msra.mxu0 0.0
        %2162 = vmatpush.xpose.msra.mxu0 0.0
        %2163 = vmatpush.xpose.msra.mxu0 0.0
        %2164 = vmatpush.xpose.msra.mxu0 0.0
        %2165 = vmatpush.xpose.msra.mxu0 0.0
        %2166 = vmatpush.xpose.msra.mxu0 0.0
        %2167 = vmatpush.xpose.msra.mxu0 0.0
        %2168 = vmatpush.xpose.msra.mxu0 0.0
        %2169 = vmatpush.xpose.msra.mxu0 0.0
        %2170 = vmatpush.xpose.msra.mxu0 0.0
        %2171 = vmatpush.xpose.msra.mxu0 0.0
        %2172 = vmatpush.xpose.msra.mxu0 0.0
        %2173 = vmatpush.xpose.msra.mxu0 %v2157
        %2174 = vmatpush.xpose.msra.mxu0 %v2155
        %2175 = vmatmul.f32.gmra.mxu0 %v2151
        %v2176 = vpop.f32.mrf.mxu0
        %v2177 = vadd.f32 0.0, %v2176
        %2178 = vmatmul.f32.gmra.mxu0 %v2153
        %v2179 = vpop.f32.mrf.mxu0
        %v2180 = vadd.f32 0.0, %v2179
        %2181 = vdwg.mxu0
        %v2182 = vmul.f32 %v2177, 0.5
        %v2183 = vmul.f32 %v2180, 0.5
        %v2184 = vsel %vm1693, %v2182, -inf
        %2185 = vmax.xlane.f32.xlu0 %v2184
        %v2186 = vpop.xlane.xlu0 %2185
        %v2187 = vsel %vm1693, %v2183, -inf
        %2188 = vmax.xlane.f32.xlu0 %v2187
        %v2189 = vpop.xlane.xlu0 %2188
        %v2190 = vsub.f32 %v2182, %v2186
        %v2191 = vsub.f32 %v2183, %v2189
        %v2192 = vmul.f32 %v2190, 1.442695
        %v2193 = vpow.pop %v2192
        %v2194 = vmul.f32 %v2191, 1.442695
        %v2195 = vpow.pop %v2194
        %v2196 = vsel %vm1693, %v2193, 0.0
        %2197 = vadd.xlane.f32.xlu0 %v2196
        %v2198 = vpop.xlane.xlu0 %2197
        %v2199 = vsel %vm1693, %v2195, 0.0
        %2200 = vadd.xlane.f32.xlu0 %v2199
        %v2201 = vpop.xlane.xlu0 %2200
        %v2202 = vrcp.pop %v2198
        %v2203 = vrcp.pop %v2201
        %v2204 = vmul.f32 %v2193, %v2202
        %v2205 = vmul.f32 %v2195, %v2203
        %2206 = vrot.lane.b32.xlu0 %v1648, 44
        %v2207 = vpop.permute.xlu0 %2206
        %2208 = vrot.lane.b32.xlu0 %v1651, 44
        %v2209 = vpop.permute.xlu0 %2208
        %v2213 = vsel %vm1693, %v2204, 0
        %v2216 = vsel %vm1693, %v2205, 0
        %2218 = vmatpush.msra.mxu0 0.0
        %2219 = vmatpush.msra.mxu0 0.0
        %2220 = vmatpush.msra.mxu0 0.0
        %2221 = vmatpush.msra.mxu0 0.0
        %2222 = vmatpush.msra.mxu0 0.0
        %2223 = vmatpush.msra.mxu0 0.0
        %2224 = vmatpush.msra.mxu0 0.0
        %2225 = vmatpush.msra.mxu0 0.0
        %2226 = vmatpush.msra.mxu0 0.0
        %2227 = vmatpush.msra.mxu0 0.0
        %2228 = vmatpush.msra.mxu0 0.0
        %2229 = vmatpush.msra.mxu0 0.0
        %2230 = vmatpush.msra.mxu0 0.0
        %2231 = vmatpush.msra.mxu0 0.0
        %2232 = vmatpush.msra.mxu0 %v2209
        %2233 = vmatpush.msra.mxu0 %v2207
        %2234 = vmatmul.f32.gmra.mxu0 %v2213
        %v2235 = vpop.f32.mrf.mxu0
        %v2236 = vadd.f32 0.0, %v2235
        %2237 = vmatmul.f32.gmra.mxu0 %v2216
        %v2238 = vpop.f32.mrf.mxu0
        %v2239 = vadd.f32 0.0, %v2238
        %2240 = vdwg.mxu0
        %2241 = vrot.lane.b32.xlu0 %v1648, 104
        %v2242 = vpop.permute.xlu0 %2241
        %2243 = vrot.lane.b32.xlu0 %v1651, 104
        %v2244 = vpop.permute.xlu0 %2243
        %2245 = vrot.lane.b32.xlu0 %v1648, 72
        %v2246 = vpop.permute.xlu0 %2245
        %2247 = vrot.lane.b32.xlu0 %v1651, 72
        %v2248 = vpop.permute.xlu0 %2247
        %v2249 = vsel %vm1659, %v2242, 0
        %v2251 = vsel %vm1659, %v2244, 0
        %v2253 = vsel %vm1659, %v2246, 0
        %v2255 = vsel %vm1659, %v2248, 0
        %2257 = vmatpush.xpose.msra.mxu0 0.0
        %2258 = vmatpush.xpose.msra.mxu0 0.0
        %2259 = vmatpush.xpose.msra.mxu0 0.0
        %2260 = vmatpush.xpose.msra.mxu0 0.0
        %2261 = vmatpush.xpose.msra.mxu0 0.0
        %2262 = vmatpush.xpose.msra.mxu0 0.0
        %2263 = vmatpush.xpose.msra.mxu0 0.0
        %2264 = vmatpush.xpose.msra.mxu0 0.0
        %2265 = vmatpush.xpose.msra.mxu0 0.0
        %2266 = vmatpush.xpose.msra.mxu0 0.0
        %2267 = vmatpush.xpose.msra.mxu0 0.0
        %2268 = vmatpush.xpose.msra.mxu0 0.0
        %2269 = vmatpush.xpose.msra.mxu0 0.0
        %2270 = vmatpush.xpose.msra.mxu0 0.0
        %2271 = vmatpush.xpose.msra.mxu0 %v2255
        %2272 = vmatpush.xpose.msra.mxu0 %v2253
        %2273 = vmatmul.f32.gmra.mxu0 %v2249
        %v2274 = vpop.f32.mrf.mxu0
        %v2275 = vadd.f32 0.0, %v2274
        %2276 = vmatmul.f32.gmra.mxu0 %v2251
        %v2277 = vpop.f32.mrf.mxu0
        %v2278 = vadd.f32 0.0, %v2277
        %2279 = vdwg.mxu0
        %v2280 = vmul.f32 %v2275, 0.5
        %v2281 = vmul.f32 %v2278, 0.5
        %v2282 = vsel %vm1693, %v2280, -inf
        %2283 = vmax.xlane.f32.xlu0 %v2282
        %v2284 = vpop.xlane.xlu0 %2283
        %v2285 = vsel %vm1693, %v2281, -inf
        %2286 = vmax.xlane.f32.xlu0 %v2285
        %v2287 = vpop.xlane.xlu0 %2286
        %v2288 = vsub.f32 %v2280, %v2284
        %v2289 = vsub.f32 %v2281, %v2287
        %v2290 = vmul.f32 %v2288, 1.442695
        %v2291 = vpow.pop %v2290
        %v2292 = vmul.f32 %v2289, 1.442695
        %v2293 = vpow.pop %v2292
        %v2294 = vsel %vm1693, %v2291, 0.0
        %2295 = vadd.xlane.f32.xlu0 %v2294
        %v2296 = vpop.xlane.xlu0 %2295
        %v2297 = vsel %vm1693, %v2293, 0.0
        %2298 = vadd.xlane.f32.xlu0 %v2297
        %v2299 = vpop.xlane.xlu0 %2298
        %v2300 = vrcp.pop %v2296
        %v2301 = vrcp.pop %v2299
        %v2302 = vmul.f32 %v2291, %v2300
        %v2303 = vmul.f32 %v2293, %v2301
        %2304 = vrot.lane.b32.xlu0 %v1648, 40
        %v2305 = vpop.permute.xlu0 %2304
        %2306 = vrot.lane.b32.xlu0 %v1651, 40
        %v2307 = vpop.permute.xlu0 %2306
        %v2311 = vsel %vm1693, %v2302, 0
        %v2314 = vsel %vm1693, %v2303, 0
        %2316 = vmatpush.msra.mxu0 0.0
        %2317 = vmatpush.msra.mxu0 0.0
        %2318 = vmatpush.msra.mxu0 0.0
        %2319 = vmatpush.msra.mxu0 0.0
        %2320 = vmatpush.msra.mxu0 0.0
        %2321 = vmatpush.msra.mxu0 0.0
        %2322 = vmatpush.msra.mxu0 0.0
        %2323 = vmatpush.msra.mxu0 0.0
        %2324 = vmatpush.msra.mxu0 0.0
        %2325 = vmatpush.msra.mxu0 0.0
        %2326 = vmatpush.msra.mxu0 0.0
        %2327 = vmatpush.msra.mxu0 0.0
        %2328 = vmatpush.msra.mxu0 0.0
        %2329 = vmatpush.msra.mxu0 0.0
        %2330 = vmatpush.msra.mxu0 %v2307
        %2331 = vmatpush.msra.mxu0 %v2305
        %2332 = vmatmul.f32.gmra.mxu0 %v2311
        %v2333 = vpop.f32.mrf.mxu0
        %v2334 = vadd.f32 0.0, %v2333
        %2335 = vmatmul.f32.gmra.mxu0 %v2314
        %v2336 = vpop.f32.mrf.mxu0
        %v2337 = vadd.f32 0.0, %v2336
        %2338 = vdwg.mxu0
        %2339 = vrot.lane.b32.xlu0 %v1648, 100
        %v2340 = vpop.permute.xlu0 %2339
        %2341 = vrot.lane.b32.xlu0 %v1651, 100
        %v2342 = vpop.permute.xlu0 %2341
        %2343 = vrot.lane.b32.xlu0 %v1648, 68
        %v2344 = vpop.permute.xlu0 %2343
        %2345 = vrot.lane.b32.xlu0 %v1651, 68
        %v2346 = vpop.permute.xlu0 %2345
        %v2347 = vsel %vm1659, %v2340, 0
        %v2349 = vsel %vm1659, %v2342, 0
        %v2351 = vsel %vm1659, %v2344, 0
        %v2353 = vsel %vm1659, %v2346, 0
        %2355 = vmatpush.xpose.msra.mxu0 0.0
        %2356 = vmatpush.xpose.msra.mxu0 0.0
        %2357 = vmatpush.xpose.msra.mxu0 0.0
        %2358 = vmatpush.xpose.msra.mxu0 0.0
        %2359 = vmatpush.xpose.msra.mxu0 0.0
        %2360 = vmatpush.xpose.msra.mxu0 0.0
        %2361 = vmatpush.xpose.msra.mxu0 0.0
        %2362 = vmatpush.xpose.msra.mxu0 0.0
        %2363 = vmatpush.xpose.msra.mxu0 0.0
        %2364 = vmatpush.xpose.msra.mxu0 0.0
        %2365 = vmatpush.xpose.msra.mxu0 0.0
        %2366 = vmatpush.xpose.msra.mxu0 0.0
        %2367 = vmatpush.xpose.msra.mxu0 0.0
        %2368 = vmatpush.xpose.msra.mxu0 0.0
        %2369 = vmatpush.xpose.msra.mxu0 %v2353
        %2370 = vmatpush.xpose.msra.mxu0 %v2351
        %2371 = vmatmul.f32.gmra.mxu0 %v2347
        %v2372 = vpop.f32.mrf.mxu0
        %v2373 = vadd.f32 0.0, %v2372
        %2374 = vmatmul.f32.gmra.mxu0 %v2349
        %v2375 = vpop.f32.mrf.mxu0
        %v2376 = vadd.f32 0.0, %v2375
        %2377 = vdwg.mxu0
        %v2378 = vmul.f32 %v2373, 0.5
        %v2379 = vmul.f32 %v2376, 0.5
        %v2380 = vsel %vm1693, %v2378, -inf
        %2381 = vmax.xlane.f32.xlu0 %v2380
        %v2382 = vpop.xlane.xlu0 %2381
        %v2383 = vsel %vm1693, %v2379, -inf
        %2384 = vmax.xlane.f32.xlu0 %v2383
        %v2385 = vpop.xlane.xlu0 %2384
        %v2386 = vsub.f32 %v2378, %v2382
        %v2387 = vsub.f32 %v2379, %v2385
        %v2388 = vmul.f32 %v2386, 1.442695
        %v2389 = vpow.pop %v2388
        %v2390 = vmul.f32 %v2387, 1.442695
        %v2391 = vpow.pop %v2390
        %v2392 = vsel %vm1693, %v2389, 0.0
        %2393 = vadd.xlane.f32.xlu0 %v2392
        %v2394 = vpop.xlane.xlu0 %2393
        %v2395 = vsel %vm1693, %v2391, 0.0
        %2396 = vadd.xlane.f32.xlu0 %v2395
        %v2397 = vpop.xlane.xlu0 %2396
        %v2398 = vrcp.pop %v2394
        %v2399 = vrcp.pop %v2397
        %v2400 = vmul.f32 %v2389, %v2398
        %v2401 = vmul.f32 %v2391, %v2399
        %2402 = vrot.lane.b32.xlu0 %v1648, 36
        %v2403 = vpop.permute.xlu0 %2402
        %2404 = vrot.lane.b32.xlu0 %v1651, 36
        %v2405 = vpop.permute.xlu0 %2404
        %v2409 = vsel %vm1693, %v2400, 0
        %v2412 = vsel %vm1693, %v2401, 0
        %2414 = vmatpush.msra.mxu0 0.0
        %2415 = vmatpush.msra.mxu0 0.0
        %2416 = vmatpush.msra.mxu0 0.0
        %2417 = vmatpush.msra.mxu0 0.0
        %2418 = vmatpush.msra.mxu0 0.0
        %2419 = vmatpush.msra.mxu0 0.0
        %2420 = vmatpush.msra.mxu0 0.0
        %2421 = vmatpush.msra.mxu0 0.0
        %2422 = vmatpush.msra.mxu0 0.0
        %2423 = vmatpush.msra.mxu0 0.0
        %2424 = vmatpush.msra.mxu0 0.0
        %2425 = vmatpush.msra.mxu0 0.0
        %2426 = vmatpush.msra.mxu0 0.0
        %2427 = vmatpush.msra.mxu0 0.0
        %2428 = vmatpush.msra.mxu0 %v2405
        %2429 = vmatpush.msra.mxu0 %v2403
        %2430 = vmatmul.f32.gmra.mxu0 %v2409
        %v2431 = vpop.f32.mrf.mxu0
        %v2432 = vadd.f32 0.0, %v2431
        %2433 = vmatmul.f32.gmra.mxu0 %v2412
        %v2434 = vpop.f32.mrf.mxu0
        %v2435 = vadd.f32 0.0, %v2434
        %2436 = vdwg.mxu0
        %2439 = vrot.lane.b32.xlu0 %v1844, 4
        %v2440 = vpop.permute.xlu0 %2439
        %2441 = vrot.lane.b32.xlu0 %v1847, 4
        %v2442 = vpop.permute.xlu0 %2441
        %2447 = vrot.lane.b32.xlu0 %v1942, 8
        %v2448 = vpop.permute.xlu0 %2447
        %2449 = vrot.lane.b32.xlu0 %v1945, 8
        %v2450 = vpop.permute.xlu0 %2449
        %2455 = vrot.lane.b32.xlu0 %v2040, 12
        %v2456 = vpop.permute.xlu0 %2455
        %2457 = vrot.lane.b32.xlu0 %v2043, 12
        %v2458 = vpop.permute.xlu0 %2457
        %2463 = vrot.lane.b32.xlu0 %v2138, 16
        %v2464 = vpop.permute.xlu0 %2463
        %2465 = vrot.lane.b32.xlu0 %v2141, 16
        %v2466 = vpop.permute.xlu0 %2465
        %2471 = vrot.lane.b32.xlu0 %v2236, 20
        %v2472 = vpop.permute.xlu0 %2471
        %2473 = vrot.lane.b32.xlu0 %v2239, 20
        %v2474 = vpop.permute.xlu0 %2473
        %2479 = vrot.lane.b32.xlu0 %v2334, 24
        %v2480 = vpop.permute.xlu0 %2479
        %2481 = vrot.lane.b32.xlu0 %v2337, 24
        %v2482 = vpop.permute.xlu0 %2481
        %2487 = vrot.lane.b32.xlu0 %v2432, 28
        %v2488 = vpop.permute.xlu0 %2487
        %2489 = vrot.lane.b32.xlu0 %v2435, 28
        %v2490 = vpop.permute.xlu0 %2489
        %v2493 = vsel %vm1659, %v1746, %v2440
        %v2494 = vsel %vm1659, %v1749, %v2442
        %vm2495 = vcmask 64512
        %v2496 = vsel %vm2495, %v2493, %v2448
        %v2497 = vsel %vm2495, %v2494, %v2450
        %vm2498 = vcmask 97280
        %v2499 = vsel %vm2498, %v2496, %v2456
        %v2500 = vsel %vm2498, %v2497, %v2458
        %v2501 = vsel %vm1693, %v2499, %v2464
        %v2502 = vsel %vm1693, %v2500, %v2466
        %vm2503 = vcmask 162816
        %v2504 = vsel %vm2503, %v2501, %v2472
        %v2505 = vsel %vm2503, %v2502, %v2474
        %vm2506 = vcmask 195584
        %v2507 = vsel %vm2506, %v2504, %v2480
        %v2508 = vsel %vm2506, %v2505, %v2482
        %vm2509 = vcmask 228352
        %v2510 = vsel %vm2509, %v2507, %v2488
        %v2511 = vsel %vm2509, %v2508, %v2490
        %v2513 = vperm.slane %v1584, 0
        %v2516 = vsel %vm1623, %v2510, 0
        %v2519 = vsel %vm1623, %v2511, 0
        %2521 = vmatpush.msra.mxu0 0.0
        %2522 = vmatpush.msra.mxu0 0.0
        %2523 = vmatpush.msra.mxu0 0.0
        %2524 = vmatpush.msra.mxu0 0.0
        %2525 = vmatpush.msra.mxu0 0.0
        %2526 = vmatpush.msra.mxu0 0.0
        %2527 = vmatpush.msra.mxu0 0.0
        %2528 = vmatpush.msra.mxu0 0.0
        %2529 = vmatpush.msra.mxu0 0.0
        %2530 = vmatpush.msra.mxu0 0.0
        %2531 = vmatpush.msra.mxu0 0.0
        %2532 = vmatpush.msra.mxu0 0.0
        %2533 = vmatpush.msra.mxu0 %v1583
        %2534 = vmatpush.msra.mxu0 %v1582
        %2535 = vmatpush.msra.mxu0 %v1581
        %2536 = vmatpush.msra.mxu0 %v1580
        %2537 = vmatmul.f32.gmra.mxu0 %v2516
        %v2538 = vpop.f32.mrf.mxu0
        %v2539 = vadd.f32 %v2513, %v2538
        %2540 = vmatmul.f32.gmra.mxu0 %v2519
        %v2541 = vpop.f32.mrf.mxu0
        %v2542 = vadd.f32 %v2513, %v2541
        %2543 = vdwg.mxu0
        %v2544 = vadd.f32 %v1572, %v2539
        %v2545 = vadd.f32 %v1573, %v2542
        %v2546 = vsel %vm1623, %v2544, 0.0
        %2547 = vadd.xlane.f32.xlu0 %v2546
        %v2548 = vpop.xlane.xlu0 %2547
        %v2549 = vsel %vm1623, %v2545, 0.0
        %2550 = vadd.xlane.f32.xlu0 %v2549
        %v2551 = vpop.xlane.xlu0 %2550
        %v2552 = vrcp.pop 32.0
        %v2553 = vmul.f32 32.0, %v2552
        %v2554 = vsub.f32 1.0, %v2553
        %v2555 = vmul.f32 %v2552, %v2554
        %v2556 = vadd.f32 %v2552, %v2555
        %vm2557 = vweird.f32 %v2552
        %v2558 = vsel %vm2557, %v2552, %v2556
        %v2559 = vmul.f32 %v2548, %v2558
        %v2560 = vmul.f32 %v2551, %v2558
        %v2561 = vsub.f32 %v2544, %v2559
        %v2562 = vsub.f32 %v2545, %v2560
        %v2563 = vmul.f32 %v2561, %v2561
        %v2564 = vmul.f32 %v2562, %v2562
        %v2565 = vsel %vm1623, %v2563, 0.0
        %2566 = vadd.xlane.f32.xlu0 %v2565
        %v2567 = vpop.xlane.xlu0 %2566
        %v2568 = vsel %vm1623, %v2564, 0.0
        %2569 = vadd.xlane.f32.xlu0 %v2568
        %v2570 = vpop.xlane.xlu0 %2569
        %v2571 = vmul.f32 %v2567, %v2558
        %v2572 = vmul.f32 %v2570, %v2558
        %v2573 = vadd.f32 %v2571, 1e-05
        %v2574 = vadd.f32 %v2572, 1e-05
        %v2575 = vrsqrt.pop %v2573
        %v2576 = vmul.f32 %v2575, %v2573
        %v2577 = vmul.f32 %v2576, %v2575
        %v2578 = vmul.f32 0.5, %v2577
        %v2579 = vsub.f32 1.5, %v2578
        %v2580 = vmul.f32 %v2575, %v2579
        %vm2581 = vweird.f32 %v2573
        %vm2582 = vweird.f32 %v2575
        %vm2583 = vmor %vm2581, %vm2582
        %v2584 = vsel %vm2583, %v2575, %v2580
        %v2585 = vrsqrt.pop %v2574
        %v2586 = vmul.f32 %v2585, %v2574
        %v2587 = vmul.f32 %v2586, %v2585
        %v2588 = vmul.f32 0.5, %v2587
        %v2589 = vsub.f32 1.5, %v2588
        %v2590 = vmul.f32 %v2585, %v2589
        %vm2591 = vweird.f32 %v2574
        %vm2592 = vweird.f32 %v2585
        %vm2593 = vmor %vm2591, %vm2592
        %v2594 = vsel %vm2593, %v2585, %v2590
        %v2595 = vmul.f32 %v2561, %v2584
        %v2596 = vmul.f32 %v2562, %v2594
        %v2598 = vperm.slane %v1585, 0
        %v2600 = vmul.f32 %v2595, %v2598
        %v2601 = vmul.f32 %v2596, %v2598
        %v2603 = vperm.slane %v1586, 0
        %v2605 = vadd.f32 %v2600, %v2603
        %v2606 = vadd.f32 %v2601, %v2603
        %v2608 = vperm.slane %v1591, 0
        %v2611 = vsel %vm1623, %v2605, 0
        %v2614 = vsel %vm1623, %v2606, 0
        %2616 = vmatpush.msra.mxu0 0.0
        %2617 = vmatpush.msra.mxu0 0.0
        %2618 = vmatpush.msra.mxu0 0.0
        %2619 = vmatpush.msra.mxu0 0.0
        %2620 = vmatpush.msra.mxu0 0.0
        %2621 = vmatpush.msra.mxu0 0.0
        %2622 = vmatpush.msra.mxu0 0.0
        %2623 = vmatpush.msra.mxu0 0.0
        %2624 = vmatpush.msra.mxu0 0.0
        %2625 = vmatpush.msra.mxu0 0.0
        %2626 = vmatpush.msra.mxu0 0.0
        %2627 = vmatpush.msra.mxu0 0.0
        %2628 = vmatpush.msra.mxu0 %v1590
        %2629 = vmatpush.msra.mxu0 %v1589
        %2630 = vmatpush.msra.mxu0 %v1588
        %2631 = vmatpush.msra.mxu0 %v1587
        %2632 = vmatmul.f32.gmra.mxu0 %v2611
        %v2633 = vpop.f32.mrf.mxu0
        %v2634 = vadd.f32 %v2608, %v2633
        %2635 = vmatmul.f32.gmra.mxu0 %v2614
        %v2636 = vpop.f32.mrf.mxu0
        %v2637 = vadd.f32 %v2608, %v2636
        %2638 = vdwg.mxu0
        %v2640 = vperm.slane %v1596, 0
        %v2643 = vsel %vm1623, %v1574, 0
        %2645 = vmatpush.msra.mxu0 0.0
        %2646 = vmatpush.msra.mxu0 0.0
        %2647 = vmatpush.msra.mxu0 0.0
        %2648 = vmatpush.msra.mxu0 0.0
        %2649 = vmatpush.msra.mxu0 0.0
        %2650 = vmatpush.msra.mxu0 0.0
        %2651 = vmatpush.msra.mxu0 0.0
        %2652 = vmatpush.msra.mxu0 0.0
        %2653 = vmatpush.msra.mxu0 0.0
        %2654 = vmatpush.msra.mxu0 0.0
        %2655 = vmatpush.msra.mxu0 0.0
        %2656 = vmatpush.msra.mxu0 0.0
        %2657 = vmatpush.msra.mxu0 %v1595
        %2658 = vmatpush.msra.mxu0 %v1594
        %2659 = vmatpush.msra.mxu0 %v1593
        %2660 = vmatpush.msra.mxu0 %v1592
        %2661 = vmatmul.f32.gmra.mxu0 %v2643
        %v2662 = vpop.f32.mrf.mxu0
        %v2663 = vadd.f32 %v2640, %v2662
        %2664 = vdwg.mxu0
        %v2666 = vsel %vm1659, %v2634, 0
        %v2669 = vsel %vm1659, %v2637, 0
        %v2672 = vsel %vm1659, %v2663, 0
        %2674 = vmatpush.xpose.msra.mxu0 0.0
        %2675 = vmatpush.xpose.msra.mxu0 0.0
        %2676 = vmatpush.xpose.msra.mxu0 0.0
        %2677 = vmatpush.xpose.msra.mxu0 0.0
        %2678 = vmatpush.xpose.msra.mxu0 0.0
        %2679 = vmatpush.xpose.msra.mxu0 0.0
        %2680 = vmatpush.xpose.msra.mxu0 0.0
        %2681 = vmatpush.xpose.msra.mxu0 0.0
        %2682 = vmatpush.xpose.msra.mxu0 0.0
        %2683 = vmatpush.xpose.msra.mxu0 0.0
        %2684 = vmatpush.xpose.msra.mxu0 0.0
        %2685 = vmatpush.xpose.msra.mxu0 0.0
        %2686 = vmatpush.xpose.msra.mxu0 0.0
        %2687 = vmatpush.xpose.msra.mxu0 0.0
        %2688 = vmatpush.xpose.msra.mxu0 0.0
        %2689 = vmatpush.xpose.msra.mxu0 %v2672
        %2690 = vmatmul.f32.gmra.mxu0 %v2666
        %v2691 = vpop.f32.mrf.mxu0
        %v2692 = vadd.f32 0.0, %v2691
        %2693 = vmatmul.f32.gmra.mxu0 %v2669
        %v2694 = vpop.f32.mrf.mxu0
        %v2695 = vadd.f32 0.0, %v2694
        %2696 = vdwg.mxu0
        %v2697 = vmul.f32 %v2692, 0.5
        %v2698 = vmul.f32 %v2695, 0.5
        %v2699 = vsel %vm2495, %v2697, -inf
        %2700 = vmax.xlane.f32.xlu0 %v2699
        %v2701 = vpop.xlane.xlu0 %2700
        %v2702 = vsel %vm2495, %v2698, -inf
        %2703 = vmax.xlane.f32.xlu0 %v2702
        %v2704 = vpop.xlane.xlu0 %2703
        %v2705 = vsub.f32 %v2697, %v2701
        %v2706 = vsub.f32 %v2698, %v2704
        %v2707 = vmul.f32 %v2705, 1.442695
        %v2708 = vpow.pop %v2707
        %v2709 = vmul.f32 %v2706, 1.442695
        %v2710 = vpow.pop %v2709
        %v2711 = vsel %vm2495, %v2708, 0.0
        %2712 = vadd.xlane.f32.xlu0 %v2711
        %v2713 = vpop.xlane.xlu0 %2712
        %v2714 = vsel %vm2495, %v2710, 0.0
        %2715 = vadd.xlane.f32.xlu0 %v2714
        %v2716 = vpop.xlane.xlu0 %2715
        %v2717 = vrcp.pop %v2713
        %v2718 = vrcp.pop %v2716
        %v2719 = vmul.f32 %v2708, %v2717
        %v2720 = vmul.f32 %v2710, %v2718
        %2721 = vrot.lane.b32.xlu0 %v2663, 96
        %v2722 = vpop.permute.xlu0 %2721
        %v2725 = vsel %vm2495, %v2719, 0
        %v2728 = vsel %vm2495, %v2720, 0
        %2730 = vmatpush.msra.mxu0 0.0
        %2731 = vmatpush.msra.mxu0 0.0
        %2732 = vmatpush.msra.mxu0 0.0
        %2733 = vmatpush.msra.mxu0 0.0
        %2734 = vmatpush.msra.mxu0 0.0
        %2735 = vmatpush.msra.mxu0 0.0
        %2736 = vmatpush.msra.mxu0 0.0
        %2737 = vmatpush.msra.mxu0 0.0
        %2738 = vmatpush.msra.mxu0 0.0
        %2739 = vmatpush.msra.mxu0 0.0
        %2740 = vmatpush.msra.mxu0 0.0
        %2741 = vmatpush.msra.mxu0 0.0
        %2742 = vmatpush.msra.mxu0 0.0
        %2743 = vmatpush.msra.mxu0 0.0
        %2744 = vmatpush.msra.mxu0 0.0
        %2745 = vmatpush.msra.mxu0 %v2722
        %2746 = vmatmul.f32.gmra.mxu0 %v2725
        %v2747 = vpop.f32.mrf.mxu0
        %v2748 = vadd.f32 0.0, %v2747
        %2749 = vmatmul.f32.gmra.mxu0 %v2728
        %v2750 = vpop.f32.mrf.mxu0
        %v2751 = vadd.f32 0.0, %v2750
        %2752 = vdwg.mxu0
        %2753 = vrot.lane.b32.xlu0 %v2634, 124
        %v2754 = vpop.permute.xlu0 %2753
        %2755 = vrot.lane.b32.xlu0 %v2637, 124
        %v2756 = vpop.permute.xlu0 %2755
        %2757 = vrot.lane.b32.xlu0 %v2663, 124
        %v2758 = vpop.permute.xlu0 %2757
        %v2759 = vsel %vm1659, %v2754, 0
        %v2761 = vsel %vm1659, %v2756, 0
        %v2763 = vsel %vm1659, %v2758, 0
        %2765 = vmatpush.xpose.msra.mxu0 0.0
        %2766 = vmatpush.xpose.msra.mxu0 0.0
        %2767 = vmatpush.xpose.msra.mxu0 0.0
        %2768 = vmatpush.xpose.msra.mxu0 0.0
        %2769 = vmatpush.xpose.msra.mxu0 0.0
        %2770 = vmatpush.xpose.msra.mxu0 0.0
        %2771 = vmatpush.xpose.msra.mxu0 0.0
        %2772 = vmatpush.xpose.msra.mxu0 0.0
        %2773 = vmatpush.xpose.msra.mxu0 0.0
        %2774 = vmatpush.xpose.msra.mxu0 0.0
        %2775 = vmatpush.xpose.msra.mxu0 0.0
        %2776 = vmatpush.xpose.msra.mxu0 0.0
        %2777 = vmatpush.xpose.msra.mxu0 0.0
        %2778 = vmatpush.xpose.msra.mxu0 0.0
        %2779 = vmatpush.xpose.msra.mxu0 0.0
        %2780 = vmatpush.xpose.msra.mxu0 %v2763
        %2781 = vmatmul.f32.gmra.mxu0 %v2759
        %v2782 = vpop.f32.mrf.mxu0
        %v2783 = vadd.f32 0.0, %v2782
        %2784 = vmatmul.f32.gmra.mxu0 %v2761
        %v2785 = vpop.f32.mrf.mxu0
        %v2786 = vadd.f32 0.0, %v2785
        %2787 = vdwg.mxu0
        %v2788 = vmul.f32 %v2783, 0.5
        %v2789 = vmul.f32 %v2786, 0.5
        %v2790 = vsel %vm2495, %v2788, -inf
        %2791 = vmax.xlane.f32.xlu0 %v2790
        %v2792 = vpop.xlane.xlu0 %2791
        %v2793 = vsel %vm2495, %v2789, -inf
        %2794 = vmax.xlane.f32.xlu0 %v2793
        %v2795 = vpop.xlane.xlu0 %2794
        %v2796 = vsub.f32 %v2788, %v2792
        %v2797 = vsub.f32 %v2789, %v2795
        %v2798 = vmul.f32 %v2796, 1.442695
        %v2799 = vpow.pop %v2798
        %v2800 = vmul.f32 %v2797, 1.442695
        %v2801 = vpow.pop %v2800
        %v2802 = vsel %vm2495, %v2799, 0.0
        %2803 = vadd.xlane.f32.xlu0 %v2802
        %v2804 = vpop.xlane.xlu0 %2803
        %v2805 = vsel %vm2495, %v2801, 0.0
        %2806 = vadd.xlane.f32.xlu0 %v2805
        %v2807 = vpop.xlane.xlu0 %2806
        %v2808 = vrcp.pop %v2804
        %v2809 = vrcp.pop %v2807
        %v2810 = vmul.f32 %v2799, %v2808
        %v2811 = vmul.f32 %v2801, %v2809
        %2812 = vrot.lane.b32.xlu0 %v2663, 92
        %v2813 = vpop.permute.xlu0 %2812
        %v2816 = vsel %vm2495, %v2810, 0
        %v2819 = vsel %vm2495, %v2811, 0
        %2821 = vmatpush.msra.mxu0 0.0
        %2822 = vmatpush.msra.mxu0 0.0
        %2823 = vmatpush.msra.mxu0 0.0
        %2824 = vmatpush.msra.mxu0 0.0
        %2825 = vmatpush.msra.mxu0 0.0
        %2826 = vmatpush.msra.mxu0 0.0
        %2827 = vmatpush.msra.mxu0 0.0
        %2828 = vmatpush.msra.mxu0 0.0
        %2829 = vmatpush.msra.mxu0 0.0
        %2830 = vmatpush.msra.mxu0 0.0
        %2831 = vmatpush.msra.mxu0 0.0
        %2832 = vmatpush.msra.mxu0 0.0
        %2833 = vmatpush.msra.mxu0 0.0
        %2834 = vmatpush.msra.mxu0 0.0
        %2835 = vmatpush.msra.mxu0 0.0
        %2836 = vmatpush.msra.mxu0 %v2813
        %2837 = vmatmul.f32.gmra.mxu0 %v2816
        %v2838 = vpop.f32.mrf.mxu0
        %v2839 = vadd.f32 0.0, %v2838
        %2840 = vmatmul.f32.gmra.mxu0 %v2819
        %v2841 = vpop.f32.mrf.mxu0
        %v2842 = vadd.f32 0.0, %v2841
        %2843 = vdwg.mxu0
        %2844 = vrot.lane.b32.xlu0 %v2634, 120
        %v2845 = vpop.permute.xlu0 %2844
        %2846 = vrot.lane.b32.xlu0 %v2637, 120
        %v2847 = vpop.permute.xlu0 %2846
        %2848 = vrot.lane.b32.xlu0 %v2663, 120
        %v2849 = vpop.permute.xlu0 %2848
        %v2850 = vsel %vm1659, %v2845, 0
        %v2852 = vsel %vm1659, %v2847, 0
        %v2854 = vsel %vm1659, %v2849, 0
        %2856 = vmatpush.xpose.msra.mxu0 0.0
        %2857 = vmatpush.xpose.msra.mxu0 0.0
        %2858 = vmatpush.xpose.msra.mxu0 0.0
        %2859 = vmatpush.xpose.msra.mxu0 0.0
        %2860 = vmatpush.xpose.msra.mxu0 0.0
        %2861 = vmatpush.xpose.msra.mxu0 0.0
        %2862 = vmatpush.xpose.msra.mxu0 0.0
        %2863 = vmatpush.xpose.msra.mxu0 0.0
        %2864 = vmatpush.xpose.msra.mxu0 0.0
        %2865 = vmatpush.xpose.msra.mxu0 0.0
        %2866 = vmatpush.xpose.msra.mxu0 0.0
        %2867 = vmatpush.xpose.msra.mxu0 0.0
        %2868 = vmatpush.xpose.msra.mxu0 0.0
        %2869 = vmatpush.xpose.msra.mxu0 0.0
        %2870 = vmatpush.xpose.msra.mxu0 0.0
        %2871 = vmatpush.xpose.msra.mxu0 %v2854
        %2872 = vmatmul.f32.gmra.mxu0 %v2850
        %v2873 = vpop.f32.mrf.mxu0
        %v2874 = vadd.f32 0.0, %v2873
        %2875 = vmatmul.f32.gmra.mxu0 %v2852
        %v2876 = vpop.f32.mrf.mxu0
        %v2877 = vadd.f32 0.0, %v2876
        %2878 = vdwg.mxu0
        %v2879 = vmul.f32 %v2874, 0.5
        %v2880 = vmul.f32 %v2877, 0.5
        %v2881 = vsel %vm2495, %v2879, -inf
        %2882 = vmax.xlane.f32.xlu0 %v2881
        %v2883 = vpop.xlane.xlu0 %2882
        %v2884 = vsel %vm2495, %v2880, -inf
        %2885 = vmax.xlane.f32.xlu0 %v2884
        %v2886 = vpop.xlane.xlu0 %2885
        %v2887 = vsub.f32 %v2879, %v2883
        %v2888 = vsub.f32 %v2880, %v2886
        %v2889 = vmul.f32 %v2887, 1.442695
        %v2890 = vpow.pop %v2889
        %v2891 = vmul.f32 %v2888, 1.442695
        %v2892 = vpow.pop %v2891
        %v2893 = vsel %vm2495, %v2890, 0.0
        %2894 = vadd.xlane.f32.xlu0 %v2893
        %v2895 = vpop.xlane.xlu0 %2894
        %v2896 = vsel %vm2495, %v2892, 0.0
        %2897 = vadd.xlane.f32.xlu0 %v2896
        %v2898 = vpop.xlane.xlu0 %2897
        %v2899 = vrcp.pop %v2895
        %v2900 = vrcp.pop %v2898
        %v2901 = vmul.f32 %v2890, %v2899
        %v2902 = vmul.f32 %v2892, %v2900
        %2903 = vrot.lane.b32.xlu0 %v2663, 88
        %v2904 = vpop.permute.xlu0 %2903
        %v2907 = vsel %vm2495, %v2901, 0
        %v2910 = vsel %vm2495, %v2902, 0
        %2912 = vmatpush.msra.mxu0 0.0
        %2913 = vmatpush.msra.mxu0 0.0
        %2914 = vmatpush.msra.mxu0 0.0
        %2915 = vmatpush.msra.mxu0 0.0
        %2916 = vmatpush.msra.mxu0 0.0
        %2917 = vmatpush.msra.mxu0 0.0
        %2918 = vmatpush.msra.mxu0 0.0
        %2919 = vmatpush.msra.mxu0 0.0
        %2920 = vmatpush.msra.mxu0 0.0
        %2921 = vmatpush.msra.mxu0 0.0
        %2922 = vmatpush.msra.mxu0 0.0
        %2923 = vmatpush.msra.mxu0 0.0
        %2924 = vmatpush.msra.mxu0 0.0
        %2925 = vmatpush.msra.mxu0 0.0
        %2926 = vmatpush.msra.mxu0 0.0
        %2927 = vmatpush.msra.mxu0 %v2904
        %2928 = vmatmul.f32.gmra.mxu0 %v2907
        %v2929 = vpop.f32.mrf.mxu0
        %v2930 = vadd.f32 0.0, %v2929
        %2931 = vmatmul.f32.gmra.mxu0 %v2910
        %v2932 = vpop.f32.mrf.mxu0
        %v2933 = vadd.f32 0.0, %v2932
        %2934 = vdwg.mxu0
        %2935 = vrot.lane.b32.xlu0 %v2634, 116
        %v2936 = vpop.permute.xlu0 %2935
        %2937 = vrot.lane.b32.xlu0 %v2637, 116
        %v2938 = vpop.permute.xlu0 %2937
        %2939 = vrot.lane.b32.xlu0 %v2663, 116
        %v2940 = vpop.permute.xlu0 %2939
        %v2941 = vsel %vm1659, %v2936, 0
        %v2943 = vsel %vm1659, %v2938, 0
        %v2945 = vsel %vm1659, %v2940, 0
        %2947 = vmatpush.xpose.msra.mxu0 0.0
        %2948 = vmatpush.xpose.msra.mxu0 0.0
        %2949 = vmatpush.xpose.msra.mxu0 0.0
        %2950 = vmatpush.xpose.msra.mxu0 0.0
        %2951 = vmatpush.xpose.msra.mxu0 0.0
        %2952 = vmatpush.xpose.msra.mxu0 0.0
        %2953 = vmatpush.xpose.msra.mxu0 0.0
        %2954 = vmatpush.xpose.msra.mxu0 0.0
        %2955 = vmatpush.xpose.msra.mxu0 0.0
        %2956 = vmatpush.xpose.msra.mxu0 0.0
        %2957 = vmatpush.xpose.msra.mxu0 0.0
        %2958 = vmatpush.xpose.msra.mxu0 0.0
        %2959 = vmatpush.xpose.msra.mxu0 0.0
        %2960 = vmatpush.xpose.msra.mxu0 0.0
        %2961 = vmatpush.xpose.msra.mxu0 0.0
        %2962 = vmatpush.xpose.msra.mxu0 %v2945
        %2963 = vmatmul.f32.gmra.mxu0 %v2941
        %v2964 = vpop.f32.mrf.mxu0
        %v2965 = vadd.f32 0.0, %v2964
        %2966 = vmatmul.f32.gmra.mxu0 %v2943
        %v2967 = vpop.f32.mrf.mxu0
        %v2968 = vadd.f32 0.0, %v2967
        %2969 = vdwg.mxu0
        %v2970 = vmul.f32 %v2965, 0.5
        %v2971 = vmul.f32 %v2968, 0.5
        %v2972 = vsel %vm2495, %v2970, -inf
        %2973 = vmax.xlane.f32.xlu0 %v2972
        %v2974 = vpop.xlane.xlu0 %2973
        %v2975 = vsel %vm2495, %v2971, -inf
        %2976 = vmax.xlane.f32.xlu0 %v2975
        %v2977 = vpop.xlane.xlu0 %2976
        %v2978 = vsub.f32 %v2970, %v2974
        %v2979 = vsub.f32 %v2971, %v2977
        %v2980 = vmul.f32 %v2978, 1.442695
        %v2981 = vpow.pop %v2980
        %v2982 = vmul.f32 %v2979, 1.442695
        %v2983 = vpow.pop %v2982
        %v2984 = vsel %vm2495, %v2981, 0.0
        %2985 = vadd.xlane.f32.xlu0 %v2984
        %v2986 = vpop.xlane.xlu0 %2985
        %v2987 = vsel %vm2495, %v2983, 0.0
        %2988 = vadd.xlane.f32.xlu0 %v2987
        %v2989 = vpop.xlane.xlu0 %2988
        %v2990 = vrcp.pop %v2986
        %v2991 = vrcp.pop %v2989
        %v2992 = vmul.f32 %v2981, %v2990
        %v2993 = vmul.f32 %v2983, %v2991
        %2994 = vrot.lane.b32.xlu0 %v2663, 84
        %v2995 = vpop.permute.xlu0 %2994
        %v2998 = vsel %vm2495, %v2992, 0
        %v3001 = vsel %vm2495, %v2993, 0
        %3003 = vmatpush.msra.mxu0 0.0
        %3004 = vmatpush.msra.mxu0 0.0
        %3005 = vmatpush.msra.mxu0 0.0
        %3006 = vmatpush.msra.mxu0 0.0
        %3007 = vmatpush.msra.mxu0 0.0
        %3008 = vmatpush.msra.mxu0 0.0
        %3009 = vmatpush.msra.mxu0 0.0
        %3010 = vmatpush.msra.mxu0 0.0
        %3011 = vmatpush.msra.mxu0 0.0
        %3012 = vmatpush.msra.mxu0 0.0
        %3013 = vmatpush.msra.mxu0 0.0
        %3014 = vmatpush.msra.mxu0 0.0
        %3015 = vmatpush.msra.mxu0 0.0
        %3016 = vmatpush.msra.mxu0 0.0
        %3017 = vmatpush.msra.mxu0 0.0
        %3018 = vmatpush.msra.mxu0 %v2995
        %3019 = vmatmul.f32.gmra.mxu0 %v2998
        %v3020 = vpop.f32.mrf.mxu0
        %v3021 = vadd.f32 0.0, %v3020
        %3022 = vmatmul.f32.gmra.mxu0 %v3001
        %v3023 = vpop.f32.mrf.mxu0
        %v3024 = vadd.f32 0.0, %v3023
        %3025 = vdwg.mxu0
        %3026 = vrot.lane.b32.xlu0 %v2634, 112
        %v3027 = vpop.permute.xlu0 %3026
        %3028 = vrot.lane.b32.xlu0 %v2637, 112
        %v3029 = vpop.permute.xlu0 %3028
        %3030 = vrot.lane.b32.xlu0 %v2663, 112
        %v3031 = vpop.permute.xlu0 %3030
        %v3032 = vsel %vm1659, %v3027, 0
        %v3034 = vsel %vm1659, %v3029, 0
        %v3036 = vsel %vm1659, %v3031, 0
        %3038 = vmatpush.xpose.msra.mxu0 0.0
        %3039 = vmatpush.xpose.msra.mxu0 0.0
        %3040 = vmatpush.xpose.msra.mxu0 0.0
        %3041 = vmatpush.xpose.msra.mxu0 0.0
        %3042 = vmatpush.xpose.msra.mxu0 0.0
        %3043 = vmatpush.xpose.msra.mxu0 0.0
        %3044 = vmatpush.xpose.msra.mxu0 0.0
        %3045 = vmatpush.xpose.msra.mxu0 0.0
        %3046 = vmatpush.xpose.msra.mxu0 0.0
        %3047 = vmatpush.xpose.msra.mxu0 0.0
        %3048 = vmatpush.xpose.msra.mxu0 0.0
        %3049 = vmatpush.xpose.msra.mxu0 0.0
        %3050 = vmatpush.xpose.msra.mxu0 0.0
        %3051 = vmatpush.xpose.msra.mxu0 0.0
        %3052 = vmatpush.xpose.msra.mxu0 0.0
        %3053 = vmatpush.xpose.msra.mxu0 %v3036
        %3054 = vmatmul.f32.gmra.mxu0 %v3032
        %v3055 = vpop.f32.mrf.mxu0
        %v3056 = vadd.f32 0.0, %v3055
        %3057 = vmatmul.f32.gmra.mxu0 %v3034
        %v3058 = vpop.f32.mrf.mxu0
        %v3059 = vadd.f32 0.0, %v3058
        %3060 = vdwg.mxu0
        %v3061 = vmul.f32 %v3056, 0.5
        %v3062 = vmul.f32 %v3059, 0.5
        %v3063 = vsel %vm2495, %v3061, -inf
        %3064 = vmax.xlane.f32.xlu0 %v3063
        %v3065 = vpop.xlane.xlu0 %3064
        %v3066 = vsel %vm2495, %v3062, -inf
        %3067 = vmax.xlane.f32.xlu0 %v3066
        %v3068 = vpop.xlane.xlu0 %3067
        %v3069 = vsub.f32 %v3061, %v3065
        %v3070 = vsub.f32 %v3062, %v3068
        %v3071 = vmul.f32 %v3069, 1.442695
        %v3072 = vpow.pop %v3071
        %v3073 = vmul.f32 %v3070, 1.442695
        %v3074 = vpow.pop %v3073
        %v3075 = vsel %vm2495, %v3072, 0.0
        %3076 = vadd.xlane.f32.xlu0 %v3075
        %v3077 = vpop.xlane.xlu0 %3076
        %v3078 = vsel %vm2495, %v3074, 0.0
        %3079 = vadd.xlane.f32.xlu0 %v3078
        %v3080 = vpop.xlane.xlu0 %3079
        %v3081 = vrcp.pop %v3077
        %v3082 = vrcp.pop %v3080
        %v3083 = vmul.f32 %v3072, %v3081
        %v3084 = vmul.f32 %v3074, %v3082
        %3085 = vrot.lane.b32.xlu0 %v2663, 80
        %v3086 = vpop.permute.xlu0 %3085
        %v3089 = vsel %vm2495, %v3083, 0
        %v3092 = vsel %vm2495, %v3084, 0
        %3094 = vmatpush.msra.mxu0 0.0
        %3095 = vmatpush.msra.mxu0 0.0
        %3096 = vmatpush.msra.mxu0 0.0
        %3097 = vmatpush.msra.mxu0 0.0
        %3098 = vmatpush.msra.mxu0 0.0
        %3099 = vmatpush.msra.mxu0 0.0
        %3100 = vmatpush.msra.mxu0 0.0
        %3101 = vmatpush.msra.mxu0 0.0
        %3102 = vmatpush.msra.mxu0 0.0
        %3103 = vmatpush.msra.mxu0 0.0
        %3104 = vmatpush.msra.mxu0 0.0
        %3105 = vmatpush.msra.mxu0 0.0
        %3106 = vmatpush.msra.mxu0 0.0
        %3107 = vmatpush.msra.mxu0 0.0
        %3108 = vmatpush.msra.mxu0 0.0
        %3109 = vmatpush.msra.mxu0 %v3086
        %3110 = vmatmul.f32.gmra.mxu0 %v3089
        %v3111 = vpop.f32.mrf.mxu0
        %v3112 = vadd.f32 0.0, %v3111
        %3113 = vmatmul.f32.gmra.mxu0 %v3092
        %v3114 = vpop.f32.mrf.mxu0
        %v3115 = vadd.f32 0.0, %v3114
        %3116 = vdwg.mxu0
        %3117 = vrot.lane.b32.xlu0 %v2634, 108
        %v3118 = vpop.permute.xlu0 %3117
        %3119 = vrot.lane.b32.xlu0 %v2637, 108
        %v3120 = vpop.permute.xlu0 %3119
        %3121 = vrot.lane.b32.xlu0 %v2663, 108
        %v3122 = vpop.permute.xlu0 %3121
        %v3123 = vsel %vm1659, %v3118, 0
        %v3125 = vsel %vm1659, %v3120, 0
        %v3127 = vsel %vm1659, %v3122, 0
        %3129 = vmatpush.xpose.msra.mxu0 0.0
        %3130 = vmatpush.xpose.msra.mxu0 0.0
        %3131 = vmatpush.xpose.msra.mxu0 0.0
        %3132 = vmatpush.xpose.msra.mxu0 0.0
        %3133 = vmatpush.xpose.msra.mxu0 0.0
        %3134 = vmatpush.xpose.msra.mxu0 0.0
        %3135 = vmatpush.xpose.msra.mxu0 0.0
        %3136 = vmatpush.xpose.msra.mxu0 0.0
        %3137 = vmatpush.xpose.msra.mxu0 0.0
        %3138 = vmatpush.xpose.msra.mxu0 0.0
        %3139 = vmatpush.xpose.msra.mxu0 0.0
        %3140 = vmatpush.xpose.msra.mxu0 0.0
        %3141 = vmatpush.xpose.msra.mxu0 0.0
        %3142 = vmatpush.xpose.msra.mxu0 0.0
        %3143 = vmatpush.xpose.msra.mxu0 0.0
        %3144 = vmatpush.xpose.msra.mxu0 %v3127
        %3145 = vmatmul.f32.gmra.mxu0 %v3123
        %v3146 = vpop.f32.mrf.mxu0
        %v3147 = vadd.f32 0.0, %v3146
        %3148 = vmatmul.f32.gmra.mxu0 %v3125
        %v3149 = vpop.f32.mrf.mxu0
        %v3150 = vadd.f32 0.0, %v3149
        %3151 = vdwg.mxu0
        %v3152 = vmul.f32 %v3147, 0.5
        %v3153 = vmul.f32 %v3150, 0.5
        %v3154 = vsel %vm2495, %v3152, -inf
        %3155 = vmax.xlane.f32.xlu0 %v3154
        %v3156 = vpop.xlane.xlu0 %3155
        %v3157 = vsel %vm2495, %v3153, -inf
        %3158 = vmax.xlane.f32.xlu0 %v3157
        %v3159 = vpop.xlane.xlu0 %3158
        %v3160 = vsub.f32 %v3152, %v3156
        %v3161 = vsub.f32 %v3153, %v3159
        %v3162 = vmul.f32 %v3160, 1.442695
        %v3163 = vpow.pop %v3162
        %v3164 = vmul.f32 %v3161, 1.442695
        %v3165 = vpow.pop %v3164
        %v3166 = vsel %vm2495, %v3163, 0.0
        %3167 = vadd.xlane.f32.xlu0 %v3166
        %v3168 = vpop.xlane.xlu0 %3167
        %v3169 = vsel %vm2495, %v3165, 0.0
        %3170 = vadd.xlane.f32.xlu0 %v3169
        %v3171 = vpop.xlane.xlu0 %3170
        %v3172 = vrcp.pop %v3168
        %v3173 = vrcp.pop %v3171
        %v3174 = vmul.f32 %v3163, %v3172
        %v3175 = vmul.f32 %v3165, %v3173
        %3176 = vrot.lane.b32.xlu0 %v2663, 76
        %v3177 = vpop.permute.xlu0 %3176
        %v3180 = vsel %vm2495, %v3174, 0
        %v3183 = vsel %vm2495, %v3175, 0
        %3185 = vmatpush.msra.mxu0 0.0
        %3186 = vmatpush.msra.mxu0 0.0
        %3187 = vmatpush.msra.mxu0 0.0
        %3188 = vmatpush.msra.mxu0 0.0
        %3189 = vmatpush.msra.mxu0 0.0
        %3190 = vmatpush.msra.mxu0 0.0
        %3191 = vmatpush.msra.mxu0 0.0
        %3192 = vmatpush.msra.mxu0 0.0
        %3193 = vmatpush.msra.mxu0 0.0
        %3194 = vmatpush.msra.mxu0 0.0
        %3195 = vmatpush.msra.mxu0 0.0
        %3196 = vmatpush.msra.mxu0 0.0
        %3197 = vmatpush.msra.mxu0 0.0
        %3198 = vmatpush.msra.mxu0 0.0
        %3199 = vmatpush.msra.mxu0 0.0
        %3200 = vmatpush.msra.mxu0 %v3177
        %3201 = vmatmul.f32.gmra.mxu0 %v3180
        %v3202 = vpop.f32.mrf.mxu0
        %v3203 = vadd.f32 0.0, %v3202
        %3204 = vmatmul.f32.gmra.mxu0 %v3183
        %v3205 = vpop.f32.mrf.mxu0
        %v3206 = vadd.f32 0.0, %v3205
        %3207 = vdwg.mxu0
        %3208 = vrot.lane.b32.xlu0 %v2634, 104
        %v3209 = vpop.permute.xlu0 %3208
        %3210 = vrot.lane.b32.xlu0 %v2637, 104
        %v3211 = vpop.permute.xlu0 %3210
        %3212 = vrot.lane.b32.xlu0 %v2663, 104
        %v3213 = vpop.permute.xlu0 %3212
        %v3214 = vsel %vm1659, %v3209, 0
        %v3216 = vsel %vm1659, %v3211, 0
        %v3218 = vsel %vm1659, %v3213, 0
        %3220 = vmatpush.xpose.msra.mxu0 0.0
        %3221 = vmatpush.xpose.msra.mxu0 0.0
        %3222 = vmatpush.xpose.msra.mxu0 0.0
        %3223 = vmatpush.xpose.msra.mxu0 0.0
        %3224 = vmatpush.xpose.msra.mxu0 0.0
        %3225 = vmatpush.xpose.msra.mxu0 0.0
        %3226 = vmatpush.xpose.msra.mxu0 0.0
        %3227 = vmatpush.xpose.msra.mxu0 0.0
        %3228 = vmatpush.xpose.msra.mxu0 0.0
        %3229 = vmatpush.xpose.msra.mxu0 0.0
        %3230 = vmatpush.xpose.msra.mxu0 0.0
        %3231 = vmatpush.xpose.msra.mxu0 0.0
        %3232 = vmatpush.xpose.msra.mxu0 0.0
        %3233 = vmatpush.xpose.msra.mxu0 0.0
        %3234 = vmatpush.xpose.msra.mxu0 0.0
        %3235 = vmatpush.xpose.msra.mxu0 %v3218
        %3236 = vmatmul.f32.gmra.mxu0 %v3214
        %v3237 = vpop.f32.mrf.mxu0
        %v3238 = vadd.f32 0.0, %v3237
        %3239 = vmatmul.f32.gmra.mxu0 %v3216
        %v3240 = vpop.f32.mrf.mxu0
        %v3241 = vadd.f32 0.0, %v3240
        %3242 = vdwg.mxu0
        %v3243 = vmul.f32 %v3238, 0.5
        %v3244 = vmul.f32 %v3241, 0.5
        %v3245 = vsel %vm2495, %v3243, -inf
        %3246 = vmax.xlane.f32.xlu0 %v3245
        %v3247 = vpop.xlane.xlu0 %3246
        %v3248 = vsel %vm2495, %v3244, -inf
        %3249 = vmax.xlane.f32.xlu0 %v3248
        %v3250 = vpop.xlane.xlu0 %3249
        %v3251 = vsub.f32 %v3243, %v3247
        %v3252 = vsub.f32 %v3244, %v3250
        %v3253 = vmul.f32 %v3251, 1.442695
        %v3254 = vpow.pop %v3253
        %v3255 = vmul.f32 %v3252, 1.442695
        %v3256 = vpow.pop %v3255
        %v3257 = vsel %vm2495, %v3254, 0.0
        %3258 = vadd.xlane.f32.xlu0 %v3257
        %v3259 = vpop.xlane.xlu0 %3258
        %v3260 = vsel %vm2495, %v3256, 0.0
        %3261 = vadd.xlane.f32.xlu0 %v3260
        %v3262 = vpop.xlane.xlu0 %3261
        %v3263 = vrcp.pop %v3259
        %v3264 = vrcp.pop %v3262
        %v3265 = vmul.f32 %v3254, %v3263
        %v3266 = vmul.f32 %v3256, %v3264
        %3267 = vrot.lane.b32.xlu0 %v2663, 72
        %v3268 = vpop.permute.xlu0 %3267
        %v3271 = vsel %vm2495, %v3265, 0
        %v3274 = vsel %vm2495, %v3266, 0
        %3276 = vmatpush.msra.mxu0 0.0
        %3277 = vmatpush.msra.mxu0 0.0
        %3278 = vmatpush.msra.mxu0 0.0
        %3279 = vmatpush.msra.mxu0 0.0
        %3280 = vmatpush.msra.mxu0 0.0
        %3281 = vmatpush.msra.mxu0 0.0
        %3282 = vmatpush.msra.mxu0 0.0
        %3283 = vmatpush.msra.mxu0 0.0
        %3284 = vmatpush.msra.mxu0 0.0
        %3285 = vmatpush.msra.mxu0 0.0
        %3286 = vmatpush.msra.mxu0 0.0
        %3287 = vmatpush.msra.mxu0 0.0
        %3288 = vmatpush.msra.mxu0 0.0
        %3289 = vmatpush.msra.mxu0 0.0
        %3290 = vmatpush.msra.mxu0 0.0
        %3291 = vmatpush.msra.mxu0 %v3268
        %3292 = vmatmul.f32.gmra.mxu0 %v3271
        %v3293 = vpop.f32.mrf.mxu0
        %v3294 = vadd.f32 0.0, %v3293
        %3295 = vmatmul.f32.gmra.mxu0 %v3274
        %v3296 = vpop.f32.mrf.mxu0
        %v3297 = vadd.f32 0.0, %v3296
        %3298 = vdwg.mxu0
        %3299 = vrot.lane.b32.xlu0 %v2634, 100
        %v3300 = vpop.permute.xlu0 %3299
        %3301 = vrot.lane.b32.xlu0 %v2637, 100
        %v3302 = vpop.permute.xlu0 %3301
        %3303 = vrot.lane.b32.xlu0 %v2663, 100
        %v3304 = vpop.permute.xlu0 %3303
        %v3305 = vsel %vm1659, %v3300, 0
        %v3307 = vsel %vm1659, %v3302, 0
        %v3309 = vsel %vm1659, %v3304, 0
        %3311 = vmatpush.xpose.msra.mxu0 0.0
        %3312 = vmatpush.xpose.msra.mxu0 0.0
        %3313 = vmatpush.xpose.msra.mxu0 0.0
        %3314 = vmatpush.xpose.msra.mxu0 0.0
        %3315 = vmatpush.xpose.msra.mxu0 0.0
        %3316 = vmatpush.xpose.msra.mxu0 0.0
        %3317 = vmatpush.xpose.msra.mxu0 0.0
        %3318 = vmatpush.xpose.msra.mxu0 0.0
        %3319 = vmatpush.xpose.msra.mxu0 0.0
        %3320 = vmatpush.xpose.msra.mxu0 0.0
        %3321 = vmatpush.xpose.msra.mxu0 0.0
        %3322 = vmatpush.xpose.msra.mxu0 0.0
        %3323 = vmatpush.xpose.msra.mxu0 0.0
        %3324 = vmatpush.xpose.msra.mxu0 0.0
        %3325 = vmatpush.xpose.msra.mxu0 0.0
        %3326 = vmatpush.xpose.msra.mxu0 %v3309
        %3327 = vmatmul.f32.gmra.mxu0 %v3305
        %v3328 = vpop.f32.mrf.mxu0
        %v3329 = vadd.f32 0.0, %v3328
        %3330 = vmatmul.f32.gmra.mxu0 %v3307
        %v3331 = vpop.f32.mrf.mxu0
        %v3332 = vadd.f32 0.0, %v3331
        %3333 = vdwg.mxu0
        %v3334 = vmul.f32 %v3329, 0.5
        %v3335 = vmul.f32 %v3332, 0.5
        %v3336 = vsel %vm2495, %v3334, -inf
        %3337 = vmax.xlane.f32.xlu0 %v3336
        %v3338 = vpop.xlane.xlu0 %3337
        %v3339 = vsel %vm2495, %v3335, -inf
        %3340 = vmax.xlane.f32.xlu0 %v3339
        %v3341 = vpop.xlane.xlu0 %3340
        %v3342 = vsub.f32 %v3334, %v3338
        %v3343 = vsub.f32 %v3335, %v3341
        %v3344 = vmul.f32 %v3342, 1.442695
        %v3345 = vpow.pop %v3344
        %v3346 = vmul.f32 %v3343, 1.442695
        %v3347 = vpow.pop %v3346
        %v3348 = vsel %vm2495, %v3345, 0.0
        %3349 = vadd.xlane.f32.xlu0 %v3348
        %v3350 = vpop.xlane.xlu0 %3349
        %v3351 = vsel %vm2495, %v3347, 0.0
        %3352 = vadd.xlane.f32.xlu0 %v3351
        %v3353 = vpop.xlane.xlu0 %3352
        %v3354 = vrcp.pop %v3350
        %v3355 = vrcp.pop %v3353
        %v3356 = vmul.f32 %v3345, %v3354
        %v3357 = vmul.f32 %v3347, %v3355
        %3358 = vrot.lane.b32.xlu0 %v2663, 68
        %v3359 = vpop.permute.xlu0 %3358
        %v3362 = vsel %vm2495, %v3356, 0
        %v3365 = vsel %vm2495, %v3357, 0
        %3367 = vmatpush.msra.mxu0 0.0
        %3368 = vmatpush.msra.mxu0 0.0
        %3369 = vmatpush.msra.mxu0 0.0
        %3370 = vmatpush.msra.mxu0 0.0
        %3371 = vmatpush.msra.mxu0 0.0
        %3372 = vmatpush.msra.mxu0 0.0
        %3373 = vmatpush.msra.mxu0 0.0
        %3374 = vmatpush.msra.mxu0 0.0
        %3375 = vmatpush.msra.mxu0 0.0
        %3376 = vmatpush.msra.mxu0 0.0
        %3377 = vmatpush.msra.mxu0 0.0
        %3378 = vmatpush.msra.mxu0 0.0
        %3379 = vmatpush.msra.mxu0 0.0
        %3380 = vmatpush.msra.mxu0 0.0
        %3381 = vmatpush.msra.mxu0 0.0
        %3382 = vmatpush.msra.mxu0 %v3359
        %3383 = vmatmul.f32.gmra.mxu0 %v3362
        %v3384 = vpop.f32.mrf.mxu0
        %v3385 = vadd.f32 0.0, %v3384
        %3386 = vmatmul.f32.gmra.mxu0 %v3365
        %v3387 = vpop.f32.mrf.mxu0
        %v3388 = vadd.f32 0.0, %v3387
        %3389 = vdwg.mxu0
        %3392 = vrot.lane.b32.xlu0 %v2839, 4
        %v3393 = vpop.permute.xlu0 %3392
        %3394 = vrot.lane.b32.xlu0 %v2842, 4
        %v3395 = vpop.permute.xlu0 %3394
        %3400 = vrot.lane.b32.xlu0 %v2930, 8
        %v3401 = vpop.permute.xlu0 %3400
        %3402 = vrot.lane.b32.xlu0 %v2933, 8
        %v3403 = vpop.permute.xlu0 %3402
        %3408 = vrot.lane.b32.xlu0 %v3021, 12
        %v3409 = vpop.permute.xlu0 %3408
        %3410 = vrot.lane.b32.xlu0 %v3024, 12
        %v3411 = vpop.permute.xlu0 %3410
        %3416 = vrot.lane.b32.xlu0 %v3112, 16
        %v3417 = vpop.permute.xlu0 %3416
        %3418 = vrot.lane.b32.xlu0 %v3115, 16
        %v3419 = vpop.permute.xlu0 %3418
        %3424 = vrot.lane.b32.xlu0 %v3203, 20
        %v3425 = vpop.permute.xlu0 %3424
        %3426 = vrot.lane.b32.xlu0 %v3206, 20
        %v3427 = vpop.permute.xlu0 %3426
        %3432 = vrot.lane.b32.xlu0 %v3294, 24
        %v3433 = vpop.permute.xlu0 %3432
        %3434 = vrot.lane.b32.xlu0 %v3297, 24
        %v3435 = vpop.permute.xlu0 %3434
        %3440 = vrot.lane.b32.xlu0 %v3385, 28
        %v3441 = vpop.permute.xlu0 %3440
        %3442 = vrot.lane.b32.xlu0 %v3388, 28
        %v3443 = vpop.permute.xlu0 %3442
        %v3446 = vsel %vm1659, %v2748, %v3393
        %v3447 = vsel %vm1659, %v2751, %v3395
        %v3448 = vsel %vm2495, %v3446, %v3401
        %v3449 = vsel %vm2495, %v3447, %v3403
        %v3450 = vsel %vm2498, %v3448, %v3409
        %v3451 = vsel %vm2498, %v3449, %v3411
        %v3452 = vsel %vm1693, %v3450, %v3417
        %v3453 = vsel %vm1693, %v3451, %v3419
        %v3454 = vsel %vm2503, %v3452, %v3425
        %v3455 = vsel %vm2503, %v3453, %v3427
        %v3456 = vsel %vm2506, %v3454, %v3433
        %v3457 = vsel %vm2506, %v3455, %v3435
        %v3458 = vsel %vm2509, %v3456, %v3441
        %v3459 = vsel %vm2509, %v3457, %v3443
        %v3461 = vperm.slane %v1601, 0
        %v3464 = vsel %vm1623, %v3458, 0
        %v3467 = vsel %vm1623, %v3459, 0
        %3469 = vmatpush.msra.mxu0 0.0
        %3470 = vmatpush.msra.mxu0 0.0
        %3471 = vmatpush.msra.mxu0 0.0
        %3472 = vmatpush.msra.mxu0 0.0
        %3473 = vmatpush.msra.mxu0 0.0
        %3474 = vmatpush.msra.mxu0 0.0
        %3475 = vmatpush.msra.mxu0 0.0
        %3476 = vmatpush.msra.mxu0 0.0
        %3477 = vmatpush.msra.mxu0 0.0
        %3478 = vmatpush.msra.mxu0 0.0
        %3479 = vmatpush.msra.mxu0 0.0
        %3480 = vmatpush.msra.mxu0 0.0
        %3481 = vmatpush.msra.mxu0 %v1600
        %3482 = vmatpush.msra.mxu0 %v1599
        %3483 = vmatpush.msra.mxu0 %v1598
        %3484 = vmatpush.msra.mxu0 %v1597
        %3485 = vmatmul.f32.gmra.mxu0 %v3464
        %v3486 = vpop.f32.mrf.mxu0
        %v3487 = vadd.f32 %v3461, %v3486
        %3488 = vmatmul.f32.gmra.mxu0 %v3467
        %v3489 = vpop.f32.mrf.mxu0
        %v3490 = vadd.f32 %v3461, %v3489
        %3491 = vdwg.mxu0
        %v3492 = vadd.f32 %v2605, %v3487
        %v3493 = vadd.f32 %v2606, %v3490
        %v3494 = vsel %vm1623, %v3492, 0.0
        %3495 = vadd.xlane.f32.xlu0 %v3494
        %v3496 = vpop.xlane.xlu0 %3495
        %v3497 = vsel %vm1623, %v3493, 0.0
        %3498 = vadd.xlane.f32.xlu0 %v3497
        %v3499 = vpop.xlane.xlu0 %3498
        %v3500 = vmul.f32 %v3496, %v2558
        %v3501 = vmul.f32 %v3499, %v2558
        %v3502 = vsub.f32 %v3492, %v3500
        %v3503 = vsub.f32 %v3493, %v3501
        %v3504 = vmul.f32 %v3502, %v3502
        %v3505 = vmul.f32 %v3503, %v3503
        %v3506 = vsel %vm1623, %v3504, 0.0
        %3507 = vadd.xlane.f32.xlu0 %v3506
        %v3508 = vpop.xlane.xlu0 %3507
        %v3509 = vsel %vm1623, %v3505, 0.0
        %3510 = vadd.xlane.f32.xlu0 %v3509
        %v3511 = vpop.xlane.xlu0 %3510
        %v3512 = vmul.f32 %v3508, %v2558
        %v3513 = vmul.f32 %v3511, %v2558
        %v3514 = vadd.f32 %v3512, 1e-05
        %v3515 = vadd.f32 %v3513, 1e-05
        %v3516 = vrsqrt.pop %v3514
        %v3517 = vmul.f32 %v3516, %v3514
        %v3518 = vmul.f32 %v3517, %v3516
        %v3519 = vmul.f32 0.5, %v3518
        %v3520 = vsub.f32 1.5, %v3519
        %v3521 = vmul.f32 %v3516, %v3520
        %vm3522 = vweird.f32 %v3514
        %vm3523 = vweird.f32 %v3516
        %vm3524 = vmor %vm3522, %vm3523
        %v3525 = vsel %vm3524, %v3516, %v3521
        %v3526 = vrsqrt.pop %v3515
        %v3527 = vmul.f32 %v3526, %v3515
        %v3528 = vmul.f32 %v3527, %v3526
        %v3529 = vmul.f32 0.5, %v3528
        %v3530 = vsub.f32 1.5, %v3529
        %v3531 = vmul.f32 %v3526, %v3530
        %vm3532 = vweird.f32 %v3515
        %vm3533 = vweird.f32 %v3526
        %vm3534 = vmor %vm3532, %vm3533
        %v3535 = vsel %vm3534, %v3526, %v3531
        %v3536 = vmul.f32 %v3502, %v3525
        %v3537 = vmul.f32 %v3503, %v3535
        %v3539 = vperm.slane %v1602, 0
        %v3541 = vmul.f32 %v3536, %v3539
        %v3542 = vmul.f32 %v3537, %v3539
        %v3544 = vperm.slane %v1603, 0
        %v3546 = vadd.f32 %v3541, %v3544
        %v3547 = vadd.f32 %v3542, %v3544
        %v3549 = vperm.slane %v1608, 0
        %v3552 = vsel %vm1623, %v3546, 0
        %v3555 = vsel %vm1623, %v3547, 0
        %3557 = vmatpush.msra.mxu0 0.0
        %3558 = vmatpush.msra.mxu0 0.0
        %3559 = vmatpush.msra.mxu0 0.0
        %3560 = vmatpush.msra.mxu0 0.0
        %3561 = vmatpush.msra.mxu0 0.0
        %3562 = vmatpush.msra.mxu0 0.0
        %3563 = vmatpush.msra.mxu0 0.0
        %3564 = vmatpush.msra.mxu0 0.0
        %3565 = vmatpush.msra.mxu0 0.0
        %3566 = vmatpush.msra.mxu0 0.0
        %3567 = vmatpush.msra.mxu0 0.0
        %3568 = vmatpush.msra.mxu0 0.0
        %3569 = vmatpush.msra.mxu0 %v1607
        %3570 = vmatpush.msra.mxu0 %v1606
        %3571 = vmatpush.msra.mxu0 %v1605
        %3572 = vmatpush.msra.mxu0 %v1604
        %3573 = vmatmul.f32.gmra.mxu0 %v3552
        %v3574 = vpop.f32.mrf.mxu0
        %v3575 = vadd.f32 %v3549, %v3574
        %3576 = vmatmul.f32.gmra.mxu0 %v3555
        %v3577 = vpop.f32.mrf.mxu0
        %v3578 = vadd.f32 %v3549, %v3577
        %3579 = vdwg.mxu0
        %v3580 = vmax.f32 %v3575, 0.0
        %v3581 = vmax.f32 %v3578, 0.0
        %v3583 = vperm.slane %v1617, 0
        %vm3585 = vcmask 523264
        %v3587 = vsel %vm3585, %v3580, 0
        %v3590 = vsel %vm3585, %v3581, 0
        %3592 = vmatpush.msra.mxu0 0.0
        %3593 = vmatpush.msra.mxu0 0.0
        %3594 = vmatpush.msra.mxu0 0.0
        %3595 = vmatpush.msra.mxu0 0.0
        %3596 = vmatpush.msra.mxu0 0.0
        %3597 = vmatpush.msra.mxu0 0.0
        %3598 = vmatpush.msra.mxu0 0.0
        %3599 = vmatpush.msra.mxu0 0.0
        %3600 = vmatpush.msra.mxu0 %v1616
        %3601 = vmatpush.msra.mxu0 %v1615
        %3602 = vmatpush.msra.mxu0 %v1614
        %3603 = vmatpush.msra.mxu0 %v1613
        %3604 = vmatpush.msra.mxu0 %v1612
        %3605 = vmatpush.msra.mxu0 %v1611
        %3606 = vmatpush.msra.mxu0 %v1610
        %3607 = vmatpush.msra.mxu0 %v1609
        %3608 = vmatmul.f32.gmra.mxu0 %v3587
        %v3609 = vpop.f32.mrf.mxu0
        %v3610 = vadd.f32 %v3583, %v3609
        %3611 = vmatmul.f32.gmra.mxu0 %v3590
        %v3612 = vpop.f32.mrf.mxu0
        %v3613 = vadd.f32 %v3583, %v3612
        %3614 = vdwg.mxu0
        %v3615 = vadd.f32 %v3546, %v3610
        %v3616 = vadd.f32 %v3547, %v3613
        %v3617 = vsel %vm1623, %v3615, 0.0
        %3618 = vadd.xlane.f32.xlu0 %v3617
        %v3619 = vpop.xlane.xlu0 %3618
        %v3620 = vsel %vm1623, %v3616, 0.0
        %3621 = vadd.xlane.f32.xlu0 %v3620
        %v3622 = vpop.xlane.xlu0 %3621
        %v3623 = vmul.f32 %v3619, %v2558
        %v3624 = vmul.f32 %v3622, %v2558
        %v3625 = vsub.f32 %v3615, %v3623
        %v3626 = vsub.f32 %v3616, %v3624
        %v3627 = vmul.f32 %v3625, %v3625
        %v3628 = vmul.f32 %v3626, %v3626
        %v3629 = vsel %vm1623, %v3627, 0.0
        %3630 = vadd.xlane.f32.xlu0 %v3629
        %v3631 = vpop.xlane.xlu0 %3630
        %v3632 = vsel %vm1623, %v3628, 0.0
        %3633 = vadd.xlane.f32.xlu0 %v3632
        %v3634 = vpop.xlane.xlu0 %3633
        %v3635 = vmul.f32 %v3631, %v2558
        %v3636 = vmul.f32 %v3634, %v2558
        %v3637 = vadd.f32 %v3635, 1e-05
        %v3638 = vadd.f32 %v3636, 1e-05
        %v3639 = vrsqrt.pop %v3637
        %v3640 = vmul.f32 %v3639, %v3637
        %v3641 = vmul.f32 %v3640, %v3639
        %v3642 = vmul.f32 0.5, %v3641
        %v3643 = vsub.f32 1.5, %v3642
        %v3644 = vmul.f32 %v3639, %v3643
        %vm3645 = vweird.f32 %v3637
        %vm3646 = vweird.f32 %v3639
        %vm3647 = vmor %vm3645, %vm3646
        %v3648 = vsel %vm3647, %v3639, %v3644
        %v3649 = vrsqrt.pop %v3638
        %v3650 = vmul.f32 %v3649, %v3638
        %v3651 = vmul.f32 %v3650, %v3649
        %v3652 = vmul.f32 0.5, %v3651
        %v3653 = vsub.f32 1.5, %v3652
        %v3654 = vmul.f32 %v3649, %v3653
        %vm3655 = vweird.f32 %v3638
        %vm3656 = vweird.f32 %v3649
        %vm3657 = vmor %vm3655, %vm3656
        %v3658 = vsel %vm3657, %v3649, %v3654
        %v3659 = vmul.f32 %v3625, %v3648
        %v3660 = vmul.f32 %v3626, %v3658
        %v3662 = vperm.slane %v1618, 0
        %v3664 = vmul.f32 %v3659, %v3662
        %v3665 = vmul.f32 %v3660, %v3662
        %v3667 = vperm.slane %v1619, 0
        %v3669 = vadd.f32 %v3664, %v3667
        %v3670 = vadd.f32 %v3665, %v3667
        %v3671 = vld [vmem:[#allocation7] sm:$0xff]
        %v3672 = vld [vmem:[#allocation7 + $0x8] sm:$0xff]
        %v3673 = vld [vmem:[#allocation7 + $0x10] sm:$0xff]
        %v3674 = vld [vmem:[#allocation7 + $0x18] sm:$0xff]
        %v3675 = vld [vmem:[%s47] sm:$0x1]
        %v3676 = vld [vmem:[#allocation8] sm:$0xff]
        %v3677 = vld [vmem:[#allocation8 + $0x8] sm:$0xff]
        %v3678 = vld [vmem:[#allocation8 + $0x10] sm:$0xff]
        %v3679 = vld [vmem:[#allocation8 + $0x18] sm:$0xff]
        %v3680 = vld [vmem:[%s51] sm:$0x1]
        %v3681 = vld [vmem:[#allocation10] sm:$0x1]
        %v3682 = vld [vmem:[#allocation11] sm:$0x1]
        %v3683 = vld [vmem:[#allocation13] sm:$0xff]
        %v3684 = vld [vmem:[#allocation13 + $0x8] sm:$0xff]
        %v3685 = vld [vmem:[#allocation13 + $0x10] sm:$0xff]
        %v3686 = vld [vmem:[#allocation13 + $0x18] sm:$0xff]
        %v3687 = vld [vmem:[#allocation14] sm:$0x1]
        %v3688 = vld [vmem:[#allocation16] sm:$0xff]
        %v3689 = vld [vmem:[#allocation16 + $0x8] sm:$0xff]
        %v3690 = vld [vmem:[#allocation16 + $0x10] sm:$0xff]
        %v3691 = vld [vmem:[#allocation16 + $0x18] sm:$0xff]
        %v3692 = vld [vmem:[#allocation17] sm:$0x1]
        %v3693 = vld [vmem:[#allocation19] sm:$0xff]
        %v3694 = vld [vmem:[#allocation19 + $0x8] sm:$0xff]
        %v3695 = vld [vmem:[#allocation19 + $0x10] sm:$0xff]
        %v3696 = vld [vmem:[#allocation19 + $0x18] sm:$0xff]
        %v3697 = vld [vmem:[#allocation20] sm:$0x1]
        %v3698 = vld [vmem:[#allocation22] sm:$0x1]
        %v3699 = vld [vmem:[#allocation23] sm:$0x1]
        %v3700 = vld [vmem:[#allocation25] sm:$0xff]
        %v3701 = vld [vmem:[#allocation25 + $0x8] sm:$0xff]
        %v3702 = vld [vmem:[#allocation25 + $0x10] sm:$0xff]
        %v3703 = vld [vmem:[#allocation25 + $0x18] sm:$0xff]
        %v3704 = vld [vmem:[%s75] sm:$0x1]
        %v3705 = vld [vmem:[%s77] sm:$0xff]
        %v3706 = vld [vmem:[%s77 + $0x8] sm:$0xff]
        %v3707 = vld [vmem:[%s77 + $0x10] sm:$0xff]
        %v3708 = vld [vmem:[%s77 + $0x18] sm:$0xff]
        %v3709 = vld [vmem:[%s77 + $0x20] sm:$0xff]
        %v3710 = vld [vmem:[%s77 + $0x28] sm:$0xff]
        %v3711 = vld [vmem:[%s77 + $0x30] sm:$0xff]
        %v3712 = vld [vmem:[%s77 + $0x38] sm:$0xff]
        %v3713 = vld [vmem:[%s79] sm:$0x1]
        %v3714 = vld [vmem:[%s81] sm:$0x1]
        %v3715 = vld [vmem:[%s83] sm:$0x1]
        %v3717 = vperm.slane %v3675, 0
        %v3720 = vsel %vm1623, %v3669, 0
        %v3723 = vsel %vm1623, %v3670, 0
        %3725 = vmatpush.msra.mxu0 0.0
        %3726 = vmatpush.msra.mxu0 0.0
        %3727 = vmatpush.msra.mxu0 0.0
        %3728 = vmatpush.msra.mxu0 0.0
        %3729 = vmatpush.msra.mxu0 0.0
        %3730 = vmatpush.msra.mxu0 0.0
        %3731 = vmatpush.msra.mxu0 0.0
        %3732 = vmatpush.msra.mxu0 0.0
        %3733 = vmatpush.msra.mxu0 0.0
        %3734 = vmatpush.msra.mxu0 0.0
        %3735 = vmatpush.msra.mxu0 0.0
        %3736 = vmatpush.msra.mxu0 0.0
        %3737 = vmatpush.msra.mxu0 %v3674
        %3738 = vmatpush.msra.mxu0 %v3673
        %3739 = vmatpush.msra.mxu0 %v3672
        %3740 = vmatpush.msra.mxu0 %v3671
        %3741 = vmatmul.f32.gmra.mxu0 %v3720
        %v3742 = vpop.f32.mrf.mxu0
        %v3743 = vadd.f32 %v3717, %v3742
        %3744 = vmatmul.f32.gmra.mxu0 %v3723
        %v3745 = vpop.f32.mrf.mxu0
        %v3746 = vadd.f32 %v3717, %v3745
        %3747 = vdwg.mxu0
        %3750 = vrot.lane.b32.xlu0 %v3743, 96
        %v3751 = vpop.permute.xlu0 %3750
        %3752 = vrot.lane.b32.xlu0 %v3746, 96
        %v3753 = vpop.permute.xlu0 %3752
        %v3754 = vsel %vm1659, %v3743, 0
        %v3756 = vsel %vm1659, %v3746, 0
        %v3758 = vsel %vm1659, %v3751, 0
        %v3760 = vsel %vm1659, %v3753, 0
        %3762 = vmatpush.xpose.msra.mxu0 0.0
        %3763 = vmatpush.xpose.msra.mxu0 0.0
        %3764 = vmatpush.xpose.msra.mxu0 0.0
        %3765 = vmatpush.xpose.msra.mxu0 0.0
        %3766 = vmatpush.xpose.msra.mxu0 0.0
        %3767 = vmatpush.xpose.msra.mxu0 0.0
        %3768 = vmatpush.xpose.msra.mxu0 0.0
        %3769 = vmatpush.xpose.msra.mxu0 0.0
        %3770 = vmatpush.xpose.msra.mxu0 0.0
        %3771 = vmatpush.xpose.msra.mxu0 0.0
        %3772 = vmatpush.xpose.msra.mxu0 0.0
        %3773 = vmatpush.xpose.msra.mxu0 0.0
        %3774 = vmatpush.xpose.msra.mxu0 0.0
        %3775 = vmatpush.xpose.msra.mxu0 0.0
        %3776 = vmatpush.xpose.msra.mxu0 %v3760
        %3777 = vmatpush.xpose.msra.mxu0 %v3758
        %3778 = vmatmul.f32.gmra.mxu0 %v3754
        %v3779 = vpop.f32.mrf.mxu0
        %v3780 = vadd.f32 0.0, %v3779
        %3781 = vmatmul.f32.gmra.mxu0 %v3756
        %v3782 = vpop.f32.mrf.mxu0
        %v3783 = vadd.f32 0.0, %v3782
        %3784 = vdwg.mxu0
        %v3785 = vmul.f32 %v3780, 0.5
        %v3786 = vmul.f32 %v3783, 0.5
        %v3787 = vsel %vm1693, %v3785, -inf
        %3788 = vmax.xlane.f32.xlu0 %v3787
        %v3789 = vpop.xlane.xlu0 %3788
        %v3790 = vsel %vm1693, %v3786, -inf
        %3791 = vmax.xlane.f32.xlu0 %v3790
        %v3792 = vpop.xlane.xlu0 %3791
        %v3793 = vsub.f32 %v3785, %v3789
        %v3794 = vsub.f32 %v3786, %v3792
        %v3795 = vmul.f32 %v3793, 1.442695
        %v3796 = vpow.pop %v3795
        %v3797 = vmul.f32 %v3794, 1.442695
        %v3798 = vpow.pop %v3797
        %v3799 = vsel %vm1693, %v3796, 0.0
        %3800 = vadd.xlane.f32.xlu0 %v3799
        %v3801 = vpop.xlane.xlu0 %3800
        %v3802 = vsel %vm1693, %v3798, 0.0
        %3803 = vadd.xlane.f32.xlu0 %v3802
        %v3804 = vpop.xlane.xlu0 %3803
        %v3805 = vrcp.pop %v3801
        %v3806 = vrcp.pop %v3804
        %v3807 = vmul.f32 %v3796, %v3805
        %v3808 = vmul.f32 %v3798, %v3806
        %3809 = vrot.lane.b32.xlu0 %v3743, 64
        %v3810 = vpop.permute.xlu0 %3809
        %3811 = vrot.lane.b32.xlu0 %v3746, 64
        %v3812 = vpop.permute.xlu0 %3811
        %v3816 = vsel %vm1693, %v3807, 0
        %v3819 = vsel %vm1693, %v3808, 0
        %3821 = vmatpush.msra.mxu0 0.0
        %3822 = vmatpush.msra.mxu0 0.0
        %3823 = vmatpush.msra.mxu0 0.0
        %3824 = vmatpush.msra.mxu0 0.0
        %3825 = vmatpush.msra.mxu0 0.0
        %3826 = vmatpush.msra.mxu0 0.0
        %3827 = vmatpush.msra.mxu0 0.0
        %3828 = vmatpush.msra.mxu0 0.0
        %3829 = vmatpush.msra.mxu0 0.0
        %3830 = vmatpush.msra.mxu0 0.0
        %3831 = vmatpush.msra.mxu0 0.0
        %3832 = vmatpush.msra.mxu0 0.0
        %3833 = vmatpush.msra.mxu0 0.0
        %3834 = vmatpush.msra.mxu0 0.0
        %3835 = vmatpush.msra.mxu0 %v3812
        %3836 = vmatpush.msra.mxu0 %v3810
        %3837 = vmatmul.f32.gmra.mxu0 %v3816
        %v3838 = vpop.f32.mrf.mxu0
        %v3839 = vadd.f32 0.0, %v3838
        %3840 = vmatmul.f32.gmra.mxu0 %v3819
        %v3841 = vpop.f32.mrf.mxu0
        %v3842 = vadd.f32 0.0, %v3841
        %3843 = vdwg.mxu0
        %3844 = vrot.lane.b32.xlu0 %v3743, 124
        %v3845 = vpop.permute.xlu0 %3844
        %3846 = vrot.lane.b32.xlu0 %v3746, 124
        %v3847 = vpop.permute.xlu0 %3846
        %3848 = vrot.lane.b32.xlu0 %v3743, 92
        %v3849 = vpop.permute.xlu0 %3848
        %3850 = vrot.lane.b32.xlu0 %v3746, 92
        %v3851 = vpop.permute.xlu0 %3850
        %v3852 = vsel %vm1659, %v3845, 0
        %v3854 = vsel %vm1659, %v3847, 0
        %v3856 = vsel %vm1659, %v3849, 0
        %v3858 = vsel %vm1659, %v3851, 0
        %3860 = vmatpush.xpose.msra.mxu0 0.0
        %3861 = vmatpush.xpose.msra.mxu0 0.0
        %3862 = vmatpush.xpose.msra.mxu0 0.0
        %3863 = vmatpush.xpose.msra.mxu0 0.0
        %3864 = vmatpush.xpose.msra.mxu0 0.0
        %3865 = vmatpush.xpose.msra.mxu0 0.0
        %3866 = vmatpush.xpose.msra.mxu0 0.0
        %3867 = vmatpush.xpose.msra.mxu0 0.0
        %3868 = vmatpush.xpose.msra.mxu0 0.0
        %3869 = vmatpush.xpose.msra.mxu0 0.0
        %3870 = vmatpush.xpose.msra.mxu0 0.0
        %3871 = vmatpush.xpose.msra.mxu0 0.0
        %3872 = vmatpush.xpose.msra.mxu0 0.0
        %3873 = vmatpush.xpose.msra.mxu0 0.0
        %3874 = vmatpush.xpose.msra.mxu0 %v3858
        %3875 = vmatpush.xpose.msra.mxu0 %v3856
        %3876 = vmatmul.f32.gmra.mxu0 %v3852
        %v3877 = vpop.f32.mrf.mxu0
        %v3878 = vadd.f32 0.0, %v3877
        %3879 = vmatmul.f32.gmra.mxu0 %v3854
        %v3880 = vpop.f32.mrf.mxu0
        %v3881 = vadd.f32 0.0, %v3880
        %3882 = vdwg.mxu0
        %v3883 = vmul.f32 %v3878, 0.5
        %v3884 = vmul.f32 %v3881, 0.5
        %v3885 = vsel %vm1693, %v3883, -inf
        %3886 = vmax.xlane.f32.xlu0 %v3885
        %v3887 = vpop.xlane.xlu0 %3886
        %v3888 = vsel %vm1693, %v3884, -inf
        %3889 = vmax.xlane.f32.xlu0 %v3888
        %v3890 = vpop.xlane.xlu0 %3889
        %v3891 = vsub.f32 %v3883, %v3887
        %v3892 = vsub.f32 %v3884, %v3890
        %v3893 = vmul.f32 %v3891, 1.442695
        %v3894 = vpow.pop %v3893
        %v3895 = vmul.f32 %v3892, 1.442695
        %v3896 = vpow.pop %v3895
        %v3897 = vsel %vm1693, %v3894, 0.0
        %3898 = vadd.xlane.f32.xlu0 %v3897
        %v3899 = vpop.xlane.xlu0 %3898
        %v3900 = vsel %vm1693, %v3896, 0.0
        %3901 = vadd.xlane.f32.xlu0 %v3900
        %v3902 = vpop.xlane.xlu0 %3901
        %v3903 = vrcp.pop %v3899
        %v3904 = vrcp.pop %v3902
        %v3905 = vmul.f32 %v3894, %v3903
        %v3906 = vmul.f32 %v3896, %v3904
        %3907 = vrot.lane.b32.xlu0 %v3743, 60
        %v3908 = vpop.permute.xlu0 %3907
        %3909 = vrot.lane.b32.xlu0 %v3746, 60
        %v3910 = vpop.permute.xlu0 %3909
        %v3914 = vsel %vm1693, %v3905, 0
        %v3917 = vsel %vm1693, %v3906, 0
        %3919 = vmatpush.msra.mxu0 0.0
        %3920 = vmatpush.msra.mxu0 0.0
        %3921 = vmatpush.msra.mxu0 0.0
        %3922 = vmatpush.msra.mxu0 0.0
        %3923 = vmatpush.msra.mxu0 0.0
        %3924 = vmatpush.msra.mxu0 0.0
        %3925 = vmatpush.msra.mxu0 0.0
        %3926 = vmatpush.msra.mxu0 0.0
        %3927 = vmatpush.msra.mxu0 0.0
        %3928 = vmatpush.msra.mxu0 0.0
        %3929 = vmatpush.msra.mxu0 0.0
        %3930 = vmatpush.msra.mxu0 0.0
        %3931 = vmatpush.msra.mxu0 0.0
        %3932 = vmatpush.msra.mxu0 0.0
        %3933 = vmatpush.msra.mxu0 %v3910
        %3934 = vmatpush.msra.mxu0 %v3908
        %3935 = vmatmul.f32.gmra.mxu0 %v3914
        %v3936 = vpop.f32.mrf.mxu0
        %v3937 = vadd.f32 0.0, %v3936
        %3938 = vmatmul.f32.gmra.mxu0 %v3917
        %v3939 = vpop.f32.mrf.mxu0
        %v3940 = vadd.f32 0.0, %v3939
        %3941 = vdwg.mxu0
        %3942 = vrot.lane.b32.xlu0 %v3743, 120
        %v3943 = vpop.permute.xlu0 %3942
        %3944 = vrot.lane.b32.xlu0 %v3746, 120
        %v3945 = vpop.permute.xlu0 %3944
        %3946 = vrot.lane.b32.xlu0 %v3743, 88
        %v3947 = vpop.permute.xlu0 %3946
        %3948 = vrot.lane.b32.xlu0 %v3746, 88
        %v3949 = vpop.permute.xlu0 %3948
        %v3950 = vsel %vm1659, %v3943, 0
        %v3952 = vsel %vm1659, %v3945, 0
        %v3954 = vsel %vm1659, %v3947, 0
        %v3956 = vsel %vm1659, %v3949, 0
        %3958 = vmatpush.xpose.msra.mxu0 0.0
        %3959 = vmatpush.xpose.msra.mxu0 0.0
        %3960 = vmatpush.xpose.msra.mxu0 0.0
        %3961 = vmatpush.xpose.msra.mxu0 0.0
        %3962 = vmatpush.xpose.msra.mxu0 0.0
        %3963 = vmatpush.xpose.msra.mxu0 0.0
        %3964 = vmatpush.xpose.msra.mxu0 0.0
        %3965 = vmatpush.xpose.msra.mxu0 0.0
        %3966 = vmatpush.xpose.msra.mxu0 0.0
        %3967 = vmatpush.xpose.msra.mxu0 0.0
        %3968 = vmatpush.xpose.msra.mxu0 0.0
        %3969 = vmatpush.xpose.msra.mxu0 0.0
        %3970 = vmatpush.xpose.msra.mxu0 0.0
        %3971 = vmatpush.xpose.msra.mxu0 0.0
        %3972 = vmatpush.xpose.msra.mxu0 %v3956
        %3973 = vmatpush.xpose.msra.mxu0 %v3954
        %3974 = vmatmul.f32.gmra.mxu0 %v3950
        %v3975 = vpop.f32.mrf.mxu0
        %v3976 = vadd.f32 0.0, %v3975
        %3977 = vmatmul.f32.gmra.mxu0 %v3952
        %v3978 = vpop.f32.mrf.mxu0
        %v3979 = vadd.f32 0.0, %v3978
        %3980 = vdwg.mxu0
        %v3981 = vmul.f32 %v3976, 0.5
        %v3982 = vmul.f32 %v3979, 0.5
        %v3983 = vsel %vm1693, %v3981, -inf
        %3984 = vmax.xlane.f32.xlu0 %v3983
        %v3985 = vpop.xlane.xlu0 %3984
        %v3986 = vsel %vm1693, %v3982, -inf
        %3987 = vmax.xlane.f32.xlu0 %v3986
        %v3988 = vpop.xlane.xlu0 %3987
        %v3989 = vsub.f32 %v3981, %v3985
        %v3990 = vsub.f32 %v3982, %v3988
        %v3991 = vmul.f32 %v3989, 1.442695
        %v3992 = vpow.pop %v3991
        %v3993 = vmul.f32 %v3990, 1.442695
        %v3994 = vpow.pop %v3993
        %v3995 = vsel %vm1693, %v3992, 0.0
        %3996 = vadd.xlane.f32.xlu0 %v3995
        %v3997 = vpop.xlane.xlu0 %3996
        %v3998 = vsel %vm1693, %v3994, 0.0
        %3999 = vadd.xlane.f32.xlu0 %v3998
        %v4000 = vpop.xlane.xlu0 %3999
        %v4001 = vrcp.pop %v3997
        %v4002 = vrcp.pop %v4000
        %v4003 = vmul.f32 %v3992, %v4001
        %v4004 = vmul.f32 %v3994, %v4002
        %4005 = vrot.lane.b32.xlu0 %v3743, 56
        %v4006 = vpop.permute.xlu0 %4005
        %4007 = vrot.lane.b32.xlu0 %v3746, 56
        %v4008 = vpop.permute.xlu0 %4007
        %v4012 = vsel %vm1693, %v4003, 0
        %v4015 = vsel %vm1693, %v4004, 0
        %4017 = vmatpush.msra.mxu0 0.0
        %4018 = vmatpush.msra.mxu0 0.0
        %4019 = vmatpush.msra.mxu0 0.0
        %4020 = vmatpush.msra.mxu0 0.0
        %4021 = vmatpush.msra.mxu0 0.0
        %4022 = vmatpush.msra.mxu0 0.0
        %4023 = vmatpush.msra.mxu0 0.0
        %4024 = vmatpush.msra.mxu0 0.0
        %4025 = vmatpush.msra.mxu0 0.0
        %4026 = vmatpush.msra.mxu0 0.0
        %4027 = vmatpush.msra.mxu0 0.0
        %4028 = vmatpush.msra.mxu0 0.0
        %4029 = vmatpush.msra.mxu0 0.0
        %4030 = vmatpush.msra.mxu0 0.0
        %4031 = vmatpush.msra.mxu0 %v4008
        %4032 = vmatpush.msra.mxu0 %v4006
        %4033 = vmatmul.f32.gmra.mxu0 %v4012
        %v4034 = vpop.f32.mrf.mxu0
        %v4035 = vadd.f32 0.0, %v4034
        %4036 = vmatmul.f32.gmra.mxu0 %v4015
        %v4037 = vpop.f32.mrf.mxu0
        %v4038 = vadd.f32 0.0, %v4037
        %4039 = vdwg.mxu0
        %4040 = vrot.lane.b32.xlu0 %v3743, 116
        %v4041 = vpop.permute.xlu0 %4040
        %4042 = vrot.lane.b32.xlu0 %v3746, 116
        %v4043 = vpop.permute.xlu0 %4042
        %4044 = vrot.lane.b32.xlu0 %v3743, 84
        %v4045 = vpop.permute.xlu0 %4044
        %4046 = vrot.lane.b32.xlu0 %v3746, 84
        %v4047 = vpop.permute.xlu0 %4046
        %v4048 = vsel %vm1659, %v4041, 0
        %v4050 = vsel %vm1659, %v4043, 0
        %v4052 = vsel %vm1659, %v4045, 0
        %v4054 = vsel %vm1659, %v4047, 0
        %4056 = vmatpush.xpose.msra.mxu0 0.0
        %4057 = vmatpush.xpose.msra.mxu0 0.0
        %4058 = vmatpush.xpose.msra.mxu0 0.0
        %4059 = vmatpush.xpose.msra.mxu0 0.0
        %4060 = vmatpush.xpose.msra.mxu0 0.0
        %4061 = vmatpush.xpose.msra.mxu0 0.0
        %4062 = vmatpush.xpose.msra.mxu0 0.0
        %4063 = vmatpush.xpose.msra.mxu0 0.0
        %4064 = vmatpush.xpose.msra.mxu0 0.0
        %4065 = vmatpush.xpose.msra.mxu0 0.0
        %4066 = vmatpush.xpose.msra.mxu0 0.0
        %4067 = vmatpush.xpose.msra.mxu0 0.0
        %4068 = vmatpush.xpose.msra.mxu0 0.0
        %4069 = vmatpush.xpose.msra.mxu0 0.0
        %4070 = vmatpush.xpose.msra.mxu0 %v4054
        %4071 = vmatpush.xpose.msra.mxu0 %v4052
        %4072 = vmatmul.f32.gmra.mxu0 %v4048
        %v4073 = vpop.f32.mrf.mxu0
        %v4074 = vadd.f32 0.0, %v4073
        %4075 = vmatmul.f32.gmra.mxu0 %v4050
        %v4076 = vpop.f32.mrf.mxu0
        %v4077 = vadd.f32 0.0, %v4076
        %4078 = vdwg.mxu0
        %v4079 = vmul.f32 %v4074, 0.5
        %v4080 = vmul.f32 %v4077, 0.5
        %v4081 = vsel %vm1693, %v4079, -inf
        %4082 = vmax.xlane.f32.xlu0 %v4081
        %v4083 = vpop.xlane.xlu0 %4082
        %v4084 = vsel %vm1693, %v4080, -inf
        %4085 = vmax.xlane.f32.xlu0 %v4084
        %v4086 = vpop.xlane.xlu0 %4085
        %v4087 = vsub.f32 %v4079, %v4083
        %v4088 = vsub.f32 %v4080, %v4086
        %v4089 = vmul.f32 %v4087, 1.442695
        %v4090 = vpow.pop %v4089
        %v4091 = vmul.f32 %v4088, 1.442695
        %v4092 = vpow.pop %v4091
        %v4093 = vsel %vm1693, %v4090, 0.0
        %4094 = vadd.xlane.f32.xlu0 %v4093
        %v4095 = vpop.xlane.xlu0 %4094
        %v4096 = vsel %vm1693, %v4092, 0.0
        %4097 = vadd.xlane.f32.xlu0 %v4096
        %v4098 = vpop.xlane.xlu0 %4097
        %v4099 = vrcp.pop %v4095
        %v4100 = vrcp.pop %v4098
        %v4101 = vmul.f32 %v4090, %v4099
        %v4102 = vmul.f32 %v4092, %v4100
        %4103 = vrot.lane.b32.xlu0 %v3743, 52
        %v4104 = vpop.permute.xlu0 %4103
        %4105 = vrot.lane.b32.xlu0 %v3746, 52
        %v4106 = vpop.permute.xlu0 %4105
        %v4110 = vsel %vm1693, %v4101, 0
        %v4113 = vsel %vm1693, %v4102, 0
        %4115 = vmatpush.msra.mxu0 0.0
        %4116 = vmatpush.msra.mxu0 0.0
        %4117 = vmatpush.msra.mxu0 0.0
        %4118 = vmatpush.msra.mxu0 0.0
        %4119 = vmatpush.msra.mxu0 0.0
        %4120 = vmatpush.msra.mxu0 0.0
        %4121 = vmatpush.msra.mxu0 0.0
        %4122 = vmatpush.msra.mxu0 0.0
        %4123 = vmatpush.msra.mxu0 0.0
        %4124 = vmatpush.msra.mxu0 0.0
        %4125 = vmatpush.msra.mxu0 0.0
        %4126 = vmatpush.msra.mxu0 0.0
        %4127 = vmatpush.msra.mxu0 0.0
        %4128 = vmatpush.msra.mxu0 0.0
        %4129 = vmatpush.msra.mxu0 %v4106
        %4130 = vmatpush.msra.mxu0 %v4104
        %4131 = vmatmul.f32.gmra.mxu0 %v4110
        %v4132 = vpop.f32.mrf.mxu0
        %v4133 = vadd.f32 0.0, %v4132
        %4134 = vmatmul.f32.gmra.mxu0 %v4113
        %v4135 = vpop.f32.mrf.mxu0
        %v4136 = vadd.f32 0.0, %v4135
        %4137 = vdwg.mxu0
        %4138 = vrot.lane.b32.xlu0 %v3743, 112
        %v4139 = vpop.permute.xlu0 %4138
        %4140 = vrot.lane.b32.xlu0 %v3746, 112
        %v4141 = vpop.permute.xlu0 %4140
        %4142 = vrot.lane.b32.xlu0 %v3743, 80
        %v4143 = vpop.permute.xlu0 %4142
        %4144 = vrot.lane.b32.xlu0 %v3746, 80
        %v4145 = vpop.permute.xlu0 %4144
        %v4146 = vsel %vm1659, %v4139, 0
        %v4148 = vsel %vm1659, %v4141, 0
        %v4150 = vsel %vm1659, %v4143, 0
        %v4152 = vsel %vm1659, %v4145, 0
        %4154 = vmatpush.xpose.msra.mxu0 0.0
        %4155 = vmatpush.xpose.msra.mxu0 0.0
        %4156 = vmatpush.xpose.msra.mxu0 0.0
        %4157 = vmatpush.xpose.msra.mxu0 0.0
        %4158 = vmatpush.xpose.msra.mxu0 0.0
        %4159 = vmatpush.xpose.msra.mxu0 0.0
        %4160 = vmatpush.xpose.msra.mxu0 0.0
        %4161 = vmatpush.xpose.msra.mxu0 0.0
        %4162 = vmatpush.xpose.msra.mxu0 0.0
        %4163 = vmatpush.xpose.msra.mxu0 0.0
        %4164 = vmatpush.xpose.msra.mxu0 0.0
        %4165 = vmatpush.xpose.msra.mxu0 0.0
        %4166 = vmatpush.xpose.msra.mxu0 0.0
        %4167 = vmatpush.xpose.msra.mxu0 0.0
        %4168 = vmatpush.xpose.msra.mxu0 %v4152
        %4169 = vmatpush.xpose.msra.mxu0 %v4150
        %4170 = vmatmul.f32.gmra.mxu0 %v4146
        %v4171 = vpop.f32.mrf.mxu0
        %v4172 = vadd.f32 0.0, %v4171
        %4173 = vmatmul.f32.gmra.mxu0 %v4148
        %v4174 = vpop.f32.mrf.mxu0
        %v4175 = vadd.f32 0.0, %v4174
        %4176 = vdwg.mxu0
        %v4177 = vmul.f32 %v4172, 0.5
        %v4178 = vmul.f32 %v4175, 0.5
        %v4179 = vsel %vm1693, %v4177, -inf
        %4180 = vmax.xlane.f32.xlu0 %v4179
        %v4181 = vpop.xlane.xlu0 %4180
        %v4182 = vsel %vm1693, %v4178, -inf
        %4183 = vmax.xlane.f32.xlu0 %v4182
        %v4184 = vpop.xlane.xlu0 %4183
        %v4185 = vsub.f32 %v4177, %v4181
        %v4186 = vsub.f32 %v4178, %v4184
        %v4187 = vmul.f32 %v4185, 1.442695
        %v4188 = vpow.pop %v4187
        %v4189 = vmul.f32 %v4186, 1.442695
        %v4190 = vpow.pop %v4189
        %v4191 = vsel %vm1693, %v4188, 0.0
        %4192 = vadd.xlane.f32.xlu0 %v4191
        %v4193 = vpop.xlane.xlu0 %4192
        %v4194 = vsel %vm1693, %v4190, 0.0
        %4195 = vadd.xlane.f32.xlu0 %v4194
        %v4196 = vpop.xlane.xlu0 %4195
        %v4197 = vrcp.pop %v4193
        %v4198 = vrcp.pop %v4196
        %v4199 = vmul.f32 %v4188, %v4197
        %v4200 = vmul.f32 %v4190, %v4198
        %4201 = vrot.lane.b32.xlu0 %v3743, 48
        %v4202 = vpop.permute.xlu0 %4201
        %4203 = vrot.lane.b32.xlu0 %v3746, 48
        %v4204 = vpop.permute.xlu0 %4203
        %v4208 = vsel %vm1693, %v4199, 0
        %v4211 = vsel %vm1693, %v4200, 0
        %4213 = vmatpush.msra.mxu0 0.0
        %4214 = vmatpush.msra.mxu0 0.0
        %4215 = vmatpush.msra.mxu0 0.0
        %4216 = vmatpush.msra.mxu0 0.0
        %4217 = vmatpush.msra.mxu0 0.0
        %4218 = vmatpush.msra.mxu0 0.0
        %4219 = vmatpush.msra.mxu0 0.0
        %4220 = vmatpush.msra.mxu0 0.0
        %4221 = vmatpush.msra.mxu0 0.0
        %4222 = vmatpush.msra.mxu0 0.0
        %4223 = vmatpush.msra.mxu0 0.0
        %4224 = vmatpush.msra.mxu0 0.0
        %4225 = vmatpush.msra.mxu0 0.0
        %4226 = vmatpush.msra.mxu0 0.0
        %4227 = vmatpush.msra.mxu0 %v4204
        %4228 = vmatpush.msra.mxu0 %v4202
        %4229 = vmatmul.f32.gmra.mxu0 %v4208
        %v4230 = vpop.f32.mrf.mxu0
        %v4231 = vadd.f32 0.0, %v4230
        %4232 = vmatmul.f32.gmra.mxu0 %v4211
        %v4233 = vpop.f32.mrf.mxu0
        %v4234 = vadd.f32 0.0, %v4233
        %4235 = vdwg.mxu0
        %4236 = vrot.lane.b32.xlu0 %v3743, 108
        %v4237 = vpop.permute.xlu0 %4236
        %4238 = vrot.lane.b32.xlu0 %v3746, 108
        %v4239 = vpop.permute.xlu0 %4238
        %4240 = vrot.lane.b32.xlu0 %v3743, 76
        %v4241 = vpop.permute.xlu0 %4240
        %4242 = vrot.lane.b32.xlu0 %v3746, 76
        %v4243 = vpop.permute.xlu0 %4242
        %v4244 = vsel %vm1659, %v4237, 0
        %v4246 = vsel %vm1659, %v4239, 0
        %v4248 = vsel %vm1659, %v4241, 0
        %v4250 = vsel %vm1659, %v4243, 0
        %4252 = vmatpush.xpose.msra.mxu0 0.0
        %4253 = vmatpush.xpose.msra.mxu0 0.0
        %4254 = vmatpush.xpose.msra.mxu0 0.0
        %4255 = vmatpush.xpose.msra.mxu0 0.0
        %4256 = vmatpush.xpose.msra.mxu0 0.0
        %4257 = vmatpush.xpose.msra.mxu0 0.0
        %4258 = vmatpush.xpose.msra.mxu0 0.0
        %4259 = vmatpush.xpose.msra.mxu0 0.0
        %4260 = vmatpush.xpose.msra.mxu0 0.0
        %4261 = vmatpush.xpose.msra.mxu0 0.0
        %4262 = vmatpush.xpose.msra.mxu0 0.0
        %4263 = vmatpush.xpose.msra.mxu0 0.0
        %4264 = vmatpush.xpose.msra.mxu0 0.0
        %4265 = vmatpush.xpose.msra.mxu0 0.0
        %4266 = vmatpush.xpose.msra.mxu0 %v4250
        %4267 = vmatpush.xpose.msra.mxu0 %v4248
        %4268 = vmatmul.f32.gmra.mxu0 %v4244
        %v4269 = vpop.f32.mrf.mxu0
        %v4270 = vadd.f32 0.0, %v4269
        %4271 = vmatmul.f32.gmra.mxu0 %v4246
        %v4272 = vpop.f32.mrf.mxu0
        %v4273 = vadd.f32 0.0, %v4272
        %4274 = vdwg.mxu0
        %v4275 = vmul.f32 %v4270, 0.5
        %v4276 = vmul.f32 %v4273, 0.5
        %v4277 = vsel %vm1693, %v4275, -inf
        %4278 = vmax.xlane.f32.xlu0 %v4277
        %v4279 = vpop.xlane.xlu0 %4278
        %v4280 = vsel %vm1693, %v4276, -inf
        %4281 = vmax.xlane.f32.xlu0 %v4280
        %v4282 = vpop.xlane.xlu0 %4281
        %v4283 = vsub.f32 %v4275, %v4279
        %v4284 = vsub.f32 %v4276, %v4282
        %v4285 = vmul.f32 %v4283, 1.442695
        %v4286 = vpow.pop %v4285
        %v4287 = vmul.f32 %v4284, 1.442695
        %v4288 = vpow.pop %v4287
        %v4289 = vsel %vm1693, %v4286, 0.0
        %4290 = vadd.xlane.f32.xlu0 %v4289
        %v4291 = vpop.xlane.xlu0 %4290
        %v4292 = vsel %vm1693, %v4288, 0.0
        %4293 = vadd.xlane.f32.xlu0 %v4292
        %v4294 = vpop.xlane.xlu0 %4293
        %v4295 = vrcp.pop %v4291
        %v4296 = vrcp.pop %v4294
        %v4297 = vmul.f32 %v4286, %v4295
        %v4298 = vmul.f32 %v4288, %v4296
        %4299 = vrot.lane.b32.xlu0 %v3743, 44
        %v4300 = vpop.permute.xlu0 %4299
        %4301 = vrot.lane.b32.xlu0 %v3746, 44
        %v4302 = vpop.permute.xlu0 %4301
        %v4306 = vsel %vm1693, %v4297, 0
        %v4309 = vsel %vm1693, %v4298, 0
        %4311 = vmatpush.msra.mxu0 0.0
        %4312 = vmatpush.msra.mxu0 0.0
        %4313 = vmatpush.msra.mxu0 0.0
        %4314 = vmatpush.msra.mxu0 0.0
        %4315 = vmatpush.msra.mxu0 0.0
        %4316 = vmatpush.msra.mxu0 0.0
        %4317 = vmatpush.msra.mxu0 0.0
        %4318 = vmatpush.msra.mxu0 0.0
        %4319 = vmatpush.msra.mxu0 0.0
        %4320 = vmatpush.msra.mxu0 0.0
        %4321 = vmatpush.msra.mxu0 0.0
        %4322 = vmatpush.msra.mxu0 0.0
        %4323 = vmatpush.msra.mxu0 0.0
        %4324 = vmatpush.msra.mxu0 0.0
        %4325 = vmatpush.msra.mxu0 %v4302
        %4326 = vmatpush.msra.mxu0 %v4300
        %4327 = vmatmul.f32.gmra.mxu0 %v4306
        %v4328 = vpop.f32.mrf.mxu0
        %v4329 = vadd.f32 0.0, %v4328
        %4330 = vmatmul.f32.gmra.mxu0 %v4309
        %v4331 = vpop.f32.mrf.mxu0
        %v4332 = vadd.f32 0.0, %v4331
        %4333 = vdwg.mxu0
        %4334 = vrot.lane.b32.xlu0 %v3743, 104
        %v4335 = vpop.permute.xlu0 %4334
        %4336 = vrot.lane.b32.xlu0 %v3746, 104
        %v4337 = vpop.permute.xlu0 %4336
        %4338 = vrot.lane.b32.xlu0 %v3743, 72
        %v4339 = vpop.permute.xlu0 %4338
        %4340 = vrot.lane.b32.xlu0 %v3746, 72
        %v4341 = vpop.permute.xlu0 %4340
        %v4342 = vsel %vm1659, %v4335, 0
        %v4344 = vsel %vm1659, %v4337, 0
        %v4346 = vsel %vm1659, %v4339, 0
        %v4348 = vsel %vm1659, %v4341, 0
        %4350 = vmatpush.xpose.msra.mxu0 0.0
        %4351 = vmatpush.xpose.msra.mxu0 0.0
        %4352 = vmatpush.xpose.msra.mxu0 0.0
        %4353 = vmatpush.xpose.msra.mxu0 0.0
        %4354 = vmatpush.xpose.msra.mxu0 0.0
        %4355 = vmatpush.xpose.msra.mxu0 0.0
        %4356 = vmatpush.xpose.msra.mxu0 0.0
        %4357 = vmatpush.xpose.msra.mxu0 0.0
        %4358 = vmatpush.xpose.msra.mxu0 0.0
        %4359 = vmatpush.xpose.msra.mxu0 0.0
        %4360 = vmatpush.xpose.msra.mxu0 0.0
        %4361 = vmatpush.xpose.msra.mxu0 0.0
        %4362 = vmatpush.xpose.msra.mxu0 0.0
        %4363 = vmatpush.xpose.msra.mxu0 0.0
        %4364 = vmatpush.xpose.msra.mxu0 %v4348
        %4365 = vmatpush.xpose.msra.mxu0 %v4346
        %4366 = vmatmul.f32.gmra.mxu0 %v4342
        %v4367 = vpop.f32.mrf.mxu0
        %v4368 = vadd.f32 0.0, %v4367
        %4369 = vmatmul.f32.gmra.mxu0 %v4344
        %v4370 = vpop.f32.mrf.mxu0
        %v4371 = vadd.f32 0.0, %v4370
        %4372 = vdwg.mxu0
        %v4373 = vmul.f32 %v4368, 0.5
        %v4374 = vmul.f32 %v4371, 0.5
        %v4375 = vsel %vm1693, %v4373, -inf
        %4376 = vmax.xlane.f32.xlu0 %v4375
        %v4377 = vpop.xlane.xlu0 %4376
        %v4378 = vsel %vm1693, %v4374, -inf
        %4379 = vmax.xlane.f32.xlu0 %v4378
        %v4380 = vpop.xlane.xlu0 %4379
        %v4381 = vsub.f32 %v4373, %v4377
        %v4382 = vsub.f32 %v4374, %v4380
        %v4383 = vmul.f32 %v4381, 1.442695
        %v4384 = vpow.pop %v4383
        %v4385 = vmul.f32 %v4382, 1.442695
        %v4386 = vpow.pop %v4385
        %v4387 = vsel %vm1693, %v4384, 0.0
        %4388 = vadd.xlane.f32.xlu0 %v4387
        %v4389 = vpop.xlane.xlu0 %4388
        %v4390 = vsel %vm1693, %v4386, 0.0
        %4391 = vadd.xlane.f32.xlu0 %v4390
        %v4392 = vpop.xlane.xlu0 %4391
        %v4393 = vrcp.pop %v4389
        %v4394 = vrcp.pop %v4392
        %v4395 = vmul.f32 %v4384, %v4393
        %v4396 = vmul.f32 %v4386, %v4394
        %4397 = vrot.lane.b32.xlu0 %v3743, 40
        %v4398 = vpop.permute.xlu0 %4397
        %4399 = vrot.lane.b32.xlu0 %v3746, 40
        %v4400 = vpop.permute.xlu0 %4399
        %v4404 = vsel %vm1693, %v4395, 0
        %v4407 = vsel %vm1693, %v4396, 0
        %4409 = vmatpush.msra.mxu0 0.0
        %4410 = vmatpush.msra.mxu0 0.0
        %4411 = vmatpush.msra.mxu0 0.0
        %4412 = vmatpush.msra.mxu0 0.0
        %4413 = vmatpush.msra.mxu0 0.0
        %4414 = vmatpush.msra.mxu0 0.0
        %4415 = vmatpush.msra.mxu0 0.0
        %4416 = vmatpush.msra.mxu0 0.0
        %4417 = vmatpush.msra.mxu0 0.0
        %4418 = vmatpush.msra.mxu0 0.0
        %4419 = vmatpush.msra.mxu0 0.0
        %4420 = vmatpush.msra.mxu0 0.0
        %4421 = vmatpush.msra.mxu0 0.0
        %4422 = vmatpush.msra.mxu0 0.0
        %4423 = vmatpush.msra.mxu0 %v4400
        %4424 = vmatpush.msra.mxu0 %v4398
        %4425 = vmatmul.f32.gmra.mxu0 %v4404
        %v4426 = vpop.f32.mrf.mxu0
        %v4427 = vadd.f32 0.0, %v4426
        %4428 = vmatmul.f32.gmra.mxu0 %v4407
        %v4429 = vpop.f32.mrf.mxu0
        %v4430 = vadd.f32 0.0, %v4429
        %4431 = vdwg.mxu0
        %4432 = vrot.lane.b32.xlu0 %v3743, 100
        %v4433 = vpop.permute.xlu0 %4432
        %4434 = vrot.lane.b32.xlu0 %v3746, 100
        %v4435 = vpop.permute.xlu0 %4434
        %4436 = vrot.lane.b32.xlu0 %v3743, 68
        %v4437 = vpop.permute.xlu0 %4436
        %4438 = vrot.lane.b32.xlu0 %v3746, 68
        %v4439 = vpop.permute.xlu0 %4438
        %v4440 = vsel %vm1659, %v4433, 0
        %v4442 = vsel %vm1659, %v4435, 0
        %v4444 = vsel %vm1659, %v4437, 0
        %v4446 = vsel %vm1659, %v4439, 0
        %4448 = vmatpush.xpose.msra.mxu0 0.0
        %4449 = vmatpush.xpose.msra.mxu0 0.0
        %4450 = vmatpush.xpose.msra.mxu0 0.0
        %4451 = vmatpush.xpose.msra.mxu0 0.0
        %4452 = vmatpush.xpose.msra.mxu0 0.0
        %4453 = vmatpush.xpose.msra.mxu0 0.0
        %4454 = vmatpush.xpose.msra.mxu0 0.0
        %4455 = vmatpush.xpose.msra.mxu0 0.0
        %4456 = vmatpush.xpose.msra.mxu0 0.0
        %4457 = vmatpush.xpose.msra.mxu0 0.0
        %4458 = vmatpush.xpose.msra.mxu0 0.0
        %4459 = vmatpush.xpose.msra.mxu0 0.0
        %4460 = vmatpush.xpose.msra.mxu0 0.0
        %4461 = vmatpush.xpose.msra.mxu0 0.0
        %4462 = vmatpush.xpose.msra.mxu0 %v4446
        %4463 = vmatpush.xpose.msra.mxu0 %v4444
        %4464 = vmatmul.f32.gmra.mxu0 %v4440
        %v4465 = vpop.f32.mrf.mxu0
        %v4466 = vadd.f32 0.0, %v4465
        %4467 = vmatmul.f32.gmra.mxu0 %v4442
        %v4468 = vpop.f32.mrf.mxu0
        %v4469 = vadd.f32 0.0, %v4468
        %4470 = vdwg.mxu0
        %v4471 = vmul.f32 %v4466, 0.5
        %v4472 = vmul.f32 %v4469, 0.5
        %v4473 = vsel %vm1693, %v4471, -inf
        %4474 = vmax.xlane.f32.xlu0 %v4473
        %v4475 = vpop.xlane.xlu0 %4474
        %v4476 = vsel %vm1693, %v4472, -inf
        %4477 = vmax.xlane.f32.xlu0 %v4476
        %v4478 = vpop.xlane.xlu0 %4477
        %v4479 = vsub.f32 %v4471, %v4475
        %v4480 = vsub.f32 %v4472, %v4478
        %v4481 = vmul.f32 %v4479, 1.442695
        %v4482 = vpow.pop %v4481
        %v4483 = vmul.f32 %v4480, 1.442695
        %v4484 = vpow.pop %v4483
        %v4485 = vsel %vm1693, %v4482, 0.0
        %4486 = vadd.xlane.f32.xlu0 %v4485
        %v4487 = vpop.xlane.xlu0 %4486
        %v4488 = vsel %vm1693, %v4484, 0.0
        %4489 = vadd.xlane.f32.xlu0 %v4488
        %v4490 = vpop.xlane.xlu0 %4489
        %v4491 = vrcp.pop %v4487
        %v4492 = vrcp.pop %v4490
        %v4493 = vmul.f32 %v4482, %v4491
        %v4494 = vmul.f32 %v4484, %v4492
        %4495 = vrot.lane.b32.xlu0 %v3743, 36
        %v4496 = vpop.permute.xlu0 %4495
        %4497 = vrot.lane.b32.xlu0 %v3746, 36
        %v4498 = vpop.permute.xlu0 %4497
        %v4502 = vsel %vm1693, %v4493, 0
        %v4505 = vsel %vm1693, %v4494, 0
        %4507 = vmatpush.msra.mxu0 0.0
        %4508 = vmatpush.msra.mxu0 0.0
        %4509 = vmatpush.msra.mxu0 0.0
        %4510 = vmatpush.msra.mxu0 0.0
        %4511 = vmatpush.msra.mxu0 0.0
        %4512 = vmatpush.msra.mxu0 0.0
        %4513 = vmatpush.msra.mxu0 0.0
        %4514 = vmatpush.msra.mxu0 0.0
        %4515 = vmatpush.msra.mxu0 0.0
        %4516 = vmatpush.msra.mxu0 0.0
        %4517 = vmatpush.msra.mxu0 0.0
        %4518 = vmatpush.msra.mxu0 0.0
        %4519 = vmatpush.msra.mxu0 0.0
        %4520 = vmatpush.msra.mxu0 0.0
        %4521 = vmatpush.msra.mxu0 %v4498
        %4522 = vmatpush.msra.mxu0 %v4496
        %4523 = vmatmul.f32.gmra.mxu0 %v4502
        %v4524 = vpop.f32.mrf.mxu0
        %v4525 = vadd.f32 0.0, %v4524
        %4526 = vmatmul.f32.gmra.mxu0 %v4505
        %v4527 = vpop.f32.mrf.mxu0
        %v4528 = vadd.f32 0.0, %v4527
        %4529 = vdwg.mxu0
        %4532 = vrot.lane.b32.xlu0 %v3937, 4
        %v4533 = vpop.permute.xlu0 %4532
        %4534 = vrot.lane.b32.xlu0 %v3940, 4
        %v4535 = vpop.permute.xlu0 %4534
        %4540 = vrot.lane.b32.xlu0 %v4035, 8
        %v4541 = vpop.permute.xlu0 %4540
        %4542 = vrot.lane.b32.xlu0 %v4038, 8
        %v4543 = vpop.permute.xlu0 %4542
        %4548 = vrot.lane.b32.xlu0 %v4133, 12
        %v4549 = vpop.permute.xlu0 %4548
        %4550 = vrot.lane.b32.xlu0 %v4136, 12
        %v4551 = vpop.permute.xlu0 %4550
        %4556 = vrot.lane.b32.xlu0 %v4231, 16
        %v4557 = vpop.permute.xlu0 %4556
        %4558 = vrot.lane.b32.xlu0 %v4234, 16
        %v4559 = vpop.permute.xlu0 %4558
        %4564 = vrot.lane.b32.xlu0 %v4329, 20
        %v4565 = vpop.permute.xlu0 %4564
        %4566 = vrot.lane.b32.xlu0 %v4332, 20
        %v4567 = vpop.permute.xlu0 %4566
        %4572 = vrot.lane.b32.xlu0 %v4427, 24
        %v4573 = vpop.permute.xlu0 %4572
        %4574 = vrot.lane.b32.xlu0 %v4430, 24
        %v4575 = vpop.permute.xlu0 %4574
        %4580 = vrot.lane.b32.xlu0 %v4525, 28
        %v4581 = vpop.permute.xlu0 %4580
        %4582 = vrot.lane.b32.xlu0 %v4528, 28
        %v4583 = vpop.permute.xlu0 %4582
        %v4586 = vsel %vm1659, %v3839, %v4533
        %v4587 = vsel %vm1659, %v3842, %v4535
        %v4588 = vsel %vm2495, %v4586, %v4541
        %v4589 = vsel %vm2495, %v4587, %v4543
        %v4590 = vsel %vm2498, %v4588, %v4549
        %v4591 = vsel %vm2498, %v4589, %v4551
        %v4592 = vsel %vm1693, %v4590, %v4557
        %v4593 = vsel %vm1693, %v4591, %v4559
        %v4594 = vsel %vm2503, %v4592, %v4565
        %v4595 = vsel %vm2503, %v4593, %v4567
        %v4596 = vsel %vm2506, %v4594, %v4573
        %v4597 = vsel %vm2506, %v4595, %v4575
        %v4598 = vsel %vm2509, %v4596, %v4581
        %v4599 = vsel %vm2509, %v4597, %v4583
        %v4601 = vperm.slane %v3680, 0
        %v4604 = vsel %vm1623, %v4598, 0
        %v4607 = vsel %vm1623, %v4599, 0
        %4609 = vmatpush.msra.mxu0 0.0
        %4610 = vmatpush.msra.mxu0 0.0
        %4611 = vmatpush.msra.mxu0 0.0
        %4612 = vmatpush.msra.mxu0 0.0
        %4613 = vmatpush.msra.mxu0 0.0
        %4614 = vmatpush.msra.mxu0 0.0
        %4615 = vmatpush.msra.mxu0 0.0
        %4616 = vmatpush.msra.mxu0 0.0
        %4617 = vmatpush.msra.mxu0 0.0
        %4618 = vmatpush.msra.mxu0 0.0
        %4619 = vmatpush.msra.mxu0 0.0
        %4620 = vmatpush.msra.mxu0 0.0
        %4621 = vmatpush.msra.mxu0 %v3679
        %4622 = vmatpush.msra.mxu0 %v3678
        %4623 = vmatpush.msra.mxu0 %v3677
        %4624 = vmatpush.msra.mxu0 %v3676
        %4625 = vmatmul.f32.gmra.mxu0 %v4604
        %v4626 = vpop.f32.mrf.mxu0
        %v4627 = vadd.f32 %v4601, %v4626
        %4628 = vmatmul.f32.gmra.mxu0 %v4607
        %v4629 = vpop.f32.mrf.mxu0
        %v4630 = vadd.f32 %v4601, %v4629
        %4631 = vdwg.mxu0
        %v4632 = vadd.f32 %v3669, %v4627
        %v4633 = vadd.f32 %v3670, %v4630
        %v4634 = vsel %vm1623, %v4632, 0.0
        %4635 = vadd.xlane.f32.xlu0 %v4634
        %v4636 = vpop.xlane.xlu0 %4635
        %v4637 = vsel %vm1623, %v4633, 0.0
        %4638 = vadd.xlane.f32.xlu0 %v4637
        %v4639 = vpop.xlane.xlu0 %4638
        %v4640 = vmul.f32 %v4636, %v2558
        %v4641 = vmul.f32 %v4639, %v2558
        %v4642 = vsub.f32 %v4632, %v4640
        %v4643 = vsub.f32 %v4633, %v4641
        %v4644 = vmul.f32 %v4642, %v4642
        %v4645 = vmul.f32 %v4643, %v4643
        %v4646 = vsel %vm1623, %v4644, 0.0
        %4647 = vadd.xlane.f32.xlu0 %v4646
        %v4648 = vpop.xlane.xlu0 %4647
        %v4649 = vsel %vm1623, %v4645, 0.0
        %4650 = vadd.xlane.f32.xlu0 %v4649
        %v4651 = vpop.xlane.xlu0 %4650
        %v4652 = vmul.f32 %v4648, %v2558
        %v4653 = vmul.f32 %v4651, %v2558
        %v4654 = vadd.f32 %v4652, 1e-05
        %v4655 = vadd.f32 %v4653, 1e-05
        %v4656 = vrsqrt.pop %v4654
        %v4657 = vmul.f32 %v4656, %v4654
        %v4658 = vmul.f32 %v4657, %v4656
        %v4659 = vmul.f32 0.5, %v4658
        %v4660 = vsub.f32 1.5, %v4659
        %v4661 = vmul.f32 %v4656, %v4660
        %vm4662 = vweird.f32 %v4654
        %vm4663 = vweird.f32 %v4656
        %vm4664 = vmor %vm4662, %vm4663
        %v4665 = vsel %vm4664, %v4656, %v4661
        %v4666 = vrsqrt.pop %v4655
        %v4667 = vmul.f32 %v4666, %v4655
        %v4668 = vmul.f32 %v4667, %v4666
        %v4669 = vmul.f32 0.5, %v4668
        %v4670 = vsub.f32 1.5, %v4669
        %v4671 = vmul.f32 %v4666, %v4670
        %vm4672 = vweird.f32 %v4655
        %vm4673 = vweird.f32 %v4666
        %vm4674 = vmor %vm4672, %vm4673
        %v4675 = vsel %vm4674, %v4666, %v4671
        %v4676 = vmul.f32 %v4642, %v4665
        %v4677 = vmul.f32 %v4643, %v4675
        %v4679 = vperm.slane %v3681, 0
        %v4681 = vmul.f32 %v4676, %v4679
        %v4682 = vmul.f32 %v4677, %v4679
        %v4684 = vperm.slane %v3682, 0
        %v4686 = vadd.f32 %v4681, %v4684
        %v4687 = vadd.f32 %v4682, %v4684
        %v4689 = vperm.slane %v3687, 0
        %v4692 = vsel %vm1623, %v4686, 0
        %v4695 = vsel %vm1623, %v4687, 0
        %4697 = vmatpush.msra.mxu0 0.0
        %4698 = vmatpush.msra.mxu0 0.0
        %4699 = vmatpush.msra.mxu0 0.0
        %4700 = vmatpush.msra.mxu0 0.0
        %4701 = vmatpush.msra.mxu0 0.0
        %4702 = vmatpush.msra.mxu0 0.0
        %4703 = vmatpush.msra.mxu0 0.0
        %4704 = vmatpush.msra.mxu0 0.0
        %4705 = vmatpush.msra.mxu0 0.0
        %4706 = vmatpush.msra.mxu0 0.0
        %4707 = vmatpush.msra.mxu0 0.0
        %4708 = vmatpush.msra.mxu0 0.0
        %4709 = vmatpush.msra.mxu0 %v3686
        %4710 = vmatpush.msra.mxu0 %v3685
        %4711 = vmatpush.msra.mxu0 %v3684
        %4712 = vmatpush.msra.mxu0 %v3683
        %4713 = vmatmul.f32.gmra.mxu0 %v4692
        %v4714 = vpop.f32.mrf.mxu0
        %v4715 = vadd.f32 %v4689, %v4714
        %4716 = vmatmul.f32.gmra.mxu0 %v4695
        %v4717 = vpop.f32.mrf.mxu0
        %v4718 = vadd.f32 %v4689, %v4717
        %4719 = vdwg.mxu0
        %v4721 = vperm.slane %v3692, 0
        %4723 = vmatpush.msra.mxu0 0.0
        %4724 = vmatpush.msra.mxu0 0.0
        %4725 = vmatpush.msra.mxu0 0.0
        %4726 = vmatpush.msra.mxu0 0.0
        %4727 = vmatpush.msra.mxu0 0.0
        %4728 = vmatpush.msra.mxu0 0.0
        %4729 = vmatpush.msra.mxu0 0.0
        %4730 = vmatpush.msra.mxu0 0.0
        %4731 = vmatpush.msra.mxu0 0.0
        %4732 = vmatpush.msra.mxu0 0.0
        %4733 = vmatpush.msra.mxu0 0.0
        %4734 = vmatpush.msra.mxu0 0.0
        %4735 = vmatpush.msra.mxu0 %v3691
        %4736 = vmatpush.msra.mxu0 %v3690
        %4737 = vmatpush.msra.mxu0 %v3689
        %4738 = vmatpush.msra.mxu0 %v3688
        %4739 = vmatmul.f32.gmra.mxu0 %v2643
        %v4740 = vpop.f32.mrf.mxu0
        %v4741 = vadd.f32 %v4721, %v4740
        %4742 = vdwg.mxu0
        %v4744 = vsel %vm1659, %v4715, 0
        %v4747 = vsel %vm1659, %v4718, 0
        %v4750 = vsel %vm1659, %v4741, 0
        %4752 = vmatpush.xpose.msra.mxu0 0.0
        %4753 = vmatpush.xpose.msra.mxu0 0.0
        %4754 = vmatpush.xpose.msra.mxu0 0.0
        %4755 = vmatpush.xpose.msra.mxu0 0.0
        %4756 = vmatpush.xpose.msra.mxu0 0.0
        %4757 = vmatpush.xpose.msra.mxu0 0.0
        %4758 = vmatpush.xpose.msra.mxu0 0.0
        %4759 = vmatpush.xpose.msra.mxu0 0.0
        %4760 = vmatpush.xpose.msra.mxu0 0.0
        %4761 = vmatpush.xpose.msra.mxu0 0.0
        %4762 = vmatpush.xpose.msra.mxu0 0.0
        %4763 = vmatpush.xpose.msra.mxu0 0.0
        %4764 = vmatpush.xpose.msra.mxu0 0.0
        %4765 = vmatpush.xpose.msra.mxu0 0.0
        %4766 = vmatpush.xpose.msra.mxu0 0.0
        %4767 = vmatpush.xpose.msra.mxu0 %v4750
        %4768 = vmatmul.f32.gmra.mxu0 %v4744
        %v4769 = vpop.f32.mrf.mxu0
        %v4770 = vadd.f32 0.0, %v4769
        %4771 = vmatmul.f32.gmra.mxu0 %v4747
        %v4772 = vpop.f32.mrf.mxu0
        %v4773 = vadd.f32 0.0, %v4772
        %4774 = vdwg.mxu0
        %v4775 = vmul.f32 %v4770, 0.5
        %v4776 = vmul.f32 %v4773, 0.5
        %v4777 = vsel %vm2495, %v4775, -inf
        %4778 = vmax.xlane.f32.xlu0 %v4777
        %v4779 = vpop.xlane.xlu0 %4778
        %v4780 = vsel %vm2495, %v4776, -inf
        %4781 = vmax.xlane.f32.xlu0 %v4780
        %v4782 = vpop.xlane.xlu0 %4781
        %v4783 = vsub.f32 %v4775, %v4779
        %v4784 = vsub.f32 %v4776, %v4782
        %v4785 = vmul.f32 %v4783, 1.442695
        %v4786 = vpow.pop %v4785
        %v4787 = vmul.f32 %v4784, 1.442695
        %v4788 = vpow.pop %v4787
        %v4789 = vsel %vm2495, %v4786, 0.0
        %4790 = vadd.xlane.f32.xlu0 %v4789
        %v4791 = vpop.xlane.xlu0 %4790
        %v4792 = vsel %vm2495, %v4788, 0.0
        %4793 = vadd.xlane.f32.xlu0 %v4792
        %v4794 = vpop.xlane.xlu0 %4793
        %v4795 = vrcp.pop %v4791
        %v4796 = vrcp.pop %v4794
        %v4797 = vmul.f32 %v4786, %v4795
        %v4798 = vmul.f32 %v4788, %v4796
        %4799 = vrot.lane.b32.xlu0 %v4741, 96
        %v4800 = vpop.permute.xlu0 %4799
        %v4803 = vsel %vm2495, %v4797, 0
        %v4806 = vsel %vm2495, %v4798, 0
        %4808 = vmatpush.msra.mxu0 0.0
        %4809 = vmatpush.msra.mxu0 0.0
        %4810 = vmatpush.msra.mxu0 0.0
        %4811 = vmatpush.msra.mxu0 0.0
        %4812 = vmatpush.msra.mxu0 0.0
        %4813 = vmatpush.msra.mxu0 0.0
        %4814 = vmatpush.msra.mxu0 0.0
        %4815 = vmatpush.msra.mxu0 0.0
        %4816 = vmatpush.msra.mxu0 0.0
        %4817 = vmatpush.msra.mxu0 0.0
        %4818 = vmatpush.msra.mxu0 0.0
        %4819 = vmatpush.msra.mxu0 0.0
        %4820 = vmatpush.msra.mxu0 0.0
        %4821 = vmatpush.msra.mxu0 0.0
        %4822 = vmatpush.msra.mxu0 0.0
        %4823 = vmatpush.msra.mxu0 %v4800
        %4824 = vmatmul.f32.gmra.mxu0 %v4803
        %v4825 = vpop.f32.mrf.mxu0
        %v4826 = vadd.f32 0.0, %v4825
        %4827 = vmatmul.f32.gmra.mxu0 %v4806
        %v4828 = vpop.f32.mrf.mxu0
        %v4829 = vadd.f32 0.0, %v4828
        %4830 = vdwg.mxu0
        %4831 = vrot.lane.b32.xlu0 %v4715, 124
        %v4832 = vpop.permute.xlu0 %4831
        %4833 = vrot.lane.b32.xlu0 %v4718, 124
        %v4834 = vpop.permute.xlu0 %4833
        %4835 = vrot.lane.b32.xlu0 %v4741, 124
        %v4836 = vpop.permute.xlu0 %4835
        %v4837 = vsel %vm1659, %v4832, 0
        %v4839 = vsel %vm1659, %v4834, 0
        %v4841 = vsel %vm1659, %v4836, 0
        %4843 = vmatpush.xpose.msra.mxu0 0.0
        %4844 = vmatpush.xpose.msra.mxu0 0.0
        %4845 = vmatpush.xpose.msra.mxu0 0.0
        %4846 = vmatpush.xpose.msra.mxu0 0.0
        %4847 = vmatpush.xpose.msra.mxu0 0.0
        %4848 = vmatpush.xpose.msra.mxu0 0.0
        %4849 = vmatpush.xpose.msra.mxu0 0.0
        %4850 = vmatpush.xpose.msra.mxu0 0.0
        %4851 = vmatpush.xpose.msra.mxu0 0.0
        %4852 = vmatpush.xpose.msra.mxu0 0.0
        %4853 = vmatpush.xpose.msra.mxu0 0.0
        %4854 = vmatpush.xpose.msra.mxu0 0.0
        %4855 = vmatpush.xpose.msra.mxu0 0.0
        %4856 = vmatpush.xpose.msra.mxu0 0.0
        %4857 = vmatpush.xpose.msra.mxu0 0.0
        %4858 = vmatpush.xpose.msra.mxu0 %v4841
        %4859 = vmatmul.f32.gmra.mxu0 %v4837
        %v4860 = vpop.f32.mrf.mxu0
        %v4861 = vadd.f32 0.0, %v4860
        %4862 = vmatmul.f32.gmra.mxu0 %v4839
        %v4863 = vpop.f32.mrf.mxu0
        %v4864 = vadd.f32 0.0, %v4863
        %4865 = vdwg.mxu0
        %v4866 = vmul.f32 %v4861, 0.5
        %v4867 = vmul.f32 %v4864, 0.5
        %v4868 = vsel %vm2495, %v4866, -inf
        %4869 = vmax.xlane.f32.xlu0 %v4868
        %v4870 = vpop.xlane.xlu0 %4869
        %v4871 = vsel %vm2495, %v4867, -inf
        %4872 = vmax.xlane.f32.xlu0 %v4871
        %v4873 = vpop.xlane.xlu0 %4872
        %v4874 = vsub.f32 %v4866, %v4870
        %v4875 = vsub.f32 %v4867, %v4873
        %v4876 = vmul.f32 %v4874, 1.442695
        %v4877 = vpow.pop %v4876
        %v4878 = vmul.f32 %v4875, 1.442695
        %v4879 = vpow.pop %v4878
        %v4880 = vsel %vm2495, %v4877, 0.0
        %4881 = vadd.xlane.f32.xlu0 %v4880
        %v4882 = vpop.xlane.xlu0 %4881
        %v4883 = vsel %vm2495, %v4879, 0.0
        %4884 = vadd.xlane.f32.xlu0 %v4883
        %v4885 = vpop.xlane.xlu0 %4884
        %v4886 = vrcp.pop %v4882
        %v4887 = vrcp.pop %v4885
        %v4888 = vmul.f32 %v4877, %v4886
        %v4889 = vmul.f32 %v4879, %v4887
        %4890 = vrot.lane.b32.xlu0 %v4741, 92
        %v4891 = vpop.permute.xlu0 %4890
        %v4894 = vsel %vm2495, %v4888, 0
        %v4897 = vsel %vm2495, %v4889, 0
        %4899 = vmatpush.msra.mxu0 0.0
        %4900 = vmatpush.msra.mxu0 0.0
        %4901 = vmatpush.msra.mxu0 0.0
        %4902 = vmatpush.msra.mxu0 0.0
        %4903 = vmatpush.msra.mxu0 0.0
        %4904 = vmatpush.msra.mxu0 0.0
        %4905 = vmatpush.msra.mxu0 0.0
        %4906 = vmatpush.msra.mxu0 0.0
        %4907 = vmatpush.msra.mxu0 0.0
        %4908 = vmatpush.msra.mxu0 0.0
        %4909 = vmatpush.msra.mxu0 0.0
        %4910 = vmatpush.msra.mxu0 0.0
        %4911 = vmatpush.msra.mxu0 0.0
        %4912 = vmatpush.msra.mxu0 0.0
        %4913 = vmatpush.msra.mxu0 0.0
        %4914 = vmatpush.msra.mxu0 %v4891
        %4915 = vmatmul.f32.gmra.mxu0 %v4894
        %v4916 = vpop.f32.mrf.mxu0
        %v4917 = vadd.f32 0.0, %v4916
        %4918 = vmatmul.f32.gmra.mxu0 %v4897
        %v4919 = vpop.f32.mrf.mxu0
        %v4920 = vadd.f32 0.0, %v4919
        %4921 = vdwg.mxu0
        %4922 = vrot.lane.b32.xlu0 %v4715, 120
        %v4923 = vpop.permute.xlu0 %4922
        %4924 = vrot.lane.b32.xlu0 %v4718, 120
        %v4925 = vpop.permute.xlu0 %4924
        %4926 = vrot.lane.b32.xlu0 %v4741, 120
        %v4927 = vpop.permute.xlu0 %4926
        %v4928 = vsel %vm1659, %v4923, 0
        %v4930 = vsel %vm1659, %v4925, 0
        %v4932 = vsel %vm1659, %v4927, 0
        %4934 = vmatpush.xpose.msra.mxu0 0.0
        %4935 = vmatpush.xpose.msra.mxu0 0.0
        %4936 = vmatpush.xpose.msra.mxu0 0.0
        %4937 = vmatpush.xpose.msra.mxu0 0.0
        %4938 = vmatpush.xpose.msra.mxu0 0.0
        %4939 = vmatpush.xpose.msra.mxu0 0.0
        %4940 = vmatpush.xpose.msra.mxu0 0.0
        %4941 = vmatpush.xpose.msra.mxu0 0.0
        %4942 = vmatpush.xpose.msra.mxu0 0.0
        %4943 = vmatpush.xpose.msra.mxu0 0.0
        %4944 = vmatpush.xpose.msra.mxu0 0.0
        %4945 = vmatpush.xpose.msra.mxu0 0.0
        %4946 = vmatpush.xpose.msra.mxu0 0.0
        %4947 = vmatpush.xpose.msra.mxu0 0.0
        %4948 = vmatpush.xpose.msra.mxu0 0.0
        %4949 = vmatpush.xpose.msra.mxu0 %v4932
        %4950 = vmatmul.f32.gmra.mxu0 %v4928
        %v4951 = vpop.f32.mrf.mxu0
        %v4952 = vadd.f32 0.0, %v4951
        %4953 = vmatmul.f32.gmra.mxu0 %v4930
        %v4954 = vpop.f32.mrf.mxu0
        %v4955 = vadd.f32 0.0, %v4954
        %4956 = vdwg.mxu0
        %v4957 = vmul.f32 %v4952, 0.5
        %v4958 = vmul.f32 %v4955, 0.5
        %v4959 = vsel %vm2495, %v4957, -inf
        %4960 = vmax.xlane.f32.xlu0 %v4959
        %v4961 = vpop.xlane.xlu0 %4960
        %v4962 = vsel %vm2495, %v4958, -inf
        %4963 = vmax.xlane.f32.xlu0 %v4962
        %v4964 = vpop.xlane.xlu0 %4963
        %v4965 = vsub.f32 %v4957, %v4961
        %v4966 = vsub.f32 %v4958, %v4964
        %v4967 = vmul.f32 %v4965, 1.442695
        %v4968 = vpow.pop %v4967
        %v4969 = vmul.f32 %v4966, 1.442695
        %v4970 = vpow.pop %v4969
        %v4971 = vsel %vm2495, %v4968, 0.0
        %4972 = vadd.xlane.f32.xlu0 %v4971
        %v4973 = vpop.xlane.xlu0 %4972
        %v4974 = vsel %vm2495, %v4970, 0.0
        %4975 = vadd.xlane.f32.xlu0 %v4974
        %v4976 = vpop.xlane.xlu0 %4975
        %v4977 = vrcp.pop %v4973
        %v4978 = vrcp.pop %v4976
        %v4979 = vmul.f32 %v4968, %v4977
        %v4980 = vmul.f32 %v4970, %v4978
        %4981 = vrot.lane.b32.xlu0 %v4741, 88
        %v4982 = vpop.permute.xlu0 %4981
        %v4985 = vsel %vm2495, %v4979, 0
        %v4988 = vsel %vm2495, %v4980, 0
        %4990 = vmatpush.msra.mxu0 0.0
        %4991 = vmatpush.msra.mxu0 0.0
        %4992 = vmatpush.msra.mxu0 0.0
        %4993 = vmatpush.msra.mxu0 0.0
        %4994 = vmatpush.msra.mxu0 0.0
        %4995 = vmatpush.msra.mxu0 0.0
        %4996 = vmatpush.msra.mxu0 0.0
        %4997 = vmatpush.msra.mxu0 0.0
        %4998 = vmatpush.msra.mxu0 0.0
        %4999 = vmatpush.msra.mxu0 0.0
        %5000 = vmatpush.msra.mxu0 0.0
        %5001 = vmatpush.msra.mxu0 0.0
        %5002 = vmatpush.msra.mxu0 0.0
        %5003 = vmatpush.msra.mxu0 0.0
        %5004 = vmatpush.msra.mxu0 0.0
        %5005 = vmatpush.msra.mxu0 %v4982
        %5006 = vmatmul.f32.gmra.mxu0 %v4985
        %v5007 = vpop.f32.mrf.mxu0
        %v5008 = vadd.f32 0.0, %v5007
        %5009 = vmatmul.f32.gmra.mxu0 %v4988
        %v5010 = vpop.f32.mrf.mxu0
        %v5011 = vadd.f32 0.0, %v5010
        %5012 = vdwg.mxu0
        %5013 = vrot.lane.b32.xlu0 %v4715, 116
        %v5014 = vpop.permute.xlu0 %5013
        %5015 = vrot.lane.b32.xlu0 %v4718, 116
        %v5016 = vpop.permute.xlu0 %5015
        %5017 = vrot.lane.b32.xlu0 %v4741, 116
        %v5018 = vpop.permute.xlu0 %5017
        %v5019 = vsel %vm1659, %v5014, 0
        %v5021 = vsel %vm1659, %v5016, 0
        %v5023 = vsel %vm1659, %v5018, 0
        %5025 = vmatpush.xpose.msra.mxu0 0.0
        %5026 = vmatpush.xpose.msra.mxu0 0.0
        %5027 = vmatpush.xpose.msra.mxu0 0.0
        %5028 = vmatpush.xpose.msra.mxu0 0.0
        %5029 = vmatpush.xpose.msra.mxu0 0.0
        %5030 = vmatpush.xpose.msra.mxu0 0.0
        %5031 = vmatpush.xpose.msra.mxu0 0.0
        %5032 = vmatpush.xpose.msra.mxu0 0.0
        %5033 = vmatpush.xpose.msra.mxu0 0.0
        %5034 = vmatpush.xpose.msra.mxu0 0.0
        %5035 = vmatpush.xpose.msra.mxu0 0.0
        %5036 = vmatpush.xpose.msra.mxu0 0.0
        %5037 = vmatpush.xpose.msra.mxu0 0.0
        %5038 = vmatpush.xpose.msra.mxu0 0.0
        %5039 = vmatpush.xpose.msra.mxu0 0.0
        %5040 = vmatpush.xpose.msra.mxu0 %v5023
        %5041 = vmatmul.f32.gmra.mxu0 %v5019
        %v5042 = vpop.f32.mrf.mxu0
        %v5043 = vadd.f32 0.0, %v5042
        %5044 = vmatmul.f32.gmra.mxu0 %v5021
        %v5045 = vpop.f32.mrf.mxu0
        %v5046 = vadd.f32 0.0, %v5045
        %5047 = vdwg.mxu0
        %v5048 = vmul.f32 %v5043, 0.5
        %v5049 = vmul.f32 %v5046, 0.5
        %v5050 = vsel %vm2495, %v5048, -inf
        %5051 = vmax.xlane.f32.xlu0 %v5050
        %v5052 = vpop.xlane.xlu0 %5051
        %v5053 = vsel %vm2495, %v5049, -inf
        %5054 = vmax.xlane.f32.xlu0 %v5053
        %v5055 = vpop.xlane.xlu0 %5054
        %v5056 = vsub.f32 %v5048, %v5052
        %v5057 = vsub.f32 %v5049, %v5055
        %v5058 = vmul.f32 %v5056, 1.442695
        %v5059 = vpow.pop %v5058
        %v5060 = vmul.f32 %v5057, 1.442695
        %v5061 = vpow.pop %v5060
        %v5062 = vsel %vm2495, %v5059, 0.0
        %5063 = vadd.xlane.f32.xlu0 %v5062
        %v5064 = vpop.xlane.xlu0 %5063
        %v5065 = vsel %vm2495, %v5061, 0.0
        %5066 = vadd.xlane.f32.xlu0 %v5065
        %v5067 = vpop.xlane.xlu0 %5066
        %v5068 = vrcp.pop %v5064
        %v5069 = vrcp.pop %v5067
        %v5070 = vmul.f32 %v5059, %v5068
        %v5071 = vmul.f32 %v5061, %v5069
        %5072 = vrot.lane.b32.xlu0 %v4741, 84
        %v5073 = vpop.permute.xlu0 %5072
        %v5076 = vsel %vm2495, %v5070, 0
        %v5079 = vsel %vm2495, %v5071, 0
        %5081 = vmatpush.msra.mxu0 0.0
        %5082 = vmatpush.msra.mxu0 0.0
        %5083 = vmatpush.msra.mxu0 0.0
        %5084 = vmatpush.msra.mxu0 0.0
        %5085 = vmatpush.msra.mxu0 0.0
        %5086 = vmatpush.msra.mxu0 0.0
        %5087 = vmatpush.msra.mxu0 0.0
        %5088 = vmatpush.msra.mxu0 0.0
        %5089 = vmatpush.msra.mxu0 0.0
        %5090 = vmatpush.msra.mxu0 0.0
        %5091 = vmatpush.msra.mxu0 0.0
        %5092 = vmatpush.msra.mxu0 0.0
        %5093 = vmatpush.msra.mxu0 0.0
        %5094 = vmatpush.msra.mxu0 0.0
        %5095 = vmatpush.msra.mxu0 0.0
        %5096 = vmatpush.msra.mxu0 %v5073
        %5097 = vmatmul.f32.gmra.mxu0 %v5076
        %v5098 = vpop.f32.mrf.mxu0
        %v5099 = vadd.f32 0.0, %v5098
        %5100 = vmatmul.f32.gmra.mxu0 %v5079
        %v5101 = vpop.f32.mrf.mxu0
        %v5102 = vadd.f32 0.0, %v5101
        %5103 = vdwg.mxu0
        %5104 = vrot.lane.b32.xlu0 %v4715, 112
        %v5105 = vpop.permute.xlu0 %5104
        %5106 = vrot.lane.b32.xlu0 %v4718, 112
        %v5107 = vpop.permute.xlu0 %5106
        %5108 = vrot.lane.b32.xlu0 %v4741, 112
        %v5109 = vpop.permute.xlu0 %5108
        %v5110 = vsel %vm1659, %v5105, 0
        %v5112 = vsel %vm1659, %v5107, 0
        %v5114 = vsel %vm1659, %v5109, 0
        %5116 = vmatpush.xpose.msra.mxu0 0.0
        %5117 = vmatpush.xpose.msra.mxu0 0.0
        %5118 = vmatpush.xpose.msra.mxu0 0.0
        %5119 = vmatpush.xpose.msra.mxu0 0.0
        %5120 = vmatpush.xpose.msra.mxu0 0.0
        %5121 = vmatpush.xpose.msra.mxu0 0.0
        %5122 = vmatpush.xpose.msra.mxu0 0.0
        %5123 = vmatpush.xpose.msra.mxu0 0.0
        %5124 = vmatpush.xpose.msra.mxu0 0.0
        %5125 = vmatpush.xpose.msra.mxu0 0.0
        %5126 = vmatpush.xpose.msra.mxu0 0.0
        %5127 = vmatpush.xpose.msra.mxu0 0.0
        %5128 = vmatpush.xpose.msra.mxu0 0.0
        %5129 = vmatpush.xpose.msra.mxu0 0.0
        %5130 = vmatpush.xpose.msra.mxu0 0.0
        %5131 = vmatpush.xpose.msra.mxu0 %v5114
        %5132 = vmatmul.f32.gmra.mxu0 %v5110
        %v5133 = vpop.f32.mrf.mxu0
        %v5134 = vadd.f32 0.0, %v5133
        %5135 = vmatmul.f32.gmra.mxu0 %v5112
        %v5136 = vpop.f32.mrf.mxu0
        %v5137 = vadd.f32 0.0, %v5136
        %5138 = vdwg.mxu0
        %v5139 = vmul.f32 %v5134, 0.5
        %v5140 = vmul.f32 %v5137, 0.5
        %v5141 = vsel %vm2495, %v5139, -inf
        %5142 = vmax.xlane.f32.xlu0 %v5141
        %v5143 = vpop.xlane.xlu0 %5142
        %v5144 = vsel %vm2495, %v5140, -inf
        %5145 = vmax.xlane.f32.xlu0 %v5144
        %v5146 = vpop.xlane.xlu0 %5145
        %v5147 = vsub.f32 %v5139, %v5143
        %v5148 = vsub.f32 %v5140, %v5146
        %v5149 = vmul.f32 %v5147, 1.442695
        %v5150 = vpow.pop %v5149
        %v5151 = vmul.f32 %v5148, 1.442695
        %v5152 = vpow.pop %v5151
        %v5153 = vsel %vm2495, %v5150, 0.0
        %5154 = vadd.xlane.f32.xlu0 %v5153
        %v5155 = vpop.xlane.xlu0 %5154
        %v5156 = vsel %vm2495, %v5152, 0.0
        %5157 = vadd.xlane.f32.xlu0 %v5156
        %v5158 = vpop.xlane.xlu0 %5157
        %v5159 = vrcp.pop %v5155
        %v5160 = vrcp.pop %v5158
        %v5161 = vmul.f32 %v5150, %v5159
        %v5162 = vmul.f32 %v5152, %v5160
        %5163 = vrot.lane.b32.xlu0 %v4741, 80
        %v5164 = vpop.permute.xlu0 %5163
        %v5167 = vsel %vm2495, %v5161, 0
        %v5170 = vsel %vm2495, %v5162, 0
        %5172 = vmatpush.msra.mxu0 0.0
        %5173 = vmatpush.msra.mxu0 0.0
        %5174 = vmatpush.msra.mxu0 0.0
        %5175 = vmatpush.msra.mxu0 0.0
        %5176 = vmatpush.msra.mxu0 0.0
        %5177 = vmatpush.msra.mxu0 0.0
        %5178 = vmatpush.msra.mxu0 0.0
        %5179 = vmatpush.msra.mxu0 0.0
        %5180 = vmatpush.msra.mxu0 0.0
        %5181 = vmatpush.msra.mxu0 0.0
        %5182 = vmatpush.msra.mxu0 0.0
        %5183 = vmatpush.msra.mxu0 0.0
        %5184 = vmatpush.msra.mxu0 0.0
        %5185 = vmatpush.msra.mxu0 0.0
        %5186 = vmatpush.msra.mxu0 0.0
        %5187 = vmatpush.msra.mxu0 %v5164
        %5188 = vmatmul.f32.gmra.mxu0 %v5167
        %v5189 = vpop.f32.mrf.mxu0
        %v5190 = vadd.f32 0.0, %v5189
        %5191 = vmatmul.f32.gmra.mxu0 %v5170
        %v5192 = vpop.f32.mrf.mxu0
        %v5193 = vadd.f32 0.0, %v5192
        %5194 = vdwg.mxu0
        %5195 = vrot.lane.b32.xlu0 %v4715, 108
        %v5196 = vpop.permute.xlu0 %5195
        %5197 = vrot.lane.b32.xlu0 %v4718, 108
        %v5198 = vpop.permute.xlu0 %5197
        %5199 = vrot.lane.b32.xlu0 %v4741, 108
        %v5200 = vpop.permute.xlu0 %5199
        %v5201 = vsel %vm1659, %v5196, 0
        %v5203 = vsel %vm1659, %v5198, 0
        %v5205 = vsel %vm1659, %v5200, 0
        %5207 = vmatpush.xpose.msra.mxu0 0.0
        %5208 = vmatpush.xpose.msra.mxu0 0.0
        %5209 = vmatpush.xpose.msra.mxu0 0.0
        %5210 = vmatpush.xpose.msra.mxu0 0.0
        %5211 = vmatpush.xpose.msra.mxu0 0.0
        %5212 = vmatpush.xpose.msra.mxu0 0.0
        %5213 = vmatpush.xpose.msra.mxu0 0.0
        %5214 = vmatpush.xpose.msra.mxu0 0.0
        %5215 = vmatpush.xpose.msra.mxu0 0.0
        %5216 = vmatpush.xpose.msra.mxu0 0.0
        %5217 = vmatpush.xpose.msra.mxu0 0.0
        %5218 = vmatpush.xpose.msra.mxu0 0.0
        %5219 = vmatpush.xpose.msra.mxu0 0.0
        %5220 = vmatpush.xpose.msra.mxu0 0.0
        %5221 = vmatpush.xpose.msra.mxu0 0.0
        %5222 = vmatpush.xpose.msra.mxu0 %v5205
        %5223 = vmatmul.f32.gmra.mxu0 %v5201
        %v5224 = vpop.f32.mrf.mxu0
        %v5225 = vadd.f32 0.0, %v5224
        %5226 = vmatmul.f32.gmra.mxu0 %v5203
        %v5227 = vpop.f32.mrf.mxu0
        %v5228 = vadd.f32 0.0, %v5227
        %5229 = vdwg.mxu0
        %v5230 = vmul.f32 %v5225, 0.5
        %v5231 = vmul.f32 %v5228, 0.5
        %v5232 = vsel %vm2495, %v5230, -inf
        %5233 = vmax.xlane.f32.xlu0 %v5232
        %v5234 = vpop.xlane.xlu0 %5233
        %v5235 = vsel %vm2495, %v5231, -inf
        %5236 = vmax.xlane.f32.xlu0 %v5235
        %v5237 = vpop.xlane.xlu0 %5236
        %v5238 = vsub.f32 %v5230, %v5234
        %v5239 = vsub.f32 %v5231, %v5237
        %v5240 = vmul.f32 %v5238, 1.442695
        %v5241 = vpow.pop %v5240
        %v5242 = vmul.f32 %v5239, 1.442695
        %v5243 = vpow.pop %v5242
        %v5244 = vsel %vm2495, %v5241, 0.0
        %5245 = vadd.xlane.f32.xlu0 %v5244
        %v5246 = vpop.xlane.xlu0 %5245
        %v5247 = vsel %vm2495, %v5243, 0.0
        %5248 = vadd.xlane.f32.xlu0 %v5247
        %v5249 = vpop.xlane.xlu0 %5248
        %v5250 = vrcp.pop %v5246
        %v5251 = vrcp.pop %v5249
        %v5252 = vmul.f32 %v5241, %v5250
        %v5253 = vmul.f32 %v5243, %v5251
        %5254 = vrot.lane.b32.xlu0 %v4741, 76
        %v5255 = vpop.permute.xlu0 %5254
        %v5258 = vsel %vm2495, %v5252, 0
        %v5261 = vsel %vm2495, %v5253, 0
        %5263 = vmatpush.msra.mxu0 0.0
        %5264 = vmatpush.msra.mxu0 0.0
        %5265 = vmatpush.msra.mxu0 0.0
        %5266 = vmatpush.msra.mxu0 0.0
        %5267 = vmatpush.msra.mxu0 0.0
        %5268 = vmatpush.msra.mxu0 0.0
        %5269 = vmatpush.msra.mxu0 0.0
        %5270 = vmatpush.msra.mxu0 0.0
        %5271 = vmatpush.msra.mxu0 0.0
        %5272 = vmatpush.msra.mxu0 0.0
        %5273 = vmatpush.msra.mxu0 0.0
        %5274 = vmatpush.msra.mxu0 0.0
        %5275 = vmatpush.msra.mxu0 0.0
        %5276 = vmatpush.msra.mxu0 0.0
        %5277 = vmatpush.msra.mxu0 0.0
        %5278 = vmatpush.msra.mxu0 %v5255
        %5279 = vmatmul.f32.gmra.mxu0 %v5258
        %v5280 = vpop.f32.mrf.mxu0
        %v5281 = vadd.f32 0.0, %v5280
        %5282 = vmatmul.f32.gmra.mxu0 %v5261
        %v5283 = vpop.f32.mrf.mxu0
        %v5284 = vadd.f32 0.0, %v5283
        %5285 = vdwg.mxu0
        %5286 = vrot.lane.b32.xlu0 %v4715, 104
        %v5287 = vpop.permute.xlu0 %5286
        %5288 = vrot.lane.b32.xlu0 %v4718, 104
        %v5289 = vpop.permute.xlu0 %5288
        %5290 = vrot.lane.b32.xlu0 %v4741, 104
        %v5291 = vpop.permute.xlu0 %5290
        %v5292 = vsel %vm1659, %v5287, 0
        %v5294 = vsel %vm1659, %v5289, 0
        %v5296 = vsel %vm1659, %v5291, 0
        %5298 = vmatpush.xpose.msra.mxu0 0.0
        %5299 = vmatpush.xpose.msra.mxu0 0.0
        %5300 = vmatpush.xpose.msra.mxu0 0.0
        %5301 = vmatpush.xpose.msra.mxu0 0.0
        %5302 = vmatpush.xpose.msra.mxu0 0.0
        %5303 = vmatpush.xpose.msra.mxu0 0.0
        %5304 = vmatpush.xpose.msra.mxu0 0.0
        %5305 = vmatpush.xpose.msra.mxu0 0.0
        %5306 = vmatpush.xpose.msra.mxu0 0.0
        %5307 = vmatpush.xpose.msra.mxu0 0.0
        %5308 = vmatpush.xpose.msra.mxu0 0.0
        %5309 = vmatpush.xpose.msra.mxu0 0.0
        %5310 = vmatpush.xpose.msra.mxu0 0.0
        %5311 = vmatpush.xpose.msra.mxu0 0.0
        %5312 = vmatpush.xpose.msra.mxu0 0.0
        %5313 = vmatpush.xpose.msra.mxu0 %v5296
        %5314 = vmatmul.f32.gmra.mxu0 %v5292
        %v5315 = vpop.f32.mrf.mxu0
        %v5316 = vadd.f32 0.0, %v5315
        %5317 = vmatmul.f32.gmra.mxu0 %v5294
        %v5318 = vpop.f32.mrf.mxu0
        %v5319 = vadd.f32 0.0, %v5318
        %5320 = vdwg.mxu0
        %v5321 = vmul.f32 %v5316, 0.5
        %v5322 = vmul.f32 %v5319, 0.5
        %v5323 = vsel %vm2495, %v5321, -inf
        %5324 = vmax.xlane.f32.xlu0 %v5323
        %v5325 = vpop.xlane.xlu0 %5324
        %v5326 = vsel %vm2495, %v5322, -inf
        %5327 = vmax.xlane.f32.xlu0 %v5326
        %v5328 = vpop.xlane.xlu0 %5327
        %v5329 = vsub.f32 %v5321, %v5325
        %v5330 = vsub.f32 %v5322, %v5328
        %v5331 = vmul.f32 %v5329, 1.442695
        %v5332 = vpow.pop %v5331
        %v5333 = vmul.f32 %v5330, 1.442695
        %v5334 = vpow.pop %v5333
        %v5335 = vsel %vm2495, %v5332, 0.0
        %5336 = vadd.xlane.f32.xlu0 %v5335
        %v5337 = vpop.xlane.xlu0 %5336
        %v5338 = vsel %vm2495, %v5334, 0.0
        %5339 = vadd.xlane.f32.xlu0 %v5338
        %v5340 = vpop.xlane.xlu0 %5339
        %v5341 = vrcp.pop %v5337
        %v5342 = vrcp.pop %v5340
        %v5343 = vmul.f32 %v5332, %v5341
        %v5344 = vmul.f32 %v5334, %v5342
        %5345 = vrot.lane.b32.xlu0 %v4741, 72
        %v5346 = vpop.permute.xlu0 %5345
        %v5349 = vsel %vm2495, %v5343, 0
        %v5352 = vsel %vm2495, %v5344, 0
        %5354 = vmatpush.msra.mxu0 0.0
        %5355 = vmatpush.msra.mxu0 0.0
        %5356 = vmatpush.msra.mxu0 0.0
        %5357 = vmatpush.msra.mxu0 0.0
        %5358 = vmatpush.msra.mxu0 0.0
        %5359 = vmatpush.msra.mxu0 0.0
        %5360 = vmatpush.msra.mxu0 0.0
        %5361 = vmatpush.msra.mxu0 0.0
        %5362 = vmatpush.msra.mxu0 0.0
        %5363 = vmatpush.msra.mxu0 0.0
        %5364 = vmatpush.msra.mxu0 0.0
        %5365 = vmatpush.msra.mxu0 0.0
        %5366 = vmatpush.msra.mxu0 0.0
        %5367 = vmatpush.msra.mxu0 0.0
        %5368 = vmatpush.msra.mxu0 0.0
        %5369 = vmatpush.msra.mxu0 %v5346
        %5370 = vmatmul.f32.gmra.mxu0 %v5349
        %v5371 = vpop.f32.mrf.mxu0
        %v5372 = vadd.f32 0.0, %v5371
        %5373 = vmatmul.f32.gmra.mxu0 %v5352
        %v5374 = vpop.f32.mrf.mxu0
        %v5375 = vadd.f32 0.0, %v5374
        %5376 = vdwg.mxu0
        %5377 = vrot.lane.b32.xlu0 %v4715, 100
        %v5378 = vpop.permute.xlu0 %5377
        %5379 = vrot.lane.b32.xlu0 %v4718, 100
        %v5380 = vpop.permute.xlu0 %5379
        %5381 = vrot.lane.b32.xlu0 %v4741, 100
        %v5382 = vpop.permute.xlu0 %5381
        %v5383 = vsel %vm1659, %v5378, 0
        %v5385 = vsel %vm1659, %v5380, 0
        %v5387 = vsel %vm1659, %v5382, 0
        %5389 = vmatpush.xpose.msra.mxu0 0.0
        %5390 = vmatpush.xpose.msra.mxu0 0.0
        %5391 = vmatpush.xpose.msra.mxu0 0.0
        %5392 = vmatpush.xpose.msra.mxu0 0.0
        %5393 = vmatpush.xpose.msra.mxu0 0.0
        %5394 = vmatpush.xpose.msra.mxu0 0.0
        %5395 = vmatpush.xpose.msra.mxu0 0.0
        %5396 = vmatpush.xpose.msra.mxu0 0.0
        %5397 = vmatpush.xpose.msra.mxu0 0.0
        %5398 = vmatpush.xpose.msra.mxu0 0.0
        %5399 = vmatpush.xpose.msra.mxu0 0.0
        %5400 = vmatpush.xpose.msra.mxu0 0.0
        %5401 = vmatpush.xpose.msra.mxu0 0.0
        %5402 = vmatpush.xpose.msra.mxu0 0.0
        %5403 = vmatpush.xpose.msra.mxu0 0.0
        %5404 = vmatpush.xpose.msra.mxu0 %v5387
        %5405 = vmatmul.f32.gmra.mxu0 %v5383
        %v5406 = vpop.f32.mrf.mxu0
        %v5407 = vadd.f32 0.0, %v5406
        %5408 = vmatmul.f32.gmra.mxu0 %v5385
        %v5409 = vpop.f32.mrf.mxu0
        %v5410 = vadd.f32 0.0, %v5409
        %5411 = vdwg.mxu0
        %v5412 = vmul.f32 %v5407, 0.5
        %v5413 = vmul.f32 %v5410, 0.5
        %v5414 = vsel %vm2495, %v5412, -inf
        %5415 = vmax.xlane.f32.xlu0 %v5414
        %v5416 = vpop.xlane.xlu0 %5415
        %v5417 = vsel %vm2495, %v5413, -inf
        %5418 = vmax.xlane.f32.xlu0 %v5417
        %v5419 = vpop.xlane.xlu0 %5418
        %v5420 = vsub.f32 %v5412, %v5416
        %v5421 = vsub.f32 %v5413, %v5419
        %v5422 = vmul.f32 %v5420, 1.442695
        %v5423 = vpow.pop %v5422
        %v5424 = vmul.f32 %v5421, 1.442695
        %v5425 = vpow.pop %v5424
        %v5426 = vsel %vm2495, %v5423, 0.0
        %5427 = vadd.xlane.f32.xlu0 %v5426
        %v5428 = vpop.xlane.xlu0 %5427
        %v5429 = vsel %vm2495, %v5425, 0.0
        %5430 = vadd.xlane.f32.xlu0 %v5429
        %v5431 = vpop.xlane.xlu0 %5430
        %v5432 = vrcp.pop %v5428
        %v5433 = vrcp.pop %v5431
        %v5434 = vmul.f32 %v5423, %v5432
        %v5435 = vmul.f32 %v5425, %v5433
        %5436 = vrot.lane.b32.xlu0 %v4741, 68
        %v5437 = vpop.permute.xlu0 %5436
        %v5440 = vsel %vm2495, %v5434, 0
        %v5443 = vsel %vm2495, %v5435, 0
        %5445 = vmatpush.msra.mxu0 0.0
        %5446 = vmatpush.msra.mxu0 0.0
        %5447 = vmatpush.msra.mxu0 0.0
        %5448 = vmatpush.msra.mxu0 0.0
        %5449 = vmatpush.msra.mxu0 0.0
        %5450 = vmatpush.msra.mxu0 0.0
        %5451 = vmatpush.msra.mxu0 0.0
        %5452 = vmatpush.msra.mxu0 0.0
        %5453 = vmatpush.msra.mxu0 0.0
        %5454 = vmatpush.msra.mxu0 0.0
        %5455 = vmatpush.msra.mxu0 0.0
        %5456 = vmatpush.msra.mxu0 0.0
        %5457 = vmatpush.msra.mxu0 0.0
        %5458 = vmatpush.msra.mxu0 0.0
        %5459 = vmatpush.msra.mxu0 0.0
        %5460 = vmatpush.msra.mxu0 %v5437
        %5461 = vmatmul.f32.gmra.mxu0 %v5440
        %v5462 = vpop.f32.mrf.mxu0
        %v5463 = vadd.f32 0.0, %v5462
        %5464 = vmatmul.f32.gmra.mxu0 %v5443
        %v5465 = vpop.f32.mrf.mxu0
        %v5466 = vadd.f32 0.0, %v5465
        %5467 = vdwg.mxu0
        %5470 = vrot.lane.b32.xlu0 %v4917, 4
        %v5471 = vpop.permute.xlu0 %5470
        %5472 = vrot.lane.b32.xlu0 %v4920, 4
        %v5473 = vpop.permute.xlu0 %5472
        %5478 = vrot.lane.b32.xlu0 %v5008, 8
        %v5479 = vpop.permute.xlu0 %5478
        %5480 = vrot.lane.b32.xlu0 %v5011, 8
        %v5481 = vpop.permute.xlu0 %5480
        %5486 = vrot.lane.b32.xlu0 %v5099, 12
        %v5487 = vpop.permute.xlu0 %5486
        %5488 = vrot.lane.b32.xlu0 %v5102, 12
        %v5489 = vpop.permute.xlu0 %5488
        %5494 = vrot.lane.b32.xlu0 %v5190, 16
        %v5495 = vpop.permute.xlu0 %5494
        %5496 = vrot.lane.b32.xlu0 %v5193, 16
        %v5497 = vpop.permute.xlu0 %5496
        %5502 = vrot.lane.b32.xlu0 %v5281, 20
        %v5503 = vpop.permute.xlu0 %5502
        %5504 = vrot.lane.b32.xlu0 %v5284, 20
        %v5505 = vpop.permute.xlu0 %5504
        %5510 = vrot.lane.b32.xlu0 %v5372, 24
        %v5511 = vpop.permute.xlu0 %5510
        %5512 = vrot.lane.b32.xlu0 %v5375, 24
        %v5513 = vpop.permute.xlu0 %5512
        %5518 = vrot.lane.b32.xlu0 %v5463, 28
        %v5519 = vpop.permute.xlu0 %5518
        %5520 = vrot.lane.b32.xlu0 %v5466, 28
        %v5521 = vpop.permute.xlu0 %5520
        %v5524 = vsel %vm1659, %v4826, %v5471
        %v5525 = vsel %vm1659, %v4829, %v5473
        %v5526 = vsel %vm2495, %v5524, %v5479
        %v5527 = vsel %vm2495, %v5525, %v5481
        %v5528 = vsel %vm2498, %v5526, %v5487
        %v5529 = vsel %vm2498, %v5527, %v5489
        %v5530 = vsel %vm1693, %v5528, %v5495
        %v5531 = vsel %vm1693, %v5529, %v5497
        %v5532 = vsel %vm2503, %v5530, %v5503
        %v5533 = vsel %vm2503, %v5531, %v5505
        %v5534 = vsel %vm2506, %v5532, %v5511
        %v5535 = vsel %vm2506, %v5533, %v5513
        %v5536 = vsel %vm2509, %v5534, %v5519
        %v5537 = vsel %vm2509, %v5535, %v5521
        %v5539 = vperm.slane %v3697, 0
        %v5542 = vsel %vm1623, %v5536, 0
        %v5545 = vsel %vm1623, %v5537, 0
        %5547 = vmatpush.msra.mxu0 0.0
        %5548 = vmatpush.msra.mxu0 0.0
        %5549 = vmatpush.msra.mxu0 0.0
        %5550 = vmatpush.msra.mxu0 0.0
        %5551 = vmatpush.msra.mxu0 0.0
        %5552 = vmatpush.msra.mxu0 0.0
        %5553 = vmatpush.msra.mxu0 0.0
        %5554 = vmatpush.msra.mxu0 0.0
        %5555 = vmatpush.msra.mxu0 0.0
        %5556 = vmatpush.msra.mxu0 0.0
        %5557 = vmatpush.msra.mxu0 0.0
        %5558 = vmatpush.msra.mxu0 0.0
        %5559 = vmatpush.msra.mxu0 %v3696
        %5560 = vmatpush.msra.mxu0 %v3695
        %5561 = vmatpush.msra.mxu0 %v3694
        %5562 = vmatpush.msra.mxu0 %v3693
        %5563 = vmatmul.f32.gmra.mxu0 %v5542
        %v5564 = vpop.f32.mrf.mxu0
        %v5565 = vadd.f32 %v5539, %v5564
        %5566 = vmatmul.f32.gmra.mxu0 %v5545
        %v5567 = vpop.f32.mrf.mxu0
        %v5568 = vadd.f32 %v5539, %v5567
        %5569 = vdwg.mxu0
        %v5570 = vadd.f32 %v4686, %v5565
        %v5571 = vadd.f32 %v4687, %v5568
        %v5572 = vsel %vm1623, %v5570, 0.0
        %5573 = vadd.xlane.f32.xlu0 %v5572
        %v5574 = vpop.xlane.xlu0 %5573
        %v5575 = vsel %vm1623, %v5571, 0.0
        %5576 = vadd.xlane.f32.xlu0 %v5575
        %v5577 = vpop.xlane.xlu0 %5576
        %v5578 = vmul.f32 %v5574, %v2558
        %v5579 = vmul.f32 %v5577, %v2558
        %v5580 = vsub.f32 %v5570, %v5578
        %v5581 = vsub.f32 %v5571, %v5579
        %v5582 = vmul.f32 %v5580, %v5580
        %v5583 = vmul.f32 %v5581, %v5581
        %v5584 = vsel %vm1623, %v5582, 0.0
        %5585 = vadd.xlane.f32.xlu0 %v5584
        %v5586 = vpop.xlane.xlu0 %5585
        %v5587 = vsel %vm1623, %v5583, 0.0
        %5588 = vadd.xlane.f32.xlu0 %v5587
        %v5589 = vpop.xlane.xlu0 %5588
        %v5590 = vmul.f32 %v5586, %v2558
        %v5591 = vmul.f32 %v5589, %v2558
        %v5592 = vadd.f32 %v5590, 1e-05
        %v5593 = vadd.f32 %v5591, 1e-05
        %v5594 = vrsqrt.pop %v5592
        %v5595 = vmul.f32 %v5594, %v5592
        %v5596 = vmul.f32 %v5595, %v5594
        %v5597 = vmul.f32 0.5, %v5596
        %v5598 = vsub.f32 1.5, %v5597
        %v5599 = vmul.f32 %v5594, %v5598
        %vm5600 = vweird.f32 %v5592
        %vm5601 = vweird.f32 %v5594
        %vm5602 = vmor %vm5600, %vm5601
        %v5603 = vsel %vm5602, %v5594, %v5599
        %v5604 = vrsqrt.pop %v5593
        %v5605 = vmul.f32 %v5604, %v5593
        %v5606 = vmul.f32 %v5605, %v5604
        %v5607 = vmul.f32 0.5, %v5606
        %v5608 = vsub.f32 1.5, %v5607
        %v5609 = vmul.f32 %v5604, %v5608
        %vm5610 = vweird.f32 %v5593
        %vm5611 = vweird.f32 %v5604
        %vm5612 = vmor %vm5610, %vm5611
        %v5613 = vsel %vm5612, %v5604, %v5609
        %v5614 = vmul.f32 %v5580, %v5603
        %v5615 = vmul.f32 %v5581, %v5613
        %v5617 = vperm.slane %v3698, 0
        %v5619 = vmul.f32 %v5614, %v5617
        %v5620 = vmul.f32 %v5615, %v5617
        %v5622 = vperm.slane %v3699, 0
        %v5624 = vadd.f32 %v5619, %v5622
        %v5625 = vadd.f32 %v5620, %v5622
        %v5627 = vperm.slane %v3704, 0
        %v5630 = vsel %vm1623, %v5624, 0
        %v5633 = vsel %vm1623, %v5625, 0
        %5635 = vmatpush.msra.mxu0 0.0
        %5636 = vmatpush.msra.mxu0 0.0
        %5637 = vmatpush.msra.mxu0 0.0
        %5638 = vmatpush.msra.mxu0 0.0
        %5639 = vmatpush.msra.mxu0 0.0
        %5640 = vmatpush.msra.mxu0 0.0
        %5641 = vmatpush.msra.mxu0 0.0
        %5642 = vmatpush.msra.mxu0 0.0
        %5643 = vmatpush.msra.mxu0 0.0
        %5644 = vmatpush.msra.mxu0 0.0
        %5645 = vmatpush.msra.mxu0 0.0
        %5646 = vmatpush.msra.mxu0 0.0
        %5647 = vmatpush.msra.mxu0 %v3703
        %5648 = vmatpush.msra.mxu0 %v3702
        %5649 = vmatpush.msra.mxu0 %v3701
        %5650 = vmatpush.msra.mxu0 %v3700
        %5651 = vmatmul.f32.gmra.mxu0 %v5630
        %v5652 = vpop.f32.mrf.mxu0
        %v5653 = vadd.f32 %v5627, %v5652
        %5654 = vmatmul.f32.gmra.mxu0 %v5633
        %v5655 = vpop.f32.mrf.mxu0
        %v5656 = vadd.f32 %v5627, %v5655
        %5657 = vdwg.mxu0
        %v5658 = vmax.f32 %v5653, 0.0
        %v5659 = vmax.f32 %v5656, 0.0
        %v5661 = vperm.slane %v3713, 0
        %v5664 = vsel %vm3585, %v5658, 0
        %v5667 = vsel %vm3585, %v5659, 0
        %5669 = vmatpush.msra.mxu0 0.0
        %5670 = vmatpush.msra.mxu0 0.0
        %5671 = vmatpush.msra.mxu0 0.0
        %5672 = vmatpush.msra.mxu0 0.0
        %5673 = vmatpush.msra.mxu0 0.0
        %5674 = vmatpush.msra.mxu0 0.0
        %5675 = vmatpush.msra.mxu0 0.0
        %5676 = vmatpush.msra.mxu0 0.0
        %5677 = vmatpush.msra.mxu0 %v3712
        %5678 = vmatpush.msra.mxu0 %v3711
        %5679 = vmatpush.msra.mxu0 %v3710
        %5680 = vmatpush.msra.mxu0 %v3709
        %5681 = vmatpush.msra.mxu0 %v3708
        %5682 = vmatpush.msra.mxu0 %v3707
        %5683 = vmatpush.msra.mxu0 %v3706
        %5684 = vmatpush.msra.mxu0 %v3705
        %5685 = vmatmul.f32.gmra.mxu0 %v5664
        %v5686 = vpop.f32.mrf.mxu0
        %v5687 = vadd.f32 %v5661, %v5686
        %5688 = vmatmul.f32.gmra.mxu0 %v5667
        %v5689 = vpop.f32.mrf.mxu0
        %v5690 = vadd.f32 %v5661, %v5689
        %5691 = vdwg.mxu0
        %v5692 = vadd.f32 %v5624, %v5687
        %v5693 = vadd.f32 %v5625, %v5690
        %v5694 = vsel %vm1623, %v5692, 0.0
        %5695 = vadd.xlane.f32.xlu0 %v5694
        %v5696 = vpop.xlane.xlu0 %5695
        %v5697 = vsel %vm1623, %v5693, 0.0
        %5698 = vadd.xlane.f32.xlu0 %v5697
        %v5699 = vpop.xlane.xlu0 %5698
        %v5700 = vmul.f32 %v5696, %v2558
        %v5701 = vmul.f32 %v5699, %v2558
        %v5702 = vsub.f32 %v5692, %v5700
        %v5703 = vsub.f32 %v5693, %v5701
        %v5704 = vmul.f32 %v5702, %v5702
        %v5705 = vmul.f32 %v5703, %v5703
        %v5706 = vsel %vm1623, %v5704, 0.0
        %5707 = vadd.xlane.f32.xlu0 %v5706
        %v5708 = vpop.xlane.xlu0 %5707
        %v5709 = vsel %vm1623, %v5705, 0.0
        %5710 = vadd.xlane.f32.xlu0 %v5709
        %v5711 = vpop.xlane.xlu0 %5710
        %v5712 = vmul.f32 %v5708, %v2558
        %v5713 = vmul.f32 %v5711, %v2558
        %v5714 = vadd.f32 %v5712, 1e-05
        %v5715 = vadd.f32 %v5713, 1e-05
        %v5716 = vrsqrt.pop %v5714
        %v5717 = vmul.f32 %v5716, %v5714
        %v5718 = vmul.f32 %v5717, %v5716
        %v5719 = vmul.f32 0.5, %v5718
        %v5720 = vsub.f32 1.5, %v5719
        %v5721 = vmul.f32 %v5716, %v5720
        %vm5722 = vweird.f32 %v5714
        %vm5723 = vweird.f32 %v5716
        %vm5724 = vmor %vm5722, %vm5723
        %v5725 = vsel %vm5724, %v5716, %v5721
        %v5726 = vrsqrt.pop %v5715
        %v5727 = vmul.f32 %v5726, %v5715
        %v5728 = vmul.f32 %v5727, %v5726
        %v5729 = vmul.f32 0.5, %v5728
        %v5730 = vsub.f32 1.5, %v5729
        %v5731 = vmul.f32 %v5726, %v5730
        %vm5732 = vweird.f32 %v5715
        %vm5733 = vweird.f32 %v5726
        %vm5734 = vmor %vm5732, %vm5733
        %v5735 = vsel %vm5734, %v5726, %v5731
        %v5736 = vmul.f32 %v5702, %v5725
        %v5737 = vmul.f32 %v5703, %v5735
        %v5739 = vperm.slane %v3714, 0
        %v5741 = vmul.f32 %v5736, %v5739
        %v5742 = vmul.f32 %v5737, %v5739
        %v5744 = vperm.slane %v3715, 0
        %v5746 = vadd.f32 %v5741, %v5744
        %v5747 = vadd.f32 %v5742, %v5744
        %v5748 = vld [vmem:[%s85] sm:$0xff]
        %v5749 = vld [vmem:[%s85 + $0x8] sm:$0xff]
        %v5750 = vld [vmem:[%s85 + $0x10] sm:$0xff]
        %v5751 = vld [vmem:[%s85 + $0x18] sm:$0xff]
        %v5752 = vld [vmem:[%s87] sm:$0x1]
        %v5754 = vperm.slane %v5752, 0
        %v5757 = vsel %vm1623, %v5746, 0
        %v5760 = vsel %vm1623, %v5747, 0
        %5762 = vmatpush.msra.mxu0 0.0
        %5763 = vmatpush.msra.mxu0 0.0
        %5764 = vmatpush.msra.mxu0 0.0
        %5765 = vmatpush.msra.mxu0 0.0
        %5766 = vmatpush.msra.mxu0 0.0
        %5767 = vmatpush.msra.mxu0 0.0
        %5768 = vmatpush.msra.mxu0 0.0
        %5769 = vmatpush.msra.mxu0 0.0
        %5770 = vmatpush.msra.mxu0 0.0
        %5771 = vmatpush.msra.mxu0 0.0
        %5772 = vmatpush.msra.mxu0 0.0
        %5773 = vmatpush.msra.mxu0 0.0
        %5774 = vmatpush.msra.mxu0 %v5751
        %5775 = vmatpush.msra.mxu0 %v5750
        %5776 = vmatpush.msra.mxu0 %v5749
        %5777 = vmatpush.msra.mxu0 %v5748
        %5778 = vmatmul.f32.gmra.mxu0 %v5757
        %v5779 = vpop.f32.mrf.mxu0
        %v5780 = vadd.f32 %v5754, %v5779
        %5781 = vmatmul.f32.gmra.mxu0 %v5760
        %v5782 = vpop.f32.mrf.mxu0
        %v5783 = vadd.f32 %v5754, %v5782
        %5784 = vdwg.mxu0
        %5785 = vst.msk [vmem:[%s1562] sm:$0xff] %vm1693, %v5780
        %5786 = vst.msk [vmem:[%s1562 + $0x8] sm:$0xff] %vm1693, %v5783
        %s5787 = sand.u32 %s1053, 1
        %s5788 = scalar_lea.sflag [#allocation4], %s5787
        %s5789 = sand.u32 %s1053, 1
        %s5790 = smul.addr %s5789, 16
        %s5791 = scalar_lea.vmem [#allocation26], %s5790
        // Predicated region
        $region257: #{tpu_custom_call.1} parent=195 // pred_check
          %p5792 = pneg %p1063
        $region258: #{tpu_custom_call.1} parent=195 // pred_check_branch
          %5794 = sbr.rel (%p5792) target = $region260
        $region259: #{tpu_custom_call.1} parent=195 // pred_region
          %5796 = vsyncadd %s5788, 0
          %s5797 = smul.addr %s111, 2
          %s5798 = smul.addr %s5797, 8
          %s5799 = scalar_lea.hbm %s89, %s5798
          %s5800 = sshll.u32 %s5791, 4
          %s5801 = int_to_ptr.vmem [resolvable:$true] %s5800
          %s5802 = sshll.u32 %s5799, 4
          %s5803 = int_to_ptr.hbm [resolvable:$true] %s5802
          %5808 = dma.vmem_to_hbm [thread:$0]  %s5801, 256, %s5803, %s5788, 128, 128, 8
        $region260: #{tpu_custom_call.1} parent=195 // pred_fallthru
          _
      $region196: #{tpu_custom_call.1} parent=5 // pred_fallthru
        _
      %p5809 = scmp.le.s32.totalorder 2, %s106
      // Predicated region
      $region261: #{tpu_custom_call.1} parent=5 // pred_check
        %p5810 = pneg %p5809
      $region262: #{tpu_custom_call.1} parent=5 // pred_check_branch
        %5812 = sbr.rel (%p5810) target = $region264
      $region263: #{tpu_custom_call.1} parent=5 // pred_region
        %s5813 = ssub.s32 %s106, 2
        // Predicated region
        $region265: #{tpu_custom_call.1} parent=263 // pred_check
          %p5814 = pneg %p1069
        $region266: #{tpu_custom_call.1} parent=263 // pred_check_branch
          %5816 = sbr.rel (%p5814) target = $region268
        $region267: #{tpu_custom_call.1} parent=263 // pred_region
          %s5817 = sand.u32 %s1054, 1
          %s5818 = scalar_lea.sflag [#allocation4], %s5817
          %s5819 = sand.u32 %s1054, 1
          %s5820 = smul.addr %s5819, 16
          %s5821 = scalar_lea.vmem [#allocation26], %s5820
          %5823 = dma.done %s5818, 256
        $region268: #{tpu_custom_call.1} parent=263 // pred_fallthru
          _
      $region264: #{tpu_custom_call.1} parent=5 // pred_fallthru
        _
    $region6: #{tpu_custom_call.1} parent=1 // loop_footer
      %s110 = sadd.s32 1, %s106
    $region7: #{tpu_custom_call.1} parent=1 // loop_footer_branch
      %105 = sbr.rel target = $region3
    $region8: #{tpu_custom_call.1} parent=1 // loop_exit
      _
    %5824 = vsyncpa [#allocation3], 1
    %s5825 = scalar_lea.sflag [#allocation3], 1
    %5826 = vsyncpa %s5825, 1
    %5827 = vsyncpa [#allocation6], 1
    %5828 = vsyncpa [#allocation9], 1
    %5829 = vsyncpa [#allocation12], 1
    %5830 = vsyncpa [#allocation15], 1
    %5831 = vsyncpa [#allocation18], 1
    %5832 = vsyncpa [#allocation21], 1
    %5833 = vsyncpa [#allocation24], 1
    %5834 = vsyncpa [#allocation4], 1
    %s5835 = scalar_lea.sflag [#allocation4], 1
    %5836 = vsyncpa %s5835, 1

</llo_original>
